<compile_context>
chip_gen: v7x
topology: tpu7x:2x2x1
jax: 0.10.0
libtpu: 0.0.40
codegen_flags: <defaults>
</compile_context>

<pallas_src>
import jax
import jax.numpy as jnp
import numpy as np
from jax.experimental import pallas as pl
from jax.experimental.pallas import tpu as pltpu


_TAPS = tuple((dy, dx) for dy in range(3) for dx in range(3))


# ----------------------------- Pallas kernels ------------------------------ #

def _zero_border(apad):
    """Zero only the 1-wide border of a padded activation scratch.

    The interior is fully overwritten every grid step, so clearing the whole
    buffer each image is wasted store bandwidth."""
    P, Q, C = apad.shape
    z_row = jnp.zeros((1, Q, C), jnp.float32)
    z_col = jnp.zeros((P, 1, C), jnp.float32)
    apad[0:1, :, :] = z_row
    apad[P - 1:P, :, :] = z_row
    apad[:, 0:1, :] = z_col
    apad[:, Q - 1:Q, :] = z_col


def _pool2x2(y, s3, H, W):
    """2x2 max-pool of y (H*W, C), rows ordered h*W + w.  Returns (H//2, W//2, C).

    Single staging buffer s3 (>=H, >=W, C): one store, then the vertical max via
    stride-2 reads on the leading dim and the horizontal max via stride-2
    sublane reads."""
    C = y.shape[-1]
    Hh, Wh = H // 2, W // 2
    s3[0:H, 0:W, :] = y.reshape(H, W, C)
    v = jnp.maximum(s3[pl.ds(0, Hh, stride=2), 0:W, :],
                    s3[pl.ds(1, Hh, stride=2), 0:W, :])          # (Hh, W, C)
    s3[0:Hh, 0:W, :] = v
    return jnp.maximum(s3[0:Hh, pl.ds(0, Wh, stride=2), :],
                       s3[0:Hh, pl.ds(1, Wh, stride=2), :])      # (Hh, Wh, C)


def _conv3x3(apad, w_ref, b_ref, Hc, Wc):
    """3x3 conv (stride 1) + bias + ReLU from zero-padded VMEM act (Hc+2, Wc+2, Cin).

    Builds a (Hc*Wc, 9*Cin) tap-concat operand and does ONE K=9*Cin matmul with
    the tap-major (9*Cin, Cout) weight.  Returns (Hc*Wc, Cout) f32."""
    Cin = apad.shape[-1]
    taps = [apad[dy:dy + Hc, dx:dx + Wc, :].reshape(Hc * Wc, Cin)
            for dy, dx in _TAPS]
    tcat = jnp.concatenate(taps, axis=-1)                        # (Hc*Wc, 9*Cin)
    y = jnp.dot(tcat, w_ref[...], preferred_element_type=jnp.float32)
    return jnp.maximum(y + b_ref[...], 0.0)


def fused_conv_kernel(p1_ref, w1_ref, b1_ref, w2_ref, b2_ref, w3_ref, b3_ref,
                      feat_ref, s3, a1p, a2p, s_t):
    """conv1(+pool) -> conv2(+pool) -> conv3 -> (C,H,W) flatten, ONE image, in VMEM."""
    # conv1: im2col matmul (1024, 9) @ (9, 32) + bias + ReLU
    y1 = jnp.dot(p1_ref[0], w1_ref[...], preferred_element_type=jnp.float32)
    y1 = jnp.maximum(y1 + b1_ref[...], 0.0)                      # (1024, 32)

    # maxpool 2x2 -> (16, 16, 32), written into the padded VMEM activation
    _zero_border(a1p)
    a1p[1:17, 1:17, :] = _pool2x2(y1, s3, 32, 32)

    # conv2: single K=288 matmul from the padded VMEM tile
    y2 = _conv3x3(a1p, w2_ref, b2_ref, 16, 16)                   # (256, 32)

    # maxpool 2x2 -> (8, 8, 32)
    _zero_border(a2p)
    a2p[1:9, 1:9, :] = _pool2x2(y2, s3, 16, 16)

    # conv3 (no pool)
    y3 = _conv3x3(a2p, w3_ref, b3_ref, 8, 8)                     # (64, 32)

    # In-kernel (C, H, W) flatten -> lane-dense (16, 128) output block:
    #   flat index f = c*64 + h*8 + w; row r = c//2, lane = (c%2)*64 + (h*8+w).
    s_t[...] = y3.T                                              # (32, 64) channel-major
    even = s_t[pl.ds(0, 16, stride=2), :]                        # channels 0,2,...,30
    odd = s_t[pl.ds(1, 16, stride=2), :]                         # channels 1,3,...,31
    feat_ref[0] = jnp.concatenate([even, odd], axis=1).astype(feat_ref.dtype)


def mlp_kernel(x_ref, w1_ref, b1_ref, w2_ref, b2_ref, o_ref):
    """Linear(2048->512) + ReLU + Linear(512->512), bf16 weights, f32 accumulate."""
    h = jnp.dot(x_ref[...], w1_ref[...], preferred_element_type=jnp.float32)
    h = jnp.maximum(h + b1_ref[...], 0.0)
    y = jnp.dot(h.astype(jnp.bfloat16), w2_ref[...],
                preferred_element_type=jnp.float32)
    o_ref[...] = (y + b2_ref[...]).astype(o_ref.dtype)


# ------------------------------ JAX wrappers ------------------------------- #

def conv_stack(x_nhwc, p):
    """Fused conv1+pool, conv2+pool, conv3 per image.  Returns (N, 16, 128) bf16
    whose row-major flatten is the PyTorch (C, H, W) feature order."""
    N, H, W, _ = x_nhwc.shape                                    # (N, 32, 32, 1)
    # conv1 im2col in XLA (tiny, bf16: 18 KB/img); tap-major, matches w.reshape(9, 32).
    xp = jnp.pad(x_nhwc, ((0, 0), (1, 1), (1, 1), (0, 0)))
    taps = [xp[:, dy:dy + H, dx:dx + W, :] for dy, dx in _TAPS]
    patches1 = jnp.concatenate(taps, axis=-1).reshape(N, H * W, 9).astype(jnp.bfloat16)

    w1 = p["w_c1"].reshape(9, 32).astype(jnp.bfloat16)
    w2 = p["w_c2"].reshape(9 * 32, 32)                           # tap-major (288, 32)
    w3 = p["w_c3"].reshape(9 * 32, 32)
    b = lambda v: v.reshape(1, 32)

    flops = 2 * N * (H * W * 9 * 32 + 256 * 288 * 32 + 64 * 288 * 32)
    bytes_accessed = (N * H * W * 9 * 2 + 9 * 32 * 2 + 2 * 288 * 32 * 4
                      + 3 * 32 * 4 + N * 2048 * 2)

    return pl.pallas_call(
        fused_conv_kernel,
        out_shape=jax.ShapeDtypeStruct((N, 16, 128), jnp.bfloat16),
        grid_spec=pltpu.PrefetchScalarGridSpec(
            num_scalar_prefetch=0,
            grid=(N,),
            in_specs=[
                pl.BlockSpec((1, H * W, 9), lambda n: (n, 0, 0)),   # conv1 patches (bf16)
                pl.BlockSpec((9, 32), lambda n: (0, 0)),            # w1 (resident)
                pl.BlockSpec((1, 32), lambda n: (0, 0)),            # b1
                pl.BlockSpec((288, 32), lambda n: (0, 0)),           # w2 tap-major
                pl.BlockSpec((1, 32), lambda n: (0, 0)),            # b2
                pl.BlockSpec((288, 32), lambda n: (0, 0)),           # w3 tap-major
                pl.BlockSpec((1, 32), lambda n: (0, 0)),            # b3
            ],
            out_specs=pl.BlockSpec((1, 16, 128), lambda n: (n, 0, 0)),
            scratch_shapes=[
                pltpu.VMEM((32, 32, 32), jnp.float32),   # pooling staging (both pools)
                pltpu.VMEM((18, 18, 32), jnp.float32),   # padded activation for conv2
                pltpu.VMEM((10, 10, 32), jnp.float32),   # padded activation for conv3
                pltpu.VMEM((32, 64), jnp.float32),       # channel-major conv3 output
            ],
        ),
        compiler_params=pltpu.CompilerParams(dimension_semantics=("parallel",)),
        cost_estimate=pl.CostEstimate(flops=flops, transcendentals=0,
                                      bytes_accessed=bytes_accessed),
    )(patches1, w1, b(p["b_c1"]), w2, b(p["b_c2"]), w3, b(p["b_c3"]))


def mlp_head(x, w1, b1, w2, b2):
    # Whole batch in one matmul pair; weights bf16, accumulation f32.
    N, Din = x.shape
    Dh = w1.shape[1]
    Do = w2.shape[1]
    flops = 2 * N * (Din * Dh + Dh * Do)
    bytes_accessed = (N * Din * 2 + Din * Dh * 2 + Dh * Do * 2
                      + (Dh + Do) * 4 + N * Do * 4)
    return pl.pallas_call(
        mlp_kernel,
        out_shape=jax.ShapeDtypeStruct((N, Do), jnp.float32),
        grid_spec=pltpu.PrefetchScalarGridSpec(
            num_scalar_prefetch=0,
            grid=(1,),
            in_specs=[
                pl.BlockSpec((N, Din), lambda i: (0, 0)),
                pl.BlockSpec((Din, Dh), lambda i: (0, 0)),
                pl.BlockSpec((1, Dh), lambda i: (0, 0)),
                pl.BlockSpec((Dh, Do), lambda i: (0, 0)),
                pl.BlockSpec((1, Do), lambda i: (0, 0)),
            ],
            out_specs=pl.BlockSpec((N, Do), lambda i: (0, 0)),
        ),
        compiler_params=pltpu.CompilerParams(dimension_semantics=("arbitrary",)),
        cost_estimate=pl.CostEstimate(flops=flops, transcendentals=0,
                                      bytes_accessed=bytes_accessed),
    )(x, w1, b1.reshape(1, Dh), w2, b2.reshape(1, Do))


def cnn_forward(x_nchw, p):
    """Forward pass matching CNN.forward: returns (output, flattened_features)."""
    N = x_nchw.shape[0]
    x = jnp.transpose(x_nchw, (0, 2, 3, 1))                   # NCHW -> NHWC
    # (N, 16, 128) bf16 -> free reshape to (N, 2048) in PyTorch (C,H,W) order.
    feats = conv_stack(x, p).reshape(N, 32 * 8 * 8)
    out = mlp_head(feats, p["w_f1"], p["b_f1"], p["w_f2"], p["b_f2"])
    return out, feats.astype(jnp.float32)


# --------------------------- params & reference ---------------------------- #

def init_params(key):
    ks = jax.random.split(key, 8)
    w = lambda k, s, sc, dt=jnp.float32: (sc * jax.random.normal(k, s)).astype(dt)
    return dict(
        w_c1=w(ks[0], (3, 3, 1, 32), 0.3),   b_c1=w(ks[1], (32,), 0.1),
        w_c2=w(ks[2], (3, 3, 32, 32), 0.05), b_c2=w(ks[3], (32,), 0.1),
        w_c3=w(ks[4], (3, 3, 32, 32), 0.05), b_c3=w(ks[5], (32,), 0.1),
        # MLP weights dominate HBM bytes -> keep them in bf16 (f32 accumulate in-kernel).
        w_f1=w(ks[6], (2048, 512), 0.02, jnp.bfloat16),
        b_f1=jnp.zeros((512,), jnp.float32),
        w_f2=w(ks[7], (512, 512), 0.03, jnp.bfloat16),
        b_f2=jnp.zeros((512,), jnp.float32),
    )


def ref_forward(x_nchw, p):
    """Pure-JAX reference for correctness checking."""
    x = jnp.transpose(x_nchw, (0, 2, 3, 1))

    def conv(x, w, b):
        y = jax.lax.conv_general_dilated(
            x, w, window_strides=(1, 1), padding="SAME",
            dimension_numbers=("NHWC", "HWIO", "NHWC"))
        return jax.nn.relu(y + b)

    def pool(x):
        return jax.lax.reduce_window(
            x, -jnp.inf, jax.lax.max, (1, 2, 2, 1), (1, 2, 2, 1), "VALID")

    x = pool(conv(x, p["w_c1"], p["b_c1"]))
    x = pool(conv(x, p["w_c2"], p["b_c2"]))
    x = conv(x, p["w_c3"], p["b_c3"])
    feats = jnp.transpose(x, (0, 3, 1, 2)).reshape(x.shape[0], -1)
    h = jax.nn.relu(feats @ p["w_f1"].astype(jnp.float32) + p["b_f1"])
    out = h @ p["w_f2"].astype(jnp.float32) + p["b_f2"]
    return out, feats


# ---------------------------------- main ----------------------------------- #

if __name__ == "__main__":
    key = jax.random.PRNGKey(0)
    k_x, k_p = jax.random.split(key)
    x = jax.random.normal(k_x, (2, 1, 32, 32), dtype=jnp.float32)  # NCHW like PyTorch
    params = init_params(k_p)

    out, feats = jax.jit(cnn_forward)(x, params)
    jax.block_until_ready((out, feats))

    assert out.shape == (2, 32 * 4 * 4), out.shape       # (N, 512)
    assert feats.shape == (2, 32 * 8 * 8), feats.shape   # (N, 2048)

    out_ref, feats_ref = jax.jit(ref_forward)(x, params)
    jax.block_until_ready((out_ref, feats_ref))
    np.testing.assert_allclose(np.asarray(feats), np.asarray(feats_ref),
                               rtol=5e-2, atol=5e-2)
    np.testing.assert_allclose(np.asarray(out), np.asarray(out_ref),
                               rtol=5e-2, atol=5e-2)

    print("KERNEL_OK")
</pallas_src>

<mosaic_0001>
module attributes {stable_mosaic.version = 11 : i64} {
  func.func @mlp_kernel(%arg0: i32, %arg1: memref<2x2048xbf16, #tpu.memory_space<vmem>>, %arg2: memref<2048x512xbf16, #tpu.memory_space<vmem>>, %arg3: memref<1x512xf32, #tpu.memory_space<vmem>>, %arg4: memref<512x512xbf16, #tpu.memory_space<vmem>>, %arg5: memref<1x512xf32, #tpu.memory_space<vmem>>, %arg6: memref<2x512xf32, #tpu.memory_space<vmem>>) attributes {dimension_semantics = [#tpu.dimension_semantics<arbitrary>], iteration_bounds = array<i64: 1>, scalar_prefetch = 0 : i64, scratch_operands = 0 : i64, tpu.core_type = #tpu.core_type<tc>, window_params = [{pipeline_mode = #tpu.pipeline_mode<synchronous>, transform_indices = @transform_0, window_bounds = array<i64: 2, 2048>}, {pipeline_mode = #tpu.pipeline_mode<synchronous>, transform_indices = @transform_1, window_bounds = array<i64: 2048, 512>}, {pipeline_mode = #tpu.pipeline_mode<synchronous>, transform_indices = @transform_2, window_bounds = array<i64: 1, 512>}, {pipeline_mode = #tpu.pipeline_mode<synchronous>, transform_indices = @transform_3, window_bounds = array<i64: 512, 512>}, {pipeline_mode = #tpu.pipeline_mode<synchronous>, transform_indices = @transform_4, window_bounds = array<i64: 1, 512>}, {pipeline_mode = #tpu.pipeline_mode<synchronous>, transform_indices = @transform_5, window_bounds = array<i64: 2, 512>}]} {
    %c0 = arith.constant 0 : index
    %c0_0 = arith.constant 0 : index
    %0 = vector.load %arg1[%c0, %c0_0] : memref<2x2048xbf16, #tpu.memory_space<vmem>>, vector<2x2048xbf16>
    %c0_1 = arith.constant 0 : index
    %c0_2 = arith.constant 0 : index
    %1 = vector.load %arg2[%c0_1, %c0_2] : memref<2048x512xbf16, #tpu.memory_space<vmem>>, vector<2048x512xbf16>
    %cst = arith.constant dense<0.000000e+00> : vector<2x512xf32>
    %2 = tpu.matmul %0, %1, %cst {dimension_numbers = #tpu.dot_dimension_numbers<[1], [0], [0], [1], [0, 0, 1, 1], [], []>} : vector<2x2048xbf16>, vector<2048x512xbf16>, vector<2x512xf32> -> vector<2x512xf32>
    %c0_3 = arith.constant 0 : index
    %c0_4 = arith.constant 0 : index
    %3 = vector.load %arg3[%c0_3, %c0_4] : memref<1x512xf32, #tpu.memory_space<vmem>>, vector<1x512xf32>
    %4 = vector.broadcast %3 : vector<1x512xf32> to vector<2x512xf32>
    %5 = arith.addf %2, %4 : vector<2x512xf32>
    %cst_5 = arith.constant 0.000000e+00 : f32
    %6 = vector.broadcast %cst_5 : f32 to vector<2x512xf32>
    %7 = arith.maximumf %5, %6 : vector<2x512xf32>
    %8 = arith.truncf %7 : vector<2x512xf32> to vector<2x512xbf16>
    %c0_6 = arith.constant 0 : index
    %c0_7 = arith.constant 0 : index
    %9 = vector.load %arg4[%c0_6, %c0_7] : memref<512x512xbf16, #tpu.memory_space<vmem>>, vector<512x512xbf16>
    %cst_8 = arith.constant dense<0.000000e+00> : vector<2x512xf32>
    %10 = tpu.matmul %8, %9, %cst_8 {dimension_numbers = #tpu.dot_dimension_numbers<[1], [0], [0], [1], [0, 0, 1, 1], [], []>} : vector<2x512xbf16>, vector<512x512xbf16>, vector<2x512xf32> -> vector<2x512xf32>
    %c0_9 = arith.constant 0 : index
    %c0_10 = arith.constant 0 : index
    %11 = vector.load %arg5[%c0_9, %c0_10] : memref<1x512xf32, #tpu.memory_space<vmem>>, vector<1x512xf32>
    %12 = vector.broadcast %11 : vector<1x512xf32> to vector<2x512xf32>
    %13 = arith.addf %10, %12 : vector<2x512xf32>
    %c0_11 = arith.constant 0 : index
    %c0_12 = arith.constant 0 : index
    %14 = vector.load %arg6[%c0_11, %c0_12] : memref<2x512xf32, #tpu.memory_space<vmem>>, vector<2x512xf32>
    tpu.vector_store %arg6[%c0_11, %c0_12], %13 {strides = array<i32>} : memref<2x512xf32, #tpu.memory_space<vmem>>, vector<2x512xf32>,
    return
  }
  func.func @transform_0(%arg0: i32) -> (i32, i32) {
    %c0_i32 = arith.constant 0 : i32
    %c0_i32_0 = arith.constant 0 : i32
    %c0_i32_1 = arith.constant 0 : i32
    return %c0_i32, %c0_i32_0 : i32, i32
  }
  func.func @transform_1(%arg0: i32) -> (i32, i32) {
    %c0_i32 = arith.constant 0 : i32
    %c0_i32_0 = arith.constant 0 : i32
    %c0_i32_1 = arith.constant 0 : i32
    return %c0_i32, %c0_i32_0 : i32, i32
  }
  func.func @transform_2(%arg0: i32) -> (i32, i32) {
    %c0_i32 = arith.constant 0 : i32
    %c0_i32_0 = arith.constant 0 : i32
    %c0_i32_1 = arith.constant 0 : i32
    return %c0_i32, %c0_i32_0 : i32, i32
  }
  func.func @transform_3(%arg0: i32) -> (i32, i32) {
    %c0_i32 = arith.constant 0 : i32
    %c0_i32_0 = arith.constant 0 : i32
    %c0_i32_1 = arith.constant 0 : i32
    return %c0_i32, %c0_i32_0 : i32, i32
  }
  func.func @transform_4(%arg0: i32) -> (i32, i32) {
    %c0_i32 = arith.constant 0 : i32
    %c0_i32_0 = arith.constant 0 : i32
    %c0_i32_1 = arith.constant 0 : i32
    return %c0_i32, %c0_i32_0 : i32, i32
  }
  func.func @transform_5(%arg0: i32) -> (i32, i32) {
    %c0_i32 = arith.constant 0 : i32
    %c0_i32_0 = arith.constant 0 : i32
    %c0_i32_1 = arith.constant 0 : i32
    return %c0_i32, %c0_i32_0 : i32, i32
  }
}

module attributes {stable_mosaic.version = 11 : i64} {
  func.func @fused_conv_kernel(%arg0: i32, %arg1: memref<1x1024x9xbf16, #tpu.memory_space<vmem>>, %arg2: memref<9x32xbf16, #tpu.memory_space<vmem>>, %arg3: memref<1x32xf32, #tpu.memory_space<vmem>>, %arg4: memref<288x32xf32, #tpu.memory_space<vmem>>, %arg5: memref<1x32xf32, #tpu.memory_space<vmem>>, %arg6: memref<288x32xf32, #tpu.memory_space<vmem>>, %arg7: memref<1x32xf32, #tpu.memory_space<vmem>>, %arg8: memref<1x16x128xbf16, #tpu.memory_space<vmem>>, %arg9: memref<32x32x32xf32, #tpu.memory_space<vmem>>, %arg10: memref<18x18x32xf32, #tpu.memory_space<vmem>>, %arg11: memref<10x10x32xf32, #tpu.memory_space<vmem>>, %arg12: memref<32x64xf32, #tpu.memory_space<vmem>>) attributes {dimension_semantics = [#tpu.dimension_semantics<parallel>], iteration_bounds = array<i64: 2>, scalar_prefetch = 0 : i64, scratch_operands = 4 : i64, tpu.core_type = #tpu.core_type<tc>, window_params = [{transform_indices = @transform_0, window_bounds = array<i64: 1, 1024, 9>}, {pipeline_mode = #tpu.pipeline_mode<synchronous>, transform_indices = @transform_1, window_bounds = array<i64: 9, 32>}, {pipeline_mode = #tpu.pipeline_mode<synchronous>, transform_indices = @transform_2, window_bounds = array<i64: 1, 32>}, {pipeline_mode = #tpu.pipeline_mode<synchronous>, transform_indices = @transform_3, window_bounds = array<i64: 288, 32>}, {pipeline_mode = #tpu.pipeline_mode<synchronous>, transform_indices = @transform_4, window_bounds = array<i64: 1, 32>}, {pipeline_mode = #tpu.pipeline_mode<synchronous>, transform_indices = @transform_5, window_bounds = array<i64: 288, 32>}, {pipeline_mode = #tpu.pipeline_mode<synchronous>, transform_indices = @transform_6, window_bounds = array<i64: 1, 32>}, {transform_indices = @transform_7, window_bounds = array<i64: 1, 16, 128>}]} {
    %c0 = arith.constant 0 : index
    %c0_0 = arith.constant 0 : index
    %c0_1 = arith.constant 0 : index
    %0 = vector.load %arg1[%c0, %c0_0, %c0_1] : memref<1x1024x9xbf16, #tpu.memory_space<vmem>>, vector<1x1024x9xbf16>
    %1 = vector.shape_cast %0 : vector<1x1024x9xbf16> to vector<1024x9xbf16>
    %c0_2 = arith.constant 0 : index
    %c0_3 = arith.constant 0 : index
    %2 = vector.load %arg2[%c0_2, %c0_3] : memref<9x32xbf16, #tpu.memory_space<vmem>>, vector<9x32xbf16>
    %cst = arith.constant dense<0.000000e+00> : vector<1024x32xf32>
    %3 = tpu.matmul %1, %2, %cst {dimension_numbers = #tpu.dot_dimension_numbers<[1], [0], [0], [1], [0, 0, 1, 1], [], []>} : vector<1024x9xbf16>, vector<9x32xbf16>, vector<1024x32xf32> -> vector<1024x32xf32>
    %c0_4 = arith.constant 0 : index
    %c0_5 = arith.constant 0 : index
    %4 = vector.load %arg3[%c0_4, %c0_5] : memref<1x32xf32, #tpu.memory_space<vmem>>, vector<1x32xf32>
    %5 = vector.broadcast %4 : vector<1x32xf32> to vector<1024x32xf32>
    %6 = arith.addf %3, %5 : vector<1024x32xf32>
    %cst_6 = arith.constant 0.000000e+00 : f32
    %7 = vector.broadcast %cst_6 : f32 to vector<1024x32xf32>
    %8 = arith.maximumf %6, %7 : vector<1024x32xf32>
    %cst_7 = arith.constant 0.000000e+00 : f32
    %9 = vector.broadcast %cst_7 : f32 to vector<1x18x32xf32>
    %cst_8 = arith.constant 0.000000e+00 : f32
    %10 = vector.broadcast %cst_8 : f32 to vector<18x1x32xf32>
    %c0_9 = arith.constant 0 : index
    %c0_10 = arith.constant 0 : index
    %c0_11 = arith.constant 0 : index
    %11 = vector.load %arg10[%c0_9, %c0_10, %c0_11] : memref<18x18x32xf32, #tpu.memory_space<vmem>>, vector<1x18x32xf32>
    tpu.vector_store %arg10[%c0_9, %c0_10, %c0_11], %9 {strides = array<i32>} : memref<18x18x32xf32, #tpu.memory_space<vmem>>, vector<1x18x32xf32>,
    %c17 = arith.constant 17 : index
    %c0_12 = arith.constant 0 : index
    %c0_13 = arith.constant 0 : index
    %12 = vector.load %arg10[%c17, %c0_12, %c0_13] : memref<18x18x32xf32, #tpu.memory_space<vmem>>, vector<1x18x32xf32>
    tpu.vector_store %arg10[%c17, %c0_12, %c0_13], %9 {strides = array<i32>} : memref<18x18x32xf32, #tpu.memory_space<vmem>>, vector<1x18x32xf32>,
    %c0_14 = arith.constant 0 : index
    %c0_15 = arith.constant 0 : index
    %c0_16 = arith.constant 0 : index
    %13 = vector.load %arg10[%c0_14, %c0_15, %c0_16] : memref<18x18x32xf32, #tpu.memory_space<vmem>>, vector<18x1x32xf32>
    tpu.vector_store %arg10[%c0_14, %c0_15, %c0_16], %10 {strides = array<i32>} : memref<18x18x32xf32, #tpu.memory_space<vmem>>, vector<18x1x32xf32>,
    %c0_17 = arith.constant 0 : index
    %c17_18 = arith.constant 17 : index
    %c0_19 = arith.constant 0 : index
    %14 = vector.load %arg10[%c0_17, %c17_18, %c0_19] : memref<18x18x32xf32, #tpu.memory_space<vmem>>, vector<18x1x32xf32>
    tpu.vector_store %arg10[%c0_17, %c17_18, %c0_19], %10 {strides = array<i32>} : memref<18x18x32xf32, #tpu.memory_space<vmem>>, vector<18x1x32xf32>,
    %15 = vector.shape_cast %8 : vector<1024x32xf32> to vector<32x32x32xf32>
    %c0_20 = arith.constant 0 : index
    %c0_21 = arith.constant 0 : index
    %c0_22 = arith.constant 0 : index
    %16 = vector.load %arg9[%c0_20, %c0_21, %c0_22] : memref<32x32x32xf32, #tpu.memory_space<vmem>>, vector<32x32x32xf32>
    tpu.vector_store %arg9[%c0_20, %c0_21, %c0_22], %15 {strides = array<i32>} : memref<32x32x32xf32, #tpu.memory_space<vmem>>, vector<32x32x32xf32>,
    %c0_23 = arith.constant 0 : index
    %c0_24 = arith.constant 0 : index
    %c0_25 = arith.constant 0 : index
    %17 = tpu.strided_load %arg9[%c0_23, %c0_24, %c0_25] {strides = array<i32: 2, 1, 1>} : memref<32x32x32xf32, #tpu.memory_space<vmem>>, vector<16x32x32xf32>
    %c1 = arith.constant 1 : index
    %c0_26 = arith.constant 0 : index
    %c0_27 = arith.constant 0 : index
    %18 = tpu.strided_load %arg9[%c1, %c0_26, %c0_27] {strides = array<i32: 2, 1, 1>} : memref<32x32x32xf32, #tpu.memory_space<vmem>>, vector<16x32x32xf32>
    %19 = arith.maximumf %17, %18 : vector<16x32x32xf32>
    %c0_28 = arith.constant 0 : index
    %c0_29 = arith.constant 0 : index
    %c0_30 = arith.constant 0 : index
    %20 = vector.load %arg9[%c0_28, %c0_29, %c0_30] : memref<32x32x32xf32, #tpu.memory_space<vmem>>, vector<16x32x32xf32>
    tpu.vector_store %arg9[%c0_28, %c0_29, %c0_30], %19 {strides = array<i32>} : memref<32x32x32xf32, #tpu.memory_space<vmem>>, vector<16x32x32xf32>,
    %c0_31 = arith.constant 0 : index
    %c0_32 = arith.constant 0 : index
    %c0_33 = arith.constant 0 : index
    %21 = tpu.strided_load %arg9[%c0_31, %c0_32, %c0_33] {strides = array<i32: 1, 2, 1>} : memref<32x32x32xf32, #tpu.memory_space<vmem>>, vector<16x16x32xf32>
    %c0_34 = arith.constant 0 : index
    %c1_35 = arith.constant 1 : index
    %c0_36 = arith.constant 0 : index
    %22 = tpu.strided_load %arg9[%c0_34, %c1_35, %c0_36] {strides = array<i32: 1, 2, 1>} : memref<32x32x32xf32, #tpu.memory_space<vmem>>, vector<16x16x32xf32>
    %23 = arith.maximumf %21, %22 : vector<16x16x32xf32>
    %c1_37 = arith.constant 1 : index
    %c1_38 = arith.constant 1 : index
    %c0_39 = arith.constant 0 : index
    %24 = vector.load %arg10[%c1_37, %c1_38, %c0_39] : memref<18x18x32xf32, #tpu.memory_space<vmem>>, vector<16x16x32xf32>
    tpu.vector_store %arg10[%c1_37, %c1_38, %c0_39], %23 {strides = array<i32>} : memref<18x18x32xf32, #tpu.memory_space<vmem>>, vector<16x16x32xf32>,
    %c0_40 = arith.constant 0 : index
    %c0_41 = arith.constant 0 : index
    %c0_42 = arith.constant 0 : index
    %25 = vector.load %arg10[%c0_40, %c0_41, %c0_42] : memref<18x18x32xf32, #tpu.memory_space<vmem>>, vector<16x16x32xf32>
    %26 = vector.shape_cast %25 : vector<16x16x32xf32> to vector<256x32xf32>
    %c0_43 = arith.constant 0 : index
    %c1_44 = arith.constant 1 : index
    %c0_45 = arith.constant 0 : index
    %27 = vector.load %arg10[%c0_43, %c1_44, %c0_45] : memref<18x18x32xf32, #tpu.memory_space<vmem>>, vector<16x16x32xf32>
    %28 = vector.shape_cast %27 : vector<16x16x32xf32> to vector<256x32xf32>
    %c0_46 = arith.constant 0 : index
    %c2 = arith.constant 2 : index
    %c0_47 = arith.constant 0 : index
    %29 = vector.load %arg10[%c0_46, %c2, %c0_47] : memref<18x18x32xf32, #tpu.memory_space<vmem>>, vector<16x16x32xf32>
    %30 = vector.shape_cast %29 : vector<16x16x32xf32> to vector<256x32xf32>
    %c1_48 = arith.constant 1 : index
    %c0_49 = arith.constant 0 : index
    %c0_50 = arith.constant 0 : index
    %31 = vector.load %arg10[%c1_48, %c0_49, %c0_50] : memref<18x18x32xf32, #tpu.memory_space<vmem>>, vector<16x16x32xf32>
    %32 = vector.shape_cast %31 : vector<16x16x32xf32> to vector<256x32xf32>
    %c1_51 = arith.constant 1 : index
    %c1_52 = arith.constant 1 : index
    %c0_53 = arith.constant 0 : index
    %33 = vector.load %arg10[%c1_51, %c1_52, %c0_53] : memref<18x18x32xf32, #tpu.memory_space<vmem>>, vector<16x16x32xf32>
    %34 = vector.shape_cast %33 : vector<16x16x32xf32> to vector<256x32xf32>
    %c1_54 = arith.constant 1 : index
    %c2_55 = arith.constant 2 : index
    %c0_56 = arith.constant 0 : index
    %35 = vector.load %arg10[%c1_54, %c2_55, %c0_56] : memref<18x18x32xf32, #tpu.memory_space<vmem>>, vector<16x16x32xf32>
    %36 = vector.shape_cast %35 : vector<16x16x32xf32> to vector<256x32xf32>
    %c2_57 = arith.constant 2 : index
    %c0_58 = arith.constant 0 : index
    %c0_59 = arith.constant 0 : index
    %37 = vector.load %arg10[%c2_57, %c0_58, %c0_59] : memref<18x18x32xf32, #tpu.memory_space<vmem>>, vector<16x16x32xf32>
    %38 = vector.shape_cast %37 : vector<16x16x32xf32> to vector<256x32xf32>
    %c2_60 = arith.constant 2 : index
    %c1_61 = arith.constant 1 : index
    %c0_62 = arith.constant 0 : index
    %39 = vector.load %arg10[%c2_60, %c1_61, %c0_62] : memref<18x18x32xf32, #tpu.memory_space<vmem>>, vector<16x16x32xf32>
    %40 = vector.shape_cast %39 : vector<16x16x32xf32> to vector<256x32xf32>
    %c2_63 = arith.constant 2 : index
    %c2_64 = arith.constant 2 : index
    %c0_65 = arith.constant 0 : index
    %41 = vector.load %arg10[%c2_63, %c2_64, %c0_65] : memref<18x18x32xf32, #tpu.memory_space<vmem>>, vector<16x16x32xf32>
    %42 = vector.shape_cast %41 : vector<16x16x32xf32> to vector<256x32xf32>
    %43 = tpu.concatenate %26, %28, %30, %32, %34, %36, %38, %40, %42 in 1 : vector<256x32xf32>, vector<256x32xf32>, vector<256x32xf32>, vector<256x32xf32>, vector<256x32xf32>, vector<256x32xf32>, vector<256x32xf32>, vector<256x32xf32>, vector<256x32xf32> -> vector<256x288xf32>
    %c0_66 = arith.constant 0 : index
    %c0_67 = arith.constant 0 : index
    %44 = vector.load %arg4[%c0_66, %c0_67] : memref<288x32xf32, #tpu.memory_space<vmem>>, vector<288x32xf32>
    %cst_68 = arith.constant dense<0.000000e+00> : vector<256x32xf32>
    %45 = tpu.matmul %43, %44, %cst_68 {dimension_numbers = #tpu.dot_dimension_numbers<[1], [0], [0], [1], [0, 0, 1, 1], [], []>} : vector<256x288xf32>, vector<288x32xf32>, vector<256x32xf32> -> vector<256x32xf32>
    %c0_69 = arith.constant 0 : index
    %c0_70 = arith.constant 0 : index
    %46 = vector.load %arg5[%c0_69, %c0_70] : memref<1x32xf32, #tpu.memory_space<vmem>>, vector<1x32xf32>
    %47 = vector.broadcast %46 : vector<1x32xf32> to vector<256x32xf32>
    %48 = arith.addf %45, %47 : vector<256x32xf32>
    %cst_71 = arith.constant 0.000000e+00 : f32
    %49 = vector.broadcast %cst_71 : f32 to vector<256x32xf32>
    %50 = arith.maximumf %48, %49 : vector<256x32xf32>
    %cst_72 = arith.constant 0.000000e+00 : f32
    %51 = vector.broadcast %cst_72 : f32 to vector<1x10x32xf32>
    %cst_73 = arith.constant 0.000000e+00 : f32
    %52 = vector.broadcast %cst_73 : f32 to vector<10x1x32xf32>
    %c0_74 = arith.constant 0 : index
    %c0_75 = arith.constant 0 : index
    %c0_76 = arith.constant 0 : index
    %53 = vector.load %arg11[%c0_74, %c0_75, %c0_76] : memref<10x10x32xf32, #tpu.memory_space<vmem>>, vector<1x10x32xf32>
    tpu.vector_store %arg11[%c0_74, %c0_75, %c0_76], %51 {strides = array<i32>} : memref<10x10x32xf32, #tpu.memory_space<vmem>>, vector<1x10x32xf32>,
    %c9 = arith.constant 9 : index
    %c0_77 = arith.constant 0 : index
    %c0_78 = arith.constant 0 : index
    %54 = vector.load %arg11[%c9, %c0_77, %c0_78] : memref<10x10x32xf32, #tpu.memory_space<vmem>>, vector<1x10x32xf32>
    tpu.vector_store %arg11[%c9, %c0_77, %c0_78], %51 {strides = array<i32>} : memref<10x10x32xf32, #tpu.memory_space<vmem>>, vector<1x10x32xf32>,
    %c0_79 = arith.constant 0 : index
    %c0_80 = arith.constant 0 : index
    %c0_81 = arith.constant 0 : index
    %55 = vector.load %arg11[%c0_79, %c0_80, %c0_81] : memref<10x10x32xf32, #tpu.memory_space<vmem>>, vector<10x1x32xf32>
    tpu.vector_store %arg11[%c0_79, %c0_80, %c0_81], %52 {strides = array<i32>} : memref<10x10x32xf32, #tpu.memory_space<vmem>>, vector<10x1x32xf32>,
    %c0_82 = arith.constant 0 : index
    %c9_83 = arith.constant 9 : index
    %c0_84 = arith.constant 0 : index
    %56 = vector.load %arg11[%c0_82, %c9_83, %c0_84] : memref<10x10x32xf32, #tpu.memory_space<vmem>>, vector<10x1x32xf32>
    tpu.vector_store %arg11[%c0_82, %c9_83, %c0_84], %52 {strides = array<i32>} : memref<10x10x32xf32, #tpu.memory_space<vmem>>, vector<10x1x32xf32>,
    %57 = vector.shape_cast %50 : vector<256x32xf32> to vector<16x16x32xf32>
    %c0_85 = arith.constant 0 : index
    %c0_86 = arith.constant 0 : index
    %c0_87 = arith.constant 0 : index
    %58 = vector.load %arg9[%c0_85, %c0_86, %c0_87] : memref<32x32x32xf32, #tpu.memory_space<vmem>>, vector<16x16x32xf32>
    tpu.vector_store %arg9[%c0_85, %c0_86, %c0_87], %57 {strides = array<i32>} : memref<32x32x32xf32, #tpu.memory_space<vmem>>, vector<16x16x32xf32>,
    %c0_88 = arith.constant 0 : index
    %c0_89 = arith.constant 0 : index
    %c0_90 = arith.constant 0 : index
    %59 = tpu.strided_load %arg9[%c0_88, %c0_89, %c0_90] {strides = array<i32: 2, 1, 1>} : memref<32x32x32xf32, #tpu.memory_space<vmem>>, vector<8x16x32xf32>
    %c1_91 = arith.constant 1 : index
    %c0_92 = arith.constant 0 : index
    %c0_93 = arith.constant 0 : index
    %60 = tpu.strided_load %arg9[%c1_91, %c0_92, %c0_93] {strides = array<i32: 2, 1, 1>} : memref<32x32x32xf32, #tpu.memory_space<vmem>>, vector<8x16x32xf32>
    %61 = arith.maximumf %59, %60 : vector<8x16x32xf32>
    %c0_94 = arith.constant 0 : index
    %c0_95 = arith.constant 0 : index
    %c0_96 = arith.constant 0 : index
    %62 = vector.load %arg9[%c0_94, %c0_95, %c0_96] : memref<32x32x32xf32, #tpu.memory_space<vmem>>, vector<8x16x32xf32>
    tpu.vector_store %arg9[%c0_94, %c0_95, %c0_96], %61 {strides = array<i32>} : memref<32x32x32xf32, #tpu.memory_space<vmem>>, vector<8x16x32xf32>,
    %c0_97 = arith.constant 0 : index
    %c0_98 = arith.constant 0 : index
    %c0_99 = arith.constant 0 : index
    %63 = tpu.strided_load %arg9[%c0_97, %c0_98, %c0_99] {strides = array<i32: 1, 2, 1>} : memref<32x32x32xf32, #tpu.memory_space<vmem>>, vector<8x8x32xf32>
    %c0_100 = arith.constant 0 : index
    %c1_101 = arith.constant 1 : index
    %c0_102 = arith.constant 0 : index
    %64 = tpu.strided_load %arg9[%c0_100, %c1_101, %c0_102] {strides = array<i32: 1, 2, 1>} : memref<32x32x32xf32, #tpu.memory_space<vmem>>, vector<8x8x32xf32>
    %65 = arith.maximumf %63, %64 : vector<8x8x32xf32>
    %c1_103 = arith.constant 1 : index
    %c1_104 = arith.constant 1 : index
    %c0_105 = arith.constant 0 : index
    %66 = vector.load %arg11[%c1_103, %c1_104, %c0_105] : memref<10x10x32xf32, #tpu.memory_space<vmem>>, vector<8x8x32xf32>
    tpu.vector_store %arg11[%c1_103, %c1_104, %c0_105], %65 {strides = array<i32>} : memref<10x10x32xf32, #tpu.memory_space<vmem>>, vector<8x8x32xf32>,
    %c0_106 = arith.constant 0 : index
    %c0_107 = arith.constant 0 : index
    %c0_108 = arith.constant 0 : index
    %67 = vector.load %arg11[%c0_106, %c0_107, %c0_108] : memref<10x10x32xf32, #tpu.memory_space<vmem>>, vector<8x8x32xf32>
    %68 = vector.shape_cast %67 : vector<8x8x32xf32> to vector<64x32xf32>
    %c0_109 = arith.constant 0 : index
    %c1_110 = arith.constant 1 : index
    %c0_111 = arith.constant 0 : index
    %69 = vector.load %arg11[%c0_109, %c1_110, %c0_111] : memref<10x10x32xf32, #tpu.memory_space<vmem>>, vector<8x8x32xf32>
    %70 = vector.shape_cast %69 : vector<8x8x32xf32> to vector<64x32xf32>
    %c0_112 = arith.constant 0 : index
    %c2_113 = arith.constant 2 : index
    %c0_114 = arith.constant 0 : index
    %71 = vector.load %arg11[%c0_112, %c2_113, %c0_114] : memref<10x10x32xf32, #tpu.memory_space<vmem>>, vector<8x8x32xf32>
    %72 = vector.shape_cast %71 : vector<8x8x32xf32> to vector<64x32xf32>
    %c1_115 = arith.constant 1 : index
    %c0_116 = arith.constant 0 : index
    %c0_117 = arith.constant 0 : index
    %73 = vector.load %arg11[%c1_115, %c0_116, %c0_117] : memref<10x10x32xf32, #tpu.memory_space<vmem>>, vector<8x8x32xf32>
    %74 = vector.shape_cast %73 : vector<8x8x32xf32> to vector<64x32xf32>
    %c1_118 = arith.constant 1 : index
    %c1_119 = arith.constant 1 : index
    %c0_120 = arith.constant 0 : index
    %75 = vector.load %arg11[%c1_118, %c1_119, %c0_120] : memref<10x10x32xf32, #tpu.memory_space<vmem>>, vector<8x8x32xf32>
    %76 = vector.shape_cast %75 : vector<8x8x32xf32> to vector<64x32xf32>
    %c1_121 = arith.constant 1 : index
    %c2_122 = arith.constant 2 : index
    %c0_123 = arith.constant 0 : index
    %77 = vector.load %arg11[%c1_121, %c2_122, %c0_123] : memref<10x10x32xf32, #tpu.memory_space<vmem>>, vector<8x8x32xf32>
    %78 = vector.shape_cast %77 : vector<8x8x32xf32> to vector<64x32xf32>
    %c2_124 = arith.constant 2 : index
    %c0_125 = arith.constant 0 : index
    %c0_126 = arith.constant 0 : index
    %79 = vector.load %arg11[%c2_124, %c0_125, %c0_126] : memref<10x10x32xf32, #tpu.memory_space<vmem>>, vector<8x8x32xf32>
    %80 = vector.shape_cast %79 : vector<8x8x32xf32> to vector<64x32xf32>
    %c2_127 = arith.constant 2 : index
    %c1_128 = arith.constant 1 : index
    %c0_129 = arith.constant 0 : index
    %81 = vector.load %arg11[%c2_127, %c1_128, %c0_129] : memref<10x10x32xf32, #tpu.memory_space<vmem>>, vector<8x8x32xf32>
    %82 = vector.shape_cast %81 : vector<8x8x32xf32> to vector<64x32xf32>
    %c2_130 = arith.constant 2 : index
    %c2_131 = arith.constant 2 : index
    %c0_132 = arith.constant 0 : index
    %83 = vector.load %arg11[%c2_130, %c2_131, %c0_132] : memref<10x10x32xf32, #tpu.memory_space<vmem>>, vector<8x8x32xf32>
    %84 = vector.shape_cast %83 : vector<8x8x32xf32> to vector<64x32xf32>
    %85 = tpu.concatenate %68, %70, %72, %74, %76, %78, %80, %82, %84 in 1 : vector<64x32xf32>, vector<64x32xf32>, vector<64x32xf32>, vector<64x32xf32>, vector<64x32xf32>, vector<64x32xf32>, vector<64x32xf32>, vector<64x32xf32>, vector<64x32xf32> -> vector<64x288xf32>
    %c0_133 = arith.constant 0 : index
    %c0_134 = arith.constant 0 : index
    %86 = vector.load %arg6[%c0_133, %c0_134] : memref<288x32xf32, #tpu.memory_space<vmem>>, vector<288x32xf32>
    %cst_135 = arith.constant dense<0.000000e+00> : vector<64x32xf32>
    %87 = tpu.matmul %85, %86, %cst_135 {dimension_numbers = #tpu.dot_dimension_numbers<[1], [0], [0], [1], [0, 0, 1, 1], [], []>} : vector<64x288xf32>, vector<288x32xf32>, vector<64x32xf32> -> vector<64x32xf32>
    %c0_136 = arith.constant 0 : index
    %c0_137 = arith.constant 0 : index
    %88 = vector.load %arg7[%c0_136, %c0_137] : memref<1x32xf32, #tpu.memory_space<vmem>>, vector<1x32xf32>
    %89 = vector.broadcast %88 : vector<1x32xf32> to vector<64x32xf32>
    %90 = arith.addf %87, %89 : vector<64x32xf32>
    %cst_138 = arith.constant 0.000000e+00 : f32
    %91 = vector.broadcast %cst_138 : f32 to vector<64x32xf32>
    %92 = arith.maximumf %90, %91 : vector<64x32xf32>
    %93 = tpu.transpose %92, [1, 0] : vector<64x32xf32> -> vector<32x64xf32>
    %c0_139 = arith.constant 0 : index
    %c0_140 = arith.constant 0 : index
    %94 = vector.load %arg12[%c0_139, %c0_140] : memref<32x64xf32, #tpu.memory_space<vmem>>, vector<32x64xf32>
    tpu.vector_store %arg12[%c0_139, %c0_140], %93 {strides = array<i32>} : memref<32x64xf32, #tpu.memory_space<vmem>>, vector<32x64xf32>,
    %c0_141 = arith.constant 0 : index
    %c0_142 = arith.constant 0 : index
    %95 = tpu.strided_load %arg12[%c0_141, %c0_142] {strides = array<i32: 2, 1>} : memref<32x64xf32, #tpu.memory_space<vmem>>, vector<16x64xf32>
    %c1_143 = arith.constant 1 : index
    %c0_144 = arith.constant 0 : index
    %96 = tpu.strided_load %arg12[%c1_143, %c0_144] {strides = array<i32: 2, 1>} : memref<32x64xf32, #tpu.memory_space<vmem>>, vector<16x64xf32>
    %97 = tpu.concatenate %95, %96 in 1 : vector<16x64xf32>, vector<16x64xf32> -> vector<16x128xf32>
    %98 = arith.truncf %97 : vector<16x128xf32> to vector<16x128xbf16>
    %c0_145 = arith.constant 0 : index
    %c0_146 = arith.constant 0 : index
    %c0_147 = arith.constant 0 : index
    %99 = vector.load %arg8[%c0_145, %c0_146, %c0_147] : memref<1x16x128xbf16, #tpu.memory_space<vmem>>, vector<1x16x128xbf16>
    %100 = vector.shape_cast %99 : vector<1x16x128xbf16> to vector<16x128xbf16>
    %101 = vector.shape_cast %98 : vector<16x128xbf16> to vector<1x16x128xbf16>
    tpu.vector_store %arg8[%c0_145, %c0_146, %c0_147], %101 {strides = array<i32>} : memref<1x16x128xbf16, #tpu.memory_space<vmem>>, vector<1x16x128xbf16>,
    return
  }
  func.func @transform_0(%arg0: i32) -> (i32, i32, i32) {
    %c0_i32 = arith.constant 0 : i32
    %c0_i32_0 = arith.constant 0 : i32
    %c0_i32_1 = arith.constant 0 : i32
    return %arg0, %c0_i32, %c0_i32_0 : i32, i32, i32
  }
  func.func @transform_1(%arg0: i32) -> (i32, i32) {
    %c0_i32 = arith.constant 0 : i32
    %c0_i32_0 = arith.constant 0 : i32
    %c0_i32_1 = arith.constant 0 : i32
    return %c0_i32, %c0_i32_0 : i32, i32
  }
  func.func @transform_2(%arg0: i32) -> (i32, i32) {
    %c0_i32 = arith.constant 0 : i32
    %c0_i32_0 = arith.constant 0 : i32
    %c0_i32_1 = arith.constant 0 : i32
    return %c0_i32, %c0_i32_0 : i32, i32
  }
  func.func @transform_3(%arg0: i32) -> (i32, i32) {
    %c0_i32 = arith.constant 0 : i32
    %c0_i32_0 = arith.constant 0 : i32
    %c0_i32_1 = arith.constant 0 : i32
    return %c0_i32, %c0_i32_0 : i32, i32
  }
  func.func @transform_4(%arg0: i32) -> (i32, i32) {
    %c0_i32 = arith.constant 0 : i32
    %c0_i32_0 = arith.constant 0 : i32
    %c0_i32_1 = arith.constant 0 : i32
    return %c0_i32, %c0_i32_0 : i32, i32
  }
  func.func @transform_5(%arg0: i32) -> (i32, i32) {
    %c0_i32 = arith.constant 0 : i32
    %c0_i32_0 = arith.constant 0 : i32
    %c0_i32_1 = arith.constant 0 : i32
    return %c0_i32, %c0_i32_0 : i32, i32
  }
  func.func @transform_6(%arg0: i32) -> (i32, i32) {
    %c0_i32 = arith.constant 0 : i32
    %c0_i32_0 = arith.constant 0 : i32
    %c0_i32_1 = arith.constant 0 : i32
    return %c0_i32, %c0_i32_0 : i32, i32
  }
  func.func @transform_7(%arg0: i32) -> (i32, i32, i32) {
    %c0_i32 = arith.constant 0 : i32
    %c0_i32_0 = arith.constant 0 : i32
    %c0_i32_1 = arith.constant 0 : i32
    return %arg0, %c0_i32, %c0_i32_0 : i32, i32, i32
  }
}

</mosaic_0001>

<llo_original>
// kernel: cnn_forward.3
$region0: #{cnn_forward.3}
  #allocation0 [shape = 'u32[]', space=smem, size = 0x4, offset = 0x4, fixed_abs, tag = 'smem constant byte address 0x4 - core index']
  #allocation1 [shape = 'u32[144,128]{1,0:T(1,128)}', space=vmem, size = 0x12000, scoped, tag = 'internal scratch']
  %s0 = inlined_call_operand.vmem [shape: bf16[2,2048], index: 0, kind: input, shape index: {}]
  %s1 = inlined_call_operand.vmem [shape: bf16[2048,512], index: 1, kind: input, shape index: {}]
  %s2 = inlined_call_operand.vmem [shape: f32[1,512], index: 2, kind: input, shape index: {}]
  %s3 = inlined_call_operand.hbm [shape: bf16[512,512], index: 3, kind: input, shape index: {}]
  %s4 = inlined_call_operand.vmem [shape: f32[1,512], index: 4, kind: input, shape index: {}]
  %s5 = inlined_call_operand.hbm [shape: f32[2,512], index: 5, kind: output, shape index: {}]
  %s6 = sld [smem:[#allocation0]]
  $region34: #{cnn_forward.3} parent=0
    _
  %s8 = ssub.s32 1, %s6
  %s9 = scalar_select 0, %s8, %s6
  $region1: #{cnn_forward.3} parent=0
    #allocation2 [shape = 'u8[524288]{0}', space=vmem, size = 0x80000, scoped, tag = 'input window, operand 3, single buffered']
    #allocation3 [shape = 's32[1]{0}', space=sflag, size = 0x4, scoped, tag = 'scoped memory for cnn_forward.3']
    #allocation4 [shape = 's32[1]{0}', space=sflag, size = 0x4, scoped, tag = 'scoped memory for cnn_forward.3']
    #allocation5 [shape = 'u8[4096]{0}', space=vmem, size = 0x1000, scoped, tag = 'output window, operand 0, single buffered']
    %10 = vsyncpa [#allocation3], 0
    %11 = vsyncpa [#allocation4], 0
    // Predicated region
    $region2: #{cnn_forward.3} parent=1 // pred_check
      _
    $region3: #{cnn_forward.3} parent=1 // pred_check_branch
      %13 = sbr.rel (0) target = $region5
    $region4: #{cnn_forward.3} parent=1 // pred_region
      _
    $region5: #{cnn_forward.3} parent=1 // pred_fallthru
      _
    // Predicated region
    $region6: #{cnn_forward.3} parent=1 // pred_check
      _
    $region7: #{cnn_forward.3} parent=1 // pred_check_branch
      %15 = sbr.rel (0) target = $region9
    $region8: #{cnn_forward.3} parent=1 // pred_region
      _
    $region9: #{cnn_forward.3} parent=1 // pred_fallthru
      _
    // Predicated region
    $region10: #{cnn_forward.3} parent=1 // pred_check
      _
    $region11: #{cnn_forward.3} parent=1 // pred_check_branch
      %17 = sbr.rel (0) target = $region13
    $region12: #{cnn_forward.3} parent=1 // pred_region
      _
    $region13: #{cnn_forward.3} parent=1 // pred_fallthru
      _
    // Predicated region
    $region14: #{cnn_forward.3} parent=1 // pred_check
      _
    $region15: #{cnn_forward.3} parent=1 // pred_check_branch
      %19 = sbr.rel (0) target = $region17
    $region16: #{cnn_forward.3} parent=1 // pred_region
      %s21 = ssub.s32 16384, 16384
      %22 = vsyncadd [#allocation3], %s21
      %s23 = sshll.u32 [#allocation2], 4
      %s24 = int_to_ptr.vmem [resolvable:$true] %s23
      %29 = dma.hbm_to_vmem [thread:$0]  %s3, 16384, %s24, [#allocation3], 256, 256, 16
    $region17: #{cnn_forward.3} parent=1 // pred_fallthru
      _
    // Predicated region
    $region18: #{cnn_forward.3} parent=1 // pred_check
      _
    $region19: #{cnn_forward.3} parent=1 // pred_check_branch
      %31 = sbr.rel (0) target = $region21
    $region20: #{cnn_forward.3} parent=1 // pred_region
      _
    $region21: #{cnn_forward.3} parent=1 // pred_fallthru
      _
    // Predicated region
    $region22: #{cnn_forward.3} parent=1 // pred_check
      _
    $region23: #{cnn_forward.3} parent=1 // pred_check_branch
      %33 = sbr.rel (0) target = $region25
    $region24: #{cnn_forward.3} parent=1 // pred_region
      %34 = dma.done [#allocation3], 16384
    $region25: #{cnn_forward.3} parent=1 // pred_fallthru
      _
    %v35 = vld [vmem:[%s0] sm:$0xff]
    %v36 = vld [vmem:[%s0 + $0x8] sm:$0xff]
    %v37 = vld [vmem:[%s1] sm:$0xff]
    %v38 = vld [vmem:[%s1 + $0x8] sm:$0xff]
    %v39 = vld [vmem:[%s1 + $0x10] sm:$0xff]
    %v40 = vld [vmem:[%s1 + $0x18] sm:$0xff]
    %v41 = vld [vmem:[%s1 + $0x20] sm:$0xff]
    %v42 = vld [vmem:[%s1 + $0x28] sm:$0xff]
    %v43 = vld [vmem:[%s1 + $0x30] sm:$0xff]
    %v44 = vld [vmem:[%s1 + $0x38] sm:$0xff]
    %v45 = vld [vmem:[%s1 + $0x40] sm:$0xff]
    %v46 = vld [vmem:[%s1 + $0x48] sm:$0xff]
    %v47 = vld [vmem:[%s1 + $0x50] sm:$0xff]
    %v48 = vld [vmem:[%s1 + $0x58] sm:$0xff]
    %v49 = vld [vmem:[%s1 + $0x60] sm:$0xff]
    %v50 = vld [vmem:[%s1 + $0x68] sm:$0xff]
    %v51 = vld [vmem:[%s1 + $0x70] sm:$0xff]
    %v52 = vld [vmem:[%s1 + $0x78] sm:$0xff]
    %v53 = vld [vmem:[%s1 + $0x80] sm:$0xff]
    %v54 = vld [vmem:[%s1 + $0x88] sm:$0xff]
    %v55 = vld [vmem:[%s1 + $0x90] sm:$0xff]
    %v56 = vld [vmem:[%s1 + $0x98] sm:$0xff]
    %v57 = vld [vmem:[%s1 + $0xa0] sm:$0xff]
    %v58 = vld [vmem:[%s1 + $0xa8] sm:$0xff]
    %v59 = vld [vmem:[%s1 + $0xb0] sm:$0xff]
    %v60 = vld [vmem:[%s1 + $0xb8] sm:$0xff]
    %v61 = vld [vmem:[%s1 + $0xc0] sm:$0xff]
    %v62 = vld [vmem:[%s1 + $0xc8] sm:$0xff]
    %v63 = vld [vmem:[%s1 + $0xd0] sm:$0xff]
    %v64 = vld [vmem:[%s1 + $0xd8] sm:$0xff]
    %v65 = vld [vmem:[%s1 + $0xe0] sm:$0xff]
    %v66 = vld [vmem:[%s1 + $0xe8] sm:$0xff]
    %v67 = vld [vmem:[%s1 + $0xf0] sm:$0xff]
    %v68 = vld [vmem:[%s1 + $0xf8] sm:$0xff]
    %v69 = vld [vmem:[%s1 + $0x100] sm:$0xff]
    %v70 = vld [vmem:[%s1 + $0x108] sm:$0xff]
    %v71 = vld [vmem:[%s1 + $0x110] sm:$0xff]
    %v72 = vld [vmem:[%s1 + $0x118] sm:$0xff]
    %v73 = vld [vmem:[%s1 + $0x120] sm:$0xff]
    %v74 = vld [vmem:[%s1 + $0x128] sm:$0xff]
    %v75 = vld [vmem:[%s1 + $0x130] sm:$0xff]
    %v76 = vld [vmem:[%s1 + $0x138] sm:$0xff]
    %v77 = vld [vmem:[%s1 + $0x140] sm:$0xff]
    %v78 = vld [vmem:[%s1 + $0x148] sm:$0xff]
    %v79 = vld [vmem:[%s1 + $0x150] sm:$0xff]
    %v80 = vld [vmem:[%s1 + $0x158] sm:$0xff]
    %v81 = vld [vmem:[%s1 + $0x160] sm:$0xff]
    %v82 = vld [vmem:[%s1 + $0x168] sm:$0xff]
    %v83 = vld [vmem:[%s1 + $0x170] sm:$0xff]
    %v84 = vld [vmem:[%s1 + $0x178] sm:$0xff]
    %v85 = vld [vmem:[%s1 + $0x180] sm:$0xff]
    %v86 = vld [vmem:[%s1 + $0x188] sm:$0xff]
    %v87 = vld [vmem:[%s1 + $0x190] sm:$0xff]
    %v88 = vld [vmem:[%s1 + $0x198] sm:$0xff]
    %v89 = vld [vmem:[%s1 + $0x1a0] sm:$0xff]
    %v90 = vld [vmem:[%s1 + $0x1a8] sm:$0xff]
    %v91 = vld [vmem:[%s1 + $0x1b0] sm:$0xff]
    %v92 = vld [vmem:[%s1 + $0x1b8] sm:$0xff]
    %v93 = vld [vmem:[%s1 + $0x1c0] sm:$0xff]
    %v94 = vld [vmem:[%s1 + $0x1c8] sm:$0xff]
    %v95 = vld [vmem:[%s1 + $0x1d0] sm:$0xff]
    %v96 = vld [vmem:[%s1 + $0x1d8] sm:$0xff]
    %v97 = vld [vmem:[%s1 + $0x1e0] sm:$0xff]
    %v98 = vld [vmem:[%s1 + $0x1e8] sm:$0xff]
    %v99 = vld [vmem:[%s1 + $0x1f0] sm:$0xff]
    %v100 = vld [vmem:[%s1 + $0x1f8] sm:$0xff]
    %v101 = vld [vmem:[%s1 + $0x200] sm:$0xff]
    %v102 = vld [vmem:[%s1 + $0x208] sm:$0xff]
    %v103 = vld [vmem:[%s1 + $0x210] sm:$0xff]
    %v104 = vld [vmem:[%s1 + $0x218] sm:$0xff]
    %v105 = vld [vmem:[%s1 + $0x220] sm:$0xff]
    %v106 = vld [vmem:[%s1 + $0x228] sm:$0xff]
    %v107 = vld [vmem:[%s1 + $0x230] sm:$0xff]
    %v108 = vld [vmem:[%s1 + $0x238] sm:$0xff]
    %v109 = vld [vmem:[%s1 + $0x240] sm:$0xff]
    %v110 = vld [vmem:[%s1 + $0x248] sm:$0xff]
    %v111 = vld [vmem:[%s1 + $0x250] sm:$0xff]
    %v112 = vld [vmem:[%s1 + $0x258] sm:$0xff]
    %v113 = vld [vmem:[%s1 + $0x260] sm:$0xff]
    %v114 = vld [vmem:[%s1 + $0x268] sm:$0xff]
    %v115 = vld [vmem:[%s1 + $0x270] sm:$0xff]
    %v116 = vld [vmem:[%s1 + $0x278] sm:$0xff]
    %v117 = vld [vmem:[%s1 + $0x280] sm:$0xff]
    %v118 = vld [vmem:[%s1 + $0x288] sm:$0xff]
    %v119 = vld [vmem:[%s1 + $0x290] sm:$0xff]
    %v120 = vld [vmem:[%s1 + $0x298] sm:$0xff]
    %v121 = vld [vmem:[%s1 + $0x2a0] sm:$0xff]
    %v122 = vld [vmem:[%s1 + $0x2a8] sm:$0xff]
    %v123 = vld [vmem:[%s1 + $0x2b0] sm:$0xff]
    %v124 = vld [vmem:[%s1 + $0x2b8] sm:$0xff]
    %v125 = vld [vmem:[%s1 + $0x2c0] sm:$0xff]
    %v126 = vld [vmem:[%s1 + $0x2c8] sm:$0xff]
    %v127 = vld [vmem:[%s1 + $0x2d0] sm:$0xff]
    %v128 = vld [vmem:[%s1 + $0x2d8] sm:$0xff]
    %v129 = vld [vmem:[%s1 + $0x2e0] sm:$0xff]
    %v130 = vld [vmem:[%s1 + $0x2e8] sm:$0xff]
    %v131 = vld [vmem:[%s1 + $0x2f0] sm:$0xff]
    %v132 = vld [vmem:[%s1 + $0x2f8] sm:$0xff]
    %v133 = vld [vmem:[%s1 + $0x300] sm:$0xff]
    %v134 = vld [vmem:[%s1 + $0x308] sm:$0xff]
    %v135 = vld [vmem:[%s1 + $0x310] sm:$0xff]
    %v136 = vld [vmem:[%s1 + $0x318] sm:$0xff]
    %v137 = vld [vmem:[%s1 + $0x320] sm:$0xff]
    %v138 = vld [vmem:[%s1 + $0x328] sm:$0xff]
    %v139 = vld [vmem:[%s1 + $0x330] sm:$0xff]
    %v140 = vld [vmem:[%s1 + $0x338] sm:$0xff]
    %v141 = vld [vmem:[%s1 + $0x340] sm:$0xff]
    %v142 = vld [vmem:[%s1 + $0x348] sm:$0xff]
    %v143 = vld [vmem:[%s1 + $0x350] sm:$0xff]
    %v144 = vld [vmem:[%s1 + $0x358] sm:$0xff]
    %v145 = vld [vmem:[%s1 + $0x360] sm:$0xff]
    %v146 = vld [vmem:[%s1 + $0x368] sm:$0xff]
    %v147 = vld [vmem:[%s1 + $0x370] sm:$0xff]
    %v148 = vld [vmem:[%s1 + $0x378] sm:$0xff]
    %v149 = vld [vmem:[%s1 + $0x380] sm:$0xff]
    %v150 = vld [vmem:[%s1 + $0x388] sm:$0xff]
    %v151 = vld [vmem:[%s1 + $0x390] sm:$0xff]
    %v152 = vld [vmem:[%s1 + $0x398] sm:$0xff]
    %v153 = vld [vmem:[%s1 + $0x3a0] sm:$0xff]
    %v154 = vld [vmem:[%s1 + $0x3a8] sm:$0xff]
    %v155 = vld [vmem:[%s1 + $0x3b0] sm:$0xff]
    %v156 = vld [vmem:[%s1 + $0x3b8] sm:$0xff]
    %v157 = vld [vmem:[%s1 + $0x3c0] sm:$0xff]
    %v158 = vld [vmem:[%s1 + $0x3c8] sm:$0xff]
    %v159 = vld [vmem:[%s1 + $0x3d0] sm:$0xff]
    %v160 = vld [vmem:[%s1 + $0x3d8] sm:$0xff]
    %v161 = vld [vmem:[%s1 + $0x3e0] sm:$0xff]
    %v162 = vld [vmem:[%s1 + $0x3e8] sm:$0xff]
    %v163 = vld [vmem:[%s1 + $0x3f0] sm:$0xff]
    %v164 = vld [vmem:[%s1 + $0x3f8] sm:$0xff]
    %v165 = vld [vmem:[%s1 + $0x400] sm:$0xff]
    %v166 = vld [vmem:[%s1 + $0x408] sm:$0xff]
    %v167 = vld [vmem:[%s1 + $0x410] sm:$0xff]
    %v168 = vld [vmem:[%s1 + $0x418] sm:$0xff]
    %v169 = vld [vmem:[%s1 + $0x420] sm:$0xff]
    %v170 = vld [vmem:[%s1 + $0x428] sm:$0xff]
    %v171 = vld [vmem:[%s1 + $0x430] sm:$0xff]
    %v172 = vld [vmem:[%s1 + $0x438] sm:$0xff]
    %v173 = vld [vmem:[%s1 + $0x440] sm:$0xff]
    %v174 = vld [vmem:[%s1 + $0x448] sm:$0xff]
    %v175 = vld [vmem:[%s1 + $0x450] sm:$0xff]
    %v176 = vld [vmem:[%s1 + $0x458] sm:$0xff]
    %v177 = vld [vmem:[%s1 + $0x460] sm:$0xff]
    %v178 = vld [vmem:[%s1 + $0x468] sm:$0xff]
    %v179 = vld [vmem:[%s1 + $0x470] sm:$0xff]
    %v180 = vld [vmem:[%s1 + $0x478] sm:$0xff]
    %v181 = vld [vmem:[%s1 + $0x480] sm:$0xff]
    %v182 = vld [vmem:[%s1 + $0x488] sm:$0xff]
    %v183 = vld [vmem:[%s1 + $0x490] sm:$0xff]
    %v184 = vld [vmem:[%s1 + $0x498] sm:$0xff]
    %v185 = vld [vmem:[%s1 + $0x4a0] sm:$0xff]
    %v186 = vld [vmem:[%s1 + $0x4a8] sm:$0xff]
    %v187 = vld [vmem:[%s1 + $0x4b0] sm:$0xff]
    %v188 = vld [vmem:[%s1 + $0x4b8] sm:$0xff]
    %v189 = vld [vmem:[%s1 + $0x4c0] sm:$0xff]
    %v190 = vld [vmem:[%s1 + $0x4c8] sm:$0xff]
    %v191 = vld [vmem:[%s1 + $0x4d0] sm:$0xff]
    %v192 = vld [vmem:[%s1 + $0x4d8] sm:$0xff]
    %v193 = vld [vmem:[%s1 + $0x4e0] sm:$0xff]
    %v194 = vld [vmem:[%s1 + $0x4e8] sm:$0xff]
    %v195 = vld [vmem:[%s1 + $0x4f0] sm:$0xff]
    %v196 = vld [vmem:[%s1 + $0x4f8] sm:$0xff]
    %v197 = vld [vmem:[%s1 + $0x500] sm:$0xff]
    %v198 = vld [vmem:[%s1 + $0x508] sm:$0xff]
    %v199 = vld [vmem:[%s1 + $0x510] sm:$0xff]
    %v200 = vld [vmem:[%s1 + $0x518] sm:$0xff]
    %v201 = vld [vmem:[%s1 + $0x520] sm:$0xff]
    %v202 = vld [vmem:[%s1 + $0x528] sm:$0xff]
    %v203 = vld [vmem:[%s1 + $0x530] sm:$0xff]
    %v204 = vld [vmem:[%s1 + $0x538] sm:$0xff]
    %v205 = vld [vmem:[%s1 + $0x540] sm:$0xff]
    %v206 = vld [vmem:[%s1 + $0x548] sm:$0xff]
    %v207 = vld [vmem:[%s1 + $0x550] sm:$0xff]
    %v208 = vld [vmem:[%s1 + $0x558] sm:$0xff]
    %v209 = vld [vmem:[%s1 + $0x560] sm:$0xff]
    %v210 = vld [vmem:[%s1 + $0x568] sm:$0xff]
    %v211 = vld [vmem:[%s1 + $0x570] sm:$0xff]
    %v212 = vld [vmem:[%s1 + $0x578] sm:$0xff]
    %v213 = vld [vmem:[%s1 + $0x580] sm:$0xff]
    %v214 = vld [vmem:[%s1 + $0x588] sm:$0xff]
    %v215 = vld [vmem:[%s1 + $0x590] sm:$0xff]
    %v216 = vld [vmem:[%s1 + $0x598] sm:$0xff]
    %v217 = vld [vmem:[%s1 + $0x5a0] sm:$0xff]
    %v218 = vld [vmem:[%s1 + $0x5a8] sm:$0xff]
    %v219 = vld [vmem:[%s1 + $0x5b0] sm:$0xff]
    %v220 = vld [vmem:[%s1 + $0x5b8] sm:$0xff]
    %v221 = vld [vmem:[%s1 + $0x5c0] sm:$0xff]
    %v222 = vld [vmem:[%s1 + $0x5c8] sm:$0xff]
    %v223 = vld [vmem:[%s1 + $0x5d0] sm:$0xff]
    %v224 = vld [vmem:[%s1 + $0x5d8] sm:$0xff]
    %v225 = vld [vmem:[%s1 + $0x5e0] sm:$0xff]
    %v226 = vld [vmem:[%s1 + $0x5e8] sm:$0xff]
    %v227 = vld [vmem:[%s1 + $0x5f0] sm:$0xff]
    %v228 = vld [vmem:[%s1 + $0x5f8] sm:$0xff]
    %v229 = vld [vmem:[%s1 + $0x600] sm:$0xff]
    %v230 = vld [vmem:[%s1 + $0x608] sm:$0xff]
    %v231 = vld [vmem:[%s1 + $0x610] sm:$0xff]
    %v232 = vld [vmem:[%s1 + $0x618] sm:$0xff]
    %v233 = vld [vmem:[%s1 + $0x620] sm:$0xff]
    %v234 = vld [vmem:[%s1 + $0x628] sm:$0xff]
    %v235 = vld [vmem:[%s1 + $0x630] sm:$0xff]
    %v236 = vld [vmem:[%s1 + $0x638] sm:$0xff]
    %v237 = vld [vmem:[%s1 + $0x640] sm:$0xff]
    %v238 = vld [vmem:[%s1 + $0x648] sm:$0xff]
    %v239 = vld [vmem:[%s1 + $0x650] sm:$0xff]
    %v240 = vld [vmem:[%s1 + $0x658] sm:$0xff]
    %v241 = vld [vmem:[%s1 + $0x660] sm:$0xff]
    %v242 = vld [vmem:[%s1 + $0x668] sm:$0xff]
    %v243 = vld [vmem:[%s1 + $0x670] sm:$0xff]
    %v244 = vld [vmem:[%s1 + $0x678] sm:$0xff]
    %v245 = vld [vmem:[%s1 + $0x680] sm:$0xff]
    %v246 = vld [vmem:[%s1 + $0x688] sm:$0xff]
    %v247 = vld [vmem:[%s1 + $0x690] sm:$0xff]
    %v248 = vld [vmem:[%s1 + $0x698] sm:$0xff]
    %v249 = vld [vmem:[%s1 + $0x6a0] sm:$0xff]
    %v250 = vld [vmem:[%s1 + $0x6a8] sm:$0xff]
    %v251 = vld [vmem:[%s1 + $0x6b0] sm:$0xff]
    %v252 = vld [vmem:[%s1 + $0x6b8] sm:$0xff]
    %v253 = vld [vmem:[%s1 + $0x6c0] sm:$0xff]
    %v254 = vld [vmem:[%s1 + $0x6c8] sm:$0xff]
    %v255 = vld [vmem:[%s1 + $0x6d0] sm:$0xff]
    %v256 = vld [vmem:[%s1 + $0x6d8] sm:$0xff]
    %v257 = vld [vmem:[%s1 + $0x6e0] sm:$0xff]
    %v258 = vld [vmem:[%s1 + $0x6e8] sm:$0xff]
    %v259 = vld [vmem:[%s1 + $0x6f0] sm:$0xff]
    %v260 = vld [vmem:[%s1 + $0x6f8] sm:$0xff]
    %v261 = vld [vmem:[%s1 + $0x700] sm:$0xff]
    %v262 = vld [vmem:[%s1 + $0x708] sm:$0xff]
    %v263 = vld [vmem:[%s1 + $0x710] sm:$0xff]
    %v264 = vld [vmem:[%s1 + $0x718] sm:$0xff]
    %v265 = vld [vmem:[%s1 + $0x720] sm:$0xff]
    %v266 = vld [vmem:[%s1 + $0x728] sm:$0xff]
    %v267 = vld [vmem:[%s1 + $0x730] sm:$0xff]
    %v268 = vld [vmem:[%s1 + $0x738] sm:$0xff]
    %v269 = vld [vmem:[%s1 + $0x740] sm:$0xff]
    %v270 = vld [vmem:[%s1 + $0x748] sm:$0xff]
    %v271 = vld [vmem:[%s1 + $0x750] sm:$0xff]
    %v272 = vld [vmem:[%s1 + $0x758] sm:$0xff]
    %v273 = vld [vmem:[%s1 + $0x760] sm:$0xff]
    %v274 = vld [vmem:[%s1 + $0x768] sm:$0xff]
    %v275 = vld [vmem:[%s1 + $0x770] sm:$0xff]
    %v276 = vld [vmem:[%s1 + $0x778] sm:$0xff]
    %v277 = vld [vmem:[%s1 + $0x780] sm:$0xff]
    %v278 = vld [vmem:[%s1 + $0x788] sm:$0xff]
    %v279 = vld [vmem:[%s1 + $0x790] sm:$0xff]
    %v280 = vld [vmem:[%s1 + $0x798] sm:$0xff]
    %v281 = vld [vmem:[%s1 + $0x7a0] sm:$0xff]
    %v282 = vld [vmem:[%s1 + $0x7a8] sm:$0xff]
    %v283 = vld [vmem:[%s1 + $0x7b0] sm:$0xff]
    %v284 = vld [vmem:[%s1 + $0x7b8] sm:$0xff]
    %v285 = vld [vmem:[%s1 + $0x7c0] sm:$0xff]
    %v286 = vld [vmem:[%s1 + $0x7c8] sm:$0xff]
    %v287 = vld [vmem:[%s1 + $0x7d0] sm:$0xff]
    %v288 = vld [vmem:[%s1 + $0x7d8] sm:$0xff]
    %v289 = vld [vmem:[%s1 + $0x7e0] sm:$0xff]
    %v290 = vld [vmem:[%s1 + $0x7e8] sm:$0xff]
    %v291 = vld [vmem:[%s1 + $0x7f0] sm:$0xff]
    %v292 = vld [vmem:[%s1 + $0x7f8] sm:$0xff]
    %v293 = vld [vmem:[%s1 + $0x800] sm:$0xff]
    %v294 = vld [vmem:[%s1 + $0x808] sm:$0xff]
    %v295 = vld [vmem:[%s1 + $0x810] sm:$0xff]
    %v296 = vld [vmem:[%s1 + $0x818] sm:$0xff]
    %v297 = vld [vmem:[%s1 + $0x820] sm:$0xff]
    %v298 = vld [vmem:[%s1 + $0x828] sm:$0xff]
    %v299 = vld [vmem:[%s1 + $0x830] sm:$0xff]
    %v300 = vld [vmem:[%s1 + $0x838] sm:$0xff]
    %v301 = vld [vmem:[%s1 + $0x840] sm:$0xff]
    %v302 = vld [vmem:[%s1 + $0x848] sm:$0xff]
    %v303 = vld [vmem:[%s1 + $0x850] sm:$0xff]
    %v304 = vld [vmem:[%s1 + $0x858] sm:$0xff]
    %v305 = vld [vmem:[%s1 + $0x860] sm:$0xff]
    %v306 = vld [vmem:[%s1 + $0x868] sm:$0xff]
    %v307 = vld [vmem:[%s1 + $0x870] sm:$0xff]
    %v308 = vld [vmem:[%s1 + $0x878] sm:$0xff]
    %v309 = vld [vmem:[%s1 + $0x880] sm:$0xff]
    %v310 = vld [vmem:[%s1 + $0x888] sm:$0xff]
    %v311 = vld [vmem:[%s1 + $0x890] sm:$0xff]
    %v312 = vld [vmem:[%s1 + $0x898] sm:$0xff]
    %v313 = vld [vmem:[%s1 + $0x8a0] sm:$0xff]
    %v314 = vld [vmem:[%s1 + $0x8a8] sm:$0xff]
    %v315 = vld [vmem:[%s1 + $0x8b0] sm:$0xff]
    %v316 = vld [vmem:[%s1 + $0x8b8] sm:$0xff]
    %v317 = vld [vmem:[%s1 + $0x8c0] sm:$0xff]
    %v318 = vld [vmem:[%s1 + $0x8c8] sm:$0xff]
    %v319 = vld [vmem:[%s1 + $0x8d0] sm:$0xff]
    %v320 = vld [vmem:[%s1 + $0x8d8] sm:$0xff]
    %v321 = vld [vmem:[%s1 + $0x8e0] sm:$0xff]
    %v322 = vld [vmem:[%s1 + $0x8e8] sm:$0xff]
    %v323 = vld [vmem:[%s1 + $0x8f0] sm:$0xff]
    %v324 = vld [vmem:[%s1 + $0x8f8] sm:$0xff]
    %v325 = vld [vmem:[%s1 + $0x900] sm:$0xff]
    %v326 = vld [vmem:[%s1 + $0x908] sm:$0xff]
    %v327 = vld [vmem:[%s1 + $0x910] sm:$0xff]
    %v328 = vld [vmem:[%s1 + $0x918] sm:$0xff]
    %v329 = vld [vmem:[%s1 + $0x920] sm:$0xff]
    %v330 = vld [vmem:[%s1 + $0x928] sm:$0xff]
    %v331 = vld [vmem:[%s1 + $0x930] sm:$0xff]
    %v332 = vld [vmem:[%s1 + $0x938] sm:$0xff]
    %v333 = vld [vmem:[%s1 + $0x940] sm:$0xff]
    %v334 = vld [vmem:[%s1 + $0x948] sm:$0xff]
    %v335 = vld [vmem:[%s1 + $0x950] sm:$0xff]
    %v336 = vld [vmem:[%s1 + $0x958] sm:$0xff]
    %v337 = vld [vmem:[%s1 + $0x960] sm:$0xff]
    %v338 = vld [vmem:[%s1 + $0x968] sm:$0xff]
    %v339 = vld [vmem:[%s1 + $0x970] sm:$0xff]
    %v340 = vld [vmem:[%s1 + $0x978] sm:$0xff]
    %v341 = vld [vmem:[%s1 + $0x980] sm:$0xff]
    %v342 = vld [vmem:[%s1 + $0x988] sm:$0xff]
    %v343 = vld [vmem:[%s1 + $0x990] sm:$0xff]
    %v344 = vld [vmem:[%s1 + $0x998] sm:$0xff]
    %v345 = vld [vmem:[%s1 + $0x9a0] sm:$0xff]
    %v346 = vld [vmem:[%s1 + $0x9a8] sm:$0xff]
    %v347 = vld [vmem:[%s1 + $0x9b0] sm:$0xff]
    %v348 = vld [vmem:[%s1 + $0x9b8] sm:$0xff]
    %v349 = vld [vmem:[%s1 + $0x9c0] sm:$0xff]
    %v350 = vld [vmem:[%s1 + $0x9c8] sm:$0xff]
    %v351 = vld [vmem:[%s1 + $0x9d0] sm:$0xff]
    %v352 = vld [vmem:[%s1 + $0x9d8] sm:$0xff]
    %v353 = vld [vmem:[%s1 + $0x9e0] sm:$0xff]
    %v354 = vld [vmem:[%s1 + $0x9e8] sm:$0xff]
    %v355 = vld [vmem:[%s1 + $0x9f0] sm:$0xff]
    %v356 = vld [vmem:[%s1 + $0x9f8] sm:$0xff]
    %v357 = vld [vmem:[%s1 + $0xa00] sm:$0xff]
    %v358 = vld [vmem:[%s1 + $0xa08] sm:$0xff]
    %v359 = vld [vmem:[%s1 + $0xa10] sm:$0xff]
    %v360 = vld [vmem:[%s1 + $0xa18] sm:$0xff]
    %v361 = vld [vmem:[%s1 + $0xa20] sm:$0xff]
    %v362 = vld [vmem:[%s1 + $0xa28] sm:$0xff]
    %v363 = vld [vmem:[%s1 + $0xa30] sm:$0xff]
    %v364 = vld [vmem:[%s1 + $0xa38] sm:$0xff]
    %v365 = vld [vmem:[%s1 + $0xa40] sm:$0xff]
    %v366 = vld [vmem:[%s1 + $0xa48] sm:$0xff]
    %v367 = vld [vmem:[%s1 + $0xa50] sm:$0xff]
    %v368 = vld [vmem:[%s1 + $0xa58] sm:$0xff]
    %v369 = vld [vmem:[%s1 + $0xa60] sm:$0xff]
    %v370 = vld [vmem:[%s1 + $0xa68] sm:$0xff]
    %v371 = vld [vmem:[%s1 + $0xa70] sm:$0xff]
    %v372 = vld [vmem:[%s1 + $0xa78] sm:$0xff]
    %v373 = vld [vmem:[%s1 + $0xa80] sm:$0xff]
    %v374 = vld [vmem:[%s1 + $0xa88] sm:$0xff]
    %v375 = vld [vmem:[%s1 + $0xa90] sm:$0xff]
    %v376 = vld [vmem:[%s1 + $0xa98] sm:$0xff]
    %v377 = vld [vmem:[%s1 + $0xaa0] sm:$0xff]
    %v378 = vld [vmem:[%s1 + $0xaa8] sm:$0xff]
    %v379 = vld [vmem:[%s1 + $0xab0] sm:$0xff]
    %v380 = vld [vmem:[%s1 + $0xab8] sm:$0xff]
    %v381 = vld [vmem:[%s1 + $0xac0] sm:$0xff]
    %v382 = vld [vmem:[%s1 + $0xac8] sm:$0xff]
    %v383 = vld [vmem:[%s1 + $0xad0] sm:$0xff]
    %v384 = vld [vmem:[%s1 + $0xad8] sm:$0xff]
    %v385 = vld [vmem:[%s1 + $0xae0] sm:$0xff]
    %v386 = vld [vmem:[%s1 + $0xae8] sm:$0xff]
    %v387 = vld [vmem:[%s1 + $0xaf0] sm:$0xff]
    %v388 = vld [vmem:[%s1 + $0xaf8] sm:$0xff]
    %v389 = vld [vmem:[%s1 + $0xb00] sm:$0xff]
    %v390 = vld [vmem:[%s1 + $0xb08] sm:$0xff]
    %v391 = vld [vmem:[%s1 + $0xb10] sm:$0xff]
    %v392 = vld [vmem:[%s1 + $0xb18] sm:$0xff]
    %v393 = vld [vmem:[%s1 + $0xb20] sm:$0xff]
    %v394 = vld [vmem:[%s1 + $0xb28] sm:$0xff]
    %v395 = vld [vmem:[%s1 + $0xb30] sm:$0xff]
    %v396 = vld [vmem:[%s1 + $0xb38] sm:$0xff]
    %v397 = vld [vmem:[%s1 + $0xb40] sm:$0xff]
    %v398 = vld [vmem:[%s1 + $0xb48] sm:$0xff]
    %v399 = vld [vmem:[%s1 + $0xb50] sm:$0xff]
    %v400 = vld [vmem:[%s1 + $0xb58] sm:$0xff]
    %v401 = vld [vmem:[%s1 + $0xb60] sm:$0xff]
    %v402 = vld [vmem:[%s1 + $0xb68] sm:$0xff]
    %v403 = vld [vmem:[%s1 + $0xb70] sm:$0xff]
    %v404 = vld [vmem:[%s1 + $0xb78] sm:$0xff]
    %v405 = vld [vmem:[%s1 + $0xb80] sm:$0xff]
    %v406 = vld [vmem:[%s1 + $0xb88] sm:$0xff]
    %v407 = vld [vmem:[%s1 + $0xb90] sm:$0xff]
    %v408 = vld [vmem:[%s1 + $0xb98] sm:$0xff]
    %v409 = vld [vmem:[%s1 + $0xba0] sm:$0xff]
    %v410 = vld [vmem:[%s1 + $0xba8] sm:$0xff]
    %v411 = vld [vmem:[%s1 + $0xbb0] sm:$0xff]
    %v412 = vld [vmem:[%s1 + $0xbb8] sm:$0xff]
    %v413 = vld [vmem:[%s1 + $0xbc0] sm:$0xff]
    %v414 = vld [vmem:[%s1 + $0xbc8] sm:$0xff]
    %v415 = vld [vmem:[%s1 + $0xbd0] sm:$0xff]
    %v416 = vld [vmem:[%s1 + $0xbd8] sm:$0xff]
    %v417 = vld [vmem:[%s1 + $0xbe0] sm:$0xff]
    %v418 = vld [vmem:[%s1 + $0xbe8] sm:$0xff]
    %v419 = vld [vmem:[%s1 + $0xbf0] sm:$0xff]
    %v420 = vld [vmem:[%s1 + $0xbf8] sm:$0xff]
    %v421 = vld [vmem:[%s1 + $0xc00] sm:$0xff]
    %v422 = vld [vmem:[%s1 + $0xc08] sm:$0xff]
    %v423 = vld [vmem:[%s1 + $0xc10] sm:$0xff]
    %v424 = vld [vmem:[%s1 + $0xc18] sm:$0xff]
    %v425 = vld [vmem:[%s1 + $0xc20] sm:$0xff]
    %v426 = vld [vmem:[%s1 + $0xc28] sm:$0xff]
    %v427 = vld [vmem:[%s1 + $0xc30] sm:$0xff]
    %v428 = vld [vmem:[%s1 + $0xc38] sm:$0xff]
    %v429 = vld [vmem:[%s1 + $0xc40] sm:$0xff]
    %v430 = vld [vmem:[%s1 + $0xc48] sm:$0xff]
    %v431 = vld [vmem:[%s1 + $0xc50] sm:$0xff]
    %v432 = vld [vmem:[%s1 + $0xc58] sm:$0xff]
    %v433 = vld [vmem:[%s1 + $0xc60] sm:$0xff]
    %v434 = vld [vmem:[%s1 + $0xc68] sm:$0xff]
    %v435 = vld [vmem:[%s1 + $0xc70] sm:$0xff]
    %v436 = vld [vmem:[%s1 + $0xc78] sm:$0xff]
    %v437 = vld [vmem:[%s1 + $0xc80] sm:$0xff]
    %v438 = vld [vmem:[%s1 + $0xc88] sm:$0xff]
    %v439 = vld [vmem:[%s1 + $0xc90] sm:$0xff]
    %v440 = vld [vmem:[%s1 + $0xc98] sm:$0xff]
    %v441 = vld [vmem:[%s1 + $0xca0] sm:$0xff]
    %v442 = vld [vmem:[%s1 + $0xca8] sm:$0xff]
    %v443 = vld [vmem:[%s1 + $0xcb0] sm:$0xff]
    %v444 = vld [vmem:[%s1 + $0xcb8] sm:$0xff]
    %v445 = vld [vmem:[%s1 + $0xcc0] sm:$0xff]
    %v446 = vld [vmem:[%s1 + $0xcc8] sm:$0xff]
    %v447 = vld [vmem:[%s1 + $0xcd0] sm:$0xff]
    %v448 = vld [vmem:[%s1 + $0xcd8] sm:$0xff]
    %v449 = vld [vmem:[%s1 + $0xce0] sm:$0xff]
    %v450 = vld [vmem:[%s1 + $0xce8] sm:$0xff]
    %v451 = vld [vmem:[%s1 + $0xcf0] sm:$0xff]
    %v452 = vld [vmem:[%s1 + $0xcf8] sm:$0xff]
    %v453 = vld [vmem:[%s1 + $0xd00] sm:$0xff]
    %v454 = vld [vmem:[%s1 + $0xd08] sm:$0xff]
    %v455 = vld [vmem:[%s1 + $0xd10] sm:$0xff]
    %v456 = vld [vmem:[%s1 + $0xd18] sm:$0xff]
    %v457 = vld [vmem:[%s1 + $0xd20] sm:$0xff]
    %v458 = vld [vmem:[%s1 + $0xd28] sm:$0xff]
    %v459 = vld [vmem:[%s1 + $0xd30] sm:$0xff]
    %v460 = vld [vmem:[%s1 + $0xd38] sm:$0xff]
    %v461 = vld [vmem:[%s1 + $0xd40] sm:$0xff]
    %v462 = vld [vmem:[%s1 + $0xd48] sm:$0xff]
    %v463 = vld [vmem:[%s1 + $0xd50] sm:$0xff]
    %v464 = vld [vmem:[%s1 + $0xd58] sm:$0xff]
    %v465 = vld [vmem:[%s1 + $0xd60] sm:$0xff]
    %v466 = vld [vmem:[%s1 + $0xd68] sm:$0xff]
    %v467 = vld [vmem:[%s1 + $0xd70] sm:$0xff]
    %v468 = vld [vmem:[%s1 + $0xd78] sm:$0xff]
    %v469 = vld [vmem:[%s1 + $0xd80] sm:$0xff]
    %v470 = vld [vmem:[%s1 + $0xd88] sm:$0xff]
    %v471 = vld [vmem:[%s1 + $0xd90] sm:$0xff]
    %v472 = vld [vmem:[%s1 + $0xd98] sm:$0xff]
    %v473 = vld [vmem:[%s1 + $0xda0] sm:$0xff]
    %v474 = vld [vmem:[%s1 + $0xda8] sm:$0xff]
    %v475 = vld [vmem:[%s1 + $0xdb0] sm:$0xff]
    %v476 = vld [vmem:[%s1 + $0xdb8] sm:$0xff]
    %v477 = vld [vmem:[%s1 + $0xdc0] sm:$0xff]
    %v478 = vld [vmem:[%s1 + $0xdc8] sm:$0xff]
    %v479 = vld [vmem:[%s1 + $0xdd0] sm:$0xff]
    %v480 = vld [vmem:[%s1 + $0xdd8] sm:$0xff]
    %v481 = vld [vmem:[%s1 + $0xde0] sm:$0xff]
    %v482 = vld [vmem:[%s1 + $0xde8] sm:$0xff]
    %v483 = vld [vmem:[%s1 + $0xdf0] sm:$0xff]
    %v484 = vld [vmem:[%s1 + $0xdf8] sm:$0xff]
    %v485 = vld [vmem:[%s1 + $0xe00] sm:$0xff]
    %v486 = vld [vmem:[%s1 + $0xe08] sm:$0xff]
    %v487 = vld [vmem:[%s1 + $0xe10] sm:$0xff]
    %v488 = vld [vmem:[%s1 + $0xe18] sm:$0xff]
    %v489 = vld [vmem:[%s1 + $0xe20] sm:$0xff]
    %v490 = vld [vmem:[%s1 + $0xe28] sm:$0xff]
    %v491 = vld [vmem:[%s1 + $0xe30] sm:$0xff]
    %v492 = vld [vmem:[%s1 + $0xe38] sm:$0xff]
    %v493 = vld [vmem:[%s1 + $0xe40] sm:$0xff]
    %v494 = vld [vmem:[%s1 + $0xe48] sm:$0xff]
    %v495 = vld [vmem:[%s1 + $0xe50] sm:$0xff]
    %v496 = vld [vmem:[%s1 + $0xe58] sm:$0xff]
    %v497 = vld [vmem:[%s1 + $0xe60] sm:$0xff]
    %v498 = vld [vmem:[%s1 + $0xe68] sm:$0xff]
    %v499 = vld [vmem:[%s1 + $0xe70] sm:$0xff]
    %v500 = vld [vmem:[%s1 + $0xe78] sm:$0xff]
    %v501 = vld [vmem:[%s1 + $0xe80] sm:$0xff]
    %v502 = vld [vmem:[%s1 + $0xe88] sm:$0xff]
    %v503 = vld [vmem:[%s1 + $0xe90] sm:$0xff]
    %v504 = vld [vmem:[%s1 + $0xe98] sm:$0xff]
    %v505 = vld [vmem:[%s1 + $0xea0] sm:$0xff]
    %v506 = vld [vmem:[%s1 + $0xea8] sm:$0xff]
    %v507 = vld [vmem:[%s1 + $0xeb0] sm:$0xff]
    %v508 = vld [vmem:[%s1 + $0xeb8] sm:$0xff]
    %v509 = vld [vmem:[%s1 + $0xec0] sm:$0xff]
    %v510 = vld [vmem:[%s1 + $0xec8] sm:$0xff]
    %v511 = vld [vmem:[%s1 + $0xed0] sm:$0xff]
    %v512 = vld [vmem:[%s1 + $0xed8] sm:$0xff]
    %v513 = vld [vmem:[%s1 + $0xee0] sm:$0xff]
    %v514 = vld [vmem:[%s1 + $0xee8] sm:$0xff]
    %v515 = vld [vmem:[%s1 + $0xef0] sm:$0xff]
    %v516 = vld [vmem:[%s1 + $0xef8] sm:$0xff]
    %v517 = vld [vmem:[%s1 + $0xf00] sm:$0xff]
    %v518 = vld [vmem:[%s1 + $0xf08] sm:$0xff]
    %v519 = vld [vmem:[%s1 + $0xf10] sm:$0xff]
    %v520 = vld [vmem:[%s1 + $0xf18] sm:$0xff]
    %v521 = vld [vmem:[%s1 + $0xf20] sm:$0xff]
    %v522 = vld [vmem:[%s1 + $0xf28] sm:$0xff]
    %v523 = vld [vmem:[%s1 + $0xf30] sm:$0xff]
    %v524 = vld [vmem:[%s1 + $0xf38] sm:$0xff]
    %v525 = vld [vmem:[%s1 + $0xf40] sm:$0xff]
    %v526 = vld [vmem:[%s1 + $0xf48] sm:$0xff]
    %v527 = vld [vmem:[%s1 + $0xf50] sm:$0xff]
    %v528 = vld [vmem:[%s1 + $0xf58] sm:$0xff]
    %v529 = vld [vmem:[%s1 + $0xf60] sm:$0xff]
    %v530 = vld [vmem:[%s1 + $0xf68] sm:$0xff]
    %v531 = vld [vmem:[%s1 + $0xf70] sm:$0xff]
    %v532 = vld [vmem:[%s1 + $0xf78] sm:$0xff]
    %v533 = vld [vmem:[%s1 + $0xf80] sm:$0xff]
    %v534 = vld [vmem:[%s1 + $0xf88] sm:$0xff]
    %v535 = vld [vmem:[%s1 + $0xf90] sm:$0xff]
    %v536 = vld [vmem:[%s1 + $0xf98] sm:$0xff]
    %v537 = vld [vmem:[%s1 + $0xfa0] sm:$0xff]
    %v538 = vld [vmem:[%s1 + $0xfa8] sm:$0xff]
    %v539 = vld [vmem:[%s1 + $0xfb0] sm:$0xff]
    %v540 = vld [vmem:[%s1 + $0xfb8] sm:$0xff]
    %v541 = vld [vmem:[%s1 + $0xfc0] sm:$0xff]
    %v542 = vld [vmem:[%s1 + $0xfc8] sm:$0xff]
    %v543 = vld [vmem:[%s1 + $0xfd0] sm:$0xff]
    %v544 = vld [vmem:[%s1 + $0xfd8] sm:$0xff]
    %v545 = vld [vmem:[%s1 + $0xfe0] sm:$0xff]
    %v546 = vld [vmem:[%s1 + $0xfe8] sm:$0xff]
    %v547 = vld [vmem:[%s1 + $0xff0] sm:$0xff]
    %v548 = vld [vmem:[%s1 + $0xff8] sm:$0xff]
    %v549 = vld [vmem:[%s2] sm:$0xf]
    %v551 = vlaneseq
    %v552 = vshrl.u32 %v551, 7
    %v553 = vsub.s32 0, %v552
    %v554 = vrot.slane %v549, %v553
    %v555 = vlaneseq
    %v556 = vshrl.u32 %v555, 7
    %v557 = vsub.s32 1, %v556
    %v558 = vrot.slane %v549, %v557
    %v559 = vlaneseq
    %v560 = vshrl.u32 %v559, 7
    %v561 = vsub.s32 2, %v560
    %v562 = vrot.slane %v549, %v561
    %v563 = vlaneseq
    %v564 = vshrl.u32 %v563, 7
    %v565 = vsub.s32 3, %v564
    %v566 = vrot.slane %v549, %v565
    %v573 = vcombine.high %v35, %v35
    %v575 = vunpack.c.l.s4 1966171168
    %v576 = vunpack.c.0.s8 %v575
    %v577 = vlaneseq
    %v578 = vshrl.u32 %v577, 7
    %v579 = vsub.s32 %v576, %v578
    %v580 = vrot.slane %v35, %v579
    %v582 = vunpack.c.l.s4 1966171168
    %v583 = vunpack.c.0.s8 %v582
    %v584 = vlaneseq
    %v585 = vshrl.u32 %v584, 7
    %v586 = vsub.s32 %v583, %v585
    %v587 = vrot.slane %v573, %v586
    %v588 = vcombine.high %v580, %v580
    %v589 = vcombine.high %v587, %v587
    %v591 = vunpack.c.l.s4 1966171168
    %v592 = vunpack.c.0.s8 %v591
    %v593 = vlaneseq
    %v594 = vshrl.u32 %v593, 7
    %v595 = vsub.s32 %v592, %v594
    %v596 = vrot.slane %v580, %v595
    %v598 = vunpack.c.l.s4 1966171168
    %v599 = vunpack.c.0.s8 %v598
    %v600 = vlaneseq
    %v601 = vshrl.u32 %v600, 7
    %v602 = vsub.s32 %v599, %v601
    %v603 = vrot.slane %v587, %v602
    %v605 = vunpack.c.l.s4 1966171168
    %v606 = vunpack.c.0.s8 %v605
    %v607 = vlaneseq
    %v608 = vshrl.u32 %v607, 7
    %v609 = vsub.s32 %v606, %v608
    %v610 = vrot.slane %v588, %v609
    %v612 = vunpack.c.l.s4 1966171168
    %v613 = vunpack.c.0.s8 %v612
    %v614 = vlaneseq
    %v615 = vshrl.u32 %v614, 7
    %v616 = vsub.s32 %v613, %v615
    %v617 = vrot.slane %v589, %v616
    %v618 = vcombine.high %v596, %v596
    %v619 = vcombine.high %v603, %v603
    %v620 = vcombine.high %v610, %v610
    %v621 = vcombine.high %v617, %v617
    %v622 = vcombine.high %v36, %v36
    %v624 = vunpack.c.l.s4 1966171168
    %v625 = vunpack.c.0.s8 %v624
    %v626 = vlaneseq
    %v627 = vshrl.u32 %v626, 7
    %v628 = vsub.s32 %v625, %v627
    %v629 = vrot.slane %v36, %v628
    %v631 = vunpack.c.l.s4 1966171168
    %v632 = vunpack.c.0.s8 %v631
    %v633 = vlaneseq
    %v634 = vshrl.u32 %v633, 7
    %v635 = vsub.s32 %v632, %v634
    %v636 = vrot.slane %v622, %v635
    %v637 = vcombine.high %v629, %v629
    %v638 = vcombine.high %v636, %v636
    %v640 = vunpack.c.l.s4 1966171168
    %v641 = vunpack.c.0.s8 %v640
    %v642 = vlaneseq
    %v643 = vshrl.u32 %v642, 7
    %v644 = vsub.s32 %v641, %v643
    %v645 = vrot.slane %v629, %v644
    %v647 = vunpack.c.l.s4 1966171168
    %v648 = vunpack.c.0.s8 %v647
    %v649 = vlaneseq
    %v650 = vshrl.u32 %v649, 7
    %v651 = vsub.s32 %v648, %v650
    %v652 = vrot.slane %v636, %v651
    %v654 = vunpack.c.l.s4 1966171168
    %v655 = vunpack.c.0.s8 %v654
    %v656 = vlaneseq
    %v657 = vshrl.u32 %v656, 7
    %v658 = vsub.s32 %v655, %v657
    %v659 = vrot.slane %v637, %v658
    %v661 = vunpack.c.l.s4 1966171168
    %v662 = vunpack.c.0.s8 %v661
    %v663 = vlaneseq
    %v664 = vshrl.u32 %v663, 7
    %v665 = vsub.s32 %v662, %v664
    %v666 = vrot.slane %v638, %v665
    %v667 = vcombine.high %v645, %v645
    %v668 = vcombine.high %v652, %v652
    %v669 = vcombine.high %v659, %v659
    %v670 = vcombine.high %v666, %v666
    %v1199 = vunpack.c.l.b16 %v37
    %v1200 = vunpack.c.h.b16 %v37
    %v1201 = vunpack.c.l.b16 %v38
    %v1202 = vunpack.c.h.b16 %v38
    %v1203 = vunpack.c.l.b16 %v39
    %v1204 = vunpack.c.h.b16 %v39
    %v1205 = vunpack.c.l.b16 %v40
    %v1206 = vunpack.c.h.b16 %v40
    %v1207 = vunpack.c.l.b16 %v41
    %v1208 = vunpack.c.h.b16 %v41
    %v1209 = vunpack.c.l.b16 %v42
    %v1210 = vunpack.c.h.b16 %v42
    %v1211 = vunpack.c.l.b16 %v43
    %v1212 = vunpack.c.h.b16 %v43
    %v1213 = vunpack.c.l.b16 %v44
    %v1214 = vunpack.c.h.b16 %v44
    %v1215 = vunpack.c.l.b16 %v45
    %v1216 = vunpack.c.h.b16 %v45
    %v1217 = vunpack.c.l.b16 %v46
    %v1218 = vunpack.c.h.b16 %v46
    %v1219 = vunpack.c.l.b16 %v47
    %v1220 = vunpack.c.h.b16 %v47
    %v1221 = vunpack.c.l.b16 %v48
    %v1222 = vunpack.c.h.b16 %v48
    %v1223 = vunpack.c.l.b16 %v49
    %v1224 = vunpack.c.h.b16 %v49
    %v1225 = vunpack.c.l.b16 %v50
    %v1226 = vunpack.c.h.b16 %v50
    %v1227 = vunpack.c.l.b16 %v51
    %v1228 = vunpack.c.h.b16 %v51
    %v1229 = vunpack.c.l.b16 %v52
    %v1230 = vunpack.c.h.b16 %v52
    %v1231 = vunpack.c.l.b16 %v53
    %v1232 = vunpack.c.h.b16 %v53
    %v1233 = vunpack.c.l.b16 %v54
    %v1234 = vunpack.c.h.b16 %v54
    %v1235 = vunpack.c.l.b16 %v55
    %v1236 = vunpack.c.h.b16 %v55
    %v1237 = vunpack.c.l.b16 %v56
    %v1238 = vunpack.c.h.b16 %v56
    %v1239 = vunpack.c.l.b16 %v57
    %v1240 = vunpack.c.h.b16 %v57
    %v1241 = vunpack.c.l.b16 %v58
    %v1242 = vunpack.c.h.b16 %v58
    %v1243 = vunpack.c.l.b16 %v59
    %v1244 = vunpack.c.h.b16 %v59
    %v1245 = vunpack.c.l.b16 %v60
    %v1246 = vunpack.c.h.b16 %v60
    %v1247 = vunpack.c.l.b16 %v61
    %v1248 = vunpack.c.h.b16 %v61
    %v1249 = vunpack.c.l.b16 %v62
    %v1250 = vunpack.c.h.b16 %v62
    %v1251 = vunpack.c.l.b16 %v63
    %v1252 = vunpack.c.h.b16 %v63
    %v1253 = vunpack.c.l.b16 %v64
    %v1254 = vunpack.c.h.b16 %v64
    %v1255 = vunpack.c.l.b16 %v65
    %v1256 = vunpack.c.h.b16 %v65
    %v1257 = vunpack.c.l.b16 %v66
    %v1258 = vunpack.c.h.b16 %v66
    %v1259 = vunpack.c.l.b16 %v67
    %v1260 = vunpack.c.h.b16 %v67
    %v1261 = vunpack.c.l.b16 %v68
    %v1262 = vunpack.c.h.b16 %v68
    %v1263 = vunpack.c.l.b16 %v69
    %v1264 = vunpack.c.h.b16 %v69
    %v1265 = vunpack.c.l.b16 %v70
    %v1266 = vunpack.c.h.b16 %v70
    %v1267 = vunpack.c.l.b16 %v71
    %v1268 = vunpack.c.h.b16 %v71
    %v1269 = vunpack.c.l.b16 %v72
    %v1270 = vunpack.c.h.b16 %v72
    %v1271 = vunpack.c.l.b16 %v73
    %v1272 = vunpack.c.h.b16 %v73
    %v1273 = vunpack.c.l.b16 %v74
    %v1274 = vunpack.c.h.b16 %v74
    %v1275 = vunpack.c.l.b16 %v75
    %v1276 = vunpack.c.h.b16 %v75
    %v1277 = vunpack.c.l.b16 %v76
    %v1278 = vunpack.c.h.b16 %v76
    %v1279 = vunpack.c.l.b16 %v77
    %v1280 = vunpack.c.h.b16 %v77
    %v1281 = vunpack.c.l.b16 %v78
    %v1282 = vunpack.c.h.b16 %v78
    %v1283 = vunpack.c.l.b16 %v79
    %v1284 = vunpack.c.h.b16 %v79
    %v1285 = vunpack.c.l.b16 %v80
    %v1286 = vunpack.c.h.b16 %v80
    %v1287 = vunpack.c.l.b16 %v81
    %v1288 = vunpack.c.h.b16 %v81
    %v1289 = vunpack.c.l.b16 %v82
    %v1290 = vunpack.c.h.b16 %v82
    %v1291 = vunpack.c.l.b16 %v83
    %v1292 = vunpack.c.h.b16 %v83
    %v1293 = vunpack.c.l.b16 %v84
    %v1294 = vunpack.c.h.b16 %v84
    %v1295 = vunpack.c.l.b16 %v85
    %v1296 = vunpack.c.h.b16 %v85
    %v1297 = vunpack.c.l.b16 %v86
    %v1298 = vunpack.c.h.b16 %v86
    %v1299 = vunpack.c.l.b16 %v87
    %v1300 = vunpack.c.h.b16 %v87
    %v1301 = vunpack.c.l.b16 %v88
    %v1302 = vunpack.c.h.b16 %v88
    %v1303 = vunpack.c.l.b16 %v89
    %v1304 = vunpack.c.h.b16 %v89
    %v1305 = vunpack.c.l.b16 %v90
    %v1306 = vunpack.c.h.b16 %v90
    %v1307 = vunpack.c.l.b16 %v91
    %v1308 = vunpack.c.h.b16 %v91
    %v1309 = vunpack.c.l.b16 %v92
    %v1310 = vunpack.c.h.b16 %v92
    %v1311 = vunpack.c.l.b16 %v93
    %v1312 = vunpack.c.h.b16 %v93
    %v1313 = vunpack.c.l.b16 %v94
    %v1314 = vunpack.c.h.b16 %v94
    %v1315 = vunpack.c.l.b16 %v95
    %v1316 = vunpack.c.h.b16 %v95
    %v1317 = vunpack.c.l.b16 %v96
    %v1318 = vunpack.c.h.b16 %v96
    %v1319 = vunpack.c.l.b16 %v97
    %v1320 = vunpack.c.h.b16 %v97
    %v1321 = vunpack.c.l.b16 %v98
    %v1322 = vunpack.c.h.b16 %v98
    %v1323 = vunpack.c.l.b16 %v99
    %v1324 = vunpack.c.h.b16 %v99
    %v1325 = vunpack.c.l.b16 %v100
    %v1326 = vunpack.c.h.b16 %v100
    %v1327 = vunpack.c.l.b16 %v101
    %v1328 = vunpack.c.h.b16 %v101
    %v1329 = vunpack.c.l.b16 %v102
    %v1330 = vunpack.c.h.b16 %v102
    %v1331 = vunpack.c.l.b16 %v103
    %v1332 = vunpack.c.h.b16 %v103
    %v1333 = vunpack.c.l.b16 %v104
    %v1334 = vunpack.c.h.b16 %v104
    %v1335 = vunpack.c.l.b16 %v105
    %v1336 = vunpack.c.h.b16 %v105
    %v1337 = vunpack.c.l.b16 %v106
    %v1338 = vunpack.c.h.b16 %v106
    %v1339 = vunpack.c.l.b16 %v107
    %v1340 = vunpack.c.h.b16 %v107
    %v1341 = vunpack.c.l.b16 %v108
    %v1342 = vunpack.c.h.b16 %v108
    %v1343 = vunpack.c.l.b16 %v109
    %v1344 = vunpack.c.h.b16 %v109
    %v1345 = vunpack.c.l.b16 %v110
    %v1346 = vunpack.c.h.b16 %v110
    %v1347 = vunpack.c.l.b16 %v111
    %v1348 = vunpack.c.h.b16 %v111
    %v1349 = vunpack.c.l.b16 %v112
    %v1350 = vunpack.c.h.b16 %v112
    %v1351 = vunpack.c.l.b16 %v113
    %v1352 = vunpack.c.h.b16 %v113
    %v1353 = vunpack.c.l.b16 %v114
    %v1354 = vunpack.c.h.b16 %v114
    %v1355 = vunpack.c.l.b16 %v115
    %v1356 = vunpack.c.h.b16 %v115
    %v1357 = vunpack.c.l.b16 %v116
    %v1358 = vunpack.c.h.b16 %v116
    %v1359 = vunpack.c.l.b16 %v117
    %v1360 = vunpack.c.h.b16 %v117
    %v1361 = vunpack.c.l.b16 %v118
    %v1362 = vunpack.c.h.b16 %v118
    %v1363 = vunpack.c.l.b16 %v119
    %v1364 = vunpack.c.h.b16 %v119
    %v1365 = vunpack.c.l.b16 %v120
    %v1366 = vunpack.c.h.b16 %v120
    %v1367 = vunpack.c.l.b16 %v121
    %v1368 = vunpack.c.h.b16 %v121
    %v1369 = vunpack.c.l.b16 %v122
    %v1370 = vunpack.c.h.b16 %v122
    %v1371 = vunpack.c.l.b16 %v123
    %v1372 = vunpack.c.h.b16 %v123
    %v1373 = vunpack.c.l.b16 %v124
    %v1374 = vunpack.c.h.b16 %v124
    %v1375 = vunpack.c.l.b16 %v125
    %v1376 = vunpack.c.h.b16 %v125
    %v1377 = vunpack.c.l.b16 %v126
    %v1378 = vunpack.c.h.b16 %v126
    %v1379 = vunpack.c.l.b16 %v127
    %v1380 = vunpack.c.h.b16 %v127
    %v1381 = vunpack.c.l.b16 %v128
    %v1382 = vunpack.c.h.b16 %v128
    %v1383 = vunpack.c.l.b16 %v129
    %v1384 = vunpack.c.h.b16 %v129
    %v1385 = vunpack.c.l.b16 %v130
    %v1386 = vunpack.c.h.b16 %v130
    %v1387 = vunpack.c.l.b16 %v131
    %v1388 = vunpack.c.h.b16 %v131
    %v1389 = vunpack.c.l.b16 %v132
    %v1390 = vunpack.c.h.b16 %v132
    %v1391 = vunpack.c.l.b16 %v133
    %v1392 = vunpack.c.h.b16 %v133
    %v1393 = vunpack.c.l.b16 %v134
    %v1394 = vunpack.c.h.b16 %v134
    %v1395 = vunpack.c.l.b16 %v135
    %v1396 = vunpack.c.h.b16 %v135
    %v1397 = vunpack.c.l.b16 %v136
    %v1398 = vunpack.c.h.b16 %v136
    %v1399 = vunpack.c.l.b16 %v137
    %v1400 = vunpack.c.h.b16 %v137
    %v1401 = vunpack.c.l.b16 %v138
    %v1402 = vunpack.c.h.b16 %v138
    %v1403 = vunpack.c.l.b16 %v139
    %v1404 = vunpack.c.h.b16 %v139
    %v1405 = vunpack.c.l.b16 %v140
    %v1406 = vunpack.c.h.b16 %v140
    %v1407 = vunpack.c.l.b16 %v141
    %v1408 = vunpack.c.h.b16 %v141
    %v1409 = vunpack.c.l.b16 %v142
    %v1410 = vunpack.c.h.b16 %v142
    %v1411 = vunpack.c.l.b16 %v143
    %v1412 = vunpack.c.h.b16 %v143
    %v1413 = vunpack.c.l.b16 %v144
    %v1414 = vunpack.c.h.b16 %v144
    %v1415 = vunpack.c.l.b16 %v145
    %v1416 = vunpack.c.h.b16 %v145
    %v1417 = vunpack.c.l.b16 %v146
    %v1418 = vunpack.c.h.b16 %v146
    %v1419 = vunpack.c.l.b16 %v147
    %v1420 = vunpack.c.h.b16 %v147
    %v1421 = vunpack.c.l.b16 %v148
    %v1422 = vunpack.c.h.b16 %v148
    %v1423 = vunpack.c.l.b16 %v149
    %v1424 = vunpack.c.h.b16 %v149
    %v1425 = vunpack.c.l.b16 %v150
    %v1426 = vunpack.c.h.b16 %v150
    %v1427 = vunpack.c.l.b16 %v151
    %v1428 = vunpack.c.h.b16 %v151
    %v1429 = vunpack.c.l.b16 %v152
    %v1430 = vunpack.c.h.b16 %v152
    %v1431 = vunpack.c.l.b16 %v153
    %v1432 = vunpack.c.h.b16 %v153
    %v1433 = vunpack.c.l.b16 %v154
    %v1434 = vunpack.c.h.b16 %v154
    %v1435 = vunpack.c.l.b16 %v155
    %v1436 = vunpack.c.h.b16 %v155
    %v1437 = vunpack.c.l.b16 %v156
    %v1438 = vunpack.c.h.b16 %v156
    %v1439 = vunpack.c.l.b16 %v157
    %v1440 = vunpack.c.h.b16 %v157
    %v1441 = vunpack.c.l.b16 %v158
    %v1442 = vunpack.c.h.b16 %v158
    %v1443 = vunpack.c.l.b16 %v159
    %v1444 = vunpack.c.h.b16 %v159
    %v1445 = vunpack.c.l.b16 %v160
    %v1446 = vunpack.c.h.b16 %v160
    %v1447 = vunpack.c.l.b16 %v161
    %v1448 = vunpack.c.h.b16 %v161
    %v1449 = vunpack.c.l.b16 %v162
    %v1450 = vunpack.c.h.b16 %v162
    %v1451 = vunpack.c.l.b16 %v163
    %v1452 = vunpack.c.h.b16 %v163
    %v1453 = vunpack.c.l.b16 %v164
    %v1454 = vunpack.c.h.b16 %v164
    %v1455 = vunpack.c.l.b16 %v165
    %v1456 = vunpack.c.h.b16 %v165
    %v1457 = vunpack.c.l.b16 %v166
    %v1458 = vunpack.c.h.b16 %v166
    %v1459 = vunpack.c.l.b16 %v167
    %v1460 = vunpack.c.h.b16 %v167
    %v1461 = vunpack.c.l.b16 %v168
    %v1462 = vunpack.c.h.b16 %v168
    %v1463 = vunpack.c.l.b16 %v169
    %v1464 = vunpack.c.h.b16 %v169
    %v1465 = vunpack.c.l.b16 %v170
    %v1466 = vunpack.c.h.b16 %v170
    %v1467 = vunpack.c.l.b16 %v171
    %v1468 = vunpack.c.h.b16 %v171
    %v1469 = vunpack.c.l.b16 %v172
    %v1470 = vunpack.c.h.b16 %v172
    %v1471 = vunpack.c.l.b16 %v173
    %v1472 = vunpack.c.h.b16 %v173
    %v1473 = vunpack.c.l.b16 %v174
    %v1474 = vunpack.c.h.b16 %v174
    %v1475 = vunpack.c.l.b16 %v175
    %v1476 = vunpack.c.h.b16 %v175
    %v1477 = vunpack.c.l.b16 %v176
    %v1478 = vunpack.c.h.b16 %v176
    %v1479 = vunpack.c.l.b16 %v177
    %v1480 = vunpack.c.h.b16 %v177
    %v1481 = vunpack.c.l.b16 %v178
    %v1482 = vunpack.c.h.b16 %v178
    %v1483 = vunpack.c.l.b16 %v179
    %v1484 = vunpack.c.h.b16 %v179
    %v1485 = vunpack.c.l.b16 %v180
    %v1486 = vunpack.c.h.b16 %v180
    %v1487 = vunpack.c.l.b16 %v181
    %v1488 = vunpack.c.h.b16 %v181
    %v1489 = vunpack.c.l.b16 %v182
    %v1490 = vunpack.c.h.b16 %v182
    %v1491 = vunpack.c.l.b16 %v183
    %v1492 = vunpack.c.h.b16 %v183
    %v1493 = vunpack.c.l.b16 %v184
    %v1494 = vunpack.c.h.b16 %v184
    %v1495 = vunpack.c.l.b16 %v185
    %v1496 = vunpack.c.h.b16 %v185
    %v1497 = vunpack.c.l.b16 %v186
    %v1498 = vunpack.c.h.b16 %v186
    %v1499 = vunpack.c.l.b16 %v187
    %v1500 = vunpack.c.h.b16 %v187
    %v1501 = vunpack.c.l.b16 %v188
    %v1502 = vunpack.c.h.b16 %v188
    %v1503 = vunpack.c.l.b16 %v189
    %v1504 = vunpack.c.h.b16 %v189
    %v1505 = vunpack.c.l.b16 %v190
    %v1506 = vunpack.c.h.b16 %v190
    %v1507 = vunpack.c.l.b16 %v191
    %v1508 = vunpack.c.h.b16 %v191
    %v1509 = vunpack.c.l.b16 %v192
    %v1510 = vunpack.c.h.b16 %v192
    %v1511 = vunpack.c.l.b16 %v193
    %v1512 = vunpack.c.h.b16 %v193
    %v1513 = vunpack.c.l.b16 %v194
    %v1514 = vunpack.c.h.b16 %v194
    %v1515 = vunpack.c.l.b16 %v195
    %v1516 = vunpack.c.h.b16 %v195
    %v1517 = vunpack.c.l.b16 %v196
    %v1518 = vunpack.c.h.b16 %v196
    %v1519 = vunpack.c.l.b16 %v197
    %v1520 = vunpack.c.h.b16 %v197
    %v1521 = vunpack.c.l.b16 %v198
    %v1522 = vunpack.c.h.b16 %v198
    %v1523 = vunpack.c.l.b16 %v199
    %v1524 = vunpack.c.h.b16 %v199
    %v1525 = vunpack.c.l.b16 %v200
    %v1526 = vunpack.c.h.b16 %v200
    %v1527 = vunpack.c.l.b16 %v201
    %v1528 = vunpack.c.h.b16 %v201
    %v1529 = vunpack.c.l.b16 %v202
    %v1530 = vunpack.c.h.b16 %v202
    %v1531 = vunpack.c.l.b16 %v203
    %v1532 = vunpack.c.h.b16 %v203
    %v1533 = vunpack.c.l.b16 %v204
    %v1534 = vunpack.c.h.b16 %v204
    %v1535 = vunpack.c.l.b16 %v205
    %v1536 = vunpack.c.h.b16 %v205
    %v1537 = vunpack.c.l.b16 %v206
    %v1538 = vunpack.c.h.b16 %v206
    %v1539 = vunpack.c.l.b16 %v207
    %v1540 = vunpack.c.h.b16 %v207
    %v1541 = vunpack.c.l.b16 %v208
    %v1542 = vunpack.c.h.b16 %v208
    %v1543 = vunpack.c.l.b16 %v209
    %v1544 = vunpack.c.h.b16 %v209
    %v1545 = vunpack.c.l.b16 %v210
    %v1546 = vunpack.c.h.b16 %v210
    %v1547 = vunpack.c.l.b16 %v211
    %v1548 = vunpack.c.h.b16 %v211
    %v1549 = vunpack.c.l.b16 %v212
    %v1550 = vunpack.c.h.b16 %v212
    %v1551 = vunpack.c.l.b16 %v213
    %v1552 = vunpack.c.h.b16 %v213
    %v1553 = vunpack.c.l.b16 %v214
    %v1554 = vunpack.c.h.b16 %v214
    %v1555 = vunpack.c.l.b16 %v215
    %v1556 = vunpack.c.h.b16 %v215
    %v1557 = vunpack.c.l.b16 %v216
    %v1558 = vunpack.c.h.b16 %v216
    %v1559 = vunpack.c.l.b16 %v217
    %v1560 = vunpack.c.h.b16 %v217
    %v1561 = vunpack.c.l.b16 %v218
    %v1562 = vunpack.c.h.b16 %v218
    %v1563 = vunpack.c.l.b16 %v219
    %v1564 = vunpack.c.h.b16 %v219
    %v1565 = vunpack.c.l.b16 %v220
    %v1566 = vunpack.c.h.b16 %v220
    %v1567 = vunpack.c.l.b16 %v221
    %v1568 = vunpack.c.h.b16 %v221
    %v1569 = vunpack.c.l.b16 %v222
    %v1570 = vunpack.c.h.b16 %v222
    %v1571 = vunpack.c.l.b16 %v223
    %v1572 = vunpack.c.h.b16 %v223
    %v1573 = vunpack.c.l.b16 %v224
    %v1574 = vunpack.c.h.b16 %v224
    %v1575 = vunpack.c.l.b16 %v225
    %v1576 = vunpack.c.h.b16 %v225
    %v1577 = vunpack.c.l.b16 %v226
    %v1578 = vunpack.c.h.b16 %v226
    %v1579 = vunpack.c.l.b16 %v227
    %v1580 = vunpack.c.h.b16 %v227
    %v1581 = vunpack.c.l.b16 %v228
    %v1582 = vunpack.c.h.b16 %v228
    %v1583 = vunpack.c.l.b16 %v229
    %v1584 = vunpack.c.h.b16 %v229
    %v1585 = vunpack.c.l.b16 %v230
    %v1586 = vunpack.c.h.b16 %v230
    %v1587 = vunpack.c.l.b16 %v231
    %v1588 = vunpack.c.h.b16 %v231
    %v1589 = vunpack.c.l.b16 %v232
    %v1590 = vunpack.c.h.b16 %v232
    %v1591 = vunpack.c.l.b16 %v233
    %v1592 = vunpack.c.h.b16 %v233
    %v1593 = vunpack.c.l.b16 %v234
    %v1594 = vunpack.c.h.b16 %v234
    %v1595 = vunpack.c.l.b16 %v235
    %v1596 = vunpack.c.h.b16 %v235
    %v1597 = vunpack.c.l.b16 %v236
    %v1598 = vunpack.c.h.b16 %v236
    %v1599 = vunpack.c.l.b16 %v237
    %v1600 = vunpack.c.h.b16 %v237
    %v1601 = vunpack.c.l.b16 %v238
    %v1602 = vunpack.c.h.b16 %v238
    %v1603 = vunpack.c.l.b16 %v239
    %v1604 = vunpack.c.h.b16 %v239
    %v1605 = vunpack.c.l.b16 %v240
    %v1606 = vunpack.c.h.b16 %v240
    %v1607 = vunpack.c.l.b16 %v241
    %v1608 = vunpack.c.h.b16 %v241
    %v1609 = vunpack.c.l.b16 %v242
    %v1610 = vunpack.c.h.b16 %v242
    %v1611 = vunpack.c.l.b16 %v243
    %v1612 = vunpack.c.h.b16 %v243
    %v1613 = vunpack.c.l.b16 %v244
    %v1614 = vunpack.c.h.b16 %v244
    %v1615 = vunpack.c.l.b16 %v245
    %v1616 = vunpack.c.h.b16 %v245
    %v1617 = vunpack.c.l.b16 %v246
    %v1618 = vunpack.c.h.b16 %v246
    %v1619 = vunpack.c.l.b16 %v247
    %v1620 = vunpack.c.h.b16 %v247
    %v1621 = vunpack.c.l.b16 %v248
    %v1622 = vunpack.c.h.b16 %v248
    %v1623 = vunpack.c.l.b16 %v249
    %v1624 = vunpack.c.h.b16 %v249
    %v1625 = vunpack.c.l.b16 %v250
    %v1626 = vunpack.c.h.b16 %v250
    %v1627 = vunpack.c.l.b16 %v251
    %v1628 = vunpack.c.h.b16 %v251
    %v1629 = vunpack.c.l.b16 %v252
    %v1630 = vunpack.c.h.b16 %v252
    %v1631 = vunpack.c.l.b16 %v253
    %v1632 = vunpack.c.h.b16 %v253
    %v1633 = vunpack.c.l.b16 %v254
    %v1634 = vunpack.c.h.b16 %v254
    %v1635 = vunpack.c.l.b16 %v255
    %v1636 = vunpack.c.h.b16 %v255
    %v1637 = vunpack.c.l.b16 %v256
    %v1638 = vunpack.c.h.b16 %v256
    %v1639 = vunpack.c.l.b16 %v257
    %v1640 = vunpack.c.h.b16 %v257
    %v1641 = vunpack.c.l.b16 %v258
    %v1642 = vunpack.c.h.b16 %v258
    %v1643 = vunpack.c.l.b16 %v259
    %v1644 = vunpack.c.h.b16 %v259
    %v1645 = vunpack.c.l.b16 %v260
    %v1646 = vunpack.c.h.b16 %v260
    %v1647 = vunpack.c.l.b16 %v261
    %v1648 = vunpack.c.h.b16 %v261
    %v1649 = vunpack.c.l.b16 %v262
    %v1650 = vunpack.c.h.b16 %v262
    %v1651 = vunpack.c.l.b16 %v263
    %v1652 = vunpack.c.h.b16 %v263
    %v1653 = vunpack.c.l.b16 %v264
    %v1654 = vunpack.c.h.b16 %v264
    %v1655 = vunpack.c.l.b16 %v265
    %v1656 = vunpack.c.h.b16 %v265
    %v1657 = vunpack.c.l.b16 %v266
    %v1658 = vunpack.c.h.b16 %v266
    %v1659 = vunpack.c.l.b16 %v267
    %v1660 = vunpack.c.h.b16 %v267
    %v1661 = vunpack.c.l.b16 %v268
    %v1662 = vunpack.c.h.b16 %v268
    %v1663 = vunpack.c.l.b16 %v269
    %v1664 = vunpack.c.h.b16 %v269
    %v1665 = vunpack.c.l.b16 %v270
    %v1666 = vunpack.c.h.b16 %v270
    %v1667 = vunpack.c.l.b16 %v271
    %v1668 = vunpack.c.h.b16 %v271
    %v1669 = vunpack.c.l.b16 %v272
    %v1670 = vunpack.c.h.b16 %v272
    %v1671 = vunpack.c.l.b16 %v273
    %v1672 = vunpack.c.h.b16 %v273
    %v1673 = vunpack.c.l.b16 %v274
    %v1674 = vunpack.c.h.b16 %v274
    %v1675 = vunpack.c.l.b16 %v275
    %v1676 = vunpack.c.h.b16 %v275
    %v1677 = vunpack.c.l.b16 %v276
    %v1678 = vunpack.c.h.b16 %v276
    %v1679 = vunpack.c.l.b16 %v277
    %v1680 = vunpack.c.h.b16 %v277
    %v1681 = vunpack.c.l.b16 %v278
    %v1682 = vunpack.c.h.b16 %v278
    %v1683 = vunpack.c.l.b16 %v279
    %v1684 = vunpack.c.h.b16 %v279
    %v1685 = vunpack.c.l.b16 %v280
    %v1686 = vunpack.c.h.b16 %v280
    %v1687 = vunpack.c.l.b16 %v281
    %v1688 = vunpack.c.h.b16 %v281
    %v1689 = vunpack.c.l.b16 %v282
    %v1690 = vunpack.c.h.b16 %v282
    %v1691 = vunpack.c.l.b16 %v283
    %v1692 = vunpack.c.h.b16 %v283
    %v1693 = vunpack.c.l.b16 %v284
    %v1694 = vunpack.c.h.b16 %v284
    %v1695 = vunpack.c.l.b16 %v285
    %v1696 = vunpack.c.h.b16 %v285
    %v1697 = vunpack.c.l.b16 %v286
    %v1698 = vunpack.c.h.b16 %v286
    %v1699 = vunpack.c.l.b16 %v287
    %v1700 = vunpack.c.h.b16 %v287
    %v1701 = vunpack.c.l.b16 %v288
    %v1702 = vunpack.c.h.b16 %v288
    %v1703 = vunpack.c.l.b16 %v289
    %v1704 = vunpack.c.h.b16 %v289
    %v1705 = vunpack.c.l.b16 %v290
    %v1706 = vunpack.c.h.b16 %v290
    %v1707 = vunpack.c.l.b16 %v291
    %v1708 = vunpack.c.h.b16 %v291
    %v1709 = vunpack.c.l.b16 %v292
    %v1710 = vunpack.c.h.b16 %v292
    %v1711 = vunpack.c.l.b16 %v293
    %v1712 = vunpack.c.h.b16 %v293
    %v1713 = vunpack.c.l.b16 %v294
    %v1714 = vunpack.c.h.b16 %v294
    %v1715 = vunpack.c.l.b16 %v295
    %v1716 = vunpack.c.h.b16 %v295
    %v1717 = vunpack.c.l.b16 %v296
    %v1718 = vunpack.c.h.b16 %v296
    %v1719 = vunpack.c.l.b16 %v297
    %v1720 = vunpack.c.h.b16 %v297
    %v1721 = vunpack.c.l.b16 %v298
    %v1722 = vunpack.c.h.b16 %v298
    %v1723 = vunpack.c.l.b16 %v299
    %v1724 = vunpack.c.h.b16 %v299
    %v1725 = vunpack.c.l.b16 %v300
    %v1726 = vunpack.c.h.b16 %v300
    %v1727 = vunpack.c.l.b16 %v301
    %v1728 = vunpack.c.h.b16 %v301
    %v1729 = vunpack.c.l.b16 %v302
    %v1730 = vunpack.c.h.b16 %v302
    %v1731 = vunpack.c.l.b16 %v303
    %v1732 = vunpack.c.h.b16 %v303
    %v1733 = vunpack.c.l.b16 %v304
    %v1734 = vunpack.c.h.b16 %v304
    %v1735 = vunpack.c.l.b16 %v305
    %v1736 = vunpack.c.h.b16 %v305
    %v1737 = vunpack.c.l.b16 %v306
    %v1738 = vunpack.c.h.b16 %v306
    %v1739 = vunpack.c.l.b16 %v307
    %v1740 = vunpack.c.h.b16 %v307
    %v1741 = vunpack.c.l.b16 %v308
    %v1742 = vunpack.c.h.b16 %v308
    %v1743 = vunpack.c.l.b16 %v309
    %v1744 = vunpack.c.h.b16 %v309
    %v1745 = vunpack.c.l.b16 %v310
    %v1746 = vunpack.c.h.b16 %v310
    %v1747 = vunpack.c.l.b16 %v311
    %v1748 = vunpack.c.h.b16 %v311
    %v1749 = vunpack.c.l.b16 %v312
    %v1750 = vunpack.c.h.b16 %v312
    %v1751 = vunpack.c.l.b16 %v313
    %v1752 = vunpack.c.h.b16 %v313
    %v1753 = vunpack.c.l.b16 %v314
    %v1754 = vunpack.c.h.b16 %v314
    %v1755 = vunpack.c.l.b16 %v315
    %v1756 = vunpack.c.h.b16 %v315
    %v1757 = vunpack.c.l.b16 %v316
    %v1758 = vunpack.c.h.b16 %v316
    %v1759 = vunpack.c.l.b16 %v317
    %v1760 = vunpack.c.h.b16 %v317
    %v1761 = vunpack.c.l.b16 %v318
    %v1762 = vunpack.c.h.b16 %v318
    %v1763 = vunpack.c.l.b16 %v319
    %v1764 = vunpack.c.h.b16 %v319
    %v1765 = vunpack.c.l.b16 %v320
    %v1766 = vunpack.c.h.b16 %v320
    %v1767 = vunpack.c.l.b16 %v321
    %v1768 = vunpack.c.h.b16 %v321
    %v1769 = vunpack.c.l.b16 %v322
    %v1770 = vunpack.c.h.b16 %v322
    %v1771 = vunpack.c.l.b16 %v323
    %v1772 = vunpack.c.h.b16 %v323
    %v1773 = vunpack.c.l.b16 %v324
    %v1774 = vunpack.c.h.b16 %v324
    %v1775 = vunpack.c.l.b16 %v325
    %v1776 = vunpack.c.h.b16 %v325
    %v1777 = vunpack.c.l.b16 %v326
    %v1778 = vunpack.c.h.b16 %v326
    %v1779 = vunpack.c.l.b16 %v327
    %v1780 = vunpack.c.h.b16 %v327
    %v1781 = vunpack.c.l.b16 %v328
    %v1782 = vunpack.c.h.b16 %v328
    %v1783 = vunpack.c.l.b16 %v329
    %v1784 = vunpack.c.h.b16 %v329
    %v1785 = vunpack.c.l.b16 %v330
    %v1786 = vunpack.c.h.b16 %v330
    %v1787 = vunpack.c.l.b16 %v331
    %v1788 = vunpack.c.h.b16 %v331
    %v1789 = vunpack.c.l.b16 %v332
    %v1790 = vunpack.c.h.b16 %v332
    %v1791 = vunpack.c.l.b16 %v333
    %v1792 = vunpack.c.h.b16 %v333
    %v1793 = vunpack.c.l.b16 %v334
    %v1794 = vunpack.c.h.b16 %v334
    %v1795 = vunpack.c.l.b16 %v335
    %v1796 = vunpack.c.h.b16 %v335
    %v1797 = vunpack.c.l.b16 %v336
    %v1798 = vunpack.c.h.b16 %v336
    %v1799 = vunpack.c.l.b16 %v337
    %v1800 = vunpack.c.h.b16 %v337
    %v1801 = vunpack.c.l.b16 %v338
    %v1802 = vunpack.c.h.b16 %v338
    %v1803 = vunpack.c.l.b16 %v339
    %v1804 = vunpack.c.h.b16 %v339
    %v1805 = vunpack.c.l.b16 %v340
    %v1806 = vunpack.c.h.b16 %v340
    %v1807 = vunpack.c.l.b16 %v341
    %v1808 = vunpack.c.h.b16 %v341
    %v1809 = vunpack.c.l.b16 %v342
    %v1810 = vunpack.c.h.b16 %v342
    %v1811 = vunpack.c.l.b16 %v343
    %v1812 = vunpack.c.h.b16 %v343
    %v1813 = vunpack.c.l.b16 %v344
    %v1814 = vunpack.c.h.b16 %v344
    %v1815 = vunpack.c.l.b16 %v345
    %v1816 = vunpack.c.h.b16 %v345
    %v1817 = vunpack.c.l.b16 %v346
    %v1818 = vunpack.c.h.b16 %v346
    %v1819 = vunpack.c.l.b16 %v347
    %v1820 = vunpack.c.h.b16 %v347
    %v1821 = vunpack.c.l.b16 %v348
    %v1822 = vunpack.c.h.b16 %v348
    %v1823 = vunpack.c.l.b16 %v349
    %v1824 = vunpack.c.h.b16 %v349
    %v1825 = vunpack.c.l.b16 %v350
    %v1826 = vunpack.c.h.b16 %v350
    %v1827 = vunpack.c.l.b16 %v351
    %v1828 = vunpack.c.h.b16 %v351
    %v1829 = vunpack.c.l.b16 %v352
    %v1830 = vunpack.c.h.b16 %v352
    %v1831 = vunpack.c.l.b16 %v353
    %v1832 = vunpack.c.h.b16 %v353
    %v1833 = vunpack.c.l.b16 %v354
    %v1834 = vunpack.c.h.b16 %v354
    %v1835 = vunpack.c.l.b16 %v355
    %v1836 = vunpack.c.h.b16 %v355
    %v1837 = vunpack.c.l.b16 %v356
    %v1838 = vunpack.c.h.b16 %v356
    %v1839 = vunpack.c.l.b16 %v357
    %v1840 = vunpack.c.h.b16 %v357
    %v1841 = vunpack.c.l.b16 %v358
    %v1842 = vunpack.c.h.b16 %v358
    %v1843 = vunpack.c.l.b16 %v359
    %v1844 = vunpack.c.h.b16 %v359
    %v1845 = vunpack.c.l.b16 %v360
    %v1846 = vunpack.c.h.b16 %v360
    %v1847 = vunpack.c.l.b16 %v361
    %v1848 = vunpack.c.h.b16 %v361
    %v1849 = vunpack.c.l.b16 %v362
    %v1850 = vunpack.c.h.b16 %v362
    %v1851 = vunpack.c.l.b16 %v363
    %v1852 = vunpack.c.h.b16 %v363
    %v1853 = vunpack.c.l.b16 %v364
    %v1854 = vunpack.c.h.b16 %v364
    %v1855 = vunpack.c.l.b16 %v365
    %v1856 = vunpack.c.h.b16 %v365
    %v1857 = vunpack.c.l.b16 %v366
    %v1858 = vunpack.c.h.b16 %v366
    %v1859 = vunpack.c.l.b16 %v367
    %v1860 = vunpack.c.h.b16 %v367
    %v1861 = vunpack.c.l.b16 %v368
    %v1862 = vunpack.c.h.b16 %v368
    %v1863 = vunpack.c.l.b16 %v369
    %v1864 = vunpack.c.h.b16 %v369
    %v1865 = vunpack.c.l.b16 %v370
    %v1866 = vunpack.c.h.b16 %v370
    %v1867 = vunpack.c.l.b16 %v371
    %v1868 = vunpack.c.h.b16 %v371
    %v1869 = vunpack.c.l.b16 %v372
    %v1870 = vunpack.c.h.b16 %v372
    %v1871 = vunpack.c.l.b16 %v373
    %v1872 = vunpack.c.h.b16 %v373
    %v1873 = vunpack.c.l.b16 %v374
    %v1874 = vunpack.c.h.b16 %v374
    %v1875 = vunpack.c.l.b16 %v375
    %v1876 = vunpack.c.h.b16 %v375
    %v1877 = vunpack.c.l.b16 %v376
    %v1878 = vunpack.c.h.b16 %v376
    %v1879 = vunpack.c.l.b16 %v377
    %v1880 = vunpack.c.h.b16 %v377
    %v1881 = vunpack.c.l.b16 %v378
    %v1882 = vunpack.c.h.b16 %v378
    %v1883 = vunpack.c.l.b16 %v379
    %v1884 = vunpack.c.h.b16 %v379
    %v1885 = vunpack.c.l.b16 %v380
    %v1886 = vunpack.c.h.b16 %v380
    %v1887 = vunpack.c.l.b16 %v381
    %v1888 = vunpack.c.h.b16 %v381
    %v1889 = vunpack.c.l.b16 %v382
    %v1890 = vunpack.c.h.b16 %v382
    %v1891 = vunpack.c.l.b16 %v383
    %v1892 = vunpack.c.h.b16 %v383
    %v1893 = vunpack.c.l.b16 %v384
    %v1894 = vunpack.c.h.b16 %v384
    %v1895 = vunpack.c.l.b16 %v385
    %v1896 = vunpack.c.h.b16 %v385
    %v1897 = vunpack.c.l.b16 %v386
    %v1898 = vunpack.c.h.b16 %v386
    %v1899 = vunpack.c.l.b16 %v387
    %v1900 = vunpack.c.h.b16 %v387
    %v1901 = vunpack.c.l.b16 %v388
    %v1902 = vunpack.c.h.b16 %v388
    %v1903 = vunpack.c.l.b16 %v389
    %v1904 = vunpack.c.h.b16 %v389
    %v1905 = vunpack.c.l.b16 %v390
    %v1906 = vunpack.c.h.b16 %v390
    %v1907 = vunpack.c.l.b16 %v391
    %v1908 = vunpack.c.h.b16 %v391
    %v1909 = vunpack.c.l.b16 %v392
    %v1910 = vunpack.c.h.b16 %v392
    %v1911 = vunpack.c.l.b16 %v393
    %v1912 = vunpack.c.h.b16 %v393
    %v1913 = vunpack.c.l.b16 %v394
    %v1914 = vunpack.c.h.b16 %v394
    %v1915 = vunpack.c.l.b16 %v395
    %v1916 = vunpack.c.h.b16 %v395
    %v1917 = vunpack.c.l.b16 %v396
    %v1918 = vunpack.c.h.b16 %v396
    %v1919 = vunpack.c.l.b16 %v397
    %v1920 = vunpack.c.h.b16 %v397
    %v1921 = vunpack.c.l.b16 %v398
    %v1922 = vunpack.c.h.b16 %v398
    %v1923 = vunpack.c.l.b16 %v399
    %v1924 = vunpack.c.h.b16 %v399
    %v1925 = vunpack.c.l.b16 %v400
    %v1926 = vunpack.c.h.b16 %v400
    %v1927 = vunpack.c.l.b16 %v401
    %v1928 = vunpack.c.h.b16 %v401
    %v1929 = vunpack.c.l.b16 %v402
    %v1930 = vunpack.c.h.b16 %v402
    %v1931 = vunpack.c.l.b16 %v403
    %v1932 = vunpack.c.h.b16 %v403
    %v1933 = vunpack.c.l.b16 %v404
    %v1934 = vunpack.c.h.b16 %v404
    %v1935 = vunpack.c.l.b16 %v405
    %v1936 = vunpack.c.h.b16 %v405
    %v1937 = vunpack.c.l.b16 %v406
    %v1938 = vunpack.c.h.b16 %v406
    %v1939 = vunpack.c.l.b16 %v407
    %v1940 = vunpack.c.h.b16 %v407
    %v1941 = vunpack.c.l.b16 %v408
    %v1942 = vunpack.c.h.b16 %v408
    %v1943 = vunpack.c.l.b16 %v409
    %v1944 = vunpack.c.h.b16 %v409
    %v1945 = vunpack.c.l.b16 %v410
    %v1946 = vunpack.c.h.b16 %v410
    %v1947 = vunpack.c.l.b16 %v411
    %v1948 = vunpack.c.h.b16 %v411
    %v1949 = vunpack.c.l.b16 %v412
    %v1950 = vunpack.c.h.b16 %v412
    %v1951 = vunpack.c.l.b16 %v413
    %v1952 = vunpack.c.h.b16 %v413
    %v1953 = vunpack.c.l.b16 %v414
    %v1954 = vunpack.c.h.b16 %v414
    %v1955 = vunpack.c.l.b16 %v415
    %v1956 = vunpack.c.h.b16 %v415
    %v1957 = vunpack.c.l.b16 %v416
    %v1958 = vunpack.c.h.b16 %v416
    %v1959 = vunpack.c.l.b16 %v417
    %v1960 = vunpack.c.h.b16 %v417
    %v1961 = vunpack.c.l.b16 %v418
    %v1962 = vunpack.c.h.b16 %v418
    %v1963 = vunpack.c.l.b16 %v419
    %v1964 = vunpack.c.h.b16 %v419
    %v1965 = vunpack.c.l.b16 %v420
    %v1966 = vunpack.c.h.b16 %v420
    %v1967 = vunpack.c.l.b16 %v421
    %v1968 = vunpack.c.h.b16 %v421
    %v1969 = vunpack.c.l.b16 %v422
    %v1970 = vunpack.c.h.b16 %v422
    %v1971 = vunpack.c.l.b16 %v423
    %v1972 = vunpack.c.h.b16 %v423
    %v1973 = vunpack.c.l.b16 %v424
    %v1974 = vunpack.c.h.b16 %v424
    %v1975 = vunpack.c.l.b16 %v425
    %v1976 = vunpack.c.h.b16 %v425
    %v1977 = vunpack.c.l.b16 %v426
    %v1978 = vunpack.c.h.b16 %v426
    %v1979 = vunpack.c.l.b16 %v427
    %v1980 = vunpack.c.h.b16 %v427
    %v1981 = vunpack.c.l.b16 %v428
    %v1982 = vunpack.c.h.b16 %v428
    %v1983 = vunpack.c.l.b16 %v429
    %v1984 = vunpack.c.h.b16 %v429
    %v1985 = vunpack.c.l.b16 %v430
    %v1986 = vunpack.c.h.b16 %v430
    %v1987 = vunpack.c.l.b16 %v431
    %v1988 = vunpack.c.h.b16 %v431
    %v1989 = vunpack.c.l.b16 %v432
    %v1990 = vunpack.c.h.b16 %v432
    %v1991 = vunpack.c.l.b16 %v433
    %v1992 = vunpack.c.h.b16 %v433
    %v1993 = vunpack.c.l.b16 %v434
    %v1994 = vunpack.c.h.b16 %v434
    %v1995 = vunpack.c.l.b16 %v435
    %v1996 = vunpack.c.h.b16 %v435
    %v1997 = vunpack.c.l.b16 %v436
    %v1998 = vunpack.c.h.b16 %v436
    %v1999 = vunpack.c.l.b16 %v437
    %v2000 = vunpack.c.h.b16 %v437
    %v2001 = vunpack.c.l.b16 %v438
    %v2002 = vunpack.c.h.b16 %v438
    %v2003 = vunpack.c.l.b16 %v439
    %v2004 = vunpack.c.h.b16 %v439
    %v2005 = vunpack.c.l.b16 %v440
    %v2006 = vunpack.c.h.b16 %v440
    %v2007 = vunpack.c.l.b16 %v441
    %v2008 = vunpack.c.h.b16 %v441
    %v2009 = vunpack.c.l.b16 %v442
    %v2010 = vunpack.c.h.b16 %v442
    %v2011 = vunpack.c.l.b16 %v443
    %v2012 = vunpack.c.h.b16 %v443
    %v2013 = vunpack.c.l.b16 %v444
    %v2014 = vunpack.c.h.b16 %v444
    %v2015 = vunpack.c.l.b16 %v445
    %v2016 = vunpack.c.h.b16 %v445
    %v2017 = vunpack.c.l.b16 %v446
    %v2018 = vunpack.c.h.b16 %v446
    %v2019 = vunpack.c.l.b16 %v447
    %v2020 = vunpack.c.h.b16 %v447
    %v2021 = vunpack.c.l.b16 %v448
    %v2022 = vunpack.c.h.b16 %v448
    %v2023 = vunpack.c.l.b16 %v449
    %v2024 = vunpack.c.h.b16 %v449
    %v2025 = vunpack.c.l.b16 %v450
    %v2026 = vunpack.c.h.b16 %v450
    %v2027 = vunpack.c.l.b16 %v451
    %v2028 = vunpack.c.h.b16 %v451
    %v2029 = vunpack.c.l.b16 %v452
    %v2030 = vunpack.c.h.b16 %v452
    %v2031 = vunpack.c.l.b16 %v453
    %v2032 = vunpack.c.h.b16 %v453
    %v2033 = vunpack.c.l.b16 %v454
    %v2034 = vunpack.c.h.b16 %v454
    %v2035 = vunpack.c.l.b16 %v455
    %v2036 = vunpack.c.h.b16 %v455
    %v2037 = vunpack.c.l.b16 %v456
    %v2038 = vunpack.c.h.b16 %v456
    %v2039 = vunpack.c.l.b16 %v457
    %v2040 = vunpack.c.h.b16 %v457
    %v2041 = vunpack.c.l.b16 %v458
    %v2042 = vunpack.c.h.b16 %v458
    %v2043 = vunpack.c.l.b16 %v459
    %v2044 = vunpack.c.h.b16 %v459
    %v2045 = vunpack.c.l.b16 %v460
    %v2046 = vunpack.c.h.b16 %v460
    %v2047 = vunpack.c.l.b16 %v461
    %v2048 = vunpack.c.h.b16 %v461
    %v2049 = vunpack.c.l.b16 %v462
    %v2050 = vunpack.c.h.b16 %v462
    %v2051 = vunpack.c.l.b16 %v463
    %v2052 = vunpack.c.h.b16 %v463
    %v2053 = vunpack.c.l.b16 %v464
    %v2054 = vunpack.c.h.b16 %v464
    %v2055 = vunpack.c.l.b16 %v465
    %v2056 = vunpack.c.h.b16 %v465
    %v2057 = vunpack.c.l.b16 %v466
    %v2058 = vunpack.c.h.b16 %v466
    %v2059 = vunpack.c.l.b16 %v467
    %v2060 = vunpack.c.h.b16 %v467
    %v2061 = vunpack.c.l.b16 %v468
    %v2062 = vunpack.c.h.b16 %v468
    %v2063 = vunpack.c.l.b16 %v469
    %v2064 = vunpack.c.h.b16 %v469
    %v2065 = vunpack.c.l.b16 %v470
    %v2066 = vunpack.c.h.b16 %v470
    %v2067 = vunpack.c.l.b16 %v471
    %v2068 = vunpack.c.h.b16 %v471
    %v2069 = vunpack.c.l.b16 %v472
    %v2070 = vunpack.c.h.b16 %v472
    %v2071 = vunpack.c.l.b16 %v473
    %v2072 = vunpack.c.h.b16 %v473
    %v2073 = vunpack.c.l.b16 %v474
    %v2074 = vunpack.c.h.b16 %v474
    %v2075 = vunpack.c.l.b16 %v475
    %v2076 = vunpack.c.h.b16 %v475
    %v2077 = vunpack.c.l.b16 %v476
    %v2078 = vunpack.c.h.b16 %v476
    %v2079 = vunpack.c.l.b16 %v477
    %v2080 = vunpack.c.h.b16 %v477
    %v2081 = vunpack.c.l.b16 %v478
    %v2082 = vunpack.c.h.b16 %v478
    %v2083 = vunpack.c.l.b16 %v479
    %v2084 = vunpack.c.h.b16 %v479
    %v2085 = vunpack.c.l.b16 %v480
    %v2086 = vunpack.c.h.b16 %v480
    %v2087 = vunpack.c.l.b16 %v481
    %v2088 = vunpack.c.h.b16 %v481
    %v2089 = vunpack.c.l.b16 %v482
    %v2090 = vunpack.c.h.b16 %v482
    %v2091 = vunpack.c.l.b16 %v483
    %v2092 = vunpack.c.h.b16 %v483
    %v2093 = vunpack.c.l.b16 %v484
    %v2094 = vunpack.c.h.b16 %v484
    %v2095 = vunpack.c.l.b16 %v485
    %v2096 = vunpack.c.h.b16 %v485
    %v2097 = vunpack.c.l.b16 %v486
    %v2098 = vunpack.c.h.b16 %v486
    %v2099 = vunpack.c.l.b16 %v487
    %v2100 = vunpack.c.h.b16 %v487
    %v2101 = vunpack.c.l.b16 %v488
    %v2102 = vunpack.c.h.b16 %v488
    %v2103 = vunpack.c.l.b16 %v489
    %v2104 = vunpack.c.h.b16 %v489
    %v2105 = vunpack.c.l.b16 %v490
    %v2106 = vunpack.c.h.b16 %v490
    %v2107 = vunpack.c.l.b16 %v491
    %v2108 = vunpack.c.h.b16 %v491
    %v2109 = vunpack.c.l.b16 %v492
    %v2110 = vunpack.c.h.b16 %v492
    %v2111 = vunpack.c.l.b16 %v493
    %v2112 = vunpack.c.h.b16 %v493
    %v2113 = vunpack.c.l.b16 %v494
    %v2114 = vunpack.c.h.b16 %v494
    %v2115 = vunpack.c.l.b16 %v495
    %v2116 = vunpack.c.h.b16 %v495
    %v2117 = vunpack.c.l.b16 %v496
    %v2118 = vunpack.c.h.b16 %v496
    %v2119 = vunpack.c.l.b16 %v497
    %v2120 = vunpack.c.h.b16 %v497
    %v2121 = vunpack.c.l.b16 %v498
    %v2122 = vunpack.c.h.b16 %v498
    %v2123 = vunpack.c.l.b16 %v499
    %v2124 = vunpack.c.h.b16 %v499
    %v2125 = vunpack.c.l.b16 %v500
    %v2126 = vunpack.c.h.b16 %v500
    %v2127 = vunpack.c.l.b16 %v501
    %v2128 = vunpack.c.h.b16 %v501
    %v2129 = vunpack.c.l.b16 %v502
    %v2130 = vunpack.c.h.b16 %v502
    %v2131 = vunpack.c.l.b16 %v503
    %v2132 = vunpack.c.h.b16 %v503
    %v2133 = vunpack.c.l.b16 %v504
    %v2134 = vunpack.c.h.b16 %v504
    %v2135 = vunpack.c.l.b16 %v505
    %v2136 = vunpack.c.h.b16 %v505
    %v2137 = vunpack.c.l.b16 %v506
    %v2138 = vunpack.c.h.b16 %v506
    %v2139 = vunpack.c.l.b16 %v507
    %v2140 = vunpack.c.h.b16 %v507
    %v2141 = vunpack.c.l.b16 %v508
    %v2142 = vunpack.c.h.b16 %v508
    %v2143 = vunpack.c.l.b16 %v509
    %v2144 = vunpack.c.h.b16 %v509
    %v2145 = vunpack.c.l.b16 %v510
    %v2146 = vunpack.c.h.b16 %v510
    %v2147 = vunpack.c.l.b16 %v511
    %v2148 = vunpack.c.h.b16 %v511
    %v2149 = vunpack.c.l.b16 %v512
    %v2150 = vunpack.c.h.b16 %v512
    %v2151 = vunpack.c.l.b16 %v513
    %v2152 = vunpack.c.h.b16 %v513
    %v2153 = vunpack.c.l.b16 %v514
    %v2154 = vunpack.c.h.b16 %v514
    %v2155 = vunpack.c.l.b16 %v515
    %v2156 = vunpack.c.h.b16 %v515
    %v2157 = vunpack.c.l.b16 %v516
    %v2158 = vunpack.c.h.b16 %v516
    %v2159 = vunpack.c.l.b16 %v517
    %v2160 = vunpack.c.h.b16 %v517
    %v2161 = vunpack.c.l.b16 %v518
    %v2162 = vunpack.c.h.b16 %v518
    %v2163 = vunpack.c.l.b16 %v519
    %v2164 = vunpack.c.h.b16 %v519
    %v2165 = vunpack.c.l.b16 %v520
    %v2166 = vunpack.c.h.b16 %v520
    %v2167 = vunpack.c.l.b16 %v521
    %v2168 = vunpack.c.h.b16 %v521
    %v2169 = vunpack.c.l.b16 %v522
    %v2170 = vunpack.c.h.b16 %v522
    %v2171 = vunpack.c.l.b16 %v523
    %v2172 = vunpack.c.h.b16 %v523
    %v2173 = vunpack.c.l.b16 %v524
    %v2174 = vunpack.c.h.b16 %v524
    %v2175 = vunpack.c.l.b16 %v525
    %v2176 = vunpack.c.h.b16 %v525
    %v2177 = vunpack.c.l.b16 %v526
    %v2178 = vunpack.c.h.b16 %v526
    %v2179 = vunpack.c.l.b16 %v527
    %v2180 = vunpack.c.h.b16 %v527
    %v2181 = vunpack.c.l.b16 %v528
    %v2182 = vunpack.c.h.b16 %v528
    %v2183 = vunpack.c.l.b16 %v529
    %v2184 = vunpack.c.h.b16 %v529
    %v2185 = vunpack.c.l.b16 %v530
    %v2186 = vunpack.c.h.b16 %v530
    %v2187 = vunpack.c.l.b16 %v531
    %v2188 = vunpack.c.h.b16 %v531
    %v2189 = vunpack.c.l.b16 %v532
    %v2190 = vunpack.c.h.b16 %v532
    %v2191 = vunpack.c.l.b16 %v533
    %v2192 = vunpack.c.h.b16 %v533
    %v2193 = vunpack.c.l.b16 %v534
    %v2194 = vunpack.c.h.b16 %v534
    %v2195 = vunpack.c.l.b16 %v535
    %v2196 = vunpack.c.h.b16 %v535
    %v2197 = vunpack.c.l.b16 %v536
    %v2198 = vunpack.c.h.b16 %v536
    %v2199 = vunpack.c.l.b16 %v537
    %v2200 = vunpack.c.h.b16 %v537
    %v2201 = vunpack.c.l.b16 %v538
    %v2202 = vunpack.c.h.b16 %v538
    %v2203 = vunpack.c.l.b16 %v539
    %v2204 = vunpack.c.h.b16 %v539
    %v2205 = vunpack.c.l.b16 %v540
    %v2206 = vunpack.c.h.b16 %v540
    %v2207 = vunpack.c.l.b16 %v541
    %v2208 = vunpack.c.h.b16 %v541
    %v2209 = vunpack.c.l.b16 %v542
    %v2210 = vunpack.c.h.b16 %v542
    %v2211 = vunpack.c.l.b16 %v543
    %v2212 = vunpack.c.h.b16 %v543
    %v2213 = vunpack.c.l.b16 %v544
    %v2214 = vunpack.c.h.b16 %v544
    %v2215 = vunpack.c.l.b16 %v545
    %v2216 = vunpack.c.h.b16 %v545
    %v2217 = vunpack.c.l.b16 %v546
    %v2218 = vunpack.c.h.b16 %v546
    %v2219 = vunpack.c.l.b16 %v547
    %v2220 = vunpack.c.h.b16 %v547
    %v2221 = vunpack.c.l.b16 %v548
    %v2222 = vunpack.c.h.b16 %v548
    %v2223 = vpack.c.b16 %v1203, %v1199
    %v2224 = vpack.c.b16 %v1204, %v1200
    %v2225 = vpack.c.b16 %v1205, %v1201
    %v2226 = vpack.c.b16 %v1206, %v1202
    %v2227 = vpack.c.b16 %v1211, %v1207
    %v2228 = vpack.c.b16 %v1212, %v1208
    %v2229 = vpack.c.b16 %v1213, %v1209
    %v2230 = vpack.c.b16 %v1214, %v1210
    %v2231 = vpack.c.b16 %v1219, %v1215
    %v2232 = vpack.c.b16 %v1220, %v1216
    %v2233 = vpack.c.b16 %v1221, %v1217
    %v2234 = vpack.c.b16 %v1222, %v1218
    %v2235 = vpack.c.b16 %v1227, %v1223
    %v2236 = vpack.c.b16 %v1228, %v1224
    %v2237 = vpack.c.b16 %v1229, %v1225
    %v2238 = vpack.c.b16 %v1230, %v1226
    %v2239 = vpack.c.b16 %v1235, %v1231
    %v2240 = vpack.c.b16 %v1236, %v1232
    %v2241 = vpack.c.b16 %v1237, %v1233
    %v2242 = vpack.c.b16 %v1238, %v1234
    %v2243 = vpack.c.b16 %v1243, %v1239
    %v2244 = vpack.c.b16 %v1244, %v1240
    %v2245 = vpack.c.b16 %v1245, %v1241
    %v2246 = vpack.c.b16 %v1246, %v1242
    %v2247 = vpack.c.b16 %v1251, %v1247
    %v2248 = vpack.c.b16 %v1252, %v1248
    %v2249 = vpack.c.b16 %v1253, %v1249
    %v2250 = vpack.c.b16 %v1254, %v1250
    %v2251 = vpack.c.b16 %v1259, %v1255
    %v2252 = vpack.c.b16 %v1260, %v1256
    %v2253 = vpack.c.b16 %v1261, %v1257
    %v2254 = vpack.c.b16 %v1262, %v1258
    %v2255 = vpack.c.b16 %v1267, %v1263
    %v2256 = vpack.c.b16 %v1268, %v1264
    %v2257 = vpack.c.b16 %v1269, %v1265
    %v2258 = vpack.c.b16 %v1270, %v1266
    %v2259 = vpack.c.b16 %v1275, %v1271
    %v2260 = vpack.c.b16 %v1276, %v1272
    %v2261 = vpack.c.b16 %v1277, %v1273
    %v2262 = vpack.c.b16 %v1278, %v1274
    %v2263 = vpack.c.b16 %v1283, %v1279
    %v2264 = vpack.c.b16 %v1284, %v1280
    %v2265 = vpack.c.b16 %v1285, %v1281
    %v2266 = vpack.c.b16 %v1286, %v1282
    %v2267 = vpack.c.b16 %v1291, %v1287
    %v2268 = vpack.c.b16 %v1292, %v1288
    %v2269 = vpack.c.b16 %v1293, %v1289
    %v2270 = vpack.c.b16 %v1294, %v1290
    %v2271 = vpack.c.b16 %v1299, %v1295
    %v2272 = vpack.c.b16 %v1300, %v1296
    %v2273 = vpack.c.b16 %v1301, %v1297
    %v2274 = vpack.c.b16 %v1302, %v1298
    %v2275 = vpack.c.b16 %v1307, %v1303
    %v2276 = vpack.c.b16 %v1308, %v1304
    %v2277 = vpack.c.b16 %v1309, %v1305
    %v2278 = vpack.c.b16 %v1310, %v1306
    %v2279 = vpack.c.b16 %v1315, %v1311
    %v2280 = vpack.c.b16 %v1316, %v1312
    %v2281 = vpack.c.b16 %v1317, %v1313
    %v2282 = vpack.c.b16 %v1318, %v1314
    %v2283 = vpack.c.b16 %v1323, %v1319
    %v2284 = vpack.c.b16 %v1324, %v1320
    %v2285 = vpack.c.b16 %v1325, %v1321
    %v2286 = vpack.c.b16 %v1326, %v1322
    %v2287 = vpack.c.b16 %v1331, %v1327
    %v2288 = vpack.c.b16 %v1332, %v1328
    %v2289 = vpack.c.b16 %v1333, %v1329
    %v2290 = vpack.c.b16 %v1334, %v1330
    %v2291 = vpack.c.b16 %v1339, %v1335
    %v2292 = vpack.c.b16 %v1340, %v1336
    %v2293 = vpack.c.b16 %v1341, %v1337
    %v2294 = vpack.c.b16 %v1342, %v1338
    %v2295 = vpack.c.b16 %v1347, %v1343
    %v2296 = vpack.c.b16 %v1348, %v1344
    %v2297 = vpack.c.b16 %v1349, %v1345
    %v2298 = vpack.c.b16 %v1350, %v1346
    %v2299 = vpack.c.b16 %v1355, %v1351
    %v2300 = vpack.c.b16 %v1356, %v1352
    %v2301 = vpack.c.b16 %v1357, %v1353
    %v2302 = vpack.c.b16 %v1358, %v1354
    %v2303 = vpack.c.b16 %v1363, %v1359
    %v2304 = vpack.c.b16 %v1364, %v1360
    %v2305 = vpack.c.b16 %v1365, %v1361
    %v2306 = vpack.c.b16 %v1366, %v1362
    %v2307 = vpack.c.b16 %v1371, %v1367
    %v2308 = vpack.c.b16 %v1372, %v1368
    %v2309 = vpack.c.b16 %v1373, %v1369
    %v2310 = vpack.c.b16 %v1374, %v1370
    %v2311 = vpack.c.b16 %v1379, %v1375
    %v2312 = vpack.c.b16 %v1380, %v1376
    %v2313 = vpack.c.b16 %v1381, %v1377
    %v2314 = vpack.c.b16 %v1382, %v1378
    %v2315 = vpack.c.b16 %v1387, %v1383
    %v2316 = vpack.c.b16 %v1388, %v1384
    %v2317 = vpack.c.b16 %v1389, %v1385
    %v2318 = vpack.c.b16 %v1390, %v1386
    %v2319 = vpack.c.b16 %v1395, %v1391
    %v2320 = vpack.c.b16 %v1396, %v1392
    %v2321 = vpack.c.b16 %v1397, %v1393
    %v2322 = vpack.c.b16 %v1398, %v1394
    %v2323 = vpack.c.b16 %v1403, %v1399
    %v2324 = vpack.c.b16 %v1404, %v1400
    %v2325 = vpack.c.b16 %v1405, %v1401
    %v2326 = vpack.c.b16 %v1406, %v1402
    %v2327 = vpack.c.b16 %v1411, %v1407
    %v2328 = vpack.c.b16 %v1412, %v1408
    %v2329 = vpack.c.b16 %v1413, %v1409
    %v2330 = vpack.c.b16 %v1414, %v1410
    %v2331 = vpack.c.b16 %v1419, %v1415
    %v2332 = vpack.c.b16 %v1420, %v1416
    %v2333 = vpack.c.b16 %v1421, %v1417
    %v2334 = vpack.c.b16 %v1422, %v1418
    %v2335 = vpack.c.b16 %v1427, %v1423
    %v2336 = vpack.c.b16 %v1428, %v1424
    %v2337 = vpack.c.b16 %v1429, %v1425
    %v2338 = vpack.c.b16 %v1430, %v1426
    %v2339 = vpack.c.b16 %v1435, %v1431
    %v2340 = vpack.c.b16 %v1436, %v1432
    %v2341 = vpack.c.b16 %v1437, %v1433
    %v2342 = vpack.c.b16 %v1438, %v1434
    %v2343 = vpack.c.b16 %v1443, %v1439
    %v2344 = vpack.c.b16 %v1444, %v1440
    %v2345 = vpack.c.b16 %v1445, %v1441
    %v2346 = vpack.c.b16 %v1446, %v1442
    %v2347 = vpack.c.b16 %v1451, %v1447
    %v2348 = vpack.c.b16 %v1452, %v1448
    %v2349 = vpack.c.b16 %v1453, %v1449
    %v2350 = vpack.c.b16 %v1454, %v1450
    %v2351 = vpack.c.b16 %v1459, %v1455
    %v2352 = vpack.c.b16 %v1460, %v1456
    %v2353 = vpack.c.b16 %v1461, %v1457
    %v2354 = vpack.c.b16 %v1462, %v1458
    %v2355 = vpack.c.b16 %v1467, %v1463
    %v2356 = vpack.c.b16 %v1468, %v1464
    %v2357 = vpack.c.b16 %v1469, %v1465
    %v2358 = vpack.c.b16 %v1470, %v1466
    %v2359 = vpack.c.b16 %v1475, %v1471
    %v2360 = vpack.c.b16 %v1476, %v1472
    %v2361 = vpack.c.b16 %v1477, %v1473
    %v2362 = vpack.c.b16 %v1478, %v1474
    %v2363 = vpack.c.b16 %v1483, %v1479
    %v2364 = vpack.c.b16 %v1484, %v1480
    %v2365 = vpack.c.b16 %v1485, %v1481
    %v2366 = vpack.c.b16 %v1486, %v1482
    %v2367 = vpack.c.b16 %v1491, %v1487
    %v2368 = vpack.c.b16 %v1492, %v1488
    %v2369 = vpack.c.b16 %v1493, %v1489
    %v2370 = vpack.c.b16 %v1494, %v1490
    %v2371 = vpack.c.b16 %v1499, %v1495
    %v2372 = vpack.c.b16 %v1500, %v1496
    %v2373 = vpack.c.b16 %v1501, %v1497
    %v2374 = vpack.c.b16 %v1502, %v1498
    %v2375 = vpack.c.b16 %v1507, %v1503
    %v2376 = vpack.c.b16 %v1508, %v1504
    %v2377 = vpack.c.b16 %v1509, %v1505
    %v2378 = vpack.c.b16 %v1510, %v1506
    %v2379 = vpack.c.b16 %v1515, %v1511
    %v2380 = vpack.c.b16 %v1516, %v1512
    %v2381 = vpack.c.b16 %v1517, %v1513
    %v2382 = vpack.c.b16 %v1518, %v1514
    %v2383 = vpack.c.b16 %v1523, %v1519
    %v2384 = vpack.c.b16 %v1524, %v1520
    %v2385 = vpack.c.b16 %v1525, %v1521
    %v2386 = vpack.c.b16 %v1526, %v1522
    %v2387 = vpack.c.b16 %v1531, %v1527
    %v2388 = vpack.c.b16 %v1532, %v1528
    %v2389 = vpack.c.b16 %v1533, %v1529
    %v2390 = vpack.c.b16 %v1534, %v1530
    %v2391 = vpack.c.b16 %v1539, %v1535
    %v2392 = vpack.c.b16 %v1540, %v1536
    %v2393 = vpack.c.b16 %v1541, %v1537
    %v2394 = vpack.c.b16 %v1542, %v1538
    %v2395 = vpack.c.b16 %v1547, %v1543
    %v2396 = vpack.c.b16 %v1548, %v1544
    %v2397 = vpack.c.b16 %v1549, %v1545
    %v2398 = vpack.c.b16 %v1550, %v1546
    %v2399 = vpack.c.b16 %v1555, %v1551
    %v2400 = vpack.c.b16 %v1556, %v1552
    %v2401 = vpack.c.b16 %v1557, %v1553
    %v2402 = vpack.c.b16 %v1558, %v1554
    %v2403 = vpack.c.b16 %v1563, %v1559
    %v2404 = vpack.c.b16 %v1564, %v1560
    %v2405 = vpack.c.b16 %v1565, %v1561
    %v2406 = vpack.c.b16 %v1566, %v1562
    %v2407 = vpack.c.b16 %v1571, %v1567
    %v2408 = vpack.c.b16 %v1572, %v1568
    %v2409 = vpack.c.b16 %v1573, %v1569
    %v2410 = vpack.c.b16 %v1574, %v1570
    %v2411 = vpack.c.b16 %v1579, %v1575
    %v2412 = vpack.c.b16 %v1580, %v1576
    %v2413 = vpack.c.b16 %v1581, %v1577
    %v2414 = vpack.c.b16 %v1582, %v1578
    %v2415 = vpack.c.b16 %v1587, %v1583
    %v2416 = vpack.c.b16 %v1588, %v1584
    %v2417 = vpack.c.b16 %v1589, %v1585
    %v2418 = vpack.c.b16 %v1590, %v1586
    %v2419 = vpack.c.b16 %v1595, %v1591
    %v2420 = vpack.c.b16 %v1596, %v1592
    %v2421 = vpack.c.b16 %v1597, %v1593
    %v2422 = vpack.c.b16 %v1598, %v1594
    %v2423 = vpack.c.b16 %v1603, %v1599
    %v2424 = vpack.c.b16 %v1604, %v1600
    %v2425 = vpack.c.b16 %v1605, %v1601
    %v2426 = vpack.c.b16 %v1606, %v1602
    %v2427 = vpack.c.b16 %v1611, %v1607
    %v2428 = vpack.c.b16 %v1612, %v1608
    %v2429 = vpack.c.b16 %v1613, %v1609
    %v2430 = vpack.c.b16 %v1614, %v1610
    %v2431 = vpack.c.b16 %v1619, %v1615
    %v2432 = vpack.c.b16 %v1620, %v1616
    %v2433 = vpack.c.b16 %v1621, %v1617
    %v2434 = vpack.c.b16 %v1622, %v1618
    %v2435 = vpack.c.b16 %v1627, %v1623
    %v2436 = vpack.c.b16 %v1628, %v1624
    %v2437 = vpack.c.b16 %v1629, %v1625
    %v2438 = vpack.c.b16 %v1630, %v1626
    %v2439 = vpack.c.b16 %v1635, %v1631
    %v2440 = vpack.c.b16 %v1636, %v1632
    %v2441 = vpack.c.b16 %v1637, %v1633
    %v2442 = vpack.c.b16 %v1638, %v1634
    %v2443 = vpack.c.b16 %v1643, %v1639
    %v2444 = vpack.c.b16 %v1644, %v1640
    %v2445 = vpack.c.b16 %v1645, %v1641
    %v2446 = vpack.c.b16 %v1646, %v1642
    %v2447 = vpack.c.b16 %v1651, %v1647
    %v2448 = vpack.c.b16 %v1652, %v1648
    %v2449 = vpack.c.b16 %v1653, %v1649
    %v2450 = vpack.c.b16 %v1654, %v1650
    %v2451 = vpack.c.b16 %v1659, %v1655
    %v2452 = vpack.c.b16 %v1660, %v1656
    %v2453 = vpack.c.b16 %v1661, %v1657
    %v2454 = vpack.c.b16 %v1662, %v1658
    %v2455 = vpack.c.b16 %v1667, %v1663
    %v2456 = vpack.c.b16 %v1668, %v1664
    %v2457 = vpack.c.b16 %v1669, %v1665
    %v2458 = vpack.c.b16 %v1670, %v1666
    %v2459 = vpack.c.b16 %v1675, %v1671
    %v2460 = vpack.c.b16 %v1676, %v1672
    %v2461 = vpack.c.b16 %v1677, %v1673
    %v2462 = vpack.c.b16 %v1678, %v1674
    %v2463 = vpack.c.b16 %v1683, %v1679
    %v2464 = vpack.c.b16 %v1684, %v1680
    %v2465 = vpack.c.b16 %v1685, %v1681
    %v2466 = vpack.c.b16 %v1686, %v1682
    %v2467 = vpack.c.b16 %v1691, %v1687
    %v2468 = vpack.c.b16 %v1692, %v1688
    %v2469 = vpack.c.b16 %v1693, %v1689
    %v2470 = vpack.c.b16 %v1694, %v1690
    %v2471 = vpack.c.b16 %v1699, %v1695
    %v2472 = vpack.c.b16 %v1700, %v1696
    %v2473 = vpack.c.b16 %v1701, %v1697
    %v2474 = vpack.c.b16 %v1702, %v1698
    %v2475 = vpack.c.b16 %v1707, %v1703
    %v2476 = vpack.c.b16 %v1708, %v1704
    %v2477 = vpack.c.b16 %v1709, %v1705
    %v2478 = vpack.c.b16 %v1710, %v1706
    %v2479 = vpack.c.b16 %v1715, %v1711
    %v2480 = vpack.c.b16 %v1716, %v1712
    %v2481 = vpack.c.b16 %v1717, %v1713
    %v2482 = vpack.c.b16 %v1718, %v1714
    %v2483 = vpack.c.b16 %v1723, %v1719
    %v2484 = vpack.c.b16 %v1724, %v1720
    %v2485 = vpack.c.b16 %v1725, %v1721
    %v2486 = vpack.c.b16 %v1726, %v1722
    %v2487 = vpack.c.b16 %v1731, %v1727
    %v2488 = vpack.c.b16 %v1732, %v1728
    %v2489 = vpack.c.b16 %v1733, %v1729
    %v2490 = vpack.c.b16 %v1734, %v1730
    %v2491 = vpack.c.b16 %v1739, %v1735
    %v2492 = vpack.c.b16 %v1740, %v1736
    %v2493 = vpack.c.b16 %v1741, %v1737
    %v2494 = vpack.c.b16 %v1742, %v1738
    %v2495 = vpack.c.b16 %v1747, %v1743
    %v2496 = vpack.c.b16 %v1748, %v1744
    %v2497 = vpack.c.b16 %v1749, %v1745
    %v2498 = vpack.c.b16 %v1750, %v1746
    %v2499 = vpack.c.b16 %v1755, %v1751
    %v2500 = vpack.c.b16 %v1756, %v1752
    %v2501 = vpack.c.b16 %v1757, %v1753
    %v2502 = vpack.c.b16 %v1758, %v1754
    %v2503 = vpack.c.b16 %v1763, %v1759
    %v2504 = vpack.c.b16 %v1764, %v1760
    %v2505 = vpack.c.b16 %v1765, %v1761
    %v2506 = vpack.c.b16 %v1766, %v1762
    %v2507 = vpack.c.b16 %v1771, %v1767
    %v2508 = vpack.c.b16 %v1772, %v1768
    %v2509 = vpack.c.b16 %v1773, %v1769
    %v2510 = vpack.c.b16 %v1774, %v1770
    %v2511 = vpack.c.b16 %v1779, %v1775
    %v2512 = vpack.c.b16 %v1780, %v1776
    %v2513 = vpack.c.b16 %v1781, %v1777
    %v2514 = vpack.c.b16 %v1782, %v1778
    %v2515 = vpack.c.b16 %v1787, %v1783
    %v2516 = vpack.c.b16 %v1788, %v1784
    %v2517 = vpack.c.b16 %v1789, %v1785
    %v2518 = vpack.c.b16 %v1790, %v1786
    %v2519 = vpack.c.b16 %v1795, %v1791
    %v2520 = vpack.c.b16 %v1796, %v1792
    %v2521 = vpack.c.b16 %v1797, %v1793
    %v2522 = vpack.c.b16 %v1798, %v1794
    %v2523 = vpack.c.b16 %v1803, %v1799
    %v2524 = vpack.c.b16 %v1804, %v1800
    %v2525 = vpack.c.b16 %v1805, %v1801
    %v2526 = vpack.c.b16 %v1806, %v1802
    %v2527 = vpack.c.b16 %v1811, %v1807
    %v2528 = vpack.c.b16 %v1812, %v1808
    %v2529 = vpack.c.b16 %v1813, %v1809
    %v2530 = vpack.c.b16 %v1814, %v1810
    %v2531 = vpack.c.b16 %v1819, %v1815
    %v2532 = vpack.c.b16 %v1820, %v1816
    %v2533 = vpack.c.b16 %v1821, %v1817
    %v2534 = vpack.c.b16 %v1822, %v1818
    %v2535 = vpack.c.b16 %v1827, %v1823
    %v2536 = vpack.c.b16 %v1828, %v1824
    %v2537 = vpack.c.b16 %v1829, %v1825
    %v2538 = vpack.c.b16 %v1830, %v1826
    %v2539 = vpack.c.b16 %v1835, %v1831
    %v2540 = vpack.c.b16 %v1836, %v1832
    %v2541 = vpack.c.b16 %v1837, %v1833
    %v2542 = vpack.c.b16 %v1838, %v1834
    %v2543 = vpack.c.b16 %v1843, %v1839
    %v2544 = vpack.c.b16 %v1844, %v1840
    %v2545 = vpack.c.b16 %v1845, %v1841
    %v2546 = vpack.c.b16 %v1846, %v1842
    %v2547 = vpack.c.b16 %v1851, %v1847
    %v2548 = vpack.c.b16 %v1852, %v1848
    %v2549 = vpack.c.b16 %v1853, %v1849
    %v2550 = vpack.c.b16 %v1854, %v1850
    %v2551 = vpack.c.b16 %v1859, %v1855
    %v2552 = vpack.c.b16 %v1860, %v1856
    %v2553 = vpack.c.b16 %v1861, %v1857
    %v2554 = vpack.c.b16 %v1862, %v1858
    %v2555 = vpack.c.b16 %v1867, %v1863
    %v2556 = vpack.c.b16 %v1868, %v1864
    %v2557 = vpack.c.b16 %v1869, %v1865
    %v2558 = vpack.c.b16 %v1870, %v1866
    %v2559 = vpack.c.b16 %v1875, %v1871
    %v2560 = vpack.c.b16 %v1876, %v1872
    %v2561 = vpack.c.b16 %v1877, %v1873
    %v2562 = vpack.c.b16 %v1878, %v1874
    %v2563 = vpack.c.b16 %v1883, %v1879
    %v2564 = vpack.c.b16 %v1884, %v1880
    %v2565 = vpack.c.b16 %v1885, %v1881
    %v2566 = vpack.c.b16 %v1886, %v1882
    %v2567 = vpack.c.b16 %v1891, %v1887
    %v2568 = vpack.c.b16 %v1892, %v1888
    %v2569 = vpack.c.b16 %v1893, %v1889
    %v2570 = vpack.c.b16 %v1894, %v1890
    %v2571 = vpack.c.b16 %v1899, %v1895
    %v2572 = vpack.c.b16 %v1900, %v1896
    %v2573 = vpack.c.b16 %v1901, %v1897
    %v2574 = vpack.c.b16 %v1902, %v1898
    %v2575 = vpack.c.b16 %v1907, %v1903
    %v2576 = vpack.c.b16 %v1908, %v1904
    %v2577 = vpack.c.b16 %v1909, %v1905
    %v2578 = vpack.c.b16 %v1910, %v1906
    %v2579 = vpack.c.b16 %v1915, %v1911
    %v2580 = vpack.c.b16 %v1916, %v1912
    %v2581 = vpack.c.b16 %v1917, %v1913
    %v2582 = vpack.c.b16 %v1918, %v1914
    %v2583 = vpack.c.b16 %v1923, %v1919
    %v2584 = vpack.c.b16 %v1924, %v1920
    %v2585 = vpack.c.b16 %v1925, %v1921
    %v2586 = vpack.c.b16 %v1926, %v1922
    %v2587 = vpack.c.b16 %v1931, %v1927
    %v2588 = vpack.c.b16 %v1932, %v1928
    %v2589 = vpack.c.b16 %v1933, %v1929
    %v2590 = vpack.c.b16 %v1934, %v1930
    %v2591 = vpack.c.b16 %v1939, %v1935
    %v2592 = vpack.c.b16 %v1940, %v1936
    %v2593 = vpack.c.b16 %v1941, %v1937
    %v2594 = vpack.c.b16 %v1942, %v1938
    %v2595 = vpack.c.b16 %v1947, %v1943
    %v2596 = vpack.c.b16 %v1948, %v1944
    %v2597 = vpack.c.b16 %v1949, %v1945
    %v2598 = vpack.c.b16 %v1950, %v1946
    %v2599 = vpack.c.b16 %v1955, %v1951
    %v2600 = vpack.c.b16 %v1956, %v1952
    %v2601 = vpack.c.b16 %v1957, %v1953
    %v2602 = vpack.c.b16 %v1958, %v1954
    %v2603 = vpack.c.b16 %v1963, %v1959
    %v2604 = vpack.c.b16 %v1964, %v1960
    %v2605 = vpack.c.b16 %v1965, %v1961
    %v2606 = vpack.c.b16 %v1966, %v1962
    %v2607 = vpack.c.b16 %v1971, %v1967
    %v2608 = vpack.c.b16 %v1972, %v1968
    %v2609 = vpack.c.b16 %v1973, %v1969
    %v2610 = vpack.c.b16 %v1974, %v1970
    %v2611 = vpack.c.b16 %v1979, %v1975
    %v2612 = vpack.c.b16 %v1980, %v1976
    %v2613 = vpack.c.b16 %v1981, %v1977
    %v2614 = vpack.c.b16 %v1982, %v1978
    %v2615 = vpack.c.b16 %v1987, %v1983
    %v2616 = vpack.c.b16 %v1988, %v1984
    %v2617 = vpack.c.b16 %v1989, %v1985
    %v2618 = vpack.c.b16 %v1990, %v1986
    %v2619 = vpack.c.b16 %v1995, %v1991
    %v2620 = vpack.c.b16 %v1996, %v1992
    %v2621 = vpack.c.b16 %v1997, %v1993
    %v2622 = vpack.c.b16 %v1998, %v1994
    %v2623 = vpack.c.b16 %v2003, %v1999
    %v2624 = vpack.c.b16 %v2004, %v2000
    %v2625 = vpack.c.b16 %v2005, %v2001
    %v2626 = vpack.c.b16 %v2006, %v2002
    %v2627 = vpack.c.b16 %v2011, %v2007
    %v2628 = vpack.c.b16 %v2012, %v2008
    %v2629 = vpack.c.b16 %v2013, %v2009
    %v2630 = vpack.c.b16 %v2014, %v2010
    %v2631 = vpack.c.b16 %v2019, %v2015
    %v2632 = vpack.c.b16 %v2020, %v2016
    %v2633 = vpack.c.b16 %v2021, %v2017
    %v2634 = vpack.c.b16 %v2022, %v2018
    %v2635 = vpack.c.b16 %v2027, %v2023
    %v2636 = vpack.c.b16 %v2028, %v2024
    %v2637 = vpack.c.b16 %v2029, %v2025
    %v2638 = vpack.c.b16 %v2030, %v2026
    %v2639 = vpack.c.b16 %v2035, %v2031
    %v2640 = vpack.c.b16 %v2036, %v2032
    %v2641 = vpack.c.b16 %v2037, %v2033
    %v2642 = vpack.c.b16 %v2038, %v2034
    %v2643 = vpack.c.b16 %v2043, %v2039
    %v2644 = vpack.c.b16 %v2044, %v2040
    %v2645 = vpack.c.b16 %v2045, %v2041
    %v2646 = vpack.c.b16 %v2046, %v2042
    %v2647 = vpack.c.b16 %v2051, %v2047
    %v2648 = vpack.c.b16 %v2052, %v2048
    %v2649 = vpack.c.b16 %v2053, %v2049
    %v2650 = vpack.c.b16 %v2054, %v2050
    %v2651 = vpack.c.b16 %v2059, %v2055
    %v2652 = vpack.c.b16 %v2060, %v2056
    %v2653 = vpack.c.b16 %v2061, %v2057
    %v2654 = vpack.c.b16 %v2062, %v2058
    %v2655 = vpack.c.b16 %v2067, %v2063
    %v2656 = vpack.c.b16 %v2068, %v2064
    %v2657 = vpack.c.b16 %v2069, %v2065
    %v2658 = vpack.c.b16 %v2070, %v2066
    %v2659 = vpack.c.b16 %v2075, %v2071
    %v2660 = vpack.c.b16 %v2076, %v2072
    %v2661 = vpack.c.b16 %v2077, %v2073
    %v2662 = vpack.c.b16 %v2078, %v2074
    %v2663 = vpack.c.b16 %v2083, %v2079
    %v2664 = vpack.c.b16 %v2084, %v2080
    %v2665 = vpack.c.b16 %v2085, %v2081
    %v2666 = vpack.c.b16 %v2086, %v2082
    %v2667 = vpack.c.b16 %v2091, %v2087
    %v2668 = vpack.c.b16 %v2092, %v2088
    %v2669 = vpack.c.b16 %v2093, %v2089
    %v2670 = vpack.c.b16 %v2094, %v2090
    %v2671 = vpack.c.b16 %v2099, %v2095
    %v2672 = vpack.c.b16 %v2100, %v2096
    %v2673 = vpack.c.b16 %v2101, %v2097
    %v2674 = vpack.c.b16 %v2102, %v2098
    %v2675 = vpack.c.b16 %v2107, %v2103
    %v2676 = vpack.c.b16 %v2108, %v2104
    %v2677 = vpack.c.b16 %v2109, %v2105
    %v2678 = vpack.c.b16 %v2110, %v2106
    %v2679 = vpack.c.b16 %v2115, %v2111
    %v2680 = vpack.c.b16 %v2116, %v2112
    %v2681 = vpack.c.b16 %v2117, %v2113
    %v2682 = vpack.c.b16 %v2118, %v2114
    %v2683 = vpack.c.b16 %v2123, %v2119
    %v2684 = vpack.c.b16 %v2124, %v2120
    %v2685 = vpack.c.b16 %v2125, %v2121
    %v2686 = vpack.c.b16 %v2126, %v2122
    %v2687 = vpack.c.b16 %v2131, %v2127
    %v2688 = vpack.c.b16 %v2132, %v2128
    %v2689 = vpack.c.b16 %v2133, %v2129
    %v2690 = vpack.c.b16 %v2134, %v2130
    %v2691 = vpack.c.b16 %v2139, %v2135
    %v2692 = vpack.c.b16 %v2140, %v2136
    %v2693 = vpack.c.b16 %v2141, %v2137
    %v2694 = vpack.c.b16 %v2142, %v2138
    %v2695 = vpack.c.b16 %v2147, %v2143
    %v2696 = vpack.c.b16 %v2148, %v2144
    %v2697 = vpack.c.b16 %v2149, %v2145
    %v2698 = vpack.c.b16 %v2150, %v2146
    %v2699 = vpack.c.b16 %v2155, %v2151
    %v2700 = vpack.c.b16 %v2156, %v2152
    %v2701 = vpack.c.b16 %v2157, %v2153
    %v2702 = vpack.c.b16 %v2158, %v2154
    %v2703 = vpack.c.b16 %v2163, %v2159
    %v2704 = vpack.c.b16 %v2164, %v2160
    %v2705 = vpack.c.b16 %v2165, %v2161
    %v2706 = vpack.c.b16 %v2166, %v2162
    %v2707 = vpack.c.b16 %v2171, %v2167
    %v2708 = vpack.c.b16 %v2172, %v2168
    %v2709 = vpack.c.b16 %v2173, %v2169
    %v2710 = vpack.c.b16 %v2174, %v2170
    %v2711 = vpack.c.b16 %v2179, %v2175
    %v2712 = vpack.c.b16 %v2180, %v2176
    %v2713 = vpack.c.b16 %v2181, %v2177
    %v2714 = vpack.c.b16 %v2182, %v2178
    %v2715 = vpack.c.b16 %v2187, %v2183
    %v2716 = vpack.c.b16 %v2188, %v2184
    %v2717 = vpack.c.b16 %v2189, %v2185
    %v2718 = vpack.c.b16 %v2190, %v2186
    %v2719 = vpack.c.b16 %v2195, %v2191
    %v2720 = vpack.c.b16 %v2196, %v2192
    %v2721 = vpack.c.b16 %v2197, %v2193
    %v2722 = vpack.c.b16 %v2198, %v2194
    %v2723 = vpack.c.b16 %v2203, %v2199
    %v2724 = vpack.c.b16 %v2204, %v2200
    %v2725 = vpack.c.b16 %v2205, %v2201
    %v2726 = vpack.c.b16 %v2206, %v2202
    %v2727 = vpack.c.b16 %v2211, %v2207
    %v2728 = vpack.c.b16 %v2212, %v2208
    %v2729 = vpack.c.b16 %v2213, %v2209
    %v2730 = vpack.c.b16 %v2214, %v2210
    %v2731 = vpack.c.b16 %v2219, %v2215
    %v2732 = vpack.c.b16 %v2220, %v2216
    %v2733 = vpack.c.b16 %v2221, %v2217
    %v2734 = vpack.c.b16 %v2222, %v2218
    %3247 = vmatprep.subr.bf16.mxu0 %v2224
    %3248 = vmatpush1.bf16.msra.mxu0 %v2223
    %3249 = vmatprep.subr.bf16.mxu0 %v2228
    %3250 = vmatpush1.bf16.msra.mxu0 %v2227
    %3251 = vmatprep.subr.bf16.mxu0 %v2232
    %3252 = vmatpush1.bf16.msra.mxu0 %v2231
    %3253 = vmatprep.subr.bf16.mxu0 %v2236
    %3254 = vmatpush1.bf16.msra.mxu0 %v2235
    %3255 = vmatprep.subr.bf16.mxu0 %v2240
    %3256 = vmatpush1.bf16.msra.mxu0 %v2239
    %3257 = vmatprep.subr.bf16.mxu0 %v2244
    %3258 = vmatpush1.bf16.msra.mxu0 %v2243
    %3259 = vmatprep.subr.bf16.mxu0 %v2248
    %3260 = vmatpush1.bf16.msra.mxu0 %v2247
    %3261 = vmatprep.subr.bf16.mxu0 %v2252
    %3262 = vmatpush1.bf16.msra.mxu0 %v2251
    %3263 = vmatprep.subr.bf16.mxu0 %v2256
    %3264 = vmatpush1.bf16.msra.mxu0 %v2255
    %3265 = vmatprep.subr.bf16.mxu0 %v2260
    %3266 = vmatpush1.bf16.msra.mxu0 %v2259
    %3267 = vmatprep.subr.bf16.mxu0 %v2264
    %3268 = vmatpush1.bf16.msra.mxu0 %v2263
    %3269 = vmatprep.subr.bf16.mxu0 %v2268
    %3270 = vmatpush1.bf16.msra.mxu0 %v2267
    %3271 = vmatprep.subr.bf16.mxu0 %v2272
    %3272 = vmatpush1.bf16.msra.mxu0 %v2271
    %3273 = vmatprep.subr.bf16.mxu0 %v2276
    %3274 = vmatpush1.bf16.msra.mxu0 %v2275
    %3275 = vmatprep.subr.bf16.mxu0 %v2280
    %3276 = vmatpush1.bf16.msra.mxu0 %v2279
    %3277 = vmatprep.subr.bf16.mxu0 %v2284
    %3278 = vmatpush1.bf16.msra.mxu0 %v2283
    %3279 = vmatprep.mubr.bf16.mxu0 %v610
    %3280 = vmatmul.mubr.bf16.gmra.mrb[0].mxu0 %v596
    %v3281 = vpop.f32.mrb[0].mxu0
    %v3282 = vadd.f32 %v554, %v3281
    %v3283 = vpop.f32.mrb[0].mxu0
    %v3284 = vadd.f32 %v558, %v3283
    %v3285 = vpop.f32.mrb[0].mxu0
    %v3286 = vpop.f32.mrb[0].mxu0
    %3287 = vdwg.mxu0
    %3288 = vmatprep.subr.bf16.mxu0 %v2288
    %3289 = vmatpush1.bf16.msra.mxu0 %v2287
    %3290 = vmatprep.subr.bf16.mxu0 %v2292
    %3291 = vmatpush1.bf16.msra.mxu0 %v2291
    %3292 = vmatprep.subr.bf16.mxu0 %v2296
    %3293 = vmatpush1.bf16.msra.mxu0 %v2295
    %3294 = vmatprep.subr.bf16.mxu0 %v2300
    %3295 = vmatpush1.bf16.msra.mxu0 %v2299
    %3296 = vmatprep.subr.bf16.mxu0 %v2304
    %3297 = vmatpush1.bf16.msra.mxu0 %v2303
    %3298 = vmatprep.subr.bf16.mxu0 %v2308
    %3299 = vmatpush1.bf16.msra.mxu0 %v2307
    %3300 = vmatprep.subr.bf16.mxu0 %v2312
    %3301 = vmatpush1.bf16.msra.mxu0 %v2311
    %3302 = vmatprep.subr.bf16.mxu0 %v2316
    %3303 = vmatpush1.bf16.msra.mxu0 %v2315
    %3304 = vmatprep.subr.bf16.mxu0 %v2320
    %3305 = vmatpush1.bf16.msra.mxu0 %v2319
    %3306 = vmatprep.subr.bf16.mxu0 %v2324
    %3307 = vmatpush1.bf16.msra.mxu0 %v2323
    %3308 = vmatprep.subr.bf16.mxu0 %v2328
    %3309 = vmatpush1.bf16.msra.mxu0 %v2327
    %3310 = vmatprep.subr.bf16.mxu0 %v2332
    %3311 = vmatpush1.bf16.msra.mxu0 %v2331
    %3312 = vmatprep.subr.bf16.mxu0 %v2336
    %3313 = vmatpush1.bf16.msra.mxu0 %v2335
    %3314 = vmatprep.subr.bf16.mxu0 %v2340
    %3315 = vmatpush1.bf16.msra.mxu0 %v2339
    %3316 = vmatprep.subr.bf16.mxu0 %v2344
    %3317 = vmatpush1.bf16.msra.mxu0 %v2343
    %3318 = vmatprep.subr.bf16.mxu0 %v2348
    %3319 = vmatpush1.bf16.msra.mxu0 %v2347
    %3320 = vmatprep.mubr.bf16.mxu0 %v620
    %3321 = vmatmul.mubr.bf16.gmra.mrb[0].mxu0 %v618
    %v3322 = vpop.f32.mrb[0].mxu0
    %v3323 = vadd.f32 %v3282, %v3322
    %v3324 = vpop.f32.mrb[0].mxu0
    %v3325 = vadd.f32 %v3284, %v3324
    %v3326 = vpop.f32.mrb[0].mxu0
    %v3327 = vpop.f32.mrb[0].mxu0
    %3328 = vdwg.mxu0
    %3329 = vmatprep.subr.bf16.mxu0 %v2352
    %3330 = vmatpush1.bf16.msra.mxu0 %v2351
    %3331 = vmatprep.subr.bf16.mxu0 %v2356
    %3332 = vmatpush1.bf16.msra.mxu0 %v2355
    %3333 = vmatprep.subr.bf16.mxu0 %v2360
    %3334 = vmatpush1.bf16.msra.mxu0 %v2359
    %3335 = vmatprep.subr.bf16.mxu0 %v2364
    %3336 = vmatpush1.bf16.msra.mxu0 %v2363
    %3337 = vmatprep.subr.bf16.mxu0 %v2368
    %3338 = vmatpush1.bf16.msra.mxu0 %v2367
    %3339 = vmatprep.subr.bf16.mxu0 %v2372
    %3340 = vmatpush1.bf16.msra.mxu0 %v2371
    %3341 = vmatprep.subr.bf16.mxu0 %v2376
    %3342 = vmatpush1.bf16.msra.mxu0 %v2375
    %3343 = vmatprep.subr.bf16.mxu0 %v2380
    %3344 = vmatpush1.bf16.msra.mxu0 %v2379
    %3345 = vmatprep.subr.bf16.mxu0 %v2384
    %3346 = vmatpush1.bf16.msra.mxu0 %v2383
    %3347 = vmatprep.subr.bf16.mxu0 %v2388
    %3348 = vmatpush1.bf16.msra.mxu0 %v2387
    %3349 = vmatprep.subr.bf16.mxu0 %v2392
    %3350 = vmatpush1.bf16.msra.mxu0 %v2391
    %3351 = vmatprep.subr.bf16.mxu0 %v2396
    %3352 = vmatpush1.bf16.msra.mxu0 %v2395
    %3353 = vmatprep.subr.bf16.mxu0 %v2400
    %3354 = vmatpush1.bf16.msra.mxu0 %v2399
    %3355 = vmatprep.subr.bf16.mxu0 %v2404
    %3356 = vmatpush1.bf16.msra.mxu0 %v2403
    %3357 = vmatprep.subr.bf16.mxu0 %v2408
    %3358 = vmatpush1.bf16.msra.mxu0 %v2407
    %3359 = vmatprep.subr.bf16.mxu0 %v2412
    %3360 = vmatpush1.bf16.msra.mxu0 %v2411
    %3361 = vmatprep.mubr.bf16.mxu0 %v617
    %3362 = vmatmul.mubr.bf16.gmra.mrb[0].mxu0 %v603
    %v3363 = vpop.f32.mrb[0].mxu0
    %v3364 = vadd.f32 %v3323, %v3363
    %v3365 = vpop.f32.mrb[0].mxu0
    %v3366 = vadd.f32 %v3325, %v3365
    %v3367 = vpop.f32.mrb[0].mxu0
    %v3368 = vpop.f32.mrb[0].mxu0
    %3369 = vdwg.mxu0
    %3370 = vmatprep.subr.bf16.mxu0 %v2416
    %3371 = vmatpush1.bf16.msra.mxu0 %v2415
    %3372 = vmatprep.subr.bf16.mxu0 %v2420
    %3373 = vmatpush1.bf16.msra.mxu0 %v2419
    %3374 = vmatprep.subr.bf16.mxu0 %v2424
    %3375 = vmatpush1.bf16.msra.mxu0 %v2423
    %3376 = vmatprep.subr.bf16.mxu0 %v2428
    %3377 = vmatpush1.bf16.msra.mxu0 %v2427
    %3378 = vmatprep.subr.bf16.mxu0 %v2432
    %3379 = vmatpush1.bf16.msra.mxu0 %v2431
    %3380 = vmatprep.subr.bf16.mxu0 %v2436
    %3381 = vmatpush1.bf16.msra.mxu0 %v2435
    %3382 = vmatprep.subr.bf16.mxu0 %v2440
    %3383 = vmatpush1.bf16.msra.mxu0 %v2439
    %3384 = vmatprep.subr.bf16.mxu0 %v2444
    %3385 = vmatpush1.bf16.msra.mxu0 %v2443
    %3386 = vmatprep.subr.bf16.mxu0 %v2448
    %3387 = vmatpush1.bf16.msra.mxu0 %v2447
    %3388 = vmatprep.subr.bf16.mxu0 %v2452
    %3389 = vmatpush1.bf16.msra.mxu0 %v2451
    %3390 = vmatprep.subr.bf16.mxu0 %v2456
    %3391 = vmatpush1.bf16.msra.mxu0 %v2455
    %3392 = vmatprep.subr.bf16.mxu0 %v2460
    %3393 = vmatpush1.bf16.msra.mxu0 %v2459
    %3394 = vmatprep.subr.bf16.mxu0 %v2464
    %3395 = vmatpush1.bf16.msra.mxu0 %v2463
    %3396 = vmatprep.subr.bf16.mxu0 %v2468
    %3397 = vmatpush1.bf16.msra.mxu0 %v2467
    %3398 = vmatprep.subr.bf16.mxu0 %v2472
    %3399 = vmatpush1.bf16.msra.mxu0 %v2471
    %3400 = vmatprep.subr.bf16.mxu0 %v2476
    %3401 = vmatpush1.bf16.msra.mxu0 %v2475
    %3402 = vmatprep.mubr.bf16.mxu0 %v621
    %3403 = vmatmul.mubr.bf16.gmra.mrb[0].mxu0 %v619
    %v3404 = vpop.f32.mrb[0].mxu0
    %v3405 = vadd.f32 %v3364, %v3404
    %v3406 = vpop.f32.mrb[0].mxu0
    %v3407 = vadd.f32 %v3366, %v3406
    %v3408 = vpop.f32.mrb[0].mxu0
    %v3409 = vpop.f32.mrb[0].mxu0
    %3410 = vdwg.mxu0
    %3411 = vmatprep.subr.bf16.mxu0 %v2480
    %3412 = vmatpush1.bf16.msra.mxu0 %v2479
    %3413 = vmatprep.subr.bf16.mxu0 %v2484
    %3414 = vmatpush1.bf16.msra.mxu0 %v2483
    %3415 = vmatprep.subr.bf16.mxu0 %v2488
    %3416 = vmatpush1.bf16.msra.mxu0 %v2487
    %3417 = vmatprep.subr.bf16.mxu0 %v2492
    %3418 = vmatpush1.bf16.msra.mxu0 %v2491
    %3419 = vmatprep.subr.bf16.mxu0 %v2496
    %3420 = vmatpush1.bf16.msra.mxu0 %v2495
    %3421 = vmatprep.subr.bf16.mxu0 %v2500
    %3422 = vmatpush1.bf16.msra.mxu0 %v2499
    %3423 = vmatprep.subr.bf16.mxu0 %v2504
    %3424 = vmatpush1.bf16.msra.mxu0 %v2503
    %3425 = vmatprep.subr.bf16.mxu0 %v2508
    %3426 = vmatpush1.bf16.msra.mxu0 %v2507
    %3427 = vmatprep.subr.bf16.mxu0 %v2512
    %3428 = vmatpush1.bf16.msra.mxu0 %v2511
    %3429 = vmatprep.subr.bf16.mxu0 %v2516
    %3430 = vmatpush1.bf16.msra.mxu0 %v2515
    %3431 = vmatprep.subr.bf16.mxu0 %v2520
    %3432 = vmatpush1.bf16.msra.mxu0 %v2519
    %3433 = vmatprep.subr.bf16.mxu0 %v2524
    %3434 = vmatpush1.bf16.msra.mxu0 %v2523
    %3435 = vmatprep.subr.bf16.mxu0 %v2528
    %3436 = vmatpush1.bf16.msra.mxu0 %v2527
    %3437 = vmatprep.subr.bf16.mxu0 %v2532
    %3438 = vmatpush1.bf16.msra.mxu0 %v2531
    %3439 = vmatprep.subr.bf16.mxu0 %v2536
    %3440 = vmatpush1.bf16.msra.mxu0 %v2535
    %3441 = vmatprep.subr.bf16.mxu0 %v2540
    %3442 = vmatpush1.bf16.msra.mxu0 %v2539
    %3443 = vmatprep.mubr.bf16.mxu0 %v659
    %3444 = vmatmul.mubr.bf16.gmra.mrb[0].mxu0 %v645
    %v3445 = vpop.f32.mrb[0].mxu0
    %v3446 = vadd.f32 %v3405, %v3445
    %v3447 = vpop.f32.mrb[0].mxu0
    %v3448 = vadd.f32 %v3407, %v3447
    %v3449 = vpop.f32.mrb[0].mxu0
    %v3450 = vpop.f32.mrb[0].mxu0
    %3451 = vdwg.mxu0
    %3452 = vmatprep.subr.bf16.mxu0 %v2544
    %3453 = vmatpush1.bf16.msra.mxu0 %v2543
    %3454 = vmatprep.subr.bf16.mxu0 %v2548
    %3455 = vmatpush1.bf16.msra.mxu0 %v2547
    %3456 = vmatprep.subr.bf16.mxu0 %v2552
    %3457 = vmatpush1.bf16.msra.mxu0 %v2551
    %3458 = vmatprep.subr.bf16.mxu0 %v2556
    %3459 = vmatpush1.bf16.msra.mxu0 %v2555
    %3460 = vmatprep.subr.bf16.mxu0 %v2560
    %3461 = vmatpush1.bf16.msra.mxu0 %v2559
    %3462 = vmatprep.subr.bf16.mxu0 %v2564
    %3463 = vmatpush1.bf16.msra.mxu0 %v2563
    %3464 = vmatprep.subr.bf16.mxu0 %v2568
    %3465 = vmatpush1.bf16.msra.mxu0 %v2567
    %3466 = vmatprep.subr.bf16.mxu0 %v2572
    %3467 = vmatpush1.bf16.msra.mxu0 %v2571
    %3468 = vmatprep.subr.bf16.mxu0 %v2576
    %3469 = vmatpush1.bf16.msra.mxu0 %v2575
    %3470 = vmatprep.subr.bf16.mxu0 %v2580
    %3471 = vmatpush1.bf16.msra.mxu0 %v2579
    %3472 = vmatprep.subr.bf16.mxu0 %v2584
    %3473 = vmatpush1.bf16.msra.mxu0 %v2583
    %3474 = vmatprep.subr.bf16.mxu0 %v2588
    %3475 = vmatpush1.bf16.msra.mxu0 %v2587
    %3476 = vmatprep.subr.bf16.mxu0 %v2592
    %3477 = vmatpush1.bf16.msra.mxu0 %v2591
    %3478 = vmatprep.subr.bf16.mxu0 %v2596
    %3479 = vmatpush1.bf16.msra.mxu0 %v2595
    %3480 = vmatprep.subr.bf16.mxu0 %v2600
    %3481 = vmatpush1.bf16.msra.mxu0 %v2599
    %3482 = vmatprep.subr.bf16.mxu0 %v2604
    %3483 = vmatpush1.bf16.msra.mxu0 %v2603
    %3484 = vmatprep.mubr.bf16.mxu0 %v669
    %3485 = vmatmul.mubr.bf16.gmra.mrb[0].mxu0 %v667
    %v3486 = vpop.f32.mrb[0].mxu0
    %v3487 = vadd.f32 %v3446, %v3486
    %v3488 = vpop.f32.mrb[0].mxu0
    %v3489 = vadd.f32 %v3448, %v3488
    %v3490 = vpop.f32.mrb[0].mxu0
    %v3491 = vpop.f32.mrb[0].mxu0
    %3492 = vdwg.mxu0
    %3493 = vmatprep.subr.bf16.mxu0 %v2608
    %3494 = vmatpush1.bf16.msra.mxu0 %v2607
    %3495 = vmatprep.subr.bf16.mxu0 %v2612
    %3496 = vmatpush1.bf16.msra.mxu0 %v2611
    %3497 = vmatprep.subr.bf16.mxu0 %v2616
    %3498 = vmatpush1.bf16.msra.mxu0 %v2615
    %3499 = vmatprep.subr.bf16.mxu0 %v2620
    %3500 = vmatpush1.bf16.msra.mxu0 %v2619
    %3501 = vmatprep.subr.bf16.mxu0 %v2624
    %3502 = vmatpush1.bf16.msra.mxu0 %v2623
    %3503 = vmatprep.subr.bf16.mxu0 %v2628
    %3504 = vmatpush1.bf16.msra.mxu0 %v2627
    %3505 = vmatprep.subr.bf16.mxu0 %v2632
    %3506 = vmatpush1.bf16.msra.mxu0 %v2631
    %3507 = vmatprep.subr.bf16.mxu0 %v2636
    %3508 = vmatpush1.bf16.msra.mxu0 %v2635
    %3509 = vmatprep.subr.bf16.mxu0 %v2640
    %3510 = vmatpush1.bf16.msra.mxu0 %v2639
    %3511 = vmatprep.subr.bf16.mxu0 %v2644
    %3512 = vmatpush1.bf16.msra.mxu0 %v2643
    %3513 = vmatprep.subr.bf16.mxu0 %v2648
    %3514 = vmatpush1.bf16.msra.mxu0 %v2647
    %3515 = vmatprep.subr.bf16.mxu0 %v2652
    %3516 = vmatpush1.bf16.msra.mxu0 %v2651
    %3517 = vmatprep.subr.bf16.mxu0 %v2656
    %3518 = vmatpush1.bf16.msra.mxu0 %v2655
    %3519 = vmatprep.subr.bf16.mxu0 %v2660
    %3520 = vmatpush1.bf16.msra.mxu0 %v2659
    %3521 = vmatprep.subr.bf16.mxu0 %v2664
    %3522 = vmatpush1.bf16.msra.mxu0 %v2663
    %3523 = vmatprep.subr.bf16.mxu0 %v2668
    %3524 = vmatpush1.bf16.msra.mxu0 %v2667
    %3525 = vmatprep.mubr.bf16.mxu0 %v666
    %3526 = vmatmul.mubr.bf16.gmra.mrb[0].mxu0 %v652
    %v3527 = vpop.f32.mrb[0].mxu0
    %v3528 = vadd.f32 %v3487, %v3527
    %v3529 = vpop.f32.mrb[0].mxu0
    %v3530 = vadd.f32 %v3489, %v3529
    %v3531 = vpop.f32.mrb[0].mxu0
    %v3532 = vpop.f32.mrb[0].mxu0
    %3533 = vdwg.mxu0
    %3534 = vmatprep.subr.bf16.mxu0 %v2672
    %3535 = vmatpush1.bf16.msra.mxu0 %v2671
    %3536 = vmatprep.subr.bf16.mxu0 %v2676
    %3537 = vmatpush1.bf16.msra.mxu0 %v2675
    %3538 = vmatprep.subr.bf16.mxu0 %v2680
    %3539 = vmatpush1.bf16.msra.mxu0 %v2679
    %3540 = vmatprep.subr.bf16.mxu0 %v2684
    %3541 = vmatpush1.bf16.msra.mxu0 %v2683
    %3542 = vmatprep.subr.bf16.mxu0 %v2688
    %3543 = vmatpush1.bf16.msra.mxu0 %v2687
    %3544 = vmatprep.subr.bf16.mxu0 %v2692
    %3545 = vmatpush1.bf16.msra.mxu0 %v2691
    %3546 = vmatprep.subr.bf16.mxu0 %v2696
    %3547 = vmatpush1.bf16.msra.mxu0 %v2695
    %3548 = vmatprep.subr.bf16.mxu0 %v2700
    %3549 = vmatpush1.bf16.msra.mxu0 %v2699
    %3550 = vmatprep.subr.bf16.mxu0 %v2704
    %3551 = vmatpush1.bf16.msra.mxu0 %v2703
    %3552 = vmatprep.subr.bf16.mxu0 %v2708
    %3553 = vmatpush1.bf16.msra.mxu0 %v2707
    %3554 = vmatprep.subr.bf16.mxu0 %v2712
    %3555 = vmatpush1.bf16.msra.mxu0 %v2711
    %3556 = vmatprep.subr.bf16.mxu0 %v2716
    %3557 = vmatpush1.bf16.msra.mxu0 %v2715
    %3558 = vmatprep.subr.bf16.mxu0 %v2720
    %3559 = vmatpush1.bf16.msra.mxu0 %v2719
    %3560 = vmatprep.subr.bf16.mxu0 %v2724
    %3561 = vmatpush1.bf16.msra.mxu0 %v2723
    %3562 = vmatprep.subr.bf16.mxu0 %v2728
    %3563 = vmatpush1.bf16.msra.mxu0 %v2727
    %3564 = vmatprep.subr.bf16.mxu0 %v2732
    %3565 = vmatpush1.bf16.msra.mxu0 %v2731
    %3566 = vmatprep.mubr.bf16.mxu0 %v670
    %3567 = vmatmul.mubr.bf16.gmra.mrb[0].mxu0 %v668
    %v3568 = vpop.f32.mrb[0].mxu0
    %v3569 = vadd.f32 %v3528, %v3568
    %v3570 = vpop.f32.mrb[0].mxu0
    %v3571 = vadd.f32 %v3530, %v3570
    %v3572 = vpop.f32.mrb[0].mxu0
    %v3573 = vpop.f32.mrb[0].mxu0
    %3574 = vdwg.mxu0
    %3575 = vmatprep.subr.bf16.mxu0 %v2226
    %3576 = vmatpush1.bf16.msra.mxu0 %v2225
    %3577 = vmatprep.subr.bf16.mxu0 %v2230
    %3578 = vmatpush1.bf16.msra.mxu0 %v2229
    %3579 = vmatprep.subr.bf16.mxu0 %v2234
    %3580 = vmatpush1.bf16.msra.mxu0 %v2233
    %3581 = vmatprep.subr.bf16.mxu0 %v2238
    %3582 = vmatpush1.bf16.msra.mxu0 %v2237
    %3583 = vmatprep.subr.bf16.mxu0 %v2242
    %3584 = vmatpush1.bf16.msra.mxu0 %v2241
    %3585 = vmatprep.subr.bf16.mxu0 %v2246
    %3586 = vmatpush1.bf16.msra.mxu0 %v2245
    %3587 = vmatprep.subr.bf16.mxu0 %v2250
    %3588 = vmatpush1.bf16.msra.mxu0 %v2249
    %3589 = vmatprep.subr.bf16.mxu0 %v2254
    %3590 = vmatpush1.bf16.msra.mxu0 %v2253
    %3591 = vmatprep.subr.bf16.mxu0 %v2258
    %3592 = vmatpush1.bf16.msra.mxu0 %v2257
    %3593 = vmatprep.subr.bf16.mxu0 %v2262
    %3594 = vmatpush1.bf16.msra.mxu0 %v2261
    %3595 = vmatprep.subr.bf16.mxu0 %v2266
    %3596 = vmatpush1.bf16.msra.mxu0 %v2265
    %3597 = vmatprep.subr.bf16.mxu0 %v2270
    %3598 = vmatpush1.bf16.msra.mxu0 %v2269
    %3599 = vmatprep.subr.bf16.mxu0 %v2274
    %3600 = vmatpush1.bf16.msra.mxu0 %v2273
    %3601 = vmatprep.subr.bf16.mxu0 %v2278
    %3602 = vmatpush1.bf16.msra.mxu0 %v2277
    %3603 = vmatprep.subr.bf16.mxu0 %v2282
    %3604 = vmatpush1.bf16.msra.mxu0 %v2281
    %3605 = vmatprep.subr.bf16.mxu0 %v2286
    %3606 = vmatpush1.bf16.msra.mxu0 %v2285
    %3607 = vmatprep.mubr.bf16.mxu0 %v610
    %3608 = vmatmul.mubr.bf16.gmra.mrb[0].mxu0 %v596
    %v3609 = vpop.f32.mrb[0].mxu0
    %v3610 = vadd.f32 %v562, %v3609
    %v3611 = vpop.f32.mrb[0].mxu0
    %v3612 = vadd.f32 %v566, %v3611
    %v3613 = vpop.f32.mrb[0].mxu0
    %v3614 = vpop.f32.mrb[0].mxu0
    %3615 = vdwg.mxu0
    %3616 = vmatprep.subr.bf16.mxu0 %v2290
    %3617 = vmatpush1.bf16.msra.mxu0 %v2289
    %3618 = vmatprep.subr.bf16.mxu0 %v2294
    %3619 = vmatpush1.bf16.msra.mxu0 %v2293
    %3620 = vmatprep.subr.bf16.mxu0 %v2298
    %3621 = vmatpush1.bf16.msra.mxu0 %v2297
    %3622 = vmatprep.subr.bf16.mxu0 %v2302
    %3623 = vmatpush1.bf16.msra.mxu0 %v2301
    %3624 = vmatprep.subr.bf16.mxu0 %v2306
    %3625 = vmatpush1.bf16.msra.mxu0 %v2305
    %3626 = vmatprep.subr.bf16.mxu0 %v2310
    %3627 = vmatpush1.bf16.msra.mxu0 %v2309
    %3628 = vmatprep.subr.bf16.mxu0 %v2314
    %3629 = vmatpush1.bf16.msra.mxu0 %v2313
    %3630 = vmatprep.subr.bf16.mxu0 %v2318
    %3631 = vmatpush1.bf16.msra.mxu0 %v2317
    %3632 = vmatprep.subr.bf16.mxu0 %v2322
    %3633 = vmatpush1.bf16.msra.mxu0 %v2321
    %3634 = vmatprep.subr.bf16.mxu0 %v2326
    %3635 = vmatpush1.bf16.msra.mxu0 %v2325
    %3636 = vmatprep.subr.bf16.mxu0 %v2330
    %3637 = vmatpush1.bf16.msra.mxu0 %v2329
    %3638 = vmatprep.subr.bf16.mxu0 %v2334
    %3639 = vmatpush1.bf16.msra.mxu0 %v2333
    %3640 = vmatprep.subr.bf16.mxu0 %v2338
    %3641 = vmatpush1.bf16.msra.mxu0 %v2337
    %3642 = vmatprep.subr.bf16.mxu0 %v2342
    %3643 = vmatpush1.bf16.msra.mxu0 %v2341
    %3644 = vmatprep.subr.bf16.mxu0 %v2346
    %3645 = vmatpush1.bf16.msra.mxu0 %v2345
    %3646 = vmatprep.subr.bf16.mxu0 %v2350
    %3647 = vmatpush1.bf16.msra.mxu0 %v2349
    %3648 = vmatprep.mubr.bf16.mxu0 %v620
    %3649 = vmatmul.mubr.bf16.gmra.mrb[0].mxu0 %v618
    %v3650 = vpop.f32.mrb[0].mxu0
    %v3651 = vadd.f32 %v3610, %v3650
    %v3652 = vpop.f32.mrb[0].mxu0
    %v3653 = vadd.f32 %v3612, %v3652
    %v3654 = vpop.f32.mrb[0].mxu0
    %v3655 = vpop.f32.mrb[0].mxu0
    %3656 = vdwg.mxu0
    %3657 = vmatprep.subr.bf16.mxu0 %v2354
    %3658 = vmatpush1.bf16.msra.mxu0 %v2353
    %3659 = vmatprep.subr.bf16.mxu0 %v2358
    %3660 = vmatpush1.bf16.msra.mxu0 %v2357
    %3661 = vmatprep.subr.bf16.mxu0 %v2362
    %3662 = vmatpush1.bf16.msra.mxu0 %v2361
    %3663 = vmatprep.subr.bf16.mxu0 %v2366
    %3664 = vmatpush1.bf16.msra.mxu0 %v2365
    %3665 = vmatprep.subr.bf16.mxu0 %v2370
    %3666 = vmatpush1.bf16.msra.mxu0 %v2369
    %3667 = vmatprep.subr.bf16.mxu0 %v2374
    %3668 = vmatpush1.bf16.msra.mxu0 %v2373
    %3669 = vmatprep.subr.bf16.mxu0 %v2378
    %3670 = vmatpush1.bf16.msra.mxu0 %v2377
    %3671 = vmatprep.subr.bf16.mxu0 %v2382
    %3672 = vmatpush1.bf16.msra.mxu0 %v2381
    %3673 = vmatprep.subr.bf16.mxu0 %v2386
    %3674 = vmatpush1.bf16.msra.mxu0 %v2385
    %3675 = vmatprep.subr.bf16.mxu0 %v2390
    %3676 = vmatpush1.bf16.msra.mxu0 %v2389
    %3677 = vmatprep.subr.bf16.mxu0 %v2394
    %3678 = vmatpush1.bf16.msra.mxu0 %v2393
    %3679 = vmatprep.subr.bf16.mxu0 %v2398
    %3680 = vmatpush1.bf16.msra.mxu0 %v2397
    %3681 = vmatprep.subr.bf16.mxu0 %v2402
    %3682 = vmatpush1.bf16.msra.mxu0 %v2401
    %3683 = vmatprep.subr.bf16.mxu0 %v2406
    %3684 = vmatpush1.bf16.msra.mxu0 %v2405
    %3685 = vmatprep.subr.bf16.mxu0 %v2410
    %3686 = vmatpush1.bf16.msra.mxu0 %v2409
    %3687 = vmatprep.subr.bf16.mxu0 %v2414
    %3688 = vmatpush1.bf16.msra.mxu0 %v2413
    %3689 = vmatprep.mubr.bf16.mxu0 %v617
    %3690 = vmatmul.mubr.bf16.gmra.mrb[0].mxu0 %v603
    %v3691 = vpop.f32.mrb[0].mxu0
    %v3692 = vadd.f32 %v3651, %v3691
    %v3693 = vpop.f32.mrb[0].mxu0
    %v3694 = vadd.f32 %v3653, %v3693
    %v3695 = vpop.f32.mrb[0].mxu0
    %v3696 = vpop.f32.mrb[0].mxu0
    %3697 = vdwg.mxu0
    %3698 = vmatprep.subr.bf16.mxu0 %v2418
    %3699 = vmatpush1.bf16.msra.mxu0 %v2417
    %3700 = vmatprep.subr.bf16.mxu0 %v2422
    %3701 = vmatpush1.bf16.msra.mxu0 %v2421
    %3702 = vmatprep.subr.bf16.mxu0 %v2426
    %3703 = vmatpush1.bf16.msra.mxu0 %v2425
    %3704 = vmatprep.subr.bf16.mxu0 %v2430
    %3705 = vmatpush1.bf16.msra.mxu0 %v2429
    %3706 = vmatprep.subr.bf16.mxu0 %v2434
    %3707 = vmatpush1.bf16.msra.mxu0 %v2433
    %3708 = vmatprep.subr.bf16.mxu0 %v2438
    %3709 = vmatpush1.bf16.msra.mxu0 %v2437
    %3710 = vmatprep.subr.bf16.mxu0 %v2442
    %3711 = vmatpush1.bf16.msra.mxu0 %v2441
    %3712 = vmatprep.subr.bf16.mxu0 %v2446
    %3713 = vmatpush1.bf16.msra.mxu0 %v2445
    %3714 = vmatprep.subr.bf16.mxu0 %v2450
    %3715 = vmatpush1.bf16.msra.mxu0 %v2449
    %3716 = vmatprep.subr.bf16.mxu0 %v2454
    %3717 = vmatpush1.bf16.msra.mxu0 %v2453
    %3718 = vmatprep.subr.bf16.mxu0 %v2458
    %3719 = vmatpush1.bf16.msra.mxu0 %v2457
    %3720 = vmatprep.subr.bf16.mxu0 %v2462
    %3721 = vmatpush1.bf16.msra.mxu0 %v2461
    %3722 = vmatprep.subr.bf16.mxu0 %v2466
    %3723 = vmatpush1.bf16.msra.mxu0 %v2465
    %3724 = vmatprep.subr.bf16.mxu0 %v2470
    %3725 = vmatpush1.bf16.msra.mxu0 %v2469
    %3726 = vmatprep.subr.bf16.mxu0 %v2474
    %3727 = vmatpush1.bf16.msra.mxu0 %v2473
    %3728 = vmatprep.subr.bf16.mxu0 %v2478
    %3729 = vmatpush1.bf16.msra.mxu0 %v2477
    %3730 = vmatprep.mubr.bf16.mxu0 %v621
    %3731 = vmatmul.mubr.bf16.gmra.mrb[0].mxu0 %v619
    %v3732 = vpop.f32.mrb[0].mxu0
    %v3733 = vadd.f32 %v3692, %v3732
    %v3734 = vpop.f32.mrb[0].mxu0
    %v3735 = vadd.f32 %v3694, %v3734
    %v3736 = vpop.f32.mrb[0].mxu0
    %v3737 = vpop.f32.mrb[0].mxu0
    %3738 = vdwg.mxu0
    %3739 = vmatprep.subr.bf16.mxu0 %v2482
    %3740 = vmatpush1.bf16.msra.mxu0 %v2481
    %3741 = vmatprep.subr.bf16.mxu0 %v2486
    %3742 = vmatpush1.bf16.msra.mxu0 %v2485
    %3743 = vmatprep.subr.bf16.mxu0 %v2490
    %3744 = vmatpush1.bf16.msra.mxu0 %v2489
    %3745 = vmatprep.subr.bf16.mxu0 %v2494
    %3746 = vmatpush1.bf16.msra.mxu0 %v2493
    %3747 = vmatprep.subr.bf16.mxu0 %v2498
    %3748 = vmatpush1.bf16.msra.mxu0 %v2497
    %3749 = vmatprep.subr.bf16.mxu0 %v2502
    %3750 = vmatpush1.bf16.msra.mxu0 %v2501
    %3751 = vmatprep.subr.bf16.mxu0 %v2506
    %3752 = vmatpush1.bf16.msra.mxu0 %v2505
    %3753 = vmatprep.subr.bf16.mxu0 %v2510
    %3754 = vmatpush1.bf16.msra.mxu0 %v2509
    %3755 = vmatprep.subr.bf16.mxu0 %v2514
    %3756 = vmatpush1.bf16.msra.mxu0 %v2513
    %3757 = vmatprep.subr.bf16.mxu0 %v2518
    %3758 = vmatpush1.bf16.msra.mxu0 %v2517
    %3759 = vmatprep.subr.bf16.mxu0 %v2522
    %3760 = vmatpush1.bf16.msra.mxu0 %v2521
    %3761 = vmatprep.subr.bf16.mxu0 %v2526
    %3762 = vmatpush1.bf16.msra.mxu0 %v2525
    %3763 = vmatprep.subr.bf16.mxu0 %v2530
    %3764 = vmatpush1.bf16.msra.mxu0 %v2529
    %3765 = vmatprep.subr.bf16.mxu0 %v2534
    %3766 = vmatpush1.bf16.msra.mxu0 %v2533
    %3767 = vmatprep.subr.bf16.mxu0 %v2538
    %3768 = vmatpush1.bf16.msra.mxu0 %v2537
    %3769 = vmatprep.subr.bf16.mxu0 %v2542
    %3770 = vmatpush1.bf16.msra.mxu0 %v2541
    %3771 = vmatprep.mubr.bf16.mxu0 %v659
    %3772 = vmatmul.mubr.bf16.gmra.mrb[0].mxu0 %v645
    %v3773 = vpop.f32.mrb[0].mxu0
    %v3774 = vadd.f32 %v3733, %v3773
    %v3775 = vpop.f32.mrb[0].mxu0
    %v3776 = vadd.f32 %v3735, %v3775
    %v3777 = vpop.f32.mrb[0].mxu0
    %v3778 = vpop.f32.mrb[0].mxu0
    %3779 = vdwg.mxu0
    %3780 = vmatprep.subr.bf16.mxu0 %v2546
    %3781 = vmatpush1.bf16.msra.mxu0 %v2545
    %3782 = vmatprep.subr.bf16.mxu0 %v2550
    %3783 = vmatpush1.bf16.msra.mxu0 %v2549
    %3784 = vmatprep.subr.bf16.mxu0 %v2554
    %3785 = vmatpush1.bf16.msra.mxu0 %v2553
    %3786 = vmatprep.subr.bf16.mxu0 %v2558
    %3787 = vmatpush1.bf16.msra.mxu0 %v2557
    %3788 = vmatprep.subr.bf16.mxu0 %v2562
    %3789 = vmatpush1.bf16.msra.mxu0 %v2561
    %3790 = vmatprep.subr.bf16.mxu0 %v2566
    %3791 = vmatpush1.bf16.msra.mxu0 %v2565
    %3792 = vmatprep.subr.bf16.mxu0 %v2570
    %3793 = vmatpush1.bf16.msra.mxu0 %v2569
    %3794 = vmatprep.subr.bf16.mxu0 %v2574
    %3795 = vmatpush1.bf16.msra.mxu0 %v2573
    %3796 = vmatprep.subr.bf16.mxu0 %v2578
    %3797 = vmatpush1.bf16.msra.mxu0 %v2577
    %3798 = vmatprep.subr.bf16.mxu0 %v2582
    %3799 = vmatpush1.bf16.msra.mxu0 %v2581
    %3800 = vmatprep.subr.bf16.mxu0 %v2586
    %3801 = vmatpush1.bf16.msra.mxu0 %v2585
    %3802 = vmatprep.subr.bf16.mxu0 %v2590
    %3803 = vmatpush1.bf16.msra.mxu0 %v2589
    %3804 = vmatprep.subr.bf16.mxu0 %v2594
    %3805 = vmatpush1.bf16.msra.mxu0 %v2593
    %3806 = vmatprep.subr.bf16.mxu0 %v2598
    %3807 = vmatpush1.bf16.msra.mxu0 %v2597
    %3808 = vmatprep.subr.bf16.mxu0 %v2602
    %3809 = vmatpush1.bf16.msra.mxu0 %v2601
    %3810 = vmatprep.subr.bf16.mxu0 %v2606
    %3811 = vmatpush1.bf16.msra.mxu0 %v2605
    %3812 = vmatprep.mubr.bf16.mxu0 %v669
    %3813 = vmatmul.mubr.bf16.gmra.mrb[0].mxu0 %v667
    %v3814 = vpop.f32.mrb[0].mxu0
    %v3815 = vadd.f32 %v3774, %v3814
    %v3816 = vpop.f32.mrb[0].mxu0
    %v3817 = vadd.f32 %v3776, %v3816
    %v3818 = vpop.f32.mrb[0].mxu0
    %v3819 = vpop.f32.mrb[0].mxu0
    %3820 = vdwg.mxu0
    %3821 = vmatprep.subr.bf16.mxu0 %v2610
    %3822 = vmatpush1.bf16.msra.mxu0 %v2609
    %3823 = vmatprep.subr.bf16.mxu0 %v2614
    %3824 = vmatpush1.bf16.msra.mxu0 %v2613
    %3825 = vmatprep.subr.bf16.mxu0 %v2618
    %3826 = vmatpush1.bf16.msra.mxu0 %v2617
    %3827 = vmatprep.subr.bf16.mxu0 %v2622
    %3828 = vmatpush1.bf16.msra.mxu0 %v2621
    %3829 = vmatprep.subr.bf16.mxu0 %v2626
    %3830 = vmatpush1.bf16.msra.mxu0 %v2625
    %3831 = vmatprep.subr.bf16.mxu0 %v2630
    %3832 = vmatpush1.bf16.msra.mxu0 %v2629
    %3833 = vmatprep.subr.bf16.mxu0 %v2634
    %3834 = vmatpush1.bf16.msra.mxu0 %v2633
    %3835 = vmatprep.subr.bf16.mxu0 %v2638
    %3836 = vmatpush1.bf16.msra.mxu0 %v2637
    %3837 = vmatprep.subr.bf16.mxu0 %v2642
    %3838 = vmatpush1.bf16.msra.mxu0 %v2641
    %3839 = vmatprep.subr.bf16.mxu0 %v2646
    %3840 = vmatpush1.bf16.msra.mxu0 %v2645
    %3841 = vmatprep.subr.bf16.mxu0 %v2650
    %3842 = vmatpush1.bf16.msra.mxu0 %v2649
    %3843 = vmatprep.subr.bf16.mxu0 %v2654
    %3844 = vmatpush1.bf16.msra.mxu0 %v2653
    %3845 = vmatprep.subr.bf16.mxu0 %v2658
    %3846 = vmatpush1.bf16.msra.mxu0 %v2657
    %3847 = vmatprep.subr.bf16.mxu0 %v2662
    %3848 = vmatpush1.bf16.msra.mxu0 %v2661
    %3849 = vmatprep.subr.bf16.mxu0 %v2666
    %3850 = vmatpush1.bf16.msra.mxu0 %v2665
    %3851 = vmatprep.subr.bf16.mxu0 %v2670
    %3852 = vmatpush1.bf16.msra.mxu0 %v2669
    %3853 = vmatprep.mubr.bf16.mxu0 %v666
    %3854 = vmatmul.mubr.bf16.gmra.mrb[0].mxu0 %v652
    %v3855 = vpop.f32.mrb[0].mxu0
    %v3856 = vadd.f32 %v3815, %v3855
    %v3857 = vpop.f32.mrb[0].mxu0
    %v3858 = vadd.f32 %v3817, %v3857
    %v3859 = vpop.f32.mrb[0].mxu0
    %v3860 = vpop.f32.mrb[0].mxu0
    %3861 = vdwg.mxu0
    %3862 = vmatprep.subr.bf16.mxu0 %v2674
    %3863 = vmatpush1.bf16.msra.mxu0 %v2673
    %3864 = vmatprep.subr.bf16.mxu0 %v2678
    %3865 = vmatpush1.bf16.msra.mxu0 %v2677
    %3866 = vmatprep.subr.bf16.mxu0 %v2682
    %3867 = vmatpush1.bf16.msra.mxu0 %v2681
    %3868 = vmatprep.subr.bf16.mxu0 %v2686
    %3869 = vmatpush1.bf16.msra.mxu0 %v2685
    %3870 = vmatprep.subr.bf16.mxu0 %v2690
    %3871 = vmatpush1.bf16.msra.mxu0 %v2689
    %3872 = vmatprep.subr.bf16.mxu0 %v2694
    %3873 = vmatpush1.bf16.msra.mxu0 %v2693
    %3874 = vmatprep.subr.bf16.mxu0 %v2698
    %3875 = vmatpush1.bf16.msra.mxu0 %v2697
    %3876 = vmatprep.subr.bf16.mxu0 %v2702
    %3877 = vmatpush1.bf16.msra.mxu0 %v2701
    %3878 = vmatprep.subr.bf16.mxu0 %v2706
    %3879 = vmatpush1.bf16.msra.mxu0 %v2705
    %3880 = vmatprep.subr.bf16.mxu0 %v2710
    %3881 = vmatpush1.bf16.msra.mxu0 %v2709
    %3882 = vmatprep.subr.bf16.mxu0 %v2714
    %3883 = vmatpush1.bf16.msra.mxu0 %v2713
    %3884 = vmatprep.subr.bf16.mxu0 %v2718
    %3885 = vmatpush1.bf16.msra.mxu0 %v2717
    %3886 = vmatprep.subr.bf16.mxu0 %v2722
    %3887 = vmatpush1.bf16.msra.mxu0 %v2721
    %3888 = vmatprep.subr.bf16.mxu0 %v2726
    %3889 = vmatpush1.bf16.msra.mxu0 %v2725
    %3890 = vmatprep.subr.bf16.mxu0 %v2730
    %3891 = vmatpush1.bf16.msra.mxu0 %v2729
    %3892 = vmatprep.subr.bf16.mxu0 %v2734
    %3893 = vmatpush1.bf16.msra.mxu0 %v2733
    %3894 = vmatprep.mubr.bf16.mxu0 %v670
    %3895 = vmatmul.mubr.bf16.gmra.mrb[0].mxu0 %v668
    %v3896 = vpop.f32.mrb[0].mxu0
    %v3897 = vadd.f32 %v3856, %v3896
    %v3898 = vpop.f32.mrb[0].mxu0
    %v3899 = vadd.f32 %v3858, %v3898
    %v3900 = vpop.f32.mrb[0].mxu0
    %v3901 = vpop.f32.mrb[0].mxu0
    %3902 = vdwg.mxu0
    %v3903 = vmax.f32 %v3569, 0.0
    %v3904 = vmax.f32 %v3571, 0.0
    %v3905 = vmax.f32 %v3897, 0.0
    %v3906 = vmax.f32 %v3899, 0.0
    %v3907 = vpack.c.bf16 %v3903, %v3903
    %v3908 = vpack.c.bf16 %v3904, %v3904
    %v3909 = vpack.c.bf16 %v3905, %v3905
    %v3910 = vpack.c.bf16 %v3906, %v3906
    %v3911 = vld [vmem:[#allocation2] sm:$0xff]
    %v3912 = vld [vmem:[#allocation2 + $0x8] sm:$0xff]
    %v3913 = vld [vmem:[#allocation2 + $0x10] sm:$0xff]
    %v3914 = vld [vmem:[#allocation2 + $0x18] sm:$0xff]
    %v3915 = vld [vmem:[#allocation2 + $0x20] sm:$0xff]
    %v3916 = vld [vmem:[#allocation2 + $0x28] sm:$0xff]
    %v3917 = vld [vmem:[#allocation2 + $0x30] sm:$0xff]
    %v3918 = vld [vmem:[#allocation2 + $0x38] sm:$0xff]
    %v3919 = vld [vmem:[#allocation2 + $0x40] sm:$0xff]
    %v3920 = vld [vmem:[#allocation2 + $0x48] sm:$0xff]
    %v3921 = vld [vmem:[#allocation2 + $0x50] sm:$0xff]
    %v3922 = vld [vmem:[#allocation2 + $0x58] sm:$0xff]
    %v3923 = vld [vmem:[#allocation2 + $0x60] sm:$0xff]
    %v3924 = vld [vmem:[#allocation2 + $0x68] sm:$0xff]
    %v3925 = vld [vmem:[#allocation2 + $0x70] sm:$0xff]
    %v3926 = vld [vmem:[#allocation2 + $0x78] sm:$0xff]
    %v3927 = vld [vmem:[#allocation2 + $0x80] sm:$0xff]
    %v3928 = vld [vmem:[#allocation2 + $0x88] sm:$0xff]
    %v3929 = vld [vmem:[#allocation2 + $0x90] sm:$0xff]
    %v3930 = vld [vmem:[#allocation2 + $0x98] sm:$0xff]
    %v3931 = vld [vmem:[#allocation2 + $0xa0] sm:$0xff]
    %v3932 = vld [vmem:[#allocation2 + $0xa8] sm:$0xff]
    %v3933 = vld [vmem:[#allocation2 + $0xb0] sm:$0xff]
    %v3934 = vld [vmem:[#allocation2 + $0xb8] sm:$0xff]
    %v3935 = vld [vmem:[#allocation2 + $0xc0] sm:$0xff]
    %v3936 = vld [vmem:[#allocation2 + $0xc8] sm:$0xff]
    %v3937 = vld [vmem:[#allocation2 + $0xd0] sm:$0xff]
    %v3938 = vld [vmem:[#allocation2 + $0xd8] sm:$0xff]
    %v3939 = vld [vmem:[#allocation2 + $0xe0] sm:$0xff]
    %v3940 = vld [vmem:[#allocation2 + $0xe8] sm:$0xff]
    %v3941 = vld [vmem:[#allocation2 + $0xf0] sm:$0xff]
    %v3942 = vld [vmem:[#allocation2 + $0xf8] sm:$0xff]
    %v3943 = vld [vmem:[#allocation2 + $0x100] sm:$0xff]
    %v3944 = vld [vmem:[#allocation2 + $0x108] sm:$0xff]
    %v3945 = vld [vmem:[#allocation2 + $0x110] sm:$0xff]
    %v3946 = vld [vmem:[#allocation2 + $0x118] sm:$0xff]
    %v3947 = vld [vmem:[#allocation2 + $0x120] sm:$0xff]
    %v3948 = vld [vmem:[#allocation2 + $0x128] sm:$0xff]
    %v3949 = vld [vmem:[#allocation2 + $0x130] sm:$0xff]
    %v3950 = vld [vmem:[#allocation2 + $0x138] sm:$0xff]
    %v3951 = vld [vmem:[#allocation2 + $0x140] sm:$0xff]
    %v3952 = vld [vmem:[#allocation2 + $0x148] sm:$0xff]
    %v3953 = vld [vmem:[#allocation2 + $0x150] sm:$0xff]
    %v3954 = vld [vmem:[#allocation2 + $0x158] sm:$0xff]
    %v3955 = vld [vmem:[#allocation2 + $0x160] sm:$0xff]
    %v3956 = vld [vmem:[#allocation2 + $0x168] sm:$0xff]
    %v3957 = vld [vmem:[#allocation2 + $0x170] sm:$0xff]
    %v3958 = vld [vmem:[#allocation2 + $0x178] sm:$0xff]
    %v3959 = vld [vmem:[#allocation2 + $0x180] sm:$0xff]
    %v3960 = vld [vmem:[#allocation2 + $0x188] sm:$0xff]
    %v3961 = vld [vmem:[#allocation2 + $0x190] sm:$0xff]
    %v3962 = vld [vmem:[#allocation2 + $0x198] sm:$0xff]
    %v3963 = vld [vmem:[#allocation2 + $0x1a0] sm:$0xff]
    %v3964 = vld [vmem:[#allocation2 + $0x1a8] sm:$0xff]
    %v3965 = vld [vmem:[#allocation2 + $0x1b0] sm:$0xff]
    %v3966 = vld [vmem:[#allocation2 + $0x1b8] sm:$0xff]
    %v3967 = vld [vmem:[#allocation2 + $0x1c0] sm:$0xff]
    %v3968 = vld [vmem:[#allocation2 + $0x1c8] sm:$0xff]
    %v3969 = vld [vmem:[#allocation2 + $0x1d0] sm:$0xff]
    %v3970 = vld [vmem:[#allocation2 + $0x1d8] sm:$0xff]
    %v3971 = vld [vmem:[#allocation2 + $0x1e0] sm:$0xff]
    %v3972 = vld [vmem:[#allocation2 + $0x1e8] sm:$0xff]
    %v3973 = vld [vmem:[#allocation2 + $0x1f0] sm:$0xff]
    %v3974 = vld [vmem:[#allocation2 + $0x1f8] sm:$0xff]
    %v3975 = vld [vmem:[#allocation2 + $0x200] sm:$0xff]
    %v3976 = vld [vmem:[#allocation2 + $0x208] sm:$0xff]
    %v3977 = vld [vmem:[#allocation2 + $0x210] sm:$0xff]
    %v3978 = vld [vmem:[#allocation2 + $0x218] sm:$0xff]
    %v3979 = vld [vmem:[#allocation2 + $0x220] sm:$0xff]
    %v3980 = vld [vmem:[#allocation2 + $0x228] sm:$0xff]
    %v3981 = vld [vmem:[#allocation2 + $0x230] sm:$0xff]
    %v3982 = vld [vmem:[#allocation2 + $0x238] sm:$0xff]
    %v3983 = vld [vmem:[#allocation2 + $0x240] sm:$0xff]
    %v3984 = vld [vmem:[#allocation2 + $0x248] sm:$0xff]
    %v3985 = vld [vmem:[#allocation2 + $0x250] sm:$0xff]
    %v3986 = vld [vmem:[#allocation2 + $0x258] sm:$0xff]
    %v3987 = vld [vmem:[#allocation2 + $0x260] sm:$0xff]
    %v3988 = vld [vmem:[#allocation2 + $0x268] sm:$0xff]
    %v3989 = vld [vmem:[#allocation2 + $0x270] sm:$0xff]
    %v3990 = vld [vmem:[#allocation2 + $0x278] sm:$0xff]
    %v3991 = vld [vmem:[#allocation2 + $0x280] sm:$0xff]
    %v3992 = vld [vmem:[#allocation2 + $0x288] sm:$0xff]
    %v3993 = vld [vmem:[#allocation2 + $0x290] sm:$0xff]
    %v3994 = vld [vmem:[#allocation2 + $0x298] sm:$0xff]
    %v3995 = vld [vmem:[#allocation2 + $0x2a0] sm:$0xff]
    %v3996 = vld [vmem:[#allocation2 + $0x2a8] sm:$0xff]
    %v3997 = vld [vmem:[#allocation2 + $0x2b0] sm:$0xff]
    %v3998 = vld [vmem:[#allocation2 + $0x2b8] sm:$0xff]
    %v3999 = vld [vmem:[#allocation2 + $0x2c0] sm:$0xff]
    %v4000 = vld [vmem:[#allocation2 + $0x2c8] sm:$0xff]
    %v4001 = vld [vmem:[#allocation2 + $0x2d0] sm:$0xff]
    %v4002 = vld [vmem:[#allocation2 + $0x2d8] sm:$0xff]
    %v4003 = vld [vmem:[#allocation2 + $0x2e0] sm:$0xff]
    %v4004 = vld [vmem:[#allocation2 + $0x2e8] sm:$0xff]
    %v4005 = vld [vmem:[#allocation2 + $0x2f0] sm:$0xff]
    %v4006 = vld [vmem:[#allocation2 + $0x2f8] sm:$0xff]
    %v4007 = vld [vmem:[#allocation2 + $0x300] sm:$0xff]
    %v4008 = vld [vmem:[#allocation2 + $0x308] sm:$0xff]
    %v4009 = vld [vmem:[#allocation2 + $0x310] sm:$0xff]
    %v4010 = vld [vmem:[#allocation2 + $0x318] sm:$0xff]
    %v4011 = vld [vmem:[#allocation2 + $0x320] sm:$0xff]
    %v4012 = vld [vmem:[#allocation2 + $0x328] sm:$0xff]
    %v4013 = vld [vmem:[#allocation2 + $0x330] sm:$0xff]
    %v4014 = vld [vmem:[#allocation2 + $0x338] sm:$0xff]
    %v4015 = vld [vmem:[#allocation2 + $0x340] sm:$0xff]
    %v4016 = vld [vmem:[#allocation2 + $0x348] sm:$0xff]
    %v4017 = vld [vmem:[#allocation2 + $0x350] sm:$0xff]
    %v4018 = vld [vmem:[#allocation2 + $0x358] sm:$0xff]
    %v4019 = vld [vmem:[#allocation2 + $0x360] sm:$0xff]
    %v4020 = vld [vmem:[#allocation2 + $0x368] sm:$0xff]
    %v4021 = vld [vmem:[#allocation2 + $0x370] sm:$0xff]
    %v4022 = vld [vmem:[#allocation2 + $0x378] sm:$0xff]
    %v4023 = vld [vmem:[#allocation2 + $0x380] sm:$0xff]
    %v4024 = vld [vmem:[#allocation2 + $0x388] sm:$0xff]
    %v4025 = vld [vmem:[#allocation2 + $0x390] sm:$0xff]
    %v4026 = vld [vmem:[#allocation2 + $0x398] sm:$0xff]
    %v4027 = vld [vmem:[#allocation2 + $0x3a0] sm:$0xff]
    %v4028 = vld [vmem:[#allocation2 + $0x3a8] sm:$0xff]
    %v4029 = vld [vmem:[#allocation2 + $0x3b0] sm:$0xff]
    %v4030 = vld [vmem:[#allocation2 + $0x3b8] sm:$0xff]
    %v4031 = vld [vmem:[#allocation2 + $0x3c0] sm:$0xff]
    %v4032 = vld [vmem:[#allocation2 + $0x3c8] sm:$0xff]
    %v4033 = vld [vmem:[#allocation2 + $0x3d0] sm:$0xff]
    %v4034 = vld [vmem:[#allocation2 + $0x3d8] sm:$0xff]
    %v4035 = vld [vmem:[#allocation2 + $0x3e0] sm:$0xff]
    %v4036 = vld [vmem:[#allocation2 + $0x3e8] sm:$0xff]
    %v4037 = vld [vmem:[#allocation2 + $0x3f0] sm:$0xff]
    %v4038 = vld [vmem:[#allocation2 + $0x3f8] sm:$0xff]
    %v4039 = vld [vmem:[%s4] sm:$0xf]
    %v4041 = vlaneseq
    %v4042 = vshrl.u32 %v4041, 7
    %v4043 = vsub.s32 0, %v4042
    %v4044 = vrot.slane %v4039, %v4043
    %v4045 = vlaneseq
    %v4046 = vshrl.u32 %v4045, 7
    %v4047 = vsub.s32 1, %v4046
    %v4048 = vrot.slane %v4039, %v4047
    %v4049 = vlaneseq
    %v4050 = vshrl.u32 %v4049, 7
    %v4051 = vsub.s32 2, %v4050
    %v4052 = vrot.slane %v4039, %v4051
    %v4053 = vlaneseq
    %v4054 = vshrl.u32 %v4053, 7
    %v4055 = vsub.s32 3, %v4054
    %v4056 = vrot.slane %v4039, %v4055
    %v4189 = vunpack.c.l.b16 %v3911
    %v4190 = vunpack.c.h.b16 %v3911
    %v4191 = vunpack.c.l.b16 %v3912
    %v4192 = vunpack.c.h.b16 %v3912
    %v4193 = vunpack.c.l.b16 %v3913
    %v4194 = vunpack.c.h.b16 %v3913
    %v4195 = vunpack.c.l.b16 %v3914
    %v4196 = vunpack.c.h.b16 %v3914
    %v4197 = vunpack.c.l.b16 %v3915
    %v4198 = vunpack.c.h.b16 %v3915
    %v4199 = vunpack.c.l.b16 %v3916
    %v4200 = vunpack.c.h.b16 %v3916
    %v4201 = vunpack.c.l.b16 %v3917
    %v4202 = vunpack.c.h.b16 %v3917
    %v4203 = vunpack.c.l.b16 %v3918
    %v4204 = vunpack.c.h.b16 %v3918
    %v4205 = vunpack.c.l.b16 %v3919
    %v4206 = vunpack.c.h.b16 %v3919
    %v4207 = vunpack.c.l.b16 %v3920
    %v4208 = vunpack.c.h.b16 %v3920
    %v4209 = vunpack.c.l.b16 %v3921
    %v4210 = vunpack.c.h.b16 %v3921
    %v4211 = vunpack.c.l.b16 %v3922
    %v4212 = vunpack.c.h.b16 %v3922
    %v4213 = vunpack.c.l.b16 %v3923
    %v4214 = vunpack.c.h.b16 %v3923
    %v4215 = vunpack.c.l.b16 %v3924
    %v4216 = vunpack.c.h.b16 %v3924
    %v4217 = vunpack.c.l.b16 %v3925
    %v4218 = vunpack.c.h.b16 %v3925
    %v4219 = vunpack.c.l.b16 %v3926
    %v4220 = vunpack.c.h.b16 %v3926
    %v4221 = vunpack.c.l.b16 %v3927
    %v4222 = vunpack.c.h.b16 %v3927
    %v4223 = vunpack.c.l.b16 %v3928
    %v4224 = vunpack.c.h.b16 %v3928
    %v4225 = vunpack.c.l.b16 %v3929
    %v4226 = vunpack.c.h.b16 %v3929
    %v4227 = vunpack.c.l.b16 %v3930
    %v4228 = vunpack.c.h.b16 %v3930
    %v4229 = vunpack.c.l.b16 %v3931
    %v4230 = vunpack.c.h.b16 %v3931
    %v4231 = vunpack.c.l.b16 %v3932
    %v4232 = vunpack.c.h.b16 %v3932
    %v4233 = vunpack.c.l.b16 %v3933
    %v4234 = vunpack.c.h.b16 %v3933
    %v4235 = vunpack.c.l.b16 %v3934
    %v4236 = vunpack.c.h.b16 %v3934
    %v4237 = vunpack.c.l.b16 %v3935
    %v4238 = vunpack.c.h.b16 %v3935
    %v4239 = vunpack.c.l.b16 %v3936
    %v4240 = vunpack.c.h.b16 %v3936
    %v4241 = vunpack.c.l.b16 %v3937
    %v4242 = vunpack.c.h.b16 %v3937
    %v4243 = vunpack.c.l.b16 %v3938
    %v4244 = vunpack.c.h.b16 %v3938
    %v4245 = vunpack.c.l.b16 %v3939
    %v4246 = vunpack.c.h.b16 %v3939
    %v4247 = vunpack.c.l.b16 %v3940
    %v4248 = vunpack.c.h.b16 %v3940
    %v4249 = vunpack.c.l.b16 %v3941
    %v4250 = vunpack.c.h.b16 %v3941
    %v4251 = vunpack.c.l.b16 %v3942
    %v4252 = vunpack.c.h.b16 %v3942
    %v4253 = vunpack.c.l.b16 %v3943
    %v4254 = vunpack.c.h.b16 %v3943
    %v4255 = vunpack.c.l.b16 %v3944
    %v4256 = vunpack.c.h.b16 %v3944
    %v4257 = vunpack.c.l.b16 %v3945
    %v4258 = vunpack.c.h.b16 %v3945
    %v4259 = vunpack.c.l.b16 %v3946
    %v4260 = vunpack.c.h.b16 %v3946
    %v4261 = vunpack.c.l.b16 %v3947
    %v4262 = vunpack.c.h.b16 %v3947
    %v4263 = vunpack.c.l.b16 %v3948
    %v4264 = vunpack.c.h.b16 %v3948
    %v4265 = vunpack.c.l.b16 %v3949
    %v4266 = vunpack.c.h.b16 %v3949
    %v4267 = vunpack.c.l.b16 %v3950
    %v4268 = vunpack.c.h.b16 %v3950
    %v4269 = vunpack.c.l.b16 %v3951
    %v4270 = vunpack.c.h.b16 %v3951
    %v4271 = vunpack.c.l.b16 %v3952
    %v4272 = vunpack.c.h.b16 %v3952
    %v4273 = vunpack.c.l.b16 %v3953
    %v4274 = vunpack.c.h.b16 %v3953
    %v4275 = vunpack.c.l.b16 %v3954
    %v4276 = vunpack.c.h.b16 %v3954
    %v4277 = vunpack.c.l.b16 %v3955
    %v4278 = vunpack.c.h.b16 %v3955
    %v4279 = vunpack.c.l.b16 %v3956
    %v4280 = vunpack.c.h.b16 %v3956
    %v4281 = vunpack.c.l.b16 %v3957
    %v4282 = vunpack.c.h.b16 %v3957
    %v4283 = vunpack.c.l.b16 %v3958
    %v4284 = vunpack.c.h.b16 %v3958
    %v4285 = vunpack.c.l.b16 %v3959
    %v4286 = vunpack.c.h.b16 %v3959
    %v4287 = vunpack.c.l.b16 %v3960
    %v4288 = vunpack.c.h.b16 %v3960
    %v4289 = vunpack.c.l.b16 %v3961
    %v4290 = vunpack.c.h.b16 %v3961
    %v4291 = vunpack.c.l.b16 %v3962
    %v4292 = vunpack.c.h.b16 %v3962
    %v4293 = vunpack.c.l.b16 %v3963
    %v4294 = vunpack.c.h.b16 %v3963
    %v4295 = vunpack.c.l.b16 %v3964
    %v4296 = vunpack.c.h.b16 %v3964
    %v4297 = vunpack.c.l.b16 %v3965
    %v4298 = vunpack.c.h.b16 %v3965
    %v4299 = vunpack.c.l.b16 %v3966
    %v4300 = vunpack.c.h.b16 %v3966
    %v4301 = vunpack.c.l.b16 %v3967
    %v4302 = vunpack.c.h.b16 %v3967
    %v4303 = vunpack.c.l.b16 %v3968
    %v4304 = vunpack.c.h.b16 %v3968
    %v4305 = vunpack.c.l.b16 %v3969
    %v4306 = vunpack.c.h.b16 %v3969
    %v4307 = vunpack.c.l.b16 %v3970
    %v4308 = vunpack.c.h.b16 %v3970
    %v4309 = vunpack.c.l.b16 %v3971
    %v4310 = vunpack.c.h.b16 %v3971
    %v4311 = vunpack.c.l.b16 %v3972
    %v4312 = vunpack.c.h.b16 %v3972
    %v4313 = vunpack.c.l.b16 %v3973
    %v4314 = vunpack.c.h.b16 %v3973
    %v4315 = vunpack.c.l.b16 %v3974
    %v4316 = vunpack.c.h.b16 %v3974
    %v4317 = vunpack.c.l.b16 %v3975
    %v4318 = vunpack.c.h.b16 %v3975
    %v4319 = vunpack.c.l.b16 %v3976
    %v4320 = vunpack.c.h.b16 %v3976
    %v4321 = vunpack.c.l.b16 %v3977
    %v4322 = vunpack.c.h.b16 %v3977
    %v4323 = vunpack.c.l.b16 %v3978
    %v4324 = vunpack.c.h.b16 %v3978
    %v4325 = vunpack.c.l.b16 %v3979
    %v4326 = vunpack.c.h.b16 %v3979
    %v4327 = vunpack.c.l.b16 %v3980
    %v4328 = vunpack.c.h.b16 %v3980
    %v4329 = vunpack.c.l.b16 %v3981
    %v4330 = vunpack.c.h.b16 %v3981
    %v4331 = vunpack.c.l.b16 %v3982
    %v4332 = vunpack.c.h.b16 %v3982
    %v4333 = vunpack.c.l.b16 %v3983
    %v4334 = vunpack.c.h.b16 %v3983
    %v4335 = vunpack.c.l.b16 %v3984
    %v4336 = vunpack.c.h.b16 %v3984
    %v4337 = vunpack.c.l.b16 %v3985
    %v4338 = vunpack.c.h.b16 %v3985
    %v4339 = vunpack.c.l.b16 %v3986
    %v4340 = vunpack.c.h.b16 %v3986
    %v4341 = vunpack.c.l.b16 %v3987
    %v4342 = vunpack.c.h.b16 %v3987
    %v4343 = vunpack.c.l.b16 %v3988
    %v4344 = vunpack.c.h.b16 %v3988
    %v4345 = vunpack.c.l.b16 %v3989
    %v4346 = vunpack.c.h.b16 %v3989
    %v4347 = vunpack.c.l.b16 %v3990
    %v4348 = vunpack.c.h.b16 %v3990
    %v4349 = vunpack.c.l.b16 %v3991
    %v4350 = vunpack.c.h.b16 %v3991
    %v4351 = vunpack.c.l.b16 %v3992
    %v4352 = vunpack.c.h.b16 %v3992
    %v4353 = vunpack.c.l.b16 %v3993
    %v4354 = vunpack.c.h.b16 %v3993
    %v4355 = vunpack.c.l.b16 %v3994
    %v4356 = vunpack.c.h.b16 %v3994
    %v4357 = vunpack.c.l.b16 %v3995
    %v4358 = vunpack.c.h.b16 %v3995
    %v4359 = vunpack.c.l.b16 %v3996
    %v4360 = vunpack.c.h.b16 %v3996
    %v4361 = vunpack.c.l.b16 %v3997
    %v4362 = vunpack.c.h.b16 %v3997
    %v4363 = vunpack.c.l.b16 %v3998
    %v4364 = vunpack.c.h.b16 %v3998
    %v4365 = vunpack.c.l.b16 %v3999
    %v4366 = vunpack.c.h.b16 %v3999
    %v4367 = vunpack.c.l.b16 %v4000
    %v4368 = vunpack.c.h.b16 %v4000
    %v4369 = vunpack.c.l.b16 %v4001
    %v4370 = vunpack.c.h.b16 %v4001
    %v4371 = vunpack.c.l.b16 %v4002
    %v4372 = vunpack.c.h.b16 %v4002
    %v4373 = vunpack.c.l.b16 %v4003
    %v4374 = vunpack.c.h.b16 %v4003
    %v4375 = vunpack.c.l.b16 %v4004
    %v4376 = vunpack.c.h.b16 %v4004
    %v4377 = vunpack.c.l.b16 %v4005
    %v4378 = vunpack.c.h.b16 %v4005
    %v4379 = vunpack.c.l.b16 %v4006
    %v4380 = vunpack.c.h.b16 %v4006
    %v4381 = vunpack.c.l.b16 %v4007
    %v4382 = vunpack.c.h.b16 %v4007
    %v4383 = vunpack.c.l.b16 %v4008
    %v4384 = vunpack.c.h.b16 %v4008
    %v4385 = vunpack.c.l.b16 %v4009
    %v4386 = vunpack.c.h.b16 %v4009
    %v4387 = vunpack.c.l.b16 %v4010
    %v4388 = vunpack.c.h.b16 %v4010
    %v4389 = vunpack.c.l.b16 %v4011
    %v4390 = vunpack.c.h.b16 %v4011
    %v4391 = vunpack.c.l.b16 %v4012
    %v4392 = vunpack.c.h.b16 %v4012
    %v4393 = vunpack.c.l.b16 %v4013
    %v4394 = vunpack.c.h.b16 %v4013
    %v4395 = vunpack.c.l.b16 %v4014
    %v4396 = vunpack.c.h.b16 %v4014
    %v4397 = vunpack.c.l.b16 %v4015
    %v4398 = vunpack.c.h.b16 %v4015
    %v4399 = vunpack.c.l.b16 %v4016
    %v4400 = vunpack.c.h.b16 %v4016
    %v4401 = vunpack.c.l.b16 %v4017
    %v4402 = vunpack.c.h.b16 %v4017
    %v4403 = vunpack.c.l.b16 %v4018
    %v4404 = vunpack.c.h.b16 %v4018
    %v4405 = vunpack.c.l.b16 %v4019
    %v4406 = vunpack.c.h.b16 %v4019
    %v4407 = vunpack.c.l.b16 %v4020
    %v4408 = vunpack.c.h.b16 %v4020
    %v4409 = vunpack.c.l.b16 %v4021
    %v4410 = vunpack.c.h.b16 %v4021
    %v4411 = vunpack.c.l.b16 %v4022
    %v4412 = vunpack.c.h.b16 %v4022
    %v4413 = vunpack.c.l.b16 %v4023
    %v4414 = vunpack.c.h.b16 %v4023
    %v4415 = vunpack.c.l.b16 %v4024
    %v4416 = vunpack.c.h.b16 %v4024
    %v4417 = vunpack.c.l.b16 %v4025
    %v4418 = vunpack.c.h.b16 %v4025
    %v4419 = vunpack.c.l.b16 %v4026
    %v4420 = vunpack.c.h.b16 %v4026
    %v4421 = vunpack.c.l.b16 %v4027
    %v4422 = vunpack.c.h.b16 %v4027
    %v4423 = vunpack.c.l.b16 %v4028
    %v4424 = vunpack.c.h.b16 %v4028
    %v4425 = vunpack.c.l.b16 %v4029
    %v4426 = vunpack.c.h.b16 %v4029
    %v4427 = vunpack.c.l.b16 %v4030
    %v4428 = vunpack.c.h.b16 %v4030
    %v4429 = vunpack.c.l.b16 %v4031
    %v4430 = vunpack.c.h.b16 %v4031
    %v4431 = vunpack.c.l.b16 %v4032
    %v4432 = vunpack.c.h.b16 %v4032
    %v4433 = vunpack.c.l.b16 %v4033
    %v4434 = vunpack.c.h.b16 %v4033
    %v4435 = vunpack.c.l.b16 %v4034
    %v4436 = vunpack.c.h.b16 %v4034
    %v4437 = vunpack.c.l.b16 %v4035
    %v4438 = vunpack.c.h.b16 %v4035
    %v4439 = vunpack.c.l.b16 %v4036
    %v4440 = vunpack.c.h.b16 %v4036
    %v4441 = vunpack.c.l.b16 %v4037
    %v4442 = vunpack.c.h.b16 %v4037
    %v4443 = vunpack.c.l.b16 %v4038
    %v4444 = vunpack.c.h.b16 %v4038
    %v4445 = vpack.c.b16 %v4193, %v4189
    %v4446 = vpack.c.b16 %v4194, %v4190
    %v4447 = vpack.c.b16 %v4195, %v4191
    %v4448 = vpack.c.b16 %v4196, %v4192
    %v4449 = vpack.c.b16 %v4201, %v4197
    %v4450 = vpack.c.b16 %v4202, %v4198
    %v4451 = vpack.c.b16 %v4203, %v4199
    %v4452 = vpack.c.b16 %v4204, %v4200
    %v4453 = vpack.c.b16 %v4209, %v4205
    %v4454 = vpack.c.b16 %v4210, %v4206
    %v4455 = vpack.c.b16 %v4211, %v4207
    %v4456 = vpack.c.b16 %v4212, %v4208
    %v4457 = vpack.c.b16 %v4217, %v4213
    %v4458 = vpack.c.b16 %v4218, %v4214
    %v4459 = vpack.c.b16 %v4219, %v4215
    %v4460 = vpack.c.b16 %v4220, %v4216
    %v4461 = vpack.c.b16 %v4225, %v4221
    %v4462 = vpack.c.b16 %v4226, %v4222
    %v4463 = vpack.c.b16 %v4227, %v4223
    %v4464 = vpack.c.b16 %v4228, %v4224
    %v4465 = vpack.c.b16 %v4233, %v4229
    %v4466 = vpack.c.b16 %v4234, %v4230
    %v4467 = vpack.c.b16 %v4235, %v4231
    %v4468 = vpack.c.b16 %v4236, %v4232
    %v4469 = vpack.c.b16 %v4241, %v4237
    %v4470 = vpack.c.b16 %v4242, %v4238
    %v4471 = vpack.c.b16 %v4243, %v4239
    %v4472 = vpack.c.b16 %v4244, %v4240
    %v4473 = vpack.c.b16 %v4249, %v4245
    %v4474 = vpack.c.b16 %v4250, %v4246
    %v4475 = vpack.c.b16 %v4251, %v4247
    %v4476 = vpack.c.b16 %v4252, %v4248
    %v4477 = vpack.c.b16 %v4257, %v4253
    %v4478 = vpack.c.b16 %v4258, %v4254
    %v4479 = vpack.c.b16 %v4259, %v4255
    %v4480 = vpack.c.b16 %v4260, %v4256
    %v4481 = vpack.c.b16 %v4265, %v4261
    %v4482 = vpack.c.b16 %v4266, %v4262
    %v4483 = vpack.c.b16 %v4267, %v4263
    %v4484 = vpack.c.b16 %v4268, %v4264
    %v4485 = vpack.c.b16 %v4273, %v4269
    %v4486 = vpack.c.b16 %v4274, %v4270
    %v4487 = vpack.c.b16 %v4275, %v4271
    %v4488 = vpack.c.b16 %v4276, %v4272
    %v4489 = vpack.c.b16 %v4281, %v4277
    %v4490 = vpack.c.b16 %v4282, %v4278
    %v4491 = vpack.c.b16 %v4283, %v4279
    %v4492 = vpack.c.b16 %v4284, %v4280
    %v4493 = vpack.c.b16 %v4289, %v4285
    %v4494 = vpack.c.b16 %v4290, %v4286
    %v4495 = vpack.c.b16 %v4291, %v4287
    %v4496 = vpack.c.b16 %v4292, %v4288
    %v4497 = vpack.c.b16 %v4297, %v4293
    %v4498 = vpack.c.b16 %v4298, %v4294
    %v4499 = vpack.c.b16 %v4299, %v4295
    %v4500 = vpack.c.b16 %v4300, %v4296
    %v4501 = vpack.c.b16 %v4305, %v4301
    %v4502 = vpack.c.b16 %v4306, %v4302
    %v4503 = vpack.c.b16 %v4307, %v4303
    %v4504 = vpack.c.b16 %v4308, %v4304
    %v4505 = vpack.c.b16 %v4313, %v4309
    %v4506 = vpack.c.b16 %v4314, %v4310
    %v4507 = vpack.c.b16 %v4315, %v4311
    %v4508 = vpack.c.b16 %v4316, %v4312
    %v4509 = vpack.c.b16 %v4321, %v4317
    %v4510 = vpack.c.b16 %v4322, %v4318
    %v4511 = vpack.c.b16 %v4323, %v4319
    %v4512 = vpack.c.b16 %v4324, %v4320
    %v4513 = vpack.c.b16 %v4329, %v4325
    %v4514 = vpack.c.b16 %v4330, %v4326
    %v4515 = vpack.c.b16 %v4331, %v4327
    %v4516 = vpack.c.b16 %v4332, %v4328
    %v4517 = vpack.c.b16 %v4337, %v4333
    %v4518 = vpack.c.b16 %v4338, %v4334
    %v4519 = vpack.c.b16 %v4339, %v4335
    %v4520 = vpack.c.b16 %v4340, %v4336
    %v4521 = vpack.c.b16 %v4345, %v4341
    %v4522 = vpack.c.b16 %v4346, %v4342
    %v4523 = vpack.c.b16 %v4347, %v4343
    %v4524 = vpack.c.b16 %v4348, %v4344
    %v4525 = vpack.c.b16 %v4353, %v4349
    %v4526 = vpack.c.b16 %v4354, %v4350
    %v4527 = vpack.c.b16 %v4355, %v4351
    %v4528 = vpack.c.b16 %v4356, %v4352
    %v4529 = vpack.c.b16 %v4361, %v4357
    %v4530 = vpack.c.b16 %v4362, %v4358
    %v4531 = vpack.c.b16 %v4363, %v4359
    %v4532 = vpack.c.b16 %v4364, %v4360
    %v4533 = vpack.c.b16 %v4369, %v4365
    %v4534 = vpack.c.b16 %v4370, %v4366
    %v4535 = vpack.c.b16 %v4371, %v4367
    %v4536 = vpack.c.b16 %v4372, %v4368
    %v4537 = vpack.c.b16 %v4377, %v4373
    %v4538 = vpack.c.b16 %v4378, %v4374
    %v4539 = vpack.c.b16 %v4379, %v4375
    %v4540 = vpack.c.b16 %v4380, %v4376
    %v4541 = vpack.c.b16 %v4385, %v4381
    %v4542 = vpack.c.b16 %v4386, %v4382
    %v4543 = vpack.c.b16 %v4387, %v4383
    %v4544 = vpack.c.b16 %v4388, %v4384
    %v4545 = vpack.c.b16 %v4393, %v4389
    %v4546 = vpack.c.b16 %v4394, %v4390
    %v4547 = vpack.c.b16 %v4395, %v4391
    %v4548 = vpack.c.b16 %v4396, %v4392
    %v4549 = vpack.c.b16 %v4401, %v4397
    %v4550 = vpack.c.b16 %v4402, %v4398
    %v4551 = vpack.c.b16 %v4403, %v4399
    %v4552 = vpack.c.b16 %v4404, %v4400
    %v4553 = vpack.c.b16 %v4409, %v4405
    %v4554 = vpack.c.b16 %v4410, %v4406
    %v4555 = vpack.c.b16 %v4411, %v4407
    %v4556 = vpack.c.b16 %v4412, %v4408
    %v4557 = vpack.c.b16 %v4417, %v4413
    %v4558 = vpack.c.b16 %v4418, %v4414
    %v4559 = vpack.c.b16 %v4419, %v4415
    %v4560 = vpack.c.b16 %v4420, %v4416
    %v4561 = vpack.c.b16 %v4425, %v4421
    %v4562 = vpack.c.b16 %v4426, %v4422
    %v4563 = vpack.c.b16 %v4427, %v4423
    %v4564 = vpack.c.b16 %v4428, %v4424
    %v4565 = vpack.c.b16 %v4433, %v4429
    %v4566 = vpack.c.b16 %v4434, %v4430
    %v4567 = vpack.c.b16 %v4435, %v4431
    %v4568 = vpack.c.b16 %v4436, %v4432
    %v4569 = vpack.c.b16 %v4441, %v4437
    %v4570 = vpack.c.b16 %v4442, %v4438
    %v4571 = vpack.c.b16 %v4443, %v4439
    %v4572 = vpack.c.b16 %v4444, %v4440
    %4701 = vmatprep.subr.bf16.mxu0 %v4446
    %4702 = vmatpush1.bf16.msra.mxu0 %v4445
    %4703 = vmatprep.subr.bf16.mxu0 %v4450
    %4704 = vmatpush1.bf16.msra.mxu0 %v4449
    %4705 = vmatprep.subr.bf16.mxu0 %v4454
    %4706 = vmatpush1.bf16.msra.mxu0 %v4453
    %4707 = vmatprep.subr.bf16.mxu0 %v4458
    %4708 = vmatpush1.bf16.msra.mxu0 %v4457
    %4709 = vmatprep.subr.bf16.mxu0 %v4462
    %4710 = vmatpush1.bf16.msra.mxu0 %v4461
    %4711 = vmatprep.subr.bf16.mxu0 %v4466
    %4712 = vmatpush1.bf16.msra.mxu0 %v4465
    %4713 = vmatprep.subr.bf16.mxu0 %v4470
    %4714 = vmatpush1.bf16.msra.mxu0 %v4469
    %4715 = vmatprep.subr.bf16.mxu0 %v4474
    %4716 = vmatpush1.bf16.msra.mxu0 %v4473
    %4717 = vmatprep.subr.bf16.mxu0 %v4478
    %4718 = vmatpush1.bf16.msra.mxu0 %v4477
    %4719 = vmatprep.subr.bf16.mxu0 %v4482
    %4720 = vmatpush1.bf16.msra.mxu0 %v4481
    %4721 = vmatprep.subr.bf16.mxu0 %v4486
    %4722 = vmatpush1.bf16.msra.mxu0 %v4485
    %4723 = vmatprep.subr.bf16.mxu0 %v4490
    %4724 = vmatpush1.bf16.msra.mxu0 %v4489
    %4725 = vmatprep.subr.bf16.mxu0 %v4494
    %4726 = vmatpush1.bf16.msra.mxu0 %v4493
    %4727 = vmatprep.subr.bf16.mxu0 %v4498
    %4728 = vmatpush1.bf16.msra.mxu0 %v4497
    %4729 = vmatprep.subr.bf16.mxu0 %v4502
    %4730 = vmatpush1.bf16.msra.mxu0 %v4501
    %4731 = vmatprep.subr.bf16.mxu0 %v4506
    %4732 = vmatpush1.bf16.msra.mxu0 %v4505
    %4733 = vmatprep.mubr.bf16.mxu0 %v3908
    %4734 = vmatmul.mubr.bf16.gmra.mrb[0].mxu0 %v3907
    %v4735 = vpop.f32.mrb[0].mxu0
    %v4736 = vadd.f32 %v4044, %v4735
    %v4737 = vpop.f32.mrb[0].mxu0
    %v4738 = vadd.f32 %v4048, %v4737
    %v4739 = vpop.f32.mrb[0].mxu0
    %v4740 = vpop.f32.mrb[0].mxu0
    %4741 = vdwg.mxu0
    %4742 = vmatprep.subr.bf16.mxu0 %v4510
    %4743 = vmatpush1.bf16.msra.mxu0 %v4509
    %4744 = vmatprep.subr.bf16.mxu0 %v4514
    %4745 = vmatpush1.bf16.msra.mxu0 %v4513
    %4746 = vmatprep.subr.bf16.mxu0 %v4518
    %4747 = vmatpush1.bf16.msra.mxu0 %v4517
    %4748 = vmatprep.subr.bf16.mxu0 %v4522
    %4749 = vmatpush1.bf16.msra.mxu0 %v4521
    %4750 = vmatprep.subr.bf16.mxu0 %v4526
    %4751 = vmatpush1.bf16.msra.mxu0 %v4525
    %4752 = vmatprep.subr.bf16.mxu0 %v4530
    %4753 = vmatpush1.bf16.msra.mxu0 %v4529
    %4754 = vmatprep.subr.bf16.mxu0 %v4534
    %4755 = vmatpush1.bf16.msra.mxu0 %v4533
    %4756 = vmatprep.subr.bf16.mxu0 %v4538
    %4757 = vmatpush1.bf16.msra.mxu0 %v4537
    %4758 = vmatprep.subr.bf16.mxu0 %v4542
    %4759 = vmatpush1.bf16.msra.mxu0 %v4541
    %4760 = vmatprep.subr.bf16.mxu0 %v4546
    %4761 = vmatpush1.bf16.msra.mxu0 %v4545
    %4762 = vmatprep.subr.bf16.mxu0 %v4550
    %4763 = vmatpush1.bf16.msra.mxu0 %v4549
    %4764 = vmatprep.subr.bf16.mxu0 %v4554
    %4765 = vmatpush1.bf16.msra.mxu0 %v4553
    %4766 = vmatprep.subr.bf16.mxu0 %v4558
    %4767 = vmatpush1.bf16.msra.mxu0 %v4557
    %4768 = vmatprep.subr.bf16.mxu0 %v4562
    %4769 = vmatpush1.bf16.msra.mxu0 %v4561
    %4770 = vmatprep.subr.bf16.mxu0 %v4566
    %4771 = vmatpush1.bf16.msra.mxu0 %v4565
    %4772 = vmatprep.subr.bf16.mxu0 %v4570
    %4773 = vmatpush1.bf16.msra.mxu0 %v4569
    %4774 = vmatprep.mubr.bf16.mxu0 %v3910
    %4775 = vmatmul.mubr.bf16.gmra.mrb[0].mxu0 %v3909
    %v4776 = vpop.f32.mrb[0].mxu0
    %v4777 = vadd.f32 %v4736, %v4776
    %v4778 = vpop.f32.mrb[0].mxu0
    %v4779 = vadd.f32 %v4738, %v4778
    %v4780 = vpop.f32.mrb[0].mxu0
    %v4781 = vpop.f32.mrb[0].mxu0
    %4782 = vdwg.mxu0
    %4783 = vmatprep.subr.bf16.mxu0 %v4448
    %4784 = vmatpush1.bf16.msra.mxu0 %v4447
    %4785 = vmatprep.subr.bf16.mxu0 %v4452
    %4786 = vmatpush1.bf16.msra.mxu0 %v4451
    %4787 = vmatprep.subr.bf16.mxu0 %v4456
    %4788 = vmatpush1.bf16.msra.mxu0 %v4455
    %4789 = vmatprep.subr.bf16.mxu0 %v4460
    %4790 = vmatpush1.bf16.msra.mxu0 %v4459
    %4791 = vmatprep.subr.bf16.mxu0 %v4464
    %4792 = vmatpush1.bf16.msra.mxu0 %v4463
    %4793 = vmatprep.subr.bf16.mxu0 %v4468
    %4794 = vmatpush1.bf16.msra.mxu0 %v4467
    %4795 = vmatprep.subr.bf16.mxu0 %v4472
    %4796 = vmatpush1.bf16.msra.mxu0 %v4471
    %4797 = vmatprep.subr.bf16.mxu0 %v4476
    %4798 = vmatpush1.bf16.msra.mxu0 %v4475
    %4799 = vmatprep.subr.bf16.mxu0 %v4480
    %4800 = vmatpush1.bf16.msra.mxu0 %v4479
    %4801 = vmatprep.subr.bf16.mxu0 %v4484
    %4802 = vmatpush1.bf16.msra.mxu0 %v4483
    %4803 = vmatprep.subr.bf16.mxu0 %v4488
    %4804 = vmatpush1.bf16.msra.mxu0 %v4487
    %4805 = vmatprep.subr.bf16.mxu0 %v4492
    %4806 = vmatpush1.bf16.msra.mxu0 %v4491
    %4807 = vmatprep.subr.bf16.mxu0 %v4496
    %4808 = vmatpush1.bf16.msra.mxu0 %v4495
    %4809 = vmatprep.subr.bf16.mxu0 %v4500
    %4810 = vmatpush1.bf16.msra.mxu0 %v4499
    %4811 = vmatprep.subr.bf16.mxu0 %v4504
    %4812 = vmatpush1.bf16.msra.mxu0 %v4503
    %4813 = vmatprep.subr.bf16.mxu0 %v4508
    %4814 = vmatpush1.bf16.msra.mxu0 %v4507
    %4815 = vmatprep.mubr.bf16.mxu0 %v3908
    %4816 = vmatmul.mubr.bf16.gmra.mrb[0].mxu0 %v3907
    %v4817 = vpop.f32.mrb[0].mxu0
    %v4818 = vadd.f32 %v4052, %v4817
    %v4819 = vpop.f32.mrb[0].mxu0
    %v4820 = vadd.f32 %v4056, %v4819
    %v4821 = vpop.f32.mrb[0].mxu0
    %v4822 = vpop.f32.mrb[0].mxu0
    %4823 = vdwg.mxu0
    %4824 = vmatprep.subr.bf16.mxu0 %v4512
    %4825 = vmatpush1.bf16.msra.mxu0 %v4511
    %4826 = vmatprep.subr.bf16.mxu0 %v4516
    %4827 = vmatpush1.bf16.msra.mxu0 %v4515
    %4828 = vmatprep.subr.bf16.mxu0 %v4520
    %4829 = vmatpush1.bf16.msra.mxu0 %v4519
    %4830 = vmatprep.subr.bf16.mxu0 %v4524
    %4831 = vmatpush1.bf16.msra.mxu0 %v4523
    %4832 = vmatprep.subr.bf16.mxu0 %v4528
    %4833 = vmatpush1.bf16.msra.mxu0 %v4527
    %4834 = vmatprep.subr.bf16.mxu0 %v4532
    %4835 = vmatpush1.bf16.msra.mxu0 %v4531
    %4836 = vmatprep.subr.bf16.mxu0 %v4536
    %4837 = vmatpush1.bf16.msra.mxu0 %v4535
    %4838 = vmatprep.subr.bf16.mxu0 %v4540
    %4839 = vmatpush1.bf16.msra.mxu0 %v4539
    %4840 = vmatprep.subr.bf16.mxu0 %v4544
    %4841 = vmatpush1.bf16.msra.mxu0 %v4543
    %4842 = vmatprep.subr.bf16.mxu0 %v4548
    %4843 = vmatpush1.bf16.msra.mxu0 %v4547
    %4844 = vmatprep.subr.bf16.mxu0 %v4552
    %4845 = vmatpush1.bf16.msra.mxu0 %v4551
    %4846 = vmatprep.subr.bf16.mxu0 %v4556
    %4847 = vmatpush1.bf16.msra.mxu0 %v4555
    %4848 = vmatprep.subr.bf16.mxu0 %v4560
    %4849 = vmatpush1.bf16.msra.mxu0 %v4559
    %4850 = vmatprep.subr.bf16.mxu0 %v4564
    %4851 = vmatpush1.bf16.msra.mxu0 %v4563
    %4852 = vmatprep.subr.bf16.mxu0 %v4568
    %4853 = vmatpush1.bf16.msra.mxu0 %v4567
    %4854 = vmatprep.subr.bf16.mxu0 %v4572
    %4855 = vmatpush1.bf16.msra.mxu0 %v4571
    %4856 = vmatprep.mubr.bf16.mxu0 %v3910
    %4857 = vmatmul.mubr.bf16.gmra.mrb[0].mxu0 %v3909
    %v4858 = vpop.f32.mrb[0].mxu0
    %v4859 = vadd.f32 %v4818, %v4858
    %v4860 = vpop.f32.mrb[0].mxu0
    %v4861 = vadd.f32 %v4820, %v4860
    %v4862 = vpop.f32.mrb[0].mxu0
    %v4863 = vpop.f32.mrb[0].mxu0
    %4864 = vdwg.mxu0
    %v4869 = vcombine.low %v4777, %v4779
    %v4870 = vcombine.low %v4859, %v4861
    %v4872 = vunpack.c.l.s4 1983009808
    %v4873 = vunpack.c.0.s8 %v4872
    %v4874 = vlaneseq
    %v4875 = vshrl.u32 %v4874, 7
    %v4876 = vsub.s32 %v4873, %v4875
    %v4877 = vrot.slane %v4869, %v4876
    %v4879 = vunpack.c.l.s4 1983009808
    %v4880 = vunpack.c.0.s8 %v4879
    %v4881 = vlaneseq
    %v4882 = vshrl.u32 %v4881, 7
    %v4883 = vsub.s32 %v4880, %v4882
    %v4884 = vrot.slane %v4870, %v4883
    %v4885 = vcombine.low %v4877, %v4884
    %4887 = vst [vmem:[#allocation5] sm:$0xff] %v4885
    // Predicated region
    $region26: #{cnn_forward.3} parent=1 // pred_check
      _
    $region27: #{cnn_forward.3} parent=1 // pred_check_branch
      %4889 = sbr.rel (0) target = $region29
    $region28: #{cnn_forward.3} parent=1 // pred_region
      %s4891 = ssub.s32 128, 128
      %4892 = vsyncadd [#allocation4], %s4891
      %s4894 = sshll.u32 [#allocation5], 4
      %s4895 = int_to_ptr.vmem [resolvable:$true] %s4894
      %4897 = dma.vmem_to_hbm [thread:$0]  %s4895, 128, %s5, [#allocation4]
    $region29: #{cnn_forward.3} parent=1 // pred_fallthru
      _
    // Predicated region
    $region30: #{cnn_forward.3} parent=1 // pred_check
      _
    $region31: #{cnn_forward.3} parent=1 // pred_check_branch
      %4899 = sbr.rel (0) target = $region33
    $region32: #{cnn_forward.3} parent=1 // pred_region
      %4900 = dma.done [#allocation4], 128
    $region33: #{cnn_forward.3} parent=1 // pred_fallthru
      _
    %4901 = vsyncpa [#allocation3], 1
    %4902 = vsyncpa [#allocation4], 1

// kernel: cnn_forward.2
$region0: #{cnn_forward.2}
  #allocation0 [shape = 'u32[]', space=smem, size = 0x4, offset = 0x4, fixed_abs, tag = 'smem constant byte address 0x4 - core index']
  #allocation1 [shape = 'u32[144,128]{1,0:T(1,128)}', space=vmem, size = 0x12000, scoped, tag = 'internal scratch']
  #allocation2 [shape = 'f32[32,32,32]{2,1,0:T(8,128)}', space=vmem, size = 0x80000, scoped, tag = 'scratch operand']
  #allocation3 [shape = 'f32[18,18,32]{2,1,0:T(8,128)}', space=vmem, size = 0x36000, scoped, tag = 'scratch operand']
  #allocation4 [shape = 'f32[10,10,32]{2,1,0:T(8,128)}', space=vmem, size = 0x14000, scoped, tag = 'scratch operand']
  #allocation5 [shape = 'f32[32,64]{1,0:T(8,128)}', space=vmem, size = 0x4000, scoped, tag = 'scratch operand']
  %s0 = inlined_call_operand.vmem [shape: bf16[2,1024,9], index: 0, kind: input, shape index: {}]
  %s1 = inlined_call_operand.vmem [shape: bf16[9,32], index: 1, kind: input, shape index: {}]
  %s2 = inlined_call_operand.hbm [shape: f32[1,32], index: 2, kind: input, shape index: {}]
  %s3 = inlined_call_operand.hbm [shape: f32[288,32], index: 3, kind: input, shape index: {}]
  %s4 = inlined_call_operand.hbm [shape: f32[1,32], index: 4, kind: input, shape index: {}]
  %s5 = inlined_call_operand.hbm [shape: f32[288,32], index: 5, kind: input, shape index: {}]
  %s6 = inlined_call_operand.hbm [shape: f32[1,32], index: 6, kind: input, shape index: {}]
  %s7 = inlined_call_operand.vmem [shape: bf16[2,16,128], index: 7, kind: output, shape index: {}]
  %s8 = sld [smem:[#allocation0]]
  $region81: #{cnn_forward.2} parent=0
    _
  %s10 = ssub.s32 1, %s8
  %s11 = scalar_select 0, %s10, %s8
  $region1: #{cnn_forward.2} parent=0
    #allocation6 [shape = 'u8[512]{0}', space=vmem, size = 0x400, scoped, tag = 'input window, operand 2, single buffered']
    #allocation7 [shape = 's32[2]{0}', space=sflag, size = 0x8, scoped, tag = 'scoped memory for cnn_forward.2']
    #allocation8 [shape = 'u8[147456]{0}', space=vmem, size = 0x24000, scoped, tag = 'input window, operand 3, single buffered']
    #allocation9 [shape = 's32[1]{0}', space=sflag, size = 0x4, scoped, tag = 'scoped memory for cnn_forward.2']
    #allocation10 [shape = 'u8[512]{0}', space=vmem, size = 0x400, scoped, tag = 'input window, operand 4, single buffered']
    #allocation11 [shape = 'u8[147456]{0}', space=vmem, size = 0x24000, scoped, tag = 'input window, operand 5, single buffered']
    #allocation12 [shape = 's32[1]{0}', space=sflag, size = 0x4, scoped, tag = 'scoped memory for cnn_forward.2']
    #allocation13 [shape = 'u8[512]{0}', space=vmem, size = 0x400, scoped, tag = 'input window, operand 6, single buffered']
    %12 = vsyncpa [#allocation7], 0
    %13 = vsyncpa [#allocation9], 0
    %14 = vsyncpa [#allocation12], 0
    loop: start=0, step=1, limit=4
    $region2: #{cnn_forward.2} parent=1 // loop_pre_header
      _
    $region3: #{cnn_forward.2} parent=1 // loop_header
      %s16 = sphi 0, %s20
      %p17 = scmp.ge.s32.totalorder %s16, 4
      %s26 = sphi 0, %s28
      %s29 = sphi 0, %s26
      %s30 = sphi 0, %s29
      %s46 = sphi 0, %s30
      %s50 = sphi 0, %s50
      %s52 = sphi 0, %s50
      %s53 = sphi 0, %s52
      %s67 = sphi 0, %s53
      %s71 = sphi 0, %s71
      %s73 = sphi 0, %s71
      %s74 = sphi 0, %s73
      %s88 = sphi 0, %s74
      %s92 = sphi 0, %s92
      %s94 = sphi 0, %s92
      %s95 = sphi 0, %s94
      %s109 = sphi 0, %s95
      %s113 = sphi 0, %s113
      %s115 = sphi 0, %s113
      %s116 = sphi 0, %s115
      %s130 = sphi 0, %s116
      %s134 = sphi 0, %s134
      %s136 = sphi 0, %s134
      %s137 = sphi 0, %s136
      %s151 = sphi 0, %s137
      %s155 = sphi 0, %s155
      %s157 = sphi 0, %s155
      %s158 = sphi 0, %s157
      %s172 = sphi 0, %s158
      %s178 = sphi 0, %s180
      %s181 = sphi 0, %s178
      %s182 = sphi 0, %s181
      %s198 = sphi 0, %s182
    $region4: #{cnn_forward.2} parent=1 // loop_header_branch
      %19 = sbr.rel (%p17) target = $region8
    $region5: #{cnn_forward.2} parent=1 // loop_body
      %s21 = ssub.s32 %s16, 1
      %s22 = ssub.s32 %s16, 2
      %s23 = sadd.s32 %s16, 1
      %s24 = ssub.s32 %s16, %s23
      %p25 = scmp.eq.s32.totalorder %s24, 0
      %s27 = sadd.s32 %s26, 1
      %s28 = scalar_select %p25, %s26, %s27
      %p31 = pneg %p25
      %p32 = scmp.eq.s32.totalorder %s16, 1
      %p33 = por %p31, %p32
      %p34 = scmp.ne.s32.totalorder %s26, %s29
      %p35 = scmp.eq.s32.totalorder %s16, 0
      %p36 = por %p34, %p35
      %p37 = scmp.ne.s32.totalorder %s26, %s29
      %p38 = scmp.eq.s32.totalorder %s21, 1
      %p39 = por %p37, %p38
      %p40 = scmp.ne.s32.totalorder %s29, %s30
      %p41 = scmp.eq.s32.totalorder %s21, 0
      %p42 = por %p40, %p41
      %p43 = scmp.ne.s32.totalorder %s29, %s30
      %p44 = scmp.eq.s32.totalorder %s22, 1
      %p45 = por %p43, %p44
      %p47 = scmp.ne.s32.totalorder %s30, %s46
      %p48 = scmp.eq.s32.totalorder %s22, 0
      %p49 = por %p47, %p48
      %s51 = sadd.s32 %s50, 1
      %p54 = scmp.eq.s32.totalorder %s16, 1
      %p55 = scmp.ne.s32.totalorder %s50, %s52
      %p56 = scmp.eq.s32.totalorder %s16, 0
      %p57 = por %p55, %p56
      %p58 = scmp.ne.s32.totalorder %s50, %s52
      %p59 = scmp.eq.s32.totalorder %s21, 1
      %p60 = por %p58, %p59
      %p61 = scmp.ne.s32.totalorder %s52, %s53
      %p62 = scmp.eq.s32.totalorder %s21, 0
      %p63 = por %p61, %p62
      %p64 = scmp.ne.s32.totalorder %s52, %s53
      %p65 = scmp.eq.s32.totalorder %s22, 1
      %p66 = por %p64, %p65
      %p68 = scmp.ne.s32.totalorder %s53, %s67
      %p69 = scmp.eq.s32.totalorder %s22, 0
      %p70 = por %p68, %p69
      %s72 = sadd.s32 %s71, 1
      %p75 = scmp.eq.s32.totalorder %s16, 1
      %p76 = scmp.ne.s32.totalorder %s71, %s73
      %p77 = scmp.eq.s32.totalorder %s16, 0
      %p78 = por %p76, %p77
      %p79 = scmp.ne.s32.totalorder %s71, %s73
      %p80 = scmp.eq.s32.totalorder %s21, 1
      %p81 = por %p79, %p80
      %p82 = scmp.ne.s32.totalorder %s73, %s74
      %p83 = scmp.eq.s32.totalorder %s21, 0
      %p84 = por %p82, %p83
      %p85 = scmp.ne.s32.totalorder %s73, %s74
      %p86 = scmp.eq.s32.totalorder %s22, 1
      %p87 = por %p85, %p86
      %p89 = scmp.ne.s32.totalorder %s74, %s88
      %p90 = scmp.eq.s32.totalorder %s22, 0
      %p91 = por %p89, %p90
      %s93 = sadd.s32 %s92, 1
      %p96 = scmp.eq.s32.totalorder %s16, 1
      %p97 = scmp.ne.s32.totalorder %s92, %s94
      %p98 = scmp.eq.s32.totalorder %s16, 0
      %p99 = por %p97, %p98
      %p100 = scmp.ne.s32.totalorder %s92, %s94
      %p101 = scmp.eq.s32.totalorder %s21, 1
      %p102 = por %p100, %p101
      %p103 = scmp.ne.s32.totalorder %s94, %s95
      %p104 = scmp.eq.s32.totalorder %s21, 0
      %p105 = por %p103, %p104
      %p106 = scmp.ne.s32.totalorder %s94, %s95
      %p107 = scmp.eq.s32.totalorder %s22, 1
      %p108 = por %p106, %p107
      %p110 = scmp.ne.s32.totalorder %s95, %s109
      %p111 = scmp.eq.s32.totalorder %s22, 0
      %p112 = por %p110, %p111
      %s114 = sadd.s32 %s113, 1
      %p117 = scmp.eq.s32.totalorder %s16, 1
      %p118 = scmp.ne.s32.totalorder %s113, %s115
      %p119 = scmp.eq.s32.totalorder %s16, 0
      %p120 = por %p118, %p119
      %p121 = scmp.ne.s32.totalorder %s113, %s115
      %p122 = scmp.eq.s32.totalorder %s21, 1
      %p123 = por %p121, %p122
      %p124 = scmp.ne.s32.totalorder %s115, %s116
      %p125 = scmp.eq.s32.totalorder %s21, 0
      %p126 = por %p124, %p125
      %p127 = scmp.ne.s32.totalorder %s115, %s116
      %p128 = scmp.eq.s32.totalorder %s22, 1
      %p129 = por %p127, %p128
      %p131 = scmp.ne.s32.totalorder %s116, %s130
      %p132 = scmp.eq.s32.totalorder %s22, 0
      %p133 = por %p131, %p132
      %s135 = sadd.s32 %s134, 1
      %p138 = scmp.eq.s32.totalorder %s16, 1
      %p139 = scmp.ne.s32.totalorder %s134, %s136
      %p140 = scmp.eq.s32.totalorder %s16, 0
      %p141 = por %p139, %p140
      %p142 = scmp.ne.s32.totalorder %s134, %s136
      %p143 = scmp.eq.s32.totalorder %s21, 1
      %p144 = por %p142, %p143
      %p145 = scmp.ne.s32.totalorder %s136, %s137
      %p146 = scmp.eq.s32.totalorder %s21, 0
      %p147 = por %p145, %p146
      %p148 = scmp.ne.s32.totalorder %s136, %s137
      %p149 = scmp.eq.s32.totalorder %s22, 1
      %p150 = por %p148, %p149
      %p152 = scmp.ne.s32.totalorder %s137, %s151
      %p153 = scmp.eq.s32.totalorder %s22, 0
      %p154 = por %p152, %p153
      %s156 = sadd.s32 %s155, 1
      %p159 = scmp.eq.s32.totalorder %s16, 1
      %p160 = scmp.ne.s32.totalorder %s155, %s157
      %p161 = scmp.eq.s32.totalorder %s16, 0
      %p162 = por %p160, %p161
      %p163 = scmp.ne.s32.totalorder %s155, %s157
      %p164 = scmp.eq.s32.totalorder %s21, 1
      %p165 = por %p163, %p164
      %p166 = scmp.ne.s32.totalorder %s157, %s158
      %p167 = scmp.eq.s32.totalorder %s21, 0
      %p168 = por %p166, %p167
      %p169 = scmp.ne.s32.totalorder %s157, %s158
      %p170 = scmp.eq.s32.totalorder %s22, 1
      %p171 = por %p169, %p170
      %p173 = scmp.ne.s32.totalorder %s158, %s172
      %p174 = scmp.eq.s32.totalorder %s22, 0
      %p175 = por %p173, %p174
      %s176 = ssub.s32 %s16, %s23
      %p177 = scmp.eq.s32.totalorder %s176, 0
      %s179 = sadd.s32 %s178, 1
      %s180 = scalar_select %p177, %s178, %s179
      %p183 = pneg %p177
      %p184 = scmp.eq.s32.totalorder %s16, 1
      %p185 = por %p183, %p184
      %p186 = scmp.ne.s32.totalorder %s178, %s181
      %p187 = scmp.eq.s32.totalorder %s16, 0
      %p188 = por %p186, %p187
      %p189 = scmp.ne.s32.totalorder %s178, %s181
      %p190 = scmp.eq.s32.totalorder %s21, 1
      %p191 = por %p189, %p190
      %p192 = scmp.ne.s32.totalorder %s181, %s182
      %p193 = scmp.eq.s32.totalorder %s21, 0
      %p194 = por %p192, %p193
      %p195 = scmp.ne.s32.totalorder %s181, %s182
      %p196 = scmp.eq.s32.totalorder %s22, 1
      %p197 = por %p195, %p196
      %p199 = scmp.ne.s32.totalorder %s182, %s198
      %p200 = scmp.eq.s32.totalorder %s22, 0
      %p201 = por %p199, %p200
      %p202 = scmp.le.s32.totalorder 1, %s16
      %p203 = scmp.lt.s32.totalorder %s16, 3
      %p204 = pnand %p202, %p203
      %p205 = pneg %p204
      // Predicated region
      $region9: #{cnn_forward.2} parent=5 // pred_check
        _
      $region10: #{cnn_forward.2} parent=5 // pred_check_branch
        %207 = sbr.rel (%p204) target = $region12
      $region11: #{cnn_forward.2} parent=5 // pred_region
        %s208 = ssub.s32 %s16, 1
        // Predicated region
        $region13: #{cnn_forward.2} parent=11 // pred_check
          %p209 = pneg %p63
        $region14: #{cnn_forward.2} parent=11 // pred_check_branch
          %211 = sbr.rel (%p209) target = $region16
        $region15: #{cnn_forward.2} parent=11 // pred_region
          _
        $region16: #{cnn_forward.2} parent=11 // pred_fallthru
          _
        // Predicated region
        $region17: #{cnn_forward.2} parent=11 // pred_check
          %p212 = pneg %p84
        $region18: #{cnn_forward.2} parent=11 // pred_check_branch
          %214 = sbr.rel (%p212) target = $region20
        $region19: #{cnn_forward.2} parent=11 // pred_region
          %s216 = ssub.s32 16, 16
          %217 = vsyncadd [#allocation7], %s216
          %s219 = sshll.u32 [#allocation6], 4
          %s220 = int_to_ptr.vmem [resolvable:$true] %s219
          %222 = dma.hbm_to_vmem [thread:$0]  %s2, 16, %s220, [#allocation7]
        $region20: #{cnn_forward.2} parent=11 // pred_fallthru
          _
        // Predicated region
        $region21: #{cnn_forward.2} parent=11 // pred_check
          %p223 = pneg %p105
        $region22: #{cnn_forward.2} parent=11 // pred_check_branch
          %225 = sbr.rel (%p223) target = $region24
        $region23: #{cnn_forward.2} parent=11 // pred_region
          %s227 = ssub.s32 4608, 4608
          %228 = vsyncadd [#allocation9], %s227
          %s229 = sshll.u32 [#allocation8], 4
          %s230 = int_to_ptr.vmem [resolvable:$true] %s229
          %235 = dma.hbm_to_vmem [thread:$0]  %s3, 4608, %s230, [#allocation9], 128, 128, 8
        $region24: #{cnn_forward.2} parent=11 // pred_fallthru
          _
        // Predicated region
        $region25: #{cnn_forward.2} parent=11 // pred_check
          %p236 = pneg %p126
        $region26: #{cnn_forward.2} parent=11 // pred_check_branch
          %238 = sbr.rel (%p236) target = $region28
        $region27: #{cnn_forward.2} parent=11 // pred_region
          %s240 = ssub.s32 16, 16
          %241 = vsyncadd [#allocation9], %s240
          %s243 = sshll.u32 [#allocation10], 4
          %s244 = int_to_ptr.vmem [resolvable:$true] %s243
          %246 = dma.hbm_to_vmem [thread:$0]  %s4, 16, %s244, [#allocation9]
        $region28: #{cnn_forward.2} parent=11 // pred_fallthru
          _
        // Predicated region
        $region29: #{cnn_forward.2} parent=11 // pred_check
          %p247 = pneg %p147
        $region30: #{cnn_forward.2} parent=11 // pred_check_branch
          %249 = sbr.rel (%p247) target = $region32
        $region31: #{cnn_forward.2} parent=11 // pred_region
          %s251 = ssub.s32 4608, 4608
          %252 = vsyncadd [#allocation12], %s251
          %s253 = sshll.u32 [#allocation11], 4
          %s254 = int_to_ptr.vmem [resolvable:$true] %s253
          %259 = dma.hbm_to_vmem [thread:$0]  %s5, 4608, %s254, [#allocation12], 128, 128, 8
        $region32: #{cnn_forward.2} parent=11 // pred_fallthru
          _
        // Predicated region
        $region33: #{cnn_forward.2} parent=11 // pred_check
          %p260 = pneg %p168
        $region34: #{cnn_forward.2} parent=11 // pred_check_branch
          %262 = sbr.rel (%p260) target = $region36
        $region35: #{cnn_forward.2} parent=11 // pred_region
          %s264 = ssub.s32 16, 16
          %265 = vsyncadd [#allocation12], %s264
          %s267 = sshll.u32 [#allocation13], 4
          %s268 = int_to_ptr.vmem [resolvable:$true] %s267
          %270 = dma.hbm_to_vmem [thread:$0]  %s6, 16, %s268, [#allocation12]
        $region36: #{cnn_forward.2} parent=11 // pred_fallthru
          _
      $region12: #{cnn_forward.2} parent=5 // pred_fallthru
        _
      %p271 = scmp.lt.s32.totalorder %s16, 2
      // Predicated region
      $region37: #{cnn_forward.2} parent=5 // pred_check
        %p272 = pneg %p271
      $region38: #{cnn_forward.2} parent=5 // pred_check_branch
        %274 = sbr.rel (%p272) target = $region40
      $region39: #{cnn_forward.2} parent=5 // pred_region
        // Predicated region
        $region41: #{cnn_forward.2} parent=39 // pred_check
          %p275 = pneg %p36
        $region42: #{cnn_forward.2} parent=39 // pred_check_branch
          %277 = sbr.rel (%p275) target = $region44
        $region43: #{cnn_forward.2} parent=39 // pred_region
          %p278 = scmp.lt.s32.totalorder %s16, 1
          %s279 = scalar_select %p278, %s16, 1
          %s280 = smul.addr %s279, 128
          %s281 = smul.addr %s280, 4
          %s282 = scalar_lea.vmem %s0, %s281
        $region44: #{cnn_forward.2} parent=39 // pred_fallthru
          _
      $region40: #{cnn_forward.2} parent=5 // pred_fallthru
        _
      %p283 = scmp.le.s32.totalorder 1, %s16
      %p284 = scmp.lt.s32.totalorder %s16, 3
      %p285 = pnand %p283, %p284
      %p286 = pneg %p285
      // Predicated region
      $region45: #{cnn_forward.2} parent=5 // pred_check
        _
      $region46: #{cnn_forward.2} parent=5 // pred_check_branch
        %288 = sbr.rel (%p285) target = $region48
      $region47: #{cnn_forward.2} parent=5 // pred_region
        %s289 = ssub.s32 %s16, 1
        // Predicated region
        $region49: #{cnn_forward.2} parent=47 // pred_check
          %p290 = pneg %p84
        $region50: #{cnn_forward.2} parent=47 // pred_check_branch
          %292 = sbr.rel (%p290) target = $region52
        $region51: #{cnn_forward.2} parent=47 // pred_region
          %293 = dma.done [#allocation7], 16
        $region52: #{cnn_forward.2} parent=47 // pred_fallthru
          _
        // Predicated region
        $region53: #{cnn_forward.2} parent=47 // pred_check
          %p294 = pneg %p105
        $region54: #{cnn_forward.2} parent=47 // pred_check_branch
          %296 = sbr.rel (%p294) target = $region56
        $region55: #{cnn_forward.2} parent=47 // pred_region
          %297 = dma.done [#allocation9], 4608
        $region56: #{cnn_forward.2} parent=47 // pred_fallthru
          _
        // Predicated region
        $region57: #{cnn_forward.2} parent=47 // pred_check
          %p298 = pneg %p126
        $region58: #{cnn_forward.2} parent=47 // pred_check_branch
          %300 = sbr.rel (%p298) target = $region60
        $region59: #{cnn_forward.2} parent=47 // pred_region
          %301 = dma.done [#allocation9], 16
        $region60: #{cnn_forward.2} parent=47 // pred_fallthru
          _
        // Predicated region
        $region61: #{cnn_forward.2} parent=47 // pred_check
          %p302 = pneg %p147
        $region62: #{cnn_forward.2} parent=47 // pred_check_branch
          %304 = sbr.rel (%p302) target = $region64
        $region63: #{cnn_forward.2} parent=47 // pred_region
          %305 = dma.done [#allocation12], 4608
        $region64: #{cnn_forward.2} parent=47 // pred_fallthru
          _
        // Predicated region
        $region65: #{cnn_forward.2} parent=47 // pred_check
          %p306 = pneg %p168
        $region66: #{cnn_forward.2} parent=47 // pred_check_branch
          %308 = sbr.rel (%p306) target = $region68
        $region67: #{cnn_forward.2} parent=47 // pred_region
          %309 = dma.done [#allocation12], 16
        $region68: #{cnn_forward.2} parent=47 // pred_fallthru
          _
        %p310 = scmp.lt.s32.totalorder %s21, 1
        %s311 = scalar_select %p310, %s21, 1
        %s312 = smul.addr %s311, 128
        %s313 = smul.addr %s312, 4
        %s314 = scalar_lea.vmem %s0, %s313
        %p315 = pneg %p42
        %p316 = pneg %p39
        %p317 = pneg %p63
        %p318 = pneg %p60
        %p319 = pneg %p84
        %p320 = pneg %p81
        %p321 = pneg %p105
        %p322 = pneg %p102
        %p323 = pneg %p126
        %p324 = pneg %p123
        %p325 = pneg %p147
        %p326 = pneg %p144
        %p327 = pneg %p168
        %p328 = pneg %p165
        %p329 = pneg %p194
        %p330 = pneg %p191
        %p331 = scmp.lt.s32.totalorder %s21, 1
        %s332 = scalar_select %p331, %s21, 1
        %s333 = smul.addr %s332, 2
        %s334 = smul.addr %s333, 4
        %s335 = scalar_lea.vmem %s7, %s334
        %p336 = scmp.lt.s32.totalorder %s21, 1
        %s337 = scalar_select %p336, %s21, 1
        %s338 = smul.addr %s337, 128
        %s339 = smul.addr %s338, 4
        %s340 = scalar_lea.vmem %s0, %s339
        %p341 = scmp.lt.s32.totalorder %s21, 1
        %s342 = scalar_select %p341, %s21, 1
        %s343 = smul.addr %s342, 2
        %s344 = smul.addr %s343, 4
        %s345 = scalar_lea.vmem %s7, %s344
        %v347 = vld [vmem:[%s340] sm:$0xf]
        %v348 = vld [vmem:[%s340 + $0x4] sm:$0xf]
        %v349 = vld [vmem:[%s340 + $0x8] sm:$0xf]
        %v350 = vld [vmem:[%s340 + $0xc] sm:$0xf]
        %v351 = vld [vmem:[%s340 + $0x10] sm:$0xf]
        %v352 = vld [vmem:[%s340 + $0x14] sm:$0xf]
        %v353 = vld [vmem:[%s340 + $0x18] sm:$0xf]
        %v354 = vld [vmem:[%s340 + $0x1c] sm:$0xf]
        %v355 = vld [vmem:[%s340 + $0x20] sm:$0xf]
        %v356 = vld [vmem:[%s340 + $0x24] sm:$0xf]
        %v357 = vld [vmem:[%s340 + $0x28] sm:$0xf]
        %v358 = vld [vmem:[%s340 + $0x2c] sm:$0xf]
        %v359 = vld [vmem:[%s340 + $0x30] sm:$0xf]
        %v360 = vld [vmem:[%s340 + $0x34] sm:$0xf]
        %v361 = vld [vmem:[%s340 + $0x38] sm:$0xf]
        %v362 = vld [vmem:[%s340 + $0x3c] sm:$0xf]
        %v363 = vld [vmem:[%s340 + $0x40] sm:$0xf]
        %v364 = vld [vmem:[%s340 + $0x44] sm:$0xf]
        %v365 = vld [vmem:[%s340 + $0x48] sm:$0xf]
        %v366 = vld [vmem:[%s340 + $0x4c] sm:$0xf]
        %v367 = vld [vmem:[%s340 + $0x50] sm:$0xf]
        %v368 = vld [vmem:[%s340 + $0x54] sm:$0xf]
        %v369 = vld [vmem:[%s340 + $0x58] sm:$0xf]
        %v370 = vld [vmem:[%s340 + $0x5c] sm:$0xf]
        %v371 = vld [vmem:[%s340 + $0x60] sm:$0xf]
        %v372 = vld [vmem:[%s340 + $0x64] sm:$0xf]
        %v373 = vld [vmem:[%s340 + $0x68] sm:$0xf]
        %v374 = vld [vmem:[%s340 + $0x6c] sm:$0xf]
        %v375 = vld [vmem:[%s340 + $0x70] sm:$0xf]
        %v376 = vld [vmem:[%s340 + $0x74] sm:$0xf]
        %v377 = vld [vmem:[%s340 + $0x78] sm:$0xf]
        %v378 = vld [vmem:[%s340 + $0x7c] sm:$0xf]
        %v379 = vld [vmem:[%s340 + $0x80] sm:$0xf]
        %v380 = vld [vmem:[%s340 + $0x84] sm:$0xf]
        %v381 = vld [vmem:[%s340 + $0x88] sm:$0xf]
        %v382 = vld [vmem:[%s340 + $0x8c] sm:$0xf]
        %v383 = vld [vmem:[%s340 + $0x90] sm:$0xf]
        %v384 = vld [vmem:[%s340 + $0x94] sm:$0xf]
        %v385 = vld [vmem:[%s340 + $0x98] sm:$0xf]
        %v386 = vld [vmem:[%s340 + $0x9c] sm:$0xf]
        %v387 = vld [vmem:[%s340 + $0xa0] sm:$0xf]
        %v388 = vld [vmem:[%s340 + $0xa4] sm:$0xf]
        %v389 = vld [vmem:[%s340 + $0xa8] sm:$0xf]
        %v390 = vld [vmem:[%s340 + $0xac] sm:$0xf]
        %v391 = vld [vmem:[%s340 + $0xb0] sm:$0xf]
        %v392 = vld [vmem:[%s340 + $0xb4] sm:$0xf]
        %v393 = vld [vmem:[%s340 + $0xb8] sm:$0xf]
        %v394 = vld [vmem:[%s340 + $0xbc] sm:$0xf]
        %v395 = vld [vmem:[%s340 + $0xc0] sm:$0xf]
        %v396 = vld [vmem:[%s340 + $0xc4] sm:$0xf]
        %v397 = vld [vmem:[%s340 + $0xc8] sm:$0xf]
        %v398 = vld [vmem:[%s340 + $0xcc] sm:$0xf]
        %v399 = vld [vmem:[%s340 + $0xd0] sm:$0xf]
        %v400 = vld [vmem:[%s340 + $0xd4] sm:$0xf]
        %v401 = vld [vmem:[%s340 + $0xd8] sm:$0xf]
        %v402 = vld [vmem:[%s340 + $0xdc] sm:$0xf]
        %v403 = vld [vmem:[%s340 + $0xe0] sm:$0xf]
        %v404 = vld [vmem:[%s340 + $0xe4] sm:$0xf]
        %v405 = vld [vmem:[%s340 + $0xe8] sm:$0xf]
        %v406 = vld [vmem:[%s340 + $0xec] sm:$0xf]
        %v407 = vld [vmem:[%s340 + $0xf0] sm:$0xf]
        %v408 = vld [vmem:[%s340 + $0xf4] sm:$0xf]
        %v409 = vld [vmem:[%s340 + $0xf8] sm:$0xf]
        %v410 = vld [vmem:[%s340 + $0xfc] sm:$0xf]
        %v411 = vld [vmem:[%s340 + $0x100] sm:$0xf]
        %v412 = vld [vmem:[%s340 + $0x104] sm:$0xf]
        %v413 = vld [vmem:[%s340 + $0x108] sm:$0xf]
        %v414 = vld [vmem:[%s340 + $0x10c] sm:$0xf]
        %v415 = vld [vmem:[%s340 + $0x110] sm:$0xf]
        %v416 = vld [vmem:[%s340 + $0x114] sm:$0xf]
        %v417 = vld [vmem:[%s340 + $0x118] sm:$0xf]
        %v418 = vld [vmem:[%s340 + $0x11c] sm:$0xf]
        %v419 = vld [vmem:[%s340 + $0x120] sm:$0xf]
        %v420 = vld [vmem:[%s340 + $0x124] sm:$0xf]
        %v421 = vld [vmem:[%s340 + $0x128] sm:$0xf]
        %v422 = vld [vmem:[%s340 + $0x12c] sm:$0xf]
        %v423 = vld [vmem:[%s340 + $0x130] sm:$0xf]
        %v424 = vld [vmem:[%s340 + $0x134] sm:$0xf]
        %v425 = vld [vmem:[%s340 + $0x138] sm:$0xf]
        %v426 = vld [vmem:[%s340 + $0x13c] sm:$0xf]
        %v427 = vld [vmem:[%s340 + $0x140] sm:$0xf]
        %v428 = vld [vmem:[%s340 + $0x144] sm:$0xf]
        %v429 = vld [vmem:[%s340 + $0x148] sm:$0xf]
        %v430 = vld [vmem:[%s340 + $0x14c] sm:$0xf]
        %v431 = vld [vmem:[%s340 + $0x150] sm:$0xf]
        %v432 = vld [vmem:[%s340 + $0x154] sm:$0xf]
        %v433 = vld [vmem:[%s340 + $0x158] sm:$0xf]
        %v434 = vld [vmem:[%s340 + $0x15c] sm:$0xf]
        %v435 = vld [vmem:[%s340 + $0x160] sm:$0xf]
        %v436 = vld [vmem:[%s340 + $0x164] sm:$0xf]
        %v437 = vld [vmem:[%s340 + $0x168] sm:$0xf]
        %v438 = vld [vmem:[%s340 + $0x16c] sm:$0xf]
        %v439 = vld [vmem:[%s340 + $0x170] sm:$0xf]
        %v440 = vld [vmem:[%s340 + $0x174] sm:$0xf]
        %v441 = vld [vmem:[%s340 + $0x178] sm:$0xf]
        %v442 = vld [vmem:[%s340 + $0x17c] sm:$0xf]
        %v443 = vld [vmem:[%s340 + $0x180] sm:$0xf]
        %v444 = vld [vmem:[%s340 + $0x184] sm:$0xf]
        %v445 = vld [vmem:[%s340 + $0x188] sm:$0xf]
        %v446 = vld [vmem:[%s340 + $0x18c] sm:$0xf]
        %v447 = vld [vmem:[%s340 + $0x190] sm:$0xf]
        %v448 = vld [vmem:[%s340 + $0x194] sm:$0xf]
        %v449 = vld [vmem:[%s340 + $0x198] sm:$0xf]
        %v450 = vld [vmem:[%s340 + $0x19c] sm:$0xf]
        %v451 = vld [vmem:[%s340 + $0x1a0] sm:$0xf]
        %v452 = vld [vmem:[%s340 + $0x1a4] sm:$0xf]
        %v453 = vld [vmem:[%s340 + $0x1a8] sm:$0xf]
        %v454 = vld [vmem:[%s340 + $0x1ac] sm:$0xf]
        %v455 = vld [vmem:[%s340 + $0x1b0] sm:$0xf]
        %v456 = vld [vmem:[%s340 + $0x1b4] sm:$0xf]
        %v457 = vld [vmem:[%s340 + $0x1b8] sm:$0xf]
        %v458 = vld [vmem:[%s340 + $0x1bc] sm:$0xf]
        %v459 = vld [vmem:[%s340 + $0x1c0] sm:$0xf]
        %v460 = vld [vmem:[%s340 + $0x1c4] sm:$0xf]
        %v461 = vld [vmem:[%s340 + $0x1c8] sm:$0xf]
        %v462 = vld [vmem:[%s340 + $0x1cc] sm:$0xf]
        %v463 = vld [vmem:[%s340 + $0x1d0] sm:$0xf]
        %v464 = vld [vmem:[%s340 + $0x1d4] sm:$0xf]
        %v465 = vld [vmem:[%s340 + $0x1d8] sm:$0xf]
        %v466 = vld [vmem:[%s340 + $0x1dc] sm:$0xf]
        %v467 = vld [vmem:[%s340 + $0x1e0] sm:$0xf]
        %v468 = vld [vmem:[%s340 + $0x1e4] sm:$0xf]
        %v469 = vld [vmem:[%s340 + $0x1e8] sm:$0xf]
        %v470 = vld [vmem:[%s340 + $0x1ec] sm:$0xf]
        %v471 = vld [vmem:[%s340 + $0x1f0] sm:$0xf]
        %v472 = vld [vmem:[%s340 + $0x1f4] sm:$0xf]
        %v473 = vld [vmem:[%s340 + $0x1f8] sm:$0xf]
        %v474 = vld [vmem:[%s340 + $0x1fc] sm:$0xf]
        %v475 = vld [vmem:[%s1] sm:$0xf]
        %v476 = vld [vmem:[%s1 + $0x4] sm:$0x1]
        %v477 = vld [vmem:[#allocation6] sm:$0x1]
        %v479 = vlaneseq
        %v480 = vshrl.u32 %v479, 7
        %v481 = vsub.s32 0, %v480
        %v482 = vrot.slane %v477, %v481
        %v612 = vunpack.c.l.b16 %v347
        %v613 = vunpack.c.l.b16 %v348
        %v614 = vunpack.c.l.b16 %v349
        %v615 = vunpack.c.l.b16 %v350
        %v616 = vunpack.c.l.b16 %v351
        %v617 = vunpack.c.l.b16 %v352
        %v618 = vunpack.c.l.b16 %v353
        %v619 = vunpack.c.l.b16 %v354
        %v620 = vunpack.c.l.b16 %v355
        %v621 = vunpack.c.l.b16 %v356
        %v622 = vunpack.c.l.b16 %v357
        %v623 = vunpack.c.l.b16 %v358
        %v624 = vunpack.c.l.b16 %v359
        %v625 = vunpack.c.l.b16 %v360
        %v626 = vunpack.c.l.b16 %v361
        %v627 = vunpack.c.l.b16 %v362
        %v628 = vunpack.c.l.b16 %v363
        %v629 = vunpack.c.l.b16 %v364
        %v630 = vunpack.c.l.b16 %v365
        %v631 = vunpack.c.l.b16 %v366
        %v632 = vunpack.c.l.b16 %v367
        %v633 = vunpack.c.l.b16 %v368
        %v634 = vunpack.c.l.b16 %v369
        %v635 = vunpack.c.l.b16 %v370
        %v636 = vunpack.c.l.b16 %v371
        %v637 = vunpack.c.l.b16 %v372
        %v638 = vunpack.c.l.b16 %v373
        %v639 = vunpack.c.l.b16 %v374
        %v640 = vunpack.c.l.b16 %v375
        %v641 = vunpack.c.l.b16 %v376
        %v642 = vunpack.c.l.b16 %v377
        %v643 = vunpack.c.l.b16 %v378
        %v644 = vunpack.c.l.b16 %v379
        %v645 = vunpack.c.l.b16 %v380
        %v646 = vunpack.c.l.b16 %v381
        %v647 = vunpack.c.l.b16 %v382
        %v648 = vunpack.c.l.b16 %v383
        %v649 = vunpack.c.l.b16 %v384
        %v650 = vunpack.c.l.b16 %v385
        %v651 = vunpack.c.l.b16 %v386
        %v652 = vunpack.c.l.b16 %v387
        %v653 = vunpack.c.l.b16 %v388
        %v654 = vunpack.c.l.b16 %v389
        %v655 = vunpack.c.l.b16 %v390
        %v656 = vunpack.c.l.b16 %v391
        %v657 = vunpack.c.l.b16 %v392
        %v658 = vunpack.c.l.b16 %v393
        %v659 = vunpack.c.l.b16 %v394
        %v660 = vunpack.c.l.b16 %v395
        %v661 = vunpack.c.l.b16 %v396
        %v662 = vunpack.c.l.b16 %v397
        %v663 = vunpack.c.l.b16 %v398
        %v664 = vunpack.c.l.b16 %v399
        %v665 = vunpack.c.l.b16 %v400
        %v666 = vunpack.c.l.b16 %v401
        %v667 = vunpack.c.l.b16 %v402
        %v668 = vunpack.c.l.b16 %v403
        %v669 = vunpack.c.l.b16 %v404
        %v670 = vunpack.c.l.b16 %v405
        %v671 = vunpack.c.l.b16 %v406
        %v672 = vunpack.c.l.b16 %v407
        %v673 = vunpack.c.l.b16 %v408
        %v674 = vunpack.c.l.b16 %v409
        %v675 = vunpack.c.l.b16 %v410
        %v676 = vunpack.c.l.b16 %v411
        %v677 = vunpack.c.l.b16 %v412
        %v678 = vunpack.c.l.b16 %v413
        %v679 = vunpack.c.l.b16 %v414
        %v680 = vunpack.c.l.b16 %v415
        %v681 = vunpack.c.l.b16 %v416
        %v682 = vunpack.c.l.b16 %v417
        %v683 = vunpack.c.l.b16 %v418
        %v684 = vunpack.c.l.b16 %v419
        %v685 = vunpack.c.l.b16 %v420
        %v686 = vunpack.c.l.b16 %v421
        %v687 = vunpack.c.l.b16 %v422
        %v688 = vunpack.c.l.b16 %v423
        %v689 = vunpack.c.l.b16 %v424
        %v690 = vunpack.c.l.b16 %v425
        %v691 = vunpack.c.l.b16 %v426
        %v692 = vunpack.c.l.b16 %v427
        %v693 = vunpack.c.l.b16 %v428
        %v694 = vunpack.c.l.b16 %v429
        %v695 = vunpack.c.l.b16 %v430
        %v696 = vunpack.c.l.b16 %v431
        %v697 = vunpack.c.l.b16 %v432
        %v698 = vunpack.c.l.b16 %v433
        %v699 = vunpack.c.l.b16 %v434
        %v700 = vunpack.c.l.b16 %v435
        %v701 = vunpack.c.l.b16 %v436
        %v702 = vunpack.c.l.b16 %v437
        %v703 = vunpack.c.l.b16 %v438
        %v704 = vunpack.c.l.b16 %v439
        %v705 = vunpack.c.l.b16 %v440
        %v706 = vunpack.c.l.b16 %v441
        %v707 = vunpack.c.l.b16 %v442
        %v708 = vunpack.c.l.b16 %v443
        %v709 = vunpack.c.l.b16 %v444
        %v710 = vunpack.c.l.b16 %v445
        %v711 = vunpack.c.l.b16 %v446
        %v712 = vunpack.c.l.b16 %v447
        %v713 = vunpack.c.l.b16 %v448
        %v714 = vunpack.c.l.b16 %v449
        %v715 = vunpack.c.l.b16 %v450
        %v716 = vunpack.c.l.b16 %v451
        %v717 = vunpack.c.l.b16 %v452
        %v718 = vunpack.c.l.b16 %v453
        %v719 = vunpack.c.l.b16 %v454
        %v720 = vunpack.c.l.b16 %v455
        %v721 = vunpack.c.l.b16 %v456
        %v722 = vunpack.c.l.b16 %v457
        %v723 = vunpack.c.l.b16 %v458
        %v724 = vunpack.c.l.b16 %v459
        %v725 = vunpack.c.l.b16 %v460
        %v726 = vunpack.c.l.b16 %v461
        %v727 = vunpack.c.l.b16 %v462
        %v728 = vunpack.c.l.b16 %v463
        %v729 = vunpack.c.l.b16 %v464
        %v730 = vunpack.c.l.b16 %v465
        %v731 = vunpack.c.l.b16 %v466
        %v732 = vunpack.c.l.b16 %v467
        %v733 = vunpack.c.l.b16 %v468
        %v734 = vunpack.c.l.b16 %v469
        %v735 = vunpack.c.l.b16 %v470
        %v736 = vunpack.c.l.b16 %v471
        %v737 = vunpack.c.l.b16 %v472
        %v738 = vunpack.c.l.b16 %v473
        %v739 = vunpack.c.l.b16 %v474
        %v740 = vpack.c.b16 %v613, %v612
        %v741 = vpack.c.b16 %v615, %v614
        %v742 = vpack.c.b16 %v617, %v616
        %v743 = vpack.c.b16 %v619, %v618
        %v744 = vpack.c.b16 %v621, %v620
        %v745 = vpack.c.b16 %v623, %v622
        %v746 = vpack.c.b16 %v625, %v624
        %v747 = vpack.c.b16 %v627, %v626
        %v748 = vpack.c.b16 %v629, %v628
        %v749 = vpack.c.b16 %v631, %v630
        %v750 = vpack.c.b16 %v633, %v632
        %v751 = vpack.c.b16 %v635, %v634
        %v752 = vpack.c.b16 %v637, %v636
        %v753 = vpack.c.b16 %v639, %v638
        %v754 = vpack.c.b16 %v641, %v640
        %v755 = vpack.c.b16 %v643, %v642
        %v756 = vpack.c.b16 %v645, %v644
        %v757 = vpack.c.b16 %v647, %v646
        %v758 = vpack.c.b16 %v649, %v648
        %v759 = vpack.c.b16 %v651, %v650
        %v760 = vpack.c.b16 %v653, %v652
        %v761 = vpack.c.b16 %v655, %v654
        %v762 = vpack.c.b16 %v657, %v656
        %v763 = vpack.c.b16 %v659, %v658
        %v764 = vpack.c.b16 %v661, %v660
        %v765 = vpack.c.b16 %v663, %v662
        %v766 = vpack.c.b16 %v665, %v664
        %v767 = vpack.c.b16 %v667, %v666
        %v768 = vpack.c.b16 %v669, %v668
        %v769 = vpack.c.b16 %v671, %v670
        %v770 = vpack.c.b16 %v673, %v672
        %v771 = vpack.c.b16 %v675, %v674
        %v772 = vpack.c.b16 %v677, %v676
        %v773 = vpack.c.b16 %v679, %v678
        %v774 = vpack.c.b16 %v681, %v680
        %v775 = vpack.c.b16 %v683, %v682
        %v776 = vpack.c.b16 %v685, %v684
        %v777 = vpack.c.b16 %v687, %v686
        %v778 = vpack.c.b16 %v689, %v688
        %v779 = vpack.c.b16 %v691, %v690
        %v780 = vpack.c.b16 %v693, %v692
        %v781 = vpack.c.b16 %v695, %v694
        %v782 = vpack.c.b16 %v697, %v696
        %v783 = vpack.c.b16 %v699, %v698
        %v784 = vpack.c.b16 %v701, %v700
        %v785 = vpack.c.b16 %v703, %v702
        %v786 = vpack.c.b16 %v705, %v704
        %v787 = vpack.c.b16 %v707, %v706
        %v788 = vpack.c.b16 %v709, %v708
        %v789 = vpack.c.b16 %v711, %v710
        %v790 = vpack.c.b16 %v713, %v712
        %v791 = vpack.c.b16 %v715, %v714
        %v792 = vpack.c.b16 %v717, %v716
        %v793 = vpack.c.b16 %v719, %v718
        %v794 = vpack.c.b16 %v721, %v720
        %v795 = vpack.c.b16 %v723, %v722
        %v796 = vpack.c.b16 %v725, %v724
        %v797 = vpack.c.b16 %v727, %v726
        %v798 = vpack.c.b16 %v729, %v728
        %v799 = vpack.c.b16 %v731, %v730
        %v800 = vpack.c.b16 %v733, %v732
        %v801 = vpack.c.b16 %v735, %v734
        %v802 = vpack.c.b16 %v737, %v736
        %v803 = vpack.c.b16 %v739, %v738
        %v806 = vunpack.c.l.b16 %v475
        %v807 = vunpack.c.l.b16 %v476
        %v808 = vpack.c.b16 %v807, %v806
        %vm809 = vcmask 72704
        %v811 = vsel %vm809, %v740, 0
        %v814 = vsel %vm809, %v741, 0
        %v817 = vsel %vm809, %v742, 0
        %v820 = vsel %vm809, %v743, 0
        %v823 = vsel %vm809, %v744, 0
        %v826 = vsel %vm809, %v745, 0
        %v829 = vsel %vm809, %v746, 0
        %v832 = vsel %vm809, %v747, 0
        %v835 = vsel %vm809, %v748, 0
        %v838 = vsel %vm809, %v749, 0
        %v841 = vsel %vm809, %v750, 0
        %v844 = vsel %vm809, %v751, 0
        %v847 = vsel %vm809, %v752, 0
        %v850 = vsel %vm809, %v753, 0
        %v853 = vsel %vm809, %v754, 0
        %v856 = vsel %vm809, %v755, 0
        %v859 = vsel %vm809, %v756, 0
        %v862 = vsel %vm809, %v757, 0
        %v865 = vsel %vm809, %v758, 0
        %v868 = vsel %vm809, %v759, 0
        %v871 = vsel %vm809, %v760, 0
        %v874 = vsel %vm809, %v761, 0
        %v877 = vsel %vm809, %v762, 0
        %v880 = vsel %vm809, %v763, 0
        %v883 = vsel %vm809, %v764, 0
        %v886 = vsel %vm809, %v765, 0
        %v889 = vsel %vm809, %v766, 0
        %v892 = vsel %vm809, %v767, 0
        %v895 = vsel %vm809, %v768, 0
        %v898 = vsel %vm809, %v769, 0
        %v901 = vsel %vm809, %v770, 0
        %v904 = vsel %vm809, %v771, 0
        %v907 = vsel %vm809, %v772, 0
        %v910 = vsel %vm809, %v773, 0
        %v913 = vsel %vm809, %v774, 0
        %v916 = vsel %vm809, %v775, 0
        %v919 = vsel %vm809, %v776, 0
        %v922 = vsel %vm809, %v777, 0
        %v925 = vsel %vm809, %v778, 0
        %v928 = vsel %vm809, %v779, 0
        %v931 = vsel %vm809, %v780, 0
        %v934 = vsel %vm809, %v781, 0
        %v937 = vsel %vm809, %v782, 0
        %v940 = vsel %vm809, %v783, 0
        %v943 = vsel %vm809, %v784, 0
        %v946 = vsel %vm809, %v785, 0
        %v949 = vsel %vm809, %v786, 0
        %v952 = vsel %vm809, %v787, 0
        %v955 = vsel %vm809, %v788, 0
        %v958 = vsel %vm809, %v789, 0
        %v961 = vsel %vm809, %v790, 0
        %v964 = vsel %vm809, %v791, 0
        %v967 = vsel %vm809, %v792, 0
        %v970 = vsel %vm809, %v793, 0
        %v973 = vsel %vm809, %v794, 0
        %v976 = vsel %vm809, %v795, 0
        %v979 = vsel %vm809, %v796, 0
        %v982 = vsel %vm809, %v797, 0
        %v985 = vsel %vm809, %v798, 0
        %v988 = vsel %vm809, %v799, 0
        %v991 = vsel %vm809, %v800, 0
        %v994 = vsel %vm809, %v801, 0
        %v997 = vsel %vm809, %v802, 0
        %v1000 = vsel %vm809, %v803, 0
        %vm1002 = vcmask 1043456
        %vm1003 = vcmask 1044480
        %v1004 = vsel %vm1002, 4294967295, 65535
        %v1005 = vsel %vm1003, %v1004, 0
        %v1007 = vand.u32 %v808, %v1005
        %1009 = vmatprep.subr.bf16.mxu0 0
        %1010 = vmatpush1.bf16.msra.mxu0 %v1007
        %1011 = vmatprep.subr.bf16.mxu0 0
        %1012 = vmatpush1.bf16.msra.mxu0 0
        %1013 = vmatprep.subr.bf16.mxu0 0
        %1014 = vmatpush1.bf16.msra.mxu0 0
        %1015 = vmatprep.subr.bf16.mxu0 0
        %1016 = vmatpush1.bf16.msra.mxu0 0
        %1017 = vmatprep.subr.bf16.mxu0 0
        %1018 = vmatpush1.bf16.msra.mxu0 0
        %1019 = vmatprep.subr.bf16.mxu0 0
        %1020 = vmatpush1.bf16.msra.mxu0 0
        %1021 = vmatprep.subr.bf16.mxu0 0
        %1022 = vmatpush1.bf16.msra.mxu0 0
        %1023 = vmatprep.subr.bf16.mxu0 0
        %1024 = vmatpush1.bf16.msra.mxu0 0
        %1025 = vmatprep.subr.bf16.mxu0 0
        %1026 = vmatpush1.bf16.msra.mxu0 0
        %1027 = vmatprep.subr.bf16.mxu0 0
        %1028 = vmatpush1.bf16.msra.mxu0 0
        %1029 = vmatprep.subr.bf16.mxu0 0
        %1030 = vmatpush1.bf16.msra.mxu0 0
        %1031 = vmatprep.subr.bf16.mxu0 0
        %1032 = vmatpush1.bf16.msra.mxu0 0
        %1033 = vmatprep.subr.bf16.mxu0 0
        %1034 = vmatpush1.bf16.msra.mxu0 0
        %1035 = vmatprep.subr.bf16.mxu0 0
        %1036 = vmatpush1.bf16.msra.mxu0 0
        %1037 = vmatprep.subr.bf16.mxu0 0
        %1038 = vmatpush1.bf16.msra.mxu0 0
        %1039 = vmatprep.subr.bf16.mxu0 0
        %1040 = vmatpush1.bf16.msra.mxu0 0
        %1041 = vmatprep.mubr.bf16.mxu0 0
        %1042 = vmatmul.mubr.bf16.gmra.mrb[0].mxu0 %v811
        %v1043 = vpop.f32.mrb[0].mxu0
        %v1044 = vadd.f32 %v482, %v1043
        %v1045 = vpop.f32.mrb[0].mxu0
        %v1046 = vpop.f32.mrb[0].mxu0
        %v1047 = vadd.f32 %v482, %v1046
        %v1048 = vpop.f32.mrb[0].mxu0
        %1049 = vmatprep.mubr.bf16.mxu0 0
        %1050 = vmatmul.mubr.bf16.gmra.mrb[0].mxu0 %v814
        %v1051 = vpop.f32.mrb[0].mxu0
        %v1052 = vadd.f32 %v482, %v1051
        %v1053 = vpop.f32.mrb[0].mxu0
        %v1054 = vpop.f32.mrb[0].mxu0
        %v1055 = vadd.f32 %v482, %v1054
        %v1056 = vpop.f32.mrb[0].mxu0
        %1057 = vmatprep.mubr.bf16.mxu0 0
        %1058 = vmatmul.mubr.bf16.gmra.mrb[0].mxu0 %v817
        %v1059 = vpop.f32.mrb[0].mxu0
        %v1060 = vadd.f32 %v482, %v1059
        %v1061 = vpop.f32.mrb[0].mxu0
        %v1062 = vpop.f32.mrb[0].mxu0
        %v1063 = vadd.f32 %v482, %v1062
        %v1064 = vpop.f32.mrb[0].mxu0
        %1065 = vmatprep.mubr.bf16.mxu0 0
        %1066 = vmatmul.mubr.bf16.gmra.mrb[0].mxu0 %v820
        %v1067 = vpop.f32.mrb[0].mxu0
        %v1068 = vadd.f32 %v482, %v1067
        %v1069 = vpop.f32.mrb[0].mxu0
        %v1070 = vpop.f32.mrb[0].mxu0
        %v1071 = vadd.f32 %v482, %v1070
        %v1072 = vpop.f32.mrb[0].mxu0
        %1073 = vmatprep.mubr.bf16.mxu0 0
        %1074 = vmatmul.mubr.bf16.gmra.mrb[0].mxu0 %v823
        %v1075 = vpop.f32.mrb[0].mxu0
        %v1076 = vadd.f32 %v482, %v1075
        %v1077 = vpop.f32.mrb[0].mxu0
        %v1078 = vpop.f32.mrb[0].mxu0
        %v1079 = vadd.f32 %v482, %v1078
        %v1080 = vpop.f32.mrb[0].mxu0
        %1081 = vmatprep.mubr.bf16.mxu0 0
        %1082 = vmatmul.mubr.bf16.gmra.mrb[0].mxu0 %v826
        %v1083 = vpop.f32.mrb[0].mxu0
        %v1084 = vadd.f32 %v482, %v1083
        %v1085 = vpop.f32.mrb[0].mxu0
        %v1086 = vpop.f32.mrb[0].mxu0
        %v1087 = vadd.f32 %v482, %v1086
        %v1088 = vpop.f32.mrb[0].mxu0
        %1089 = vmatprep.mubr.bf16.mxu0 0
        %1090 = vmatmul.mubr.bf16.gmra.mrb[0].mxu0 %v829
        %v1091 = vpop.f32.mrb[0].mxu0
        %v1092 = vadd.f32 %v482, %v1091
        %v1093 = vpop.f32.mrb[0].mxu0
        %v1094 = vpop.f32.mrb[0].mxu0
        %v1095 = vadd.f32 %v482, %v1094
        %v1096 = vpop.f32.mrb[0].mxu0
        %1097 = vmatprep.mubr.bf16.mxu0 0
        %1098 = vmatmul.mubr.bf16.gmra.mrb[0].mxu0 %v832
        %v1099 = vpop.f32.mrb[0].mxu0
        %v1100 = vadd.f32 %v482, %v1099
        %v1101 = vpop.f32.mrb[0].mxu0
        %v1102 = vpop.f32.mrb[0].mxu0
        %v1103 = vadd.f32 %v482, %v1102
        %v1104 = vpop.f32.mrb[0].mxu0
        %1105 = vmatprep.mubr.bf16.mxu0 0
        %1106 = vmatmul.mubr.bf16.gmra.mrb[0].mxu0 %v835
        %v1107 = vpop.f32.mrb[0].mxu0
        %v1108 = vadd.f32 %v482, %v1107
        %v1109 = vpop.f32.mrb[0].mxu0
        %v1110 = vpop.f32.mrb[0].mxu0
        %v1111 = vadd.f32 %v482, %v1110
        %v1112 = vpop.f32.mrb[0].mxu0
        %1113 = vmatprep.mubr.bf16.mxu0 0
        %1114 = vmatmul.mubr.bf16.gmra.mrb[0].mxu0 %v838
        %v1115 = vpop.f32.mrb[0].mxu0
        %v1116 = vadd.f32 %v482, %v1115
        %v1117 = vpop.f32.mrb[0].mxu0
        %v1118 = vpop.f32.mrb[0].mxu0
        %v1119 = vadd.f32 %v482, %v1118
        %v1120 = vpop.f32.mrb[0].mxu0
        %1121 = vmatprep.mubr.bf16.mxu0 0
        %1122 = vmatmul.mubr.bf16.gmra.mrb[0].mxu0 %v841
        %v1123 = vpop.f32.mrb[0].mxu0
        %v1124 = vadd.f32 %v482, %v1123
        %v1125 = vpop.f32.mrb[0].mxu0
        %v1126 = vpop.f32.mrb[0].mxu0
        %v1127 = vadd.f32 %v482, %v1126
        %v1128 = vpop.f32.mrb[0].mxu0
        %1129 = vmatprep.mubr.bf16.mxu0 0
        %1130 = vmatmul.mubr.bf16.gmra.mrb[0].mxu0 %v844
        %v1131 = vpop.f32.mrb[0].mxu0
        %v1132 = vadd.f32 %v482, %v1131
        %v1133 = vpop.f32.mrb[0].mxu0
        %v1134 = vpop.f32.mrb[0].mxu0
        %v1135 = vadd.f32 %v482, %v1134
        %v1136 = vpop.f32.mrb[0].mxu0
        %1137 = vmatprep.mubr.bf16.mxu0 0
        %1138 = vmatmul.mubr.bf16.gmra.mrb[0].mxu0 %v847
        %v1139 = vpop.f32.mrb[0].mxu0
        %v1140 = vadd.f32 %v482, %v1139
        %v1141 = vpop.f32.mrb[0].mxu0
        %v1142 = vpop.f32.mrb[0].mxu0
        %v1143 = vadd.f32 %v482, %v1142
        %v1144 = vpop.f32.mrb[0].mxu0
        %1145 = vmatprep.mubr.bf16.mxu0 0
        %1146 = vmatmul.mubr.bf16.gmra.mrb[0].mxu0 %v850
        %v1147 = vpop.f32.mrb[0].mxu0
        %v1148 = vadd.f32 %v482, %v1147
        %v1149 = vpop.f32.mrb[0].mxu0
        %v1150 = vpop.f32.mrb[0].mxu0
        %v1151 = vadd.f32 %v482, %v1150
        %v1152 = vpop.f32.mrb[0].mxu0
        %1153 = vmatprep.mubr.bf16.mxu0 0
        %1154 = vmatmul.mubr.bf16.gmra.mrb[0].mxu0 %v853
        %v1155 = vpop.f32.mrb[0].mxu0
        %v1156 = vadd.f32 %v482, %v1155
        %v1157 = vpop.f32.mrb[0].mxu0
        %v1158 = vpop.f32.mrb[0].mxu0
        %v1159 = vadd.f32 %v482, %v1158
        %v1160 = vpop.f32.mrb[0].mxu0
        %1161 = vmatprep.mubr.bf16.mxu0 0
        %1162 = vmatmul.mubr.bf16.gmra.mrb[0].mxu0 %v856
        %v1163 = vpop.f32.mrb[0].mxu0
        %v1164 = vadd.f32 %v482, %v1163
        %v1165 = vpop.f32.mrb[0].mxu0
        %v1166 = vpop.f32.mrb[0].mxu0
        %v1167 = vadd.f32 %v482, %v1166
        %v1168 = vpop.f32.mrb[0].mxu0
        %1169 = vmatprep.mubr.bf16.mxu0 0
        %1170 = vmatmul.mubr.bf16.gmra.mrb[0].mxu0 %v859
        %v1171 = vpop.f32.mrb[0].mxu0
        %v1172 = vadd.f32 %v482, %v1171
        %v1173 = vpop.f32.mrb[0].mxu0
        %v1174 = vpop.f32.mrb[0].mxu0
        %v1175 = vadd.f32 %v482, %v1174
        %v1176 = vpop.f32.mrb[0].mxu0
        %1177 = vmatprep.mubr.bf16.mxu0 0
        %1178 = vmatmul.mubr.bf16.gmra.mrb[0].mxu0 %v862
        %v1179 = vpop.f32.mrb[0].mxu0
        %v1180 = vadd.f32 %v482, %v1179
        %v1181 = vpop.f32.mrb[0].mxu0
        %v1182 = vpop.f32.mrb[0].mxu0
        %v1183 = vadd.f32 %v482, %v1182
        %v1184 = vpop.f32.mrb[0].mxu0
        %1185 = vmatprep.mubr.bf16.mxu0 0
        %1186 = vmatmul.mubr.bf16.gmra.mrb[0].mxu0 %v865
        %v1187 = vpop.f32.mrb[0].mxu0
        %v1188 = vadd.f32 %v482, %v1187
        %v1189 = vpop.f32.mrb[0].mxu0
        %v1190 = vpop.f32.mrb[0].mxu0
        %v1191 = vadd.f32 %v482, %v1190
        %v1192 = vpop.f32.mrb[0].mxu0
        %1193 = vmatprep.mubr.bf16.mxu0 0
        %1194 = vmatmul.mubr.bf16.gmra.mrb[0].mxu0 %v868
        %v1195 = vpop.f32.mrb[0].mxu0
        %v1196 = vadd.f32 %v482, %v1195
        %v1197 = vpop.f32.mrb[0].mxu0
        %v1198 = vpop.f32.mrb[0].mxu0
        %v1199 = vadd.f32 %v482, %v1198
        %v1200 = vpop.f32.mrb[0].mxu0
        %1201 = vmatprep.mubr.bf16.mxu0 0
        %1202 = vmatmul.mubr.bf16.gmra.mrb[0].mxu0 %v871
        %v1203 = vpop.f32.mrb[0].mxu0
        %v1204 = vadd.f32 %v482, %v1203
        %v1205 = vpop.f32.mrb[0].mxu0
        %v1206 = vpop.f32.mrb[0].mxu0
        %v1207 = vadd.f32 %v482, %v1206
        %v1208 = vpop.f32.mrb[0].mxu0
        %1209 = vmatprep.mubr.bf16.mxu0 0
        %1210 = vmatmul.mubr.bf16.gmra.mrb[0].mxu0 %v874
        %v1211 = vpop.f32.mrb[0].mxu0
        %v1212 = vadd.f32 %v482, %v1211
        %v1213 = vpop.f32.mrb[0].mxu0
        %v1214 = vpop.f32.mrb[0].mxu0
        %v1215 = vadd.f32 %v482, %v1214
        %v1216 = vpop.f32.mrb[0].mxu0
        %1217 = vmatprep.mubr.bf16.mxu0 0
        %1218 = vmatmul.mubr.bf16.gmra.mrb[0].mxu0 %v877
        %v1219 = vpop.f32.mrb[0].mxu0
        %v1220 = vadd.f32 %v482, %v1219
        %v1221 = vpop.f32.mrb[0].mxu0
        %v1222 = vpop.f32.mrb[0].mxu0
        %v1223 = vadd.f32 %v482, %v1222
        %v1224 = vpop.f32.mrb[0].mxu0
        %1225 = vmatprep.mubr.bf16.mxu0 0
        %1226 = vmatmul.mubr.bf16.gmra.mrb[0].mxu0 %v880
        %v1227 = vpop.f32.mrb[0].mxu0
        %v1228 = vadd.f32 %v482, %v1227
        %v1229 = vpop.f32.mrb[0].mxu0
        %v1230 = vpop.f32.mrb[0].mxu0
        %v1231 = vadd.f32 %v482, %v1230
        %v1232 = vpop.f32.mrb[0].mxu0
        %1233 = vmatprep.mubr.bf16.mxu0 0
        %1234 = vmatmul.mubr.bf16.gmra.mrb[0].mxu0 %v883
        %v1235 = vpop.f32.mrb[0].mxu0
        %v1236 = vadd.f32 %v482, %v1235
        %v1237 = vpop.f32.mrb[0].mxu0
        %v1238 = vpop.f32.mrb[0].mxu0
        %v1239 = vadd.f32 %v482, %v1238
        %v1240 = vpop.f32.mrb[0].mxu0
        %1241 = vmatprep.mubr.bf16.mxu0 0
        %1242 = vmatmul.mubr.bf16.gmra.mrb[0].mxu0 %v886
        %v1243 = vpop.f32.mrb[0].mxu0
        %v1244 = vadd.f32 %v482, %v1243
        %v1245 = vpop.f32.mrb[0].mxu0
        %v1246 = vpop.f32.mrb[0].mxu0
        %v1247 = vadd.f32 %v482, %v1246
        %v1248 = vpop.f32.mrb[0].mxu0
        %1249 = vmatprep.mubr.bf16.mxu0 0
        %1250 = vmatmul.mubr.bf16.gmra.mrb[0].mxu0 %v889
        %v1251 = vpop.f32.mrb[0].mxu0
        %v1252 = vadd.f32 %v482, %v1251
        %v1253 = vpop.f32.mrb[0].mxu0
        %v1254 = vpop.f32.mrb[0].mxu0
        %v1255 = vadd.f32 %v482, %v1254
        %v1256 = vpop.f32.mrb[0].mxu0
        %1257 = vmatprep.mubr.bf16.mxu0 0
        %1258 = vmatmul.mubr.bf16.gmra.mrb[0].mxu0 %v892
        %v1259 = vpop.f32.mrb[0].mxu0
        %v1260 = vadd.f32 %v482, %v1259
        %v1261 = vpop.f32.mrb[0].mxu0
        %v1262 = vpop.f32.mrb[0].mxu0
        %v1263 = vadd.f32 %v482, %v1262
        %v1264 = vpop.f32.mrb[0].mxu0
        %1265 = vmatprep.mubr.bf16.mxu0 0
        %1266 = vmatmul.mubr.bf16.gmra.mrb[0].mxu0 %v895
        %v1267 = vpop.f32.mrb[0].mxu0
        %v1268 = vadd.f32 %v482, %v1267
        %v1269 = vpop.f32.mrb[0].mxu0
        %v1270 = vpop.f32.mrb[0].mxu0
        %v1271 = vadd.f32 %v482, %v1270
        %v1272 = vpop.f32.mrb[0].mxu0
        %1273 = vmatprep.mubr.bf16.mxu0 0
        %1274 = vmatmul.mubr.bf16.gmra.mrb[0].mxu0 %v898
        %v1275 = vpop.f32.mrb[0].mxu0
        %v1276 = vadd.f32 %v482, %v1275
        %v1277 = vpop.f32.mrb[0].mxu0
        %v1278 = vpop.f32.mrb[0].mxu0
        %v1279 = vadd.f32 %v482, %v1278
        %v1280 = vpop.f32.mrb[0].mxu0
        %1281 = vmatprep.mubr.bf16.mxu0 0
        %1282 = vmatmul.mubr.bf16.gmra.mrb[0].mxu0 %v901
        %v1283 = vpop.f32.mrb[0].mxu0
        %v1284 = vadd.f32 %v482, %v1283
        %v1285 = vpop.f32.mrb[0].mxu0
        %v1286 = vpop.f32.mrb[0].mxu0
        %v1287 = vadd.f32 %v482, %v1286
        %v1288 = vpop.f32.mrb[0].mxu0
        %1289 = vmatprep.mubr.bf16.mxu0 0
        %1290 = vmatmul.mubr.bf16.gmra.mrb[0].mxu0 %v904
        %v1291 = vpop.f32.mrb[0].mxu0
        %v1292 = vadd.f32 %v482, %v1291
        %v1293 = vpop.f32.mrb[0].mxu0
        %v1294 = vpop.f32.mrb[0].mxu0
        %v1295 = vadd.f32 %v482, %v1294
        %v1296 = vpop.f32.mrb[0].mxu0
        %1297 = vmatprep.mubr.bf16.mxu0 0
        %1298 = vmatmul.mubr.bf16.gmra.mrb[0].mxu0 %v907
        %v1299 = vpop.f32.mrb[0].mxu0
        %v1300 = vadd.f32 %v482, %v1299
        %v1301 = vpop.f32.mrb[0].mxu0
        %v1302 = vpop.f32.mrb[0].mxu0
        %v1303 = vadd.f32 %v482, %v1302
        %v1304 = vpop.f32.mrb[0].mxu0
        %1305 = vmatprep.mubr.bf16.mxu0 0
        %1306 = vmatmul.mubr.bf16.gmra.mrb[0].mxu0 %v910
        %v1307 = vpop.f32.mrb[0].mxu0
        %v1308 = vadd.f32 %v482, %v1307
        %v1309 = vpop.f32.mrb[0].mxu0
        %v1310 = vpop.f32.mrb[0].mxu0
        %v1311 = vadd.f32 %v482, %v1310
        %v1312 = vpop.f32.mrb[0].mxu0
        %1313 = vmatprep.mubr.bf16.mxu0 0
        %1314 = vmatmul.mubr.bf16.gmra.mrb[0].mxu0 %v913
        %v1315 = vpop.f32.mrb[0].mxu0
        %v1316 = vadd.f32 %v482, %v1315
        %v1317 = vpop.f32.mrb[0].mxu0
        %v1318 = vpop.f32.mrb[0].mxu0
        %v1319 = vadd.f32 %v482, %v1318
        %v1320 = vpop.f32.mrb[0].mxu0
        %1321 = vmatprep.mubr.bf16.mxu0 0
        %1322 = vmatmul.mubr.bf16.gmra.mrb[0].mxu0 %v916
        %v1323 = vpop.f32.mrb[0].mxu0
        %v1324 = vadd.f32 %v482, %v1323
        %v1325 = vpop.f32.mrb[0].mxu0
        %v1326 = vpop.f32.mrb[0].mxu0
        %v1327 = vadd.f32 %v482, %v1326
        %v1328 = vpop.f32.mrb[0].mxu0
        %1329 = vmatprep.mubr.bf16.mxu0 0
        %1330 = vmatmul.mubr.bf16.gmra.mrb[0].mxu0 %v919
        %v1331 = vpop.f32.mrb[0].mxu0
        %v1332 = vadd.f32 %v482, %v1331
        %v1333 = vpop.f32.mrb[0].mxu0
        %v1334 = vpop.f32.mrb[0].mxu0
        %v1335 = vadd.f32 %v482, %v1334
        %v1336 = vpop.f32.mrb[0].mxu0
        %1337 = vmatprep.mubr.bf16.mxu0 0
        %1338 = vmatmul.mubr.bf16.gmra.mrb[0].mxu0 %v922
        %v1339 = vpop.f32.mrb[0].mxu0
        %v1340 = vadd.f32 %v482, %v1339
        %v1341 = vpop.f32.mrb[0].mxu0
        %v1342 = vpop.f32.mrb[0].mxu0
        %v1343 = vadd.f32 %v482, %v1342
        %v1344 = vpop.f32.mrb[0].mxu0
        %1345 = vmatprep.mubr.bf16.mxu0 0
        %1346 = vmatmul.mubr.bf16.gmra.mrb[0].mxu0 %v925
        %v1347 = vpop.f32.mrb[0].mxu0
        %v1348 = vadd.f32 %v482, %v1347
        %v1349 = vpop.f32.mrb[0].mxu0
        %v1350 = vpop.f32.mrb[0].mxu0
        %v1351 = vadd.f32 %v482, %v1350
        %v1352 = vpop.f32.mrb[0].mxu0
        %1353 = vmatprep.mubr.bf16.mxu0 0
        %1354 = vmatmul.mubr.bf16.gmra.mrb[0].mxu0 %v928
        %v1355 = vpop.f32.mrb[0].mxu0
        %v1356 = vadd.f32 %v482, %v1355
        %v1357 = vpop.f32.mrb[0].mxu0
        %v1358 = vpop.f32.mrb[0].mxu0
        %v1359 = vadd.f32 %v482, %v1358
        %v1360 = vpop.f32.mrb[0].mxu0
        %1361 = vmatprep.mubr.bf16.mxu0 0
        %1362 = vmatmul.mubr.bf16.gmra.mrb[0].mxu0 %v931
        %v1363 = vpop.f32.mrb[0].mxu0
        %v1364 = vadd.f32 %v482, %v1363
        %v1365 = vpop.f32.mrb[0].mxu0
        %v1366 = vpop.f32.mrb[0].mxu0
        %v1367 = vadd.f32 %v482, %v1366
        %v1368 = vpop.f32.mrb[0].mxu0
        %1369 = vmatprep.mubr.bf16.mxu0 0
        %1370 = vmatmul.mubr.bf16.gmra.mrb[0].mxu0 %v934
        %v1371 = vpop.f32.mrb[0].mxu0
        %v1372 = vadd.f32 %v482, %v1371
        %v1373 = vpop.f32.mrb[0].mxu0
        %v1374 = vpop.f32.mrb[0].mxu0
        %v1375 = vadd.f32 %v482, %v1374
        %v1376 = vpop.f32.mrb[0].mxu0
        %1377 = vmatprep.mubr.bf16.mxu0 0
        %1378 = vmatmul.mubr.bf16.gmra.mrb[0].mxu0 %v937
        %v1379 = vpop.f32.mrb[0].mxu0
        %v1380 = vadd.f32 %v482, %v1379
        %v1381 = vpop.f32.mrb[0].mxu0
        %v1382 = vpop.f32.mrb[0].mxu0
        %v1383 = vadd.f32 %v482, %v1382
        %v1384 = vpop.f32.mrb[0].mxu0
        %1385 = vmatprep.mubr.bf16.mxu0 0
        %1386 = vmatmul.mubr.bf16.gmra.mrb[0].mxu0 %v940
        %v1387 = vpop.f32.mrb[0].mxu0
        %v1388 = vadd.f32 %v482, %v1387
        %v1389 = vpop.f32.mrb[0].mxu0
        %v1390 = vpop.f32.mrb[0].mxu0
        %v1391 = vadd.f32 %v482, %v1390
        %v1392 = vpop.f32.mrb[0].mxu0
        %1393 = vmatprep.mubr.bf16.mxu0 0
        %1394 = vmatmul.mubr.bf16.gmra.mrb[0].mxu0 %v943
        %v1395 = vpop.f32.mrb[0].mxu0
        %v1396 = vadd.f32 %v482, %v1395
        %v1397 = vpop.f32.mrb[0].mxu0
        %v1398 = vpop.f32.mrb[0].mxu0
        %v1399 = vadd.f32 %v482, %v1398
        %v1400 = vpop.f32.mrb[0].mxu0
        %1401 = vmatprep.mubr.bf16.mxu0 0
        %1402 = vmatmul.mubr.bf16.gmra.mrb[0].mxu0 %v946
        %v1403 = vpop.f32.mrb[0].mxu0
        %v1404 = vadd.f32 %v482, %v1403
        %v1405 = vpop.f32.mrb[0].mxu0
        %v1406 = vpop.f32.mrb[0].mxu0
        %v1407 = vadd.f32 %v482, %v1406
        %v1408 = vpop.f32.mrb[0].mxu0
        %1409 = vmatprep.mubr.bf16.mxu0 0
        %1410 = vmatmul.mubr.bf16.gmra.mrb[0].mxu0 %v949
        %v1411 = vpop.f32.mrb[0].mxu0
        %v1412 = vadd.f32 %v482, %v1411
        %v1413 = vpop.f32.mrb[0].mxu0
        %v1414 = vpop.f32.mrb[0].mxu0
        %v1415 = vadd.f32 %v482, %v1414
        %v1416 = vpop.f32.mrb[0].mxu0
        %1417 = vmatprep.mubr.bf16.mxu0 0
        %1418 = vmatmul.mubr.bf16.gmra.mrb[0].mxu0 %v952
        %v1419 = vpop.f32.mrb[0].mxu0
        %v1420 = vadd.f32 %v482, %v1419
        %v1421 = vpop.f32.mrb[0].mxu0
        %v1422 = vpop.f32.mrb[0].mxu0
        %v1423 = vadd.f32 %v482, %v1422
        %v1424 = vpop.f32.mrb[0].mxu0
        %1425 = vmatprep.mubr.bf16.mxu0 0
        %1426 = vmatmul.mubr.bf16.gmra.mrb[0].mxu0 %v955
        %v1427 = vpop.f32.mrb[0].mxu0
        %v1428 = vadd.f32 %v482, %v1427
        %v1429 = vpop.f32.mrb[0].mxu0
        %v1430 = vpop.f32.mrb[0].mxu0
        %v1431 = vadd.f32 %v482, %v1430
        %v1432 = vpop.f32.mrb[0].mxu0
        %1433 = vmatprep.mubr.bf16.mxu0 0
        %1434 = vmatmul.mubr.bf16.gmra.mrb[0].mxu0 %v958
        %v1435 = vpop.f32.mrb[0].mxu0
        %v1436 = vadd.f32 %v482, %v1435
        %v1437 = vpop.f32.mrb[0].mxu0
        %v1438 = vpop.f32.mrb[0].mxu0
        %v1439 = vadd.f32 %v482, %v1438
        %v1440 = vpop.f32.mrb[0].mxu0
        %1441 = vmatprep.mubr.bf16.mxu0 0
        %1442 = vmatmul.mubr.bf16.gmra.mrb[0].mxu0 %v961
        %v1443 = vpop.f32.mrb[0].mxu0
        %v1444 = vadd.f32 %v482, %v1443
        %v1445 = vpop.f32.mrb[0].mxu0
        %v1446 = vpop.f32.mrb[0].mxu0
        %v1447 = vadd.f32 %v482, %v1446
        %v1448 = vpop.f32.mrb[0].mxu0
        %1449 = vmatprep.mubr.bf16.mxu0 0
        %1450 = vmatmul.mubr.bf16.gmra.mrb[0].mxu0 %v964
        %v1451 = vpop.f32.mrb[0].mxu0
        %v1452 = vadd.f32 %v482, %v1451
        %v1453 = vpop.f32.mrb[0].mxu0
        %v1454 = vpop.f32.mrb[0].mxu0
        %v1455 = vadd.f32 %v482, %v1454
        %v1456 = vpop.f32.mrb[0].mxu0
        %1457 = vmatprep.mubr.bf16.mxu0 0
        %1458 = vmatmul.mubr.bf16.gmra.mrb[0].mxu0 %v967
        %v1459 = vpop.f32.mrb[0].mxu0
        %v1460 = vadd.f32 %v482, %v1459
        %v1461 = vpop.f32.mrb[0].mxu0
        %v1462 = vpop.f32.mrb[0].mxu0
        %v1463 = vadd.f32 %v482, %v1462
        %v1464 = vpop.f32.mrb[0].mxu0
        %1465 = vmatprep.mubr.bf16.mxu0 0
        %1466 = vmatmul.mubr.bf16.gmra.mrb[0].mxu0 %v970
        %v1467 = vpop.f32.mrb[0].mxu0
        %v1468 = vadd.f32 %v482, %v1467
        %v1469 = vpop.f32.mrb[0].mxu0
        %v1470 = vpop.f32.mrb[0].mxu0
        %v1471 = vadd.f32 %v482, %v1470
        %v1472 = vpop.f32.mrb[0].mxu0
        %1473 = vmatprep.mubr.bf16.mxu0 0
        %1474 = vmatmul.mubr.bf16.gmra.mrb[0].mxu0 %v973
        %v1475 = vpop.f32.mrb[0].mxu0
        %v1476 = vadd.f32 %v482, %v1475
        %v1477 = vpop.f32.mrb[0].mxu0
        %v1478 = vpop.f32.mrb[0].mxu0
        %v1479 = vadd.f32 %v482, %v1478
        %v1480 = vpop.f32.mrb[0].mxu0
        %1481 = vmatprep.mubr.bf16.mxu0 0
        %1482 = vmatmul.mubr.bf16.gmra.mrb[0].mxu0 %v976
        %v1483 = vpop.f32.mrb[0].mxu0
        %v1484 = vadd.f32 %v482, %v1483
        %v1485 = vpop.f32.mrb[0].mxu0
        %v1486 = vpop.f32.mrb[0].mxu0
        %v1487 = vadd.f32 %v482, %v1486
        %v1488 = vpop.f32.mrb[0].mxu0
        %1489 = vmatprep.mubr.bf16.mxu0 0
        %1490 = vmatmul.mubr.bf16.gmra.mrb[0].mxu0 %v979
        %v1491 = vpop.f32.mrb[0].mxu0
        %v1492 = vadd.f32 %v482, %v1491
        %v1493 = vpop.f32.mrb[0].mxu0
        %v1494 = vpop.f32.mrb[0].mxu0
        %v1495 = vadd.f32 %v482, %v1494
        %v1496 = vpop.f32.mrb[0].mxu0
        %1497 = vmatprep.mubr.bf16.mxu0 0
        %1498 = vmatmul.mubr.bf16.gmra.mrb[0].mxu0 %v982
        %v1499 = vpop.f32.mrb[0].mxu0
        %v1500 = vadd.f32 %v482, %v1499
        %v1501 = vpop.f32.mrb[0].mxu0
        %v1502 = vpop.f32.mrb[0].mxu0
        %v1503 = vadd.f32 %v482, %v1502
        %v1504 = vpop.f32.mrb[0].mxu0
        %1505 = vmatprep.mubr.bf16.mxu0 0
        %1506 = vmatmul.mubr.bf16.gmra.mrb[0].mxu0 %v985
        %v1507 = vpop.f32.mrb[0].mxu0
        %v1508 = vadd.f32 %v482, %v1507
        %v1509 = vpop.f32.mrb[0].mxu0
        %v1510 = vpop.f32.mrb[0].mxu0
        %v1511 = vadd.f32 %v482, %v1510
        %v1512 = vpop.f32.mrb[0].mxu0
        %1513 = vmatprep.mubr.bf16.mxu0 0
        %1514 = vmatmul.mubr.bf16.gmra.mrb[0].mxu0 %v988
        %v1515 = vpop.f32.mrb[0].mxu0
        %v1516 = vadd.f32 %v482, %v1515
        %v1517 = vpop.f32.mrb[0].mxu0
        %v1518 = vpop.f32.mrb[0].mxu0
        %v1519 = vadd.f32 %v482, %v1518
        %v1520 = vpop.f32.mrb[0].mxu0
        %1521 = vmatprep.mubr.bf16.mxu0 0
        %1522 = vmatmul.mubr.bf16.gmra.mrb[0].mxu0 %v991
        %v1523 = vpop.f32.mrb[0].mxu0
        %v1524 = vadd.f32 %v482, %v1523
        %v1525 = vpop.f32.mrb[0].mxu0
        %v1526 = vpop.f32.mrb[0].mxu0
        %v1527 = vadd.f32 %v482, %v1526
        %v1528 = vpop.f32.mrb[0].mxu0
        %1529 = vmatprep.mubr.bf16.mxu0 0
        %1530 = vmatmul.mubr.bf16.gmra.mrb[0].mxu0 %v994
        %v1531 = vpop.f32.mrb[0].mxu0
        %v1532 = vadd.f32 %v482, %v1531
        %v1533 = vpop.f32.mrb[0].mxu0
        %v1534 = vpop.f32.mrb[0].mxu0
        %v1535 = vadd.f32 %v482, %v1534
        %v1536 = vpop.f32.mrb[0].mxu0
        %1537 = vmatprep.mubr.bf16.mxu0 0
        %1538 = vmatmul.mubr.bf16.gmra.mrb[0].mxu0 %v997
        %v1539 = vpop.f32.mrb[0].mxu0
        %v1540 = vadd.f32 %v482, %v1539
        %v1541 = vpop.f32.mrb[0].mxu0
        %v1542 = vpop.f32.mrb[0].mxu0
        %v1543 = vadd.f32 %v482, %v1542
        %v1544 = vpop.f32.mrb[0].mxu0
        %1545 = vmatprep.mubr.bf16.mxu0 0
        %1546 = vmatmul.mubr.bf16.gmra.mrb[0].mxu0 %v1000
        %v1547 = vpop.f32.mrb[0].mxu0
        %v1548 = vadd.f32 %v482, %v1547
        %v1549 = vpop.f32.mrb[0].mxu0
        %v1550 = vpop.f32.mrb[0].mxu0
        %v1551 = vadd.f32 %v482, %v1550
        %v1552 = vpop.f32.mrb[0].mxu0
        %1553 = vdwg.mxu0
        %v1554 = vmax.f32 %v1044, 0.0
        %v1555 = vmax.f32 %v1047, 0.0
        %v1556 = vmax.f32 %v1052, 0.0
        %v1557 = vmax.f32 %v1055, 0.0
        %v1558 = vmax.f32 %v1060, 0.0
        %v1559 = vmax.f32 %v1063, 0.0
        %v1560 = vmax.f32 %v1068, 0.0
        %v1561 = vmax.f32 %v1071, 0.0
        %v1562 = vmax.f32 %v1076, 0.0
        %v1563 = vmax.f32 %v1079, 0.0
        %v1564 = vmax.f32 %v1084, 0.0
        %v1565 = vmax.f32 %v1087, 0.0
        %v1566 = vmax.f32 %v1092, 0.0
        %v1567 = vmax.f32 %v1095, 0.0
        %v1568 = vmax.f32 %v1100, 0.0
        %v1569 = vmax.f32 %v1103, 0.0
        %v1570 = vmax.f32 %v1108, 0.0
        %v1571 = vmax.f32 %v1111, 0.0
        %v1572 = vmax.f32 %v1116, 0.0
        %v1573 = vmax.f32 %v1119, 0.0
        %v1574 = vmax.f32 %v1124, 0.0
        %v1575 = vmax.f32 %v1127, 0.0
        %v1576 = vmax.f32 %v1132, 0.0
        %v1577 = vmax.f32 %v1135, 0.0
        %v1578 = vmax.f32 %v1140, 0.0
        %v1579 = vmax.f32 %v1143, 0.0
        %v1580 = vmax.f32 %v1148, 0.0
        %v1581 = vmax.f32 %v1151, 0.0
        %v1582 = vmax.f32 %v1156, 0.0
        %v1583 = vmax.f32 %v1159, 0.0
        %v1584 = vmax.f32 %v1164, 0.0
        %v1585 = vmax.f32 %v1167, 0.0
        %v1586 = vmax.f32 %v1172, 0.0
        %v1587 = vmax.f32 %v1175, 0.0
        %v1588 = vmax.f32 %v1180, 0.0
        %v1589 = vmax.f32 %v1183, 0.0
        %v1590 = vmax.f32 %v1188, 0.0
        %v1591 = vmax.f32 %v1191, 0.0
        %v1592 = vmax.f32 %v1196, 0.0
        %v1593 = vmax.f32 %v1199, 0.0
        %v1594 = vmax.f32 %v1204, 0.0
        %v1595 = vmax.f32 %v1207, 0.0
        %v1596 = vmax.f32 %v1212, 0.0
        %v1597 = vmax.f32 %v1215, 0.0
        %v1598 = vmax.f32 %v1220, 0.0
        %v1599 = vmax.f32 %v1223, 0.0
        %v1600 = vmax.f32 %v1228, 0.0
        %v1601 = vmax.f32 %v1231, 0.0
        %v1602 = vmax.f32 %v1236, 0.0
        %v1603 = vmax.f32 %v1239, 0.0
        %v1604 = vmax.f32 %v1244, 0.0
        %v1605 = vmax.f32 %v1247, 0.0
        %v1606 = vmax.f32 %v1252, 0.0
        %v1607 = vmax.f32 %v1255, 0.0
        %v1608 = vmax.f32 %v1260, 0.0
        %v1609 = vmax.f32 %v1263, 0.0
        %v1610 = vmax.f32 %v1268, 0.0
        %v1611 = vmax.f32 %v1271, 0.0
        %v1612 = vmax.f32 %v1276, 0.0
        %v1613 = vmax.f32 %v1279, 0.0
        %v1614 = vmax.f32 %v1284, 0.0
        %v1615 = vmax.f32 %v1287, 0.0
        %v1616 = vmax.f32 %v1292, 0.0
        %v1617 = vmax.f32 %v1295, 0.0
        %v1618 = vmax.f32 %v1300, 0.0
        %v1619 = vmax.f32 %v1303, 0.0
        %v1620 = vmax.f32 %v1308, 0.0
        %v1621 = vmax.f32 %v1311, 0.0
        %v1622 = vmax.f32 %v1316, 0.0
        %v1623 = vmax.f32 %v1319, 0.0
        %v1624 = vmax.f32 %v1324, 0.0
        %v1625 = vmax.f32 %v1327, 0.0
        %v1626 = vmax.f32 %v1332, 0.0
        %v1627 = vmax.f32 %v1335, 0.0
        %v1628 = vmax.f32 %v1340, 0.0
        %v1629 = vmax.f32 %v1343, 0.0
        %v1630 = vmax.f32 %v1348, 0.0
        %v1631 = vmax.f32 %v1351, 0.0
        %v1632 = vmax.f32 %v1356, 0.0
        %v1633 = vmax.f32 %v1359, 0.0
        %v1634 = vmax.f32 %v1364, 0.0
        %v1635 = vmax.f32 %v1367, 0.0
        %v1636 = vmax.f32 %v1372, 0.0
        %v1637 = vmax.f32 %v1375, 0.0
        %v1638 = vmax.f32 %v1380, 0.0
        %v1639 = vmax.f32 %v1383, 0.0
        %v1640 = vmax.f32 %v1388, 0.0
        %v1641 = vmax.f32 %v1391, 0.0
        %v1642 = vmax.f32 %v1396, 0.0
        %v1643 = vmax.f32 %v1399, 0.0
        %v1644 = vmax.f32 %v1404, 0.0
        %v1645 = vmax.f32 %v1407, 0.0
        %v1646 = vmax.f32 %v1412, 0.0
        %v1647 = vmax.f32 %v1415, 0.0
        %v1648 = vmax.f32 %v1420, 0.0
        %v1649 = vmax.f32 %v1423, 0.0
        %v1650 = vmax.f32 %v1428, 0.0
        %v1651 = vmax.f32 %v1431, 0.0
        %v1652 = vmax.f32 %v1436, 0.0
        %v1653 = vmax.f32 %v1439, 0.0
        %v1654 = vmax.f32 %v1444, 0.0
        %v1655 = vmax.f32 %v1447, 0.0
        %v1656 = vmax.f32 %v1452, 0.0
        %v1657 = vmax.f32 %v1455, 0.0
        %v1658 = vmax.f32 %v1460, 0.0
        %v1659 = vmax.f32 %v1463, 0.0
        %v1660 = vmax.f32 %v1468, 0.0
        %v1661 = vmax.f32 %v1471, 0.0
        %v1662 = vmax.f32 %v1476, 0.0
        %v1663 = vmax.f32 %v1479, 0.0
        %v1664 = vmax.f32 %v1484, 0.0
        %v1665 = vmax.f32 %v1487, 0.0
        %v1666 = vmax.f32 %v1492, 0.0
        %v1667 = vmax.f32 %v1495, 0.0
        %v1668 = vmax.f32 %v1500, 0.0
        %v1669 = vmax.f32 %v1503, 0.0
        %v1670 = vmax.f32 %v1508, 0.0
        %v1671 = vmax.f32 %v1511, 0.0
        %v1672 = vmax.f32 %v1516, 0.0
        %v1673 = vmax.f32 %v1519, 0.0
        %v1674 = vmax.f32 %v1524, 0.0
        %v1675 = vmax.f32 %v1527, 0.0
        %v1676 = vmax.f32 %v1532, 0.0
        %v1677 = vmax.f32 %v1535, 0.0
        %v1678 = vmax.f32 %v1540, 0.0
        %v1679 = vmax.f32 %v1543, 0.0
        %v1680 = vmax.f32 %v1548, 0.0
        %v1681 = vmax.f32 %v1551, 0.0
        %vm1682 = vcmask 261120
        %1683 = vst.msk [vmem:[#allocation3] sm:$0xff] %vm1682, 0.0
        %1684 = vst.msk [vmem:[#allocation3 + $0x8] sm:$0xff] %vm1682, 0.0
        %vm1685 = vcmask 254976
        %1686 = vst.msk [vmem:[#allocation3 + $0x10] sm:$0x3] %vm1685, 0.0
        %s1687 = scalar_lea.vmem [#allocation3], 408
        %1688 = vst.msk [vmem:[%s1687] sm:$0xff] %vm1682, 0.0
        %1689 = vst.msk [vmem:[%s1687 + $0x8] sm:$0xff] %vm1682, 0.0
        %1690 = vst.msk [vmem:[%s1687 + $0x10] sm:$0x3] %vm1685, 0.0
        %vm1691 = vcmask 253952
        %1692 = vst.msk [vmem:[#allocation3] sm:$0x1] %vm1691, 0.0
        %1693 = vst.msk [vmem:[#allocation3 + $0x18] sm:$0x1] %vm1691, 0.0
        %1694 = vst.msk [vmem:[#allocation3 + $0x30] sm:$0x1] %vm1691, 0.0
        %1695 = vst.msk [vmem:[#allocation3 + $0x48] sm:$0x1] %vm1691, 0.0
        %1696 = vst.msk [vmem:[#allocation3 + $0x60] sm:$0x1] %vm1691, 0.0
        %1697 = vst.msk [vmem:[#allocation3 + $0x78] sm:$0x1] %vm1691, 0.0
        %1698 = vst.msk [vmem:[#allocation3 + $0x90] sm:$0x1] %vm1691, 0.0
        %1699 = vst.msk [vmem:[#allocation3 + $0xa8] sm:$0x1] %vm1691, 0.0
        %1700 = vst.msk [vmem:[#allocation3 + $0xc0] sm:$0x1] %vm1691, 0.0
        %1701 = vst.msk [vmem:[#allocation3 + $0xd8] sm:$0x1] %vm1691, 0.0
        %1702 = vst.msk [vmem:[#allocation3 + $0xf0] sm:$0x1] %vm1691, 0.0
        %1703 = vst.msk [vmem:[#allocation3 + $0x108] sm:$0x1] %vm1691, 0.0
        %1704 = vst.msk [vmem:[#allocation3 + $0x120] sm:$0x1] %vm1691, 0.0
        %1705 = vst.msk [vmem:[#allocation3 + $0x138] sm:$0x1] %vm1691, 0.0
        %1706 = vst.msk [vmem:[#allocation3 + $0x150] sm:$0x1] %vm1691, 0.0
        %1707 = vst.msk [vmem:[#allocation3 + $0x168] sm:$0x1] %vm1691, 0.0
        %1708 = vst.msk [vmem:[#allocation3 + $0x180] sm:$0x1] %vm1691, 0.0
        %1709 = vst.msk [vmem:[#allocation3 + $0x198] sm:$0x1] %vm1691, 0.0
        %1710 = vst.msk [vmem:[#allocation3 + $0x11] sm:$0x1] %vm1691, 0.0
        %1711 = vst.msk [vmem:[#allocation3 + $0x29] sm:$0x1] %vm1691, 0.0
        %1712 = vst.msk [vmem:[#allocation3 + $0x41] sm:$0x1] %vm1691, 0.0
        %1713 = vst.msk [vmem:[#allocation3 + $0x59] sm:$0x1] %vm1691, 0.0
        %1714 = vst.msk [vmem:[#allocation3 + $0x71] sm:$0x1] %vm1691, 0.0
        %1715 = vst.msk [vmem:[#allocation3 + $0x89] sm:$0x1] %vm1691, 0.0
        %1716 = vst.msk [vmem:[#allocation3 + $0xa1] sm:$0x1] %vm1691, 0.0
        %1717 = vst.msk [vmem:[#allocation3 + $0xb9] sm:$0x1] %vm1691, 0.0
        %1718 = vst.msk [vmem:[#allocation3 + $0xd1] sm:$0x1] %vm1691, 0.0
        %1719 = vst.msk [vmem:[#allocation3 + $0xe9] sm:$0x1] %vm1691, 0.0
        %1720 = vst.msk [vmem:[#allocation3 + $0x101] sm:$0x1] %vm1691, 0.0
        %1721 = vst.msk [vmem:[#allocation3 + $0x119] sm:$0x1] %vm1691, 0.0
        %1722 = vst.msk [vmem:[#allocation3 + $0x131] sm:$0x1] %vm1691, 0.0
        %1723 = vst.msk [vmem:[#allocation3 + $0x149] sm:$0x1] %vm1691, 0.0
        %1724 = vst.msk [vmem:[#allocation3 + $0x161] sm:$0x1] %vm1691, 0.0
        %1725 = vst.msk [vmem:[#allocation3 + $0x179] sm:$0x1] %vm1691, 0.0
        %1726 = vst.msk [vmem:[#allocation3 + $0x191] sm:$0x1] %vm1691, 0.0
        %1727 = vst.msk [vmem:[#allocation3 + $0x1a9] sm:$0x1] %vm1691, 0.0
        %1728 = vst.msk [vmem:[#allocation2] sm:$0xff] %vm1682, %v1554
        %1729 = vst.msk [vmem:[#allocation2 + $0x8] sm:$0xff] %vm1682, %v1555
        %1730 = vst.msk [vmem:[#allocation2 + $0x10] sm:$0xff] %vm1682, %v1556
        %1731 = vst.msk [vmem:[#allocation2 + $0x18] sm:$0xff] %vm1682, %v1557
        %1732 = vst.msk [vmem:[#allocation2 + $0x20] sm:$0xff] %vm1682, %v1558
        %1733 = vst.msk [vmem:[#allocation2 + $0x28] sm:$0xff] %vm1682, %v1559
        %1734 = vst.msk [vmem:[#allocation2 + $0x30] sm:$0xff] %vm1682, %v1560
        %1735 = vst.msk [vmem:[#allocation2 + $0x38] sm:$0xff] %vm1682, %v1561
        %1736 = vst.msk [vmem:[#allocation2 + $0x40] sm:$0xff] %vm1682, %v1562
        %1737 = vst.msk [vmem:[#allocation2 + $0x48] sm:$0xff] %vm1682, %v1563
        %1738 = vst.msk [vmem:[#allocation2 + $0x50] sm:$0xff] %vm1682, %v1564
        %1739 = vst.msk [vmem:[#allocation2 + $0x58] sm:$0xff] %vm1682, %v1565
        %1740 = vst.msk [vmem:[#allocation2 + $0x60] sm:$0xff] %vm1682, %v1566
        %1741 = vst.msk [vmem:[#allocation2 + $0x68] sm:$0xff] %vm1682, %v1567
        %1742 = vst.msk [vmem:[#allocation2 + $0x70] sm:$0xff] %vm1682, %v1568
        %1743 = vst.msk [vmem:[#allocation2 + $0x78] sm:$0xff] %vm1682, %v1569
        %1744 = vst.msk [vmem:[#allocation2 + $0x80] sm:$0xff] %vm1682, %v1570
        %1745 = vst.msk [vmem:[#allocation2 + $0x88] sm:$0xff] %vm1682, %v1571
        %1746 = vst.msk [vmem:[#allocation2 + $0x90] sm:$0xff] %vm1682, %v1572
        %1747 = vst.msk [vmem:[#allocation2 + $0x98] sm:$0xff] %vm1682, %v1573
        %1748 = vst.msk [vmem:[#allocation2 + $0xa0] sm:$0xff] %vm1682, %v1574
        %1749 = vst.msk [vmem:[#allocation2 + $0xa8] sm:$0xff] %vm1682, %v1575
        %1750 = vst.msk [vmem:[#allocation2 + $0xb0] sm:$0xff] %vm1682, %v1576
        %1751 = vst.msk [vmem:[#allocation2 + $0xb8] sm:$0xff] %vm1682, %v1577
        %1752 = vst.msk [vmem:[#allocation2 + $0xc0] sm:$0xff] %vm1682, %v1578
        %1753 = vst.msk [vmem:[#allocation2 + $0xc8] sm:$0xff] %vm1682, %v1579
        %1754 = vst.msk [vmem:[#allocation2 + $0xd0] sm:$0xff] %vm1682, %v1580
        %1755 = vst.msk [vmem:[#allocation2 + $0xd8] sm:$0xff] %vm1682, %v1581
        %1756 = vst.msk [vmem:[#allocation2 + $0xe0] sm:$0xff] %vm1682, %v1582
        %1757 = vst.msk [vmem:[#allocation2 + $0xe8] sm:$0xff] %vm1682, %v1583
        %1758 = vst.msk [vmem:[#allocation2 + $0xf0] sm:$0xff] %vm1682, %v1584
        %1759 = vst.msk [vmem:[#allocation2 + $0xf8] sm:$0xff] %vm1682, %v1585
        %1760 = vst.msk [vmem:[#allocation2 + $0x100] sm:$0xff] %vm1682, %v1586
        %1761 = vst.msk [vmem:[#allocation2 + $0x108] sm:$0xff] %vm1682, %v1587
        %1762 = vst.msk [vmem:[#allocation2 + $0x110] sm:$0xff] %vm1682, %v1588
        %1763 = vst.msk [vmem:[#allocation2 + $0x118] sm:$0xff] %vm1682, %v1589
        %1764 = vst.msk [vmem:[#allocation2 + $0x120] sm:$0xff] %vm1682, %v1590
        %1765 = vst.msk [vmem:[#allocation2 + $0x128] sm:$0xff] %vm1682, %v1591
        %1766 = vst.msk [vmem:[#allocation2 + $0x130] sm:$0xff] %vm1682, %v1592
        %1767 = vst.msk [vmem:[#allocation2 + $0x138] sm:$0xff] %vm1682, %v1593
        %1768 = vst.msk [vmem:[#allocation2 + $0x140] sm:$0xff] %vm1682, %v1594
        %1769 = vst.msk [vmem:[#allocation2 + $0x148] sm:$0xff] %vm1682, %v1595
        %1770 = vst.msk [vmem:[#allocation2 + $0x150] sm:$0xff] %vm1682, %v1596
        %1771 = vst.msk [vmem:[#allocation2 + $0x158] sm:$0xff] %vm1682, %v1597
        %1772 = vst.msk [vmem:[#allocation2 + $0x160] sm:$0xff] %vm1682, %v1598
        %1773 = vst.msk [vmem:[#allocation2 + $0x168] sm:$0xff] %vm1682, %v1599
        %1774 = vst.msk [vmem:[#allocation2 + $0x170] sm:$0xff] %vm1682, %v1600
        %1775 = vst.msk [vmem:[#allocation2 + $0x178] sm:$0xff] %vm1682, %v1601
        %1776 = vst.msk [vmem:[#allocation2 + $0x180] sm:$0xff] %vm1682, %v1602
        %1777 = vst.msk [vmem:[#allocation2 + $0x188] sm:$0xff] %vm1682, %v1603
        %1778 = vst.msk [vmem:[#allocation2 + $0x190] sm:$0xff] %vm1682, %v1604
        %1779 = vst.msk [vmem:[#allocation2 + $0x198] sm:$0xff] %vm1682, %v1605
        %1780 = vst.msk [vmem:[#allocation2 + $0x1a0] sm:$0xff] %vm1682, %v1606
        %1781 = vst.msk [vmem:[#allocation2 + $0x1a8] sm:$0xff] %vm1682, %v1607
        %1782 = vst.msk [vmem:[#allocation2 + $0x1b0] sm:$0xff] %vm1682, %v1608
        %1783 = vst.msk [vmem:[#allocation2 + $0x1b8] sm:$0xff] %vm1682, %v1609
        %1784 = vst.msk [vmem:[#allocation2 + $0x1c0] sm:$0xff] %vm1682, %v1610
        %1785 = vst.msk [vmem:[#allocation2 + $0x1c8] sm:$0xff] %vm1682, %v1611
        %1786 = vst.msk [vmem:[#allocation2 + $0x1d0] sm:$0xff] %vm1682, %v1612
        %1787 = vst.msk [vmem:[#allocation2 + $0x1d8] sm:$0xff] %vm1682, %v1613
        %1788 = vst.msk [vmem:[#allocation2 + $0x1e0] sm:$0xff] %vm1682, %v1614
        %1789 = vst.msk [vmem:[#allocation2 + $0x1e8] sm:$0xff] %vm1682, %v1615
        %1790 = vst.msk [vmem:[#allocation2 + $0x1f0] sm:$0xff] %vm1682, %v1616
        %1791 = vst.msk [vmem:[#allocation2 + $0x1f8] sm:$0xff] %vm1682, %v1617
        %1792 = vst.msk [vmem:[#allocation2 + $0x200] sm:$0xff] %vm1682, %v1618
        %1793 = vst.msk [vmem:[#allocation2 + $0x208] sm:$0xff] %vm1682, %v1619
        %1794 = vst.msk [vmem:[#allocation2 + $0x210] sm:$0xff] %vm1682, %v1620
        %1795 = vst.msk [vmem:[#allocation2 + $0x218] sm:$0xff] %vm1682, %v1621
        %1796 = vst.msk [vmem:[#allocation2 + $0x220] sm:$0xff] %vm1682, %v1622
        %1797 = vst.msk [vmem:[#allocation2 + $0x228] sm:$0xff] %vm1682, %v1623
        %1798 = vst.msk [vmem:[#allocation2 + $0x230] sm:$0xff] %vm1682, %v1624
        %1799 = vst.msk [vmem:[#allocation2 + $0x238] sm:$0xff] %vm1682, %v1625
        %1800 = vst.msk [vmem:[#allocation2 + $0x240] sm:$0xff] %vm1682, %v1626
        %1801 = vst.msk [vmem:[#allocation2 + $0x248] sm:$0xff] %vm1682, %v1627
        %1802 = vst.msk [vmem:[#allocation2 + $0x250] sm:$0xff] %vm1682, %v1628
        %1803 = vst.msk [vmem:[#allocation2 + $0x258] sm:$0xff] %vm1682, %v1629
        %1804 = vst.msk [vmem:[#allocation2 + $0x260] sm:$0xff] %vm1682, %v1630
        %1805 = vst.msk [vmem:[#allocation2 + $0x268] sm:$0xff] %vm1682, %v1631
        %1806 = vst.msk [vmem:[#allocation2 + $0x270] sm:$0xff] %vm1682, %v1632
        %1807 = vst.msk [vmem:[#allocation2 + $0x278] sm:$0xff] %vm1682, %v1633
        %1808 = vst.msk [vmem:[#allocation2 + $0x280] sm:$0xff] %vm1682, %v1634
        %1809 = vst.msk [vmem:[#allocation2 + $0x288] sm:$0xff] %vm1682, %v1635
        %1810 = vst.msk [vmem:[#allocation2 + $0x290] sm:$0xff] %vm1682, %v1636
        %1811 = vst.msk [vmem:[#allocation2 + $0x298] sm:$0xff] %vm1682, %v1637
        %1812 = vst.msk [vmem:[#allocation2 + $0x2a0] sm:$0xff] %vm1682, %v1638
        %1813 = vst.msk [vmem:[#allocation2 + $0x2a8] sm:$0xff] %vm1682, %v1639
        %1814 = vst.msk [vmem:[#allocation2 + $0x2b0] sm:$0xff] %vm1682, %v1640
        %1815 = vst.msk [vmem:[#allocation2 + $0x2b8] sm:$0xff] %vm1682, %v1641
        %1816 = vst.msk [vmem:[#allocation2 + $0x2c0] sm:$0xff] %vm1682, %v1642
        %1817 = vst.msk [vmem:[#allocation2 + $0x2c8] sm:$0xff] %vm1682, %v1643
        %1818 = vst.msk [vmem:[#allocation2 + $0x2d0] sm:$0xff] %vm1682, %v1644
        %1819 = vst.msk [vmem:[#allocation2 + $0x2d8] sm:$0xff] %vm1682, %v1645
        %1820 = vst.msk [vmem:[#allocation2 + $0x2e0] sm:$0xff] %vm1682, %v1646
        %1821 = vst.msk [vmem:[#allocation2 + $0x2e8] sm:$0xff] %vm1682, %v1647
        %1822 = vst.msk [vmem:[#allocation2 + $0x2f0] sm:$0xff] %vm1682, %v1648
        %1823 = vst.msk [vmem:[#allocation2 + $0x2f8] sm:$0xff] %vm1682, %v1649
        %1824 = vst.msk [vmem:[#allocation2 + $0x300] sm:$0xff] %vm1682, %v1650
        %1825 = vst.msk [vmem:[#allocation2 + $0x308] sm:$0xff] %vm1682, %v1651
        %1826 = vst.msk [vmem:[#allocation2 + $0x310] sm:$0xff] %vm1682, %v1652
        %1827 = vst.msk [vmem:[#allocation2 + $0x318] sm:$0xff] %vm1682, %v1653
        %1828 = vst.msk [vmem:[#allocation2 + $0x320] sm:$0xff] %vm1682, %v1654
        %1829 = vst.msk [vmem:[#allocation2 + $0x328] sm:$0xff] %vm1682, %v1655
        %1830 = vst.msk [vmem:[#allocation2 + $0x330] sm:$0xff] %vm1682, %v1656
        %1831 = vst.msk [vmem:[#allocation2 + $0x338] sm:$0xff] %vm1682, %v1657
        %1832 = vst.msk [vmem:[#allocation2 + $0x340] sm:$0xff] %vm1682, %v1658
        %1833 = vst.msk [vmem:[#allocation2 + $0x348] sm:$0xff] %vm1682, %v1659
        %1834 = vst.msk [vmem:[#allocation2 + $0x350] sm:$0xff] %vm1682, %v1660
        %1835 = vst.msk [vmem:[#allocation2 + $0x358] sm:$0xff] %vm1682, %v1661
        %1836 = vst.msk [vmem:[#allocation2 + $0x360] sm:$0xff] %vm1682, %v1662
        %1837 = vst.msk [vmem:[#allocation2 + $0x368] sm:$0xff] %vm1682, %v1663
        %1838 = vst.msk [vmem:[#allocation2 + $0x370] sm:$0xff] %vm1682, %v1664
        %1839 = vst.msk [vmem:[#allocation2 + $0x378] sm:$0xff] %vm1682, %v1665
        %1840 = vst.msk [vmem:[#allocation2 + $0x380] sm:$0xff] %vm1682, %v1666
        %1841 = vst.msk [vmem:[#allocation2 + $0x388] sm:$0xff] %vm1682, %v1667
        %1842 = vst.msk [vmem:[#allocation2 + $0x390] sm:$0xff] %vm1682, %v1668
        %1843 = vst.msk [vmem:[#allocation2 + $0x398] sm:$0xff] %vm1682, %v1669
        %1844 = vst.msk [vmem:[#allocation2 + $0x3a0] sm:$0xff] %vm1682, %v1670
        %1845 = vst.msk [vmem:[#allocation2 + $0x3a8] sm:$0xff] %vm1682, %v1671
        %1846 = vst.msk [vmem:[#allocation2 + $0x3b0] sm:$0xff] %vm1682, %v1672
        %1847 = vst.msk [vmem:[#allocation2 + $0x3b8] sm:$0xff] %vm1682, %v1673
        %1848 = vst.msk [vmem:[#allocation2 + $0x3c0] sm:$0xff] %vm1682, %v1674
        %1849 = vst.msk [vmem:[#allocation2 + $0x3c8] sm:$0xff] %vm1682, %v1675
        %1850 = vst.msk [vmem:[#allocation2 + $0x3d0] sm:$0xff] %vm1682, %v1676
        %1851 = vst.msk [vmem:[#allocation2 + $0x3d8] sm:$0xff] %vm1682, %v1677
        %1852 = vst.msk [vmem:[#allocation2 + $0x3e0] sm:$0xff] %vm1682, %v1678
        %1853 = vst.msk [vmem:[#allocation2 + $0x3e8] sm:$0xff] %vm1682, %v1679
        %1854 = vst.msk [vmem:[#allocation2 + $0x3f0] sm:$0xff] %vm1682, %v1680
        %1855 = vst.msk [vmem:[#allocation2 + $0x3f8] sm:$0xff] %vm1682, %v1681
        %v1856 = vld [vmem:[#allocation2] sm:$0xff]
        %v1857 = vld [vmem:[#allocation2 + $0x8] sm:$0xff]
        %v1858 = vld [vmem:[#allocation2 + $0x10] sm:$0xff]
        %v1859 = vld [vmem:[#allocation2 + $0x18] sm:$0xff]
        %v1860 = vld [vmem:[#allocation2 + $0x40] sm:$0xff]
        %v1861 = vld [vmem:[#allocation2 + $0x48] sm:$0xff]
        %v1862 = vld [vmem:[#allocation2 + $0x50] sm:$0xff]
        %v1863 = vld [vmem:[#allocation2 + $0x58] sm:$0xff]
        %v1864 = vld [vmem:[#allocation2 + $0x80] sm:$0xff]
        %v1865 = vld [vmem:[#allocation2 + $0x88] sm:$0xff]
        %v1866 = vld [vmem:[#allocation2 + $0x90] sm:$0xff]
        %v1867 = vld [vmem:[#allocation2 + $0x98] sm:$0xff]
        %v1868 = vld [vmem:[#allocation2 + $0xc0] sm:$0xff]
        %v1869 = vld [vmem:[#allocation2 + $0xc8] sm:$0xff]
        %v1870 = vld [vmem:[#allocation2 + $0xd0] sm:$0xff]
        %v1871 = vld [vmem:[#allocation2 + $0xd8] sm:$0xff]
        %v1872 = vld [vmem:[#allocation2 + $0x100] sm:$0xff]
        %v1873 = vld [vmem:[#allocation2 + $0x108] sm:$0xff]
        %v1874 = vld [vmem:[#allocation2 + $0x110] sm:$0xff]
        %v1875 = vld [vmem:[#allocation2 + $0x118] sm:$0xff]
        %v1876 = vld [vmem:[#allocation2 + $0x140] sm:$0xff]
        %v1877 = vld [vmem:[#allocation2 + $0x148] sm:$0xff]
        %v1878 = vld [vmem:[#allocation2 + $0x150] sm:$0xff]
        %v1879 = vld [vmem:[#allocation2 + $0x158] sm:$0xff]
        %v1880 = vld [vmem:[#allocation2 + $0x180] sm:$0xff]
        %v1881 = vld [vmem:[#allocation2 + $0x188] sm:$0xff]
        %v1882 = vld [vmem:[#allocation2 + $0x190] sm:$0xff]
        %v1883 = vld [vmem:[#allocation2 + $0x198] sm:$0xff]
        %v1884 = vld [vmem:[#allocation2 + $0x1c0] sm:$0xff]
        %v1885 = vld [vmem:[#allocation2 + $0x1c8] sm:$0xff]
        %v1886 = vld [vmem:[#allocation2 + $0x1d0] sm:$0xff]
        %v1887 = vld [vmem:[#allocation2 + $0x1d8] sm:$0xff]
        %v1888 = vld [vmem:[#allocation2 + $0x200] sm:$0xff]
        %v1889 = vld [vmem:[#allocation2 + $0x208] sm:$0xff]
        %v1890 = vld [vmem:[#allocation2 + $0x210] sm:$0xff]
        %v1891 = vld [vmem:[#allocation2 + $0x218] sm:$0xff]
        %v1892 = vld [vmem:[#allocation2 + $0x240] sm:$0xff]
        %v1893 = vld [vmem:[#allocation2 + $0x248] sm:$0xff]
        %v1894 = vld [vmem:[#allocation2 + $0x250] sm:$0xff]
        %v1895 = vld [vmem:[#allocation2 + $0x258] sm:$0xff]
        %v1896 = vld [vmem:[#allocation2 + $0x280] sm:$0xff]
        %v1897 = vld [vmem:[#allocation2 + $0x288] sm:$0xff]
        %v1898 = vld [vmem:[#allocation2 + $0x290] sm:$0xff]
        %v1899 = vld [vmem:[#allocation2 + $0x298] sm:$0xff]
        %v1900 = vld [vmem:[#allocation2 + $0x2c0] sm:$0xff]
        %v1901 = vld [vmem:[#allocation2 + $0x2c8] sm:$0xff]
        %v1902 = vld [vmem:[#allocation2 + $0x2d0] sm:$0xff]
        %v1903 = vld [vmem:[#allocation2 + $0x2d8] sm:$0xff]
        %v1904 = vld [vmem:[#allocation2 + $0x300] sm:$0xff]
        %v1905 = vld [vmem:[#allocation2 + $0x308] sm:$0xff]
        %v1906 = vld [vmem:[#allocation2 + $0x310] sm:$0xff]
        %v1907 = vld [vmem:[#allocation2 + $0x318] sm:$0xff]
        %v1908 = vld [vmem:[#allocation2 + $0x340] sm:$0xff]
        %v1909 = vld [vmem:[#allocation2 + $0x348] sm:$0xff]
        %v1910 = vld [vmem:[#allocation2 + $0x350] sm:$0xff]
        %v1911 = vld [vmem:[#allocation2 + $0x358] sm:$0xff]
        %v1912 = vld [vmem:[#allocation2 + $0x380] sm:$0xff]
        %v1913 = vld [vmem:[#allocation2 + $0x388] sm:$0xff]
        %v1914 = vld [vmem:[#allocation2 + $0x390] sm:$0xff]
        %v1915 = vld [vmem:[#allocation2 + $0x398] sm:$0xff]
        %v1916 = vld [vmem:[#allocation2 + $0x3c0] sm:$0xff]
        %v1917 = vld [vmem:[#allocation2 + $0x3c8] sm:$0xff]
        %v1918 = vld [vmem:[#allocation2 + $0x3d0] sm:$0xff]
        %v1919 = vld [vmem:[#allocation2 + $0x3d8] sm:$0xff]
        %s1920 = scalar_lea.vmem [#allocation2], 32
        %v1921 = vld [vmem:[%s1920] sm:$0xff]
        %v1922 = vld [vmem:[%s1920 + $0x8] sm:$0xff]
        %v1923 = vld [vmem:[%s1920 + $0x10] sm:$0xff]
        %v1924 = vld [vmem:[%s1920 + $0x18] sm:$0xff]
        %v1925 = vld [vmem:[%s1920 + $0x40] sm:$0xff]
        %v1926 = vld [vmem:[%s1920 + $0x48] sm:$0xff]
        %v1927 = vld [vmem:[%s1920 + $0x50] sm:$0xff]
        %v1928 = vld [vmem:[%s1920 + $0x58] sm:$0xff]
        %v1929 = vld [vmem:[%s1920 + $0x80] sm:$0xff]
        %v1930 = vld [vmem:[%s1920 + $0x88] sm:$0xff]
        %v1931 = vld [vmem:[%s1920 + $0x90] sm:$0xff]
        %v1932 = vld [vmem:[%s1920 + $0x98] sm:$0xff]
        %v1933 = vld [vmem:[%s1920 + $0xc0] sm:$0xff]
        %v1934 = vld [vmem:[%s1920 + $0xc8] sm:$0xff]
        %v1935 = vld [vmem:[%s1920 + $0xd0] sm:$0xff]
        %v1936 = vld [vmem:[%s1920 + $0xd8] sm:$0xff]
        %v1937 = vld [vmem:[%s1920 + $0x100] sm:$0xff]
        %v1938 = vld [vmem:[%s1920 + $0x108] sm:$0xff]
        %v1939 = vld [vmem:[%s1920 + $0x110] sm:$0xff]
        %v1940 = vld [vmem:[%s1920 + $0x118] sm:$0xff]
        %v1941 = vld [vmem:[%s1920 + $0x140] sm:$0xff]
        %v1942 = vld [vmem:[%s1920 + $0x148] sm:$0xff]
        %v1943 = vld [vmem:[%s1920 + $0x150] sm:$0xff]
        %v1944 = vld [vmem:[%s1920 + $0x158] sm:$0xff]
        %v1945 = vld [vmem:[%s1920 + $0x180] sm:$0xff]
        %v1946 = vld [vmem:[%s1920 + $0x188] sm:$0xff]
        %v1947 = vld [vmem:[%s1920 + $0x190] sm:$0xff]
        %v1948 = vld [vmem:[%s1920 + $0x198] sm:$0xff]
        %v1949 = vld [vmem:[%s1920 + $0x1c0] sm:$0xff]
        %v1950 = vld [vmem:[%s1920 + $0x1c8] sm:$0xff]
        %v1951 = vld [vmem:[%s1920 + $0x1d0] sm:$0xff]
        %v1952 = vld [vmem:[%s1920 + $0x1d8] sm:$0xff]
        %v1953 = vld [vmem:[%s1920 + $0x200] sm:$0xff]
        %v1954 = vld [vmem:[%s1920 + $0x208] sm:$0xff]
        %v1955 = vld [vmem:[%s1920 + $0x210] sm:$0xff]
        %v1956 = vld [vmem:[%s1920 + $0x218] sm:$0xff]
        %v1957 = vld [vmem:[%s1920 + $0x240] sm:$0xff]
        %v1958 = vld [vmem:[%s1920 + $0x248] sm:$0xff]
        %v1959 = vld [vmem:[%s1920 + $0x250] sm:$0xff]
        %v1960 = vld [vmem:[%s1920 + $0x258] sm:$0xff]
        %v1961 = vld [vmem:[%s1920 + $0x280] sm:$0xff]
        %v1962 = vld [vmem:[%s1920 + $0x288] sm:$0xff]
        %v1963 = vld [vmem:[%s1920 + $0x290] sm:$0xff]
        %v1964 = vld [vmem:[%s1920 + $0x298] sm:$0xff]
        %v1965 = vld [vmem:[%s1920 + $0x2c0] sm:$0xff]
        %v1966 = vld [vmem:[%s1920 + $0x2c8] sm:$0xff]
        %v1967 = vld [vmem:[%s1920 + $0x2d0] sm:$0xff]
        %v1968 = vld [vmem:[%s1920 + $0x2d8] sm:$0xff]
        %v1969 = vld [vmem:[%s1920 + $0x300] sm:$0xff]
        %v1970 = vld [vmem:[%s1920 + $0x308] sm:$0xff]
        %v1971 = vld [vmem:[%s1920 + $0x310] sm:$0xff]
        %v1972 = vld [vmem:[%s1920 + $0x318] sm:$0xff]
        %v1973 = vld [vmem:[%s1920 + $0x340] sm:$0xff]
        %v1974 = vld [vmem:[%s1920 + $0x348] sm:$0xff]
        %v1975 = vld [vmem:[%s1920 + $0x350] sm:$0xff]
        %v1976 = vld [vmem:[%s1920 + $0x358] sm:$0xff]
        %v1977 = vld [vmem:[%s1920 + $0x380] sm:$0xff]
        %v1978 = vld [vmem:[%s1920 + $0x388] sm:$0xff]
        %v1979 = vld [vmem:[%s1920 + $0x390] sm:$0xff]
        %v1980 = vld [vmem:[%s1920 + $0x398] sm:$0xff]
        %v1981 = vld [vmem:[%s1920 + $0x3c0] sm:$0xff]
        %v1982 = vld [vmem:[%s1920 + $0x3c8] sm:$0xff]
        %v1983 = vld [vmem:[%s1920 + $0x3d0] sm:$0xff]
        %v1984 = vld [vmem:[%s1920 + $0x3d8] sm:$0xff]
        %v1985 = vmax.f32 %v1856, %v1921
        %v1986 = vmax.f32 %v1857, %v1922
        %v1987 = vmax.f32 %v1858, %v1923
        %v1988 = vmax.f32 %v1859, %v1924
        %v1989 = vmax.f32 %v1860, %v1925
        %v1990 = vmax.f32 %v1861, %v1926
        %v1991 = vmax.f32 %v1862, %v1927
        %v1992 = vmax.f32 %v1863, %v1928
        %v1993 = vmax.f32 %v1864, %v1929
        %v1994 = vmax.f32 %v1865, %v1930
        %v1995 = vmax.f32 %v1866, %v1931
        %v1996 = vmax.f32 %v1867, %v1932
        %v1997 = vmax.f32 %v1868, %v1933
        %v1998 = vmax.f32 %v1869, %v1934
        %v1999 = vmax.f32 %v1870, %v1935
        %v2000 = vmax.f32 %v1871, %v1936
        %v2001 = vmax.f32 %v1872, %v1937
        %v2002 = vmax.f32 %v1873, %v1938
        %v2003 = vmax.f32 %v1874, %v1939
        %v2004 = vmax.f32 %v1875, %v1940
        %v2005 = vmax.f32 %v1876, %v1941
        %v2006 = vmax.f32 %v1877, %v1942
        %v2007 = vmax.f32 %v1878, %v1943
        %v2008 = vmax.f32 %v1879, %v1944
        %v2009 = vmax.f32 %v1880, %v1945
        %v2010 = vmax.f32 %v1881, %v1946
        %v2011 = vmax.f32 %v1882, %v1947
        %v2012 = vmax.f32 %v1883, %v1948
        %v2013 = vmax.f32 %v1884, %v1949
        %v2014 = vmax.f32 %v1885, %v1950
        %v2015 = vmax.f32 %v1886, %v1951
        %v2016 = vmax.f32 %v1887, %v1952
        %v2017 = vmax.f32 %v1888, %v1953
        %v2018 = vmax.f32 %v1889, %v1954
        %v2019 = vmax.f32 %v1890, %v1955
        %v2020 = vmax.f32 %v1891, %v1956
        %v2021 = vmax.f32 %v1892, %v1957
        %v2022 = vmax.f32 %v1893, %v1958
        %v2023 = vmax.f32 %v1894, %v1959
        %v2024 = vmax.f32 %v1895, %v1960
        %v2025 = vmax.f32 %v1896, %v1961
        %v2026 = vmax.f32 %v1897, %v1962
        %v2027 = vmax.f32 %v1898, %v1963
        %v2028 = vmax.f32 %v1899, %v1964
        %v2029 = vmax.f32 %v1900, %v1965
        %v2030 = vmax.f32 %v1901, %v1966
        %v2031 = vmax.f32 %v1902, %v1967
        %v2032 = vmax.f32 %v1903, %v1968
        %v2033 = vmax.f32 %v1904, %v1969
        %v2034 = vmax.f32 %v1905, %v1970
        %v2035 = vmax.f32 %v1906, %v1971
        %v2036 = vmax.f32 %v1907, %v1972
        %v2037 = vmax.f32 %v1908, %v1973
        %v2038 = vmax.f32 %v1909, %v1974
        %v2039 = vmax.f32 %v1910, %v1975
        %v2040 = vmax.f32 %v1911, %v1976
        %v2041 = vmax.f32 %v1912, %v1977
        %v2042 = vmax.f32 %v1913, %v1978
        %v2043 = vmax.f32 %v1914, %v1979
        %v2044 = vmax.f32 %v1915, %v1980
        %v2045 = vmax.f32 %v1916, %v1981
        %v2046 = vmax.f32 %v1917, %v1982
        %v2047 = vmax.f32 %v1918, %v1983
        %v2048 = vmax.f32 %v1919, %v1984
        %2049 = vst.msk [vmem:[#allocation2] sm:$0xff] %vm1682, %v1985
        %2050 = vst.msk [vmem:[#allocation2 + $0x8] sm:$0xff] %vm1682, %v1986
        %2051 = vst.msk [vmem:[#allocation2 + $0x10] sm:$0xff] %vm1682, %v1987
        %2052 = vst.msk [vmem:[#allocation2 + $0x18] sm:$0xff] %vm1682, %v1988
        %2053 = vst.msk [vmem:[#allocation2 + $0x20] sm:$0xff] %vm1682, %v1989
        %2054 = vst.msk [vmem:[#allocation2 + $0x28] sm:$0xff] %vm1682, %v1990
        %2055 = vst.msk [vmem:[#allocation2 + $0x30] sm:$0xff] %vm1682, %v1991
        %2056 = vst.msk [vmem:[#allocation2 + $0x38] sm:$0xff] %vm1682, %v1992
        %2057 = vst.msk [vmem:[#allocation2 + $0x40] sm:$0xff] %vm1682, %v1993
        %2058 = vst.msk [vmem:[#allocation2 + $0x48] sm:$0xff] %vm1682, %v1994
        %2059 = vst.msk [vmem:[#allocation2 + $0x50] sm:$0xff] %vm1682, %v1995
        %2060 = vst.msk [vmem:[#allocation2 + $0x58] sm:$0xff] %vm1682, %v1996
        %2061 = vst.msk [vmem:[#allocation2 + $0x60] sm:$0xff] %vm1682, %v1997
        %2062 = vst.msk [vmem:[#allocation2 + $0x68] sm:$0xff] %vm1682, %v1998
        %2063 = vst.msk [vmem:[#allocation2 + $0x70] sm:$0xff] %vm1682, %v1999
        %2064 = vst.msk [vmem:[#allocation2 + $0x78] sm:$0xff] %vm1682, %v2000
        %2065 = vst.msk [vmem:[#allocation2 + $0x80] sm:$0xff] %vm1682, %v2001
        %2066 = vst.msk [vmem:[#allocation2 + $0x88] sm:$0xff] %vm1682, %v2002
        %2067 = vst.msk [vmem:[#allocation2 + $0x90] sm:$0xff] %vm1682, %v2003
        %2068 = vst.msk [vmem:[#allocation2 + $0x98] sm:$0xff] %vm1682, %v2004
        %2069 = vst.msk [vmem:[#allocation2 + $0xa0] sm:$0xff] %vm1682, %v2005
        %2070 = vst.msk [vmem:[#allocation2 + $0xa8] sm:$0xff] %vm1682, %v2006
        %2071 = vst.msk [vmem:[#allocation2 + $0xb0] sm:$0xff] %vm1682, %v2007
        %2072 = vst.msk [vmem:[#allocation2 + $0xb8] sm:$0xff] %vm1682, %v2008
        %2073 = vst.msk [vmem:[#allocation2 + $0xc0] sm:$0xff] %vm1682, %v2009
        %2074 = vst.msk [vmem:[#allocation2 + $0xc8] sm:$0xff] %vm1682, %v2010
        %2075 = vst.msk [vmem:[#allocation2 + $0xd0] sm:$0xff] %vm1682, %v2011
        %2076 = vst.msk [vmem:[#allocation2 + $0xd8] sm:$0xff] %vm1682, %v2012
        %2077 = vst.msk [vmem:[#allocation2 + $0xe0] sm:$0xff] %vm1682, %v2013
        %2078 = vst.msk [vmem:[#allocation2 + $0xe8] sm:$0xff] %vm1682, %v2014
        %2079 = vst.msk [vmem:[#allocation2 + $0xf0] sm:$0xff] %vm1682, %v2015
        %2080 = vst.msk [vmem:[#allocation2 + $0xf8] sm:$0xff] %vm1682, %v2016
        %2081 = vst.msk [vmem:[#allocation2 + $0x100] sm:$0xff] %vm1682, %v2017
        %2082 = vst.msk [vmem:[#allocation2 + $0x108] sm:$0xff] %vm1682, %v2018
        %2083 = vst.msk [vmem:[#allocation2 + $0x110] sm:$0xff] %vm1682, %v2019
        %2084 = vst.msk [vmem:[#allocation2 + $0x118] sm:$0xff] %vm1682, %v2020
        %2085 = vst.msk [vmem:[#allocation2 + $0x120] sm:$0xff] %vm1682, %v2021
        %2086 = vst.msk [vmem:[#allocation2 + $0x128] sm:$0xff] %vm1682, %v2022
        %2087 = vst.msk [vmem:[#allocation2 + $0x130] sm:$0xff] %vm1682, %v2023
        %2088 = vst.msk [vmem:[#allocation2 + $0x138] sm:$0xff] %vm1682, %v2024
        %2089 = vst.msk [vmem:[#allocation2 + $0x140] sm:$0xff] %vm1682, %v2025
        %2090 = vst.msk [vmem:[#allocation2 + $0x148] sm:$0xff] %vm1682, %v2026
        %2091 = vst.msk [vmem:[#allocation2 + $0x150] sm:$0xff] %vm1682, %v2027
        %2092 = vst.msk [vmem:[#allocation2 + $0x158] sm:$0xff] %vm1682, %v2028
        %2093 = vst.msk [vmem:[#allocation2 + $0x160] sm:$0xff] %vm1682, %v2029
        %2094 = vst.msk [vmem:[#allocation2 + $0x168] sm:$0xff] %vm1682, %v2030
        %2095 = vst.msk [vmem:[#allocation2 + $0x170] sm:$0xff] %vm1682, %v2031
        %2096 = vst.msk [vmem:[#allocation2 + $0x178] sm:$0xff] %vm1682, %v2032
        %2097 = vst.msk [vmem:[#allocation2 + $0x180] sm:$0xff] %vm1682, %v2033
        %2098 = vst.msk [vmem:[#allocation2 + $0x188] sm:$0xff] %vm1682, %v2034
        %2099 = vst.msk [vmem:[#allocation2 + $0x190] sm:$0xff] %vm1682, %v2035
        %2100 = vst.msk [vmem:[#allocation2 + $0x198] sm:$0xff] %vm1682, %v2036
        %2101 = vst.msk [vmem:[#allocation2 + $0x1a0] sm:$0xff] %vm1682, %v2037
        %2102 = vst.msk [vmem:[#allocation2 + $0x1a8] sm:$0xff] %vm1682, %v2038
        %2103 = vst.msk [vmem:[#allocation2 + $0x1b0] sm:$0xff] %vm1682, %v2039
        %2104 = vst.msk [vmem:[#allocation2 + $0x1b8] sm:$0xff] %vm1682, %v2040
        %2105 = vst.msk [vmem:[#allocation2 + $0x1c0] sm:$0xff] %vm1682, %v2041
        %2106 = vst.msk [vmem:[#allocation2 + $0x1c8] sm:$0xff] %vm1682, %v2042
        %2107 = vst.msk [vmem:[#allocation2 + $0x1d0] sm:$0xff] %vm1682, %v2043
        %2108 = vst.msk [vmem:[#allocation2 + $0x1d8] sm:$0xff] %vm1682, %v2044
        %2109 = vst.msk [vmem:[#allocation2 + $0x1e0] sm:$0xff] %vm1682, %v2045
        %2110 = vst.msk [vmem:[#allocation2 + $0x1e8] sm:$0xff] %vm1682, %v2046
        %2111 = vst.msk [vmem:[#allocation2 + $0x1f0] sm:$0xff] %vm1682, %v2047
        %2112 = vst.msk [vmem:[#allocation2 + $0x1f8] sm:$0xff] %vm1682, %v2048
        %v2113 = vld [vmem:[#allocation2] ss:$2 sm:$0xff]
        %s2114 = scalar_lea.vmem [#allocation2], 16
        %v2115 = vld [vmem:[%s2114] ss:$2 sm:$0xff]
        %s2116 = scalar_lea.vmem [#allocation2], 32
        %v2117 = vld [vmem:[%s2116] ss:$2 sm:$0xff]
        %s2118 = scalar_lea.vmem [#allocation2], 48
        %v2119 = vld [vmem:[%s2118] ss:$2 sm:$0xff]
        %s2120 = scalar_lea.vmem [#allocation2], 64
        %v2121 = vld [vmem:[%s2120] ss:$2 sm:$0xff]
        %s2122 = scalar_lea.vmem [#allocation2], 80
        %v2123 = vld [vmem:[%s2122] ss:$2 sm:$0xff]
        %s2124 = scalar_lea.vmem [#allocation2], 96
        %v2125 = vld [vmem:[%s2124] ss:$2 sm:$0xff]
        %s2126 = scalar_lea.vmem [#allocation2], 112
        %v2127 = vld [vmem:[%s2126] ss:$2 sm:$0xff]
        %s2128 = scalar_lea.vmem [#allocation2], 128
        %v2129 = vld [vmem:[%s2128] ss:$2 sm:$0xff]
        %s2130 = scalar_lea.vmem [#allocation2], 144
        %v2131 = vld [vmem:[%s2130] ss:$2 sm:$0xff]
        %s2132 = scalar_lea.vmem [#allocation2], 160
        %v2133 = vld [vmem:[%s2132] ss:$2 sm:$0xff]
        %s2134 = scalar_lea.vmem [#allocation2], 176
        %v2135 = vld [vmem:[%s2134] ss:$2 sm:$0xff]
        %s2136 = scalar_lea.vmem [#allocation2], 192
        %v2137 = vld [vmem:[%s2136] ss:$2 sm:$0xff]
        %s2138 = scalar_lea.vmem [#allocation2], 208
        %v2139 = vld [vmem:[%s2138] ss:$2 sm:$0xff]
        %s2140 = scalar_lea.vmem [#allocation2], 224
        %v2141 = vld [vmem:[%s2140] ss:$2 sm:$0xff]
        %s2142 = scalar_lea.vmem [#allocation2], 240
        %v2143 = vld [vmem:[%s2142] ss:$2 sm:$0xff]
        %s2144 = scalar_lea.vmem [#allocation2], 256
        %v2145 = vld [vmem:[%s2144] ss:$2 sm:$0xff]
        %s2146 = scalar_lea.vmem [#allocation2], 272
        %v2147 = vld [vmem:[%s2146] ss:$2 sm:$0xff]
        %s2148 = scalar_lea.vmem [#allocation2], 288
        %v2149 = vld [vmem:[%s2148] ss:$2 sm:$0xff]
        %s2150 = scalar_lea.vmem [#allocation2], 304
        %v2151 = vld [vmem:[%s2150] ss:$2 sm:$0xff]
        %s2152 = scalar_lea.vmem [#allocation2], 320
        %v2153 = vld [vmem:[%s2152] ss:$2 sm:$0xff]
        %s2154 = scalar_lea.vmem [#allocation2], 336
        %v2155 = vld [vmem:[%s2154] ss:$2 sm:$0xff]
        %s2156 = scalar_lea.vmem [#allocation2], 352
        %v2157 = vld [vmem:[%s2156] ss:$2 sm:$0xff]
        %s2158 = scalar_lea.vmem [#allocation2], 368
        %v2159 = vld [vmem:[%s2158] ss:$2 sm:$0xff]
        %s2160 = scalar_lea.vmem [#allocation2], 384
        %v2161 = vld [vmem:[%s2160] ss:$2 sm:$0xff]
        %s2162 = scalar_lea.vmem [#allocation2], 400
        %v2163 = vld [vmem:[%s2162] ss:$2 sm:$0xff]
        %s2164 = scalar_lea.vmem [#allocation2], 416
        %v2165 = vld [vmem:[%s2164] ss:$2 sm:$0xff]
        %s2166 = scalar_lea.vmem [#allocation2], 432
        %v2167 = vld [vmem:[%s2166] ss:$2 sm:$0xff]
        %s2168 = scalar_lea.vmem [#allocation2], 448
        %v2169 = vld [vmem:[%s2168] ss:$2 sm:$0xff]
        %s2170 = scalar_lea.vmem [#allocation2], 464
        %v2171 = vld [vmem:[%s2170] ss:$2 sm:$0xff]
        %s2172 = scalar_lea.vmem [#allocation2], 480
        %v2173 = vld [vmem:[%s2172] ss:$2 sm:$0xff]
        %s2174 = scalar_lea.vmem [#allocation2], 496
        %v2175 = vld [vmem:[%s2174] ss:$2 sm:$0xff]
        %s2176 = scalar_lea.vmem [#allocation2], 1
        %v2177 = vld [vmem:[%s2176] ss:$2 sm:$0xff]
        %s2178 = scalar_lea.vmem [#allocation2], 17
        %v2179 = vld [vmem:[%s2178] ss:$2 sm:$0xff]
        %s2180 = scalar_lea.vmem [#allocation2], 33
        %v2181 = vld [vmem:[%s2180] ss:$2 sm:$0xff]
        %s2182 = scalar_lea.vmem [#allocation2], 49
        %v2183 = vld [vmem:[%s2182] ss:$2 sm:$0xff]
        %s2184 = scalar_lea.vmem [#allocation2], 65
        %v2185 = vld [vmem:[%s2184] ss:$2 sm:$0xff]
        %s2186 = scalar_lea.vmem [#allocation2], 81
        %v2187 = vld [vmem:[%s2186] ss:$2 sm:$0xff]
        %s2188 = scalar_lea.vmem [#allocation2], 97
        %v2189 = vld [vmem:[%s2188] ss:$2 sm:$0xff]
        %s2190 = scalar_lea.vmem [#allocation2], 113
        %v2191 = vld [vmem:[%s2190] ss:$2 sm:$0xff]
        %s2192 = scalar_lea.vmem [#allocation2], 129
        %v2193 = vld [vmem:[%s2192] ss:$2 sm:$0xff]
        %s2194 = scalar_lea.vmem [#allocation2], 145
        %v2195 = vld [vmem:[%s2194] ss:$2 sm:$0xff]
        %s2196 = scalar_lea.vmem [#allocation2], 161
        %v2197 = vld [vmem:[%s2196] ss:$2 sm:$0xff]
        %s2198 = scalar_lea.vmem [#allocation2], 177
        %v2199 = vld [vmem:[%s2198] ss:$2 sm:$0xff]
        %s2200 = scalar_lea.vmem [#allocation2], 193
        %v2201 = vld [vmem:[%s2200] ss:$2 sm:$0xff]
        %s2202 = scalar_lea.vmem [#allocation2], 209
        %v2203 = vld [vmem:[%s2202] ss:$2 sm:$0xff]
        %s2204 = scalar_lea.vmem [#allocation2], 225
        %v2205 = vld [vmem:[%s2204] ss:$2 sm:$0xff]
        %s2206 = scalar_lea.vmem [#allocation2], 241
        %v2207 = vld [vmem:[%s2206] ss:$2 sm:$0xff]
        %s2208 = scalar_lea.vmem [#allocation2], 257
        %v2209 = vld [vmem:[%s2208] ss:$2 sm:$0xff]
        %s2210 = scalar_lea.vmem [#allocation2], 273
        %v2211 = vld [vmem:[%s2210] ss:$2 sm:$0xff]
        %s2212 = scalar_lea.vmem [#allocation2], 289
        %v2213 = vld [vmem:[%s2212] ss:$2 sm:$0xff]
        %s2214 = scalar_lea.vmem [#allocation2], 305
        %v2215 = vld [vmem:[%s2214] ss:$2 sm:$0xff]
        %s2216 = scalar_lea.vmem [#allocation2], 321
        %v2217 = vld [vmem:[%s2216] ss:$2 sm:$0xff]
        %s2218 = scalar_lea.vmem [#allocation2], 337
        %v2219 = vld [vmem:[%s2218] ss:$2 sm:$0xff]
        %s2220 = scalar_lea.vmem [#allocation2], 353
        %v2221 = vld [vmem:[%s2220] ss:$2 sm:$0xff]
        %s2222 = scalar_lea.vmem [#allocation2], 369
        %v2223 = vld [vmem:[%s2222] ss:$2 sm:$0xff]
        %s2224 = scalar_lea.vmem [#allocation2], 385
        %v2225 = vld [vmem:[%s2224] ss:$2 sm:$0xff]
        %s2226 = scalar_lea.vmem [#allocation2], 401
        %v2227 = vld [vmem:[%s2226] ss:$2 sm:$0xff]
        %s2228 = scalar_lea.vmem [#allocation2], 417
        %v2229 = vld [vmem:[%s2228] ss:$2 sm:$0xff]
        %s2230 = scalar_lea.vmem [#allocation2], 433
        %v2231 = vld [vmem:[%s2230] ss:$2 sm:$0xff]
        %s2232 = scalar_lea.vmem [#allocation2], 449
        %v2233 = vld [vmem:[%s2232] ss:$2 sm:$0xff]
        %s2234 = scalar_lea.vmem [#allocation2], 465
        %v2235 = vld [vmem:[%s2234] ss:$2 sm:$0xff]
        %s2236 = scalar_lea.vmem [#allocation2], 481
        %v2237 = vld [vmem:[%s2236] ss:$2 sm:$0xff]
        %s2238 = scalar_lea.vmem [#allocation2], 497
        %v2239 = vld [vmem:[%s2238] ss:$2 sm:$0xff]
        %v2240 = vmax.f32 %v2113, %v2177
        %v2241 = vmax.f32 %v2115, %v2179
        %v2242 = vmax.f32 %v2117, %v2181
        %v2243 = vmax.f32 %v2119, %v2183
        %v2244 = vmax.f32 %v2121, %v2185
        %v2245 = vmax.f32 %v2123, %v2187
        %v2246 = vmax.f32 %v2125, %v2189
        %v2247 = vmax.f32 %v2127, %v2191
        %v2248 = vmax.f32 %v2129, %v2193
        %v2249 = vmax.f32 %v2131, %v2195
        %v2250 = vmax.f32 %v2133, %v2197
        %v2251 = vmax.f32 %v2135, %v2199
        %v2252 = vmax.f32 %v2137, %v2201
        %v2253 = vmax.f32 %v2139, %v2203
        %v2254 = vmax.f32 %v2141, %v2205
        %v2255 = vmax.f32 %v2143, %v2207
        %v2256 = vmax.f32 %v2145, %v2209
        %v2257 = vmax.f32 %v2147, %v2211
        %v2258 = vmax.f32 %v2149, %v2213
        %v2259 = vmax.f32 %v2151, %v2215
        %v2260 = vmax.f32 %v2153, %v2217
        %v2261 = vmax.f32 %v2155, %v2219
        %v2262 = vmax.f32 %v2157, %v2221
        %v2263 = vmax.f32 %v2159, %v2223
        %v2264 = vmax.f32 %v2161, %v2225
        %v2265 = vmax.f32 %v2163, %v2227
        %v2266 = vmax.f32 %v2165, %v2229
        %v2267 = vmax.f32 %v2167, %v2231
        %v2268 = vmax.f32 %v2169, %v2233
        %v2269 = vmax.f32 %v2171, %v2235
        %v2270 = vmax.f32 %v2173, %v2237
        %v2271 = vmax.f32 %v2175, %v2239
        %s2272 = scalar_lea.vmem [#allocation3], 24
        %2273 = vst.msk [vmem:[%s2272 + $0x1] sm:$0xff] %vm1682, %v2240
        %2274 = vst.msk [vmem:[%s2272 + $0x9] sm:$0xff] %vm1682, %v2241
        %2275 = vst.msk [vmem:[%s2272 + $0x19] sm:$0xff] %vm1682, %v2242
        %2276 = vst.msk [vmem:[%s2272 + $0x21] sm:$0xff] %vm1682, %v2243
        %2277 = vst.msk [vmem:[%s2272 + $0x31] sm:$0xff] %vm1682, %v2244
        %2278 = vst.msk [vmem:[%s2272 + $0x39] sm:$0xff] %vm1682, %v2245
        %2279 = vst.msk [vmem:[%s2272 + $0x49] sm:$0xff] %vm1682, %v2246
        %2280 = vst.msk [vmem:[%s2272 + $0x51] sm:$0xff] %vm1682, %v2247
        %2281 = vst.msk [vmem:[%s2272 + $0x61] sm:$0xff] %vm1682, %v2248
        %2282 = vst.msk [vmem:[%s2272 + $0x69] sm:$0xff] %vm1682, %v2249
        %2283 = vst.msk [vmem:[%s2272 + $0x79] sm:$0xff] %vm1682, %v2250
        %2284 = vst.msk [vmem:[%s2272 + $0x81] sm:$0xff] %vm1682, %v2251
        %2285 = vst.msk [vmem:[%s2272 + $0x91] sm:$0xff] %vm1682, %v2252
        %2286 = vst.msk [vmem:[%s2272 + $0x99] sm:$0xff] %vm1682, %v2253
        %2287 = vst.msk [vmem:[%s2272 + $0xa9] sm:$0xff] %vm1682, %v2254
        %2288 = vst.msk [vmem:[%s2272 + $0xb1] sm:$0xff] %vm1682, %v2255
        %2289 = vst.msk [vmem:[%s2272 + $0xc1] sm:$0xff] %vm1682, %v2256
        %2290 = vst.msk [vmem:[%s2272 + $0xc9] sm:$0xff] %vm1682, %v2257
        %2291 = vst.msk [vmem:[%s2272 + $0xd9] sm:$0xff] %vm1682, %v2258
        %2292 = vst.msk [vmem:[%s2272 + $0xe1] sm:$0xff] %vm1682, %v2259
        %2293 = vst.msk [vmem:[%s2272 + $0xf1] sm:$0xff] %vm1682, %v2260
        %2294 = vst.msk [vmem:[%s2272 + $0xf9] sm:$0xff] %vm1682, %v2261
        %2295 = vst.msk [vmem:[%s2272 + $0x109] sm:$0xff] %vm1682, %v2262
        %2296 = vst.msk [vmem:[%s2272 + $0x111] sm:$0xff] %vm1682, %v2263
        %2297 = vst.msk [vmem:[%s2272 + $0x121] sm:$0xff] %vm1682, %v2264
        %2298 = vst.msk [vmem:[%s2272 + $0x129] sm:$0xff] %vm1682, %v2265
        %2299 = vst.msk [vmem:[%s2272 + $0x139] sm:$0xff] %vm1682, %v2266
        %2300 = vst.msk [vmem:[%s2272 + $0x141] sm:$0xff] %vm1682, %v2267
        %2301 = vst.msk [vmem:[%s2272 + $0x151] sm:$0xff] %vm1682, %v2268
        %2302 = vst.msk [vmem:[%s2272 + $0x159] sm:$0xff] %vm1682, %v2269
        %2303 = vst.msk [vmem:[%s2272 + $0x169] sm:$0xff] %vm1682, %v2270
        %2304 = vst.msk [vmem:[%s2272 + $0x171] sm:$0xff] %vm1682, %v2271
        %v2305 = vld [vmem:[#allocation3] sm:$0xff]
        %v2306 = vld [vmem:[#allocation3 + $0x8] sm:$0xff]
        %v2307 = vld [vmem:[#allocation3 + $0x18] sm:$0xff]
        %v2308 = vld [vmem:[#allocation3 + $0x20] sm:$0xff]
        %v2309 = vld [vmem:[#allocation3 + $0x30] sm:$0xff]
        %v2310 = vld [vmem:[#allocation3 + $0x38] sm:$0xff]
        %v2311 = vld [vmem:[#allocation3 + $0x48] sm:$0xff]
        %v2312 = vld [vmem:[#allocation3 + $0x50] sm:$0xff]
        %v2313 = vld [vmem:[#allocation3 + $0x60] sm:$0xff]
        %v2314 = vld [vmem:[#allocation3 + $0x68] sm:$0xff]
        %v2315 = vld [vmem:[#allocation3 + $0x78] sm:$0xff]
        %v2316 = vld [vmem:[#allocation3 + $0x80] sm:$0xff]
        %v2317 = vld [vmem:[#allocation3 + $0x90] sm:$0xff]
        %v2318 = vld [vmem:[#allocation3 + $0x98] sm:$0xff]
        %v2319 = vld [vmem:[#allocation3 + $0xa8] sm:$0xff]
        %v2320 = vld [vmem:[#allocation3 + $0xb0] sm:$0xff]
        %v2321 = vld [vmem:[#allocation3 + $0xc0] sm:$0xff]
        %v2322 = vld [vmem:[#allocation3 + $0xc8] sm:$0xff]
        %v2323 = vld [vmem:[#allocation3 + $0xd8] sm:$0xff]
        %v2324 = vld [vmem:[#allocation3 + $0xe0] sm:$0xff]
        %v2325 = vld [vmem:[#allocation3 + $0xf0] sm:$0xff]
        %v2326 = vld [vmem:[#allocation3 + $0xf8] sm:$0xff]
        %v2327 = vld [vmem:[#allocation3 + $0x108] sm:$0xff]
        %v2328 = vld [vmem:[#allocation3 + $0x110] sm:$0xff]
        %v2329 = vld [vmem:[#allocation3 + $0x120] sm:$0xff]
        %v2330 = vld [vmem:[#allocation3 + $0x128] sm:$0xff]
        %v2331 = vld [vmem:[#allocation3 + $0x138] sm:$0xff]
        %v2332 = vld [vmem:[#allocation3 + $0x140] sm:$0xff]
        %v2333 = vld [vmem:[#allocation3 + $0x150] sm:$0xff]
        %v2334 = vld [vmem:[#allocation3 + $0x158] sm:$0xff]
        %v2335 = vld [vmem:[#allocation3 + $0x168] sm:$0xff]
        %v2336 = vld [vmem:[#allocation3 + $0x170] sm:$0xff]
        %v2337 = vld [vmem:[#allocation3 + $0x1] sm:$0xff]
        %v2338 = vld [vmem:[#allocation3 + $0x9] sm:$0xff]
        %v2339 = vld [vmem:[#allocation3 + $0x19] sm:$0xff]
        %v2340 = vld [vmem:[#allocation3 + $0x21] sm:$0xff]
        %v2341 = vld [vmem:[#allocation3 + $0x31] sm:$0xff]
        %v2342 = vld [vmem:[#allocation3 + $0x39] sm:$0xff]
        %v2343 = vld [vmem:[#allocation3 + $0x49] sm:$0xff]
        %v2344 = vld [vmem:[#allocation3 + $0x51] sm:$0xff]
        %v2345 = vld [vmem:[#allocation3 + $0x61] sm:$0xff]
        %v2346 = vld [vmem:[#allocation3 + $0x69] sm:$0xff]
        %v2347 = vld [vmem:[#allocation3 + $0x79] sm:$0xff]
        %v2348 = vld [vmem:[#allocation3 + $0x81] sm:$0xff]
        %v2349 = vld [vmem:[#allocation3 + $0x91] sm:$0xff]
        %v2350 = vld [vmem:[#allocation3 + $0x99] sm:$0xff]
        %v2351 = vld [vmem:[#allocation3 + $0xa9] sm:$0xff]
        %v2352 = vld [vmem:[#allocation3 + $0xb1] sm:$0xff]
        %v2353 = vld [vmem:[#allocation3 + $0xc1] sm:$0xff]
        %v2354 = vld [vmem:[#allocation3 + $0xc9] sm:$0xff]
        %v2355 = vld [vmem:[#allocation3 + $0xd9] sm:$0xff]
        %v2356 = vld [vmem:[#allocation3 + $0xe1] sm:$0xff]
        %v2357 = vld [vmem:[#allocation3 + $0xf1] sm:$0xff]
        %v2358 = vld [vmem:[#allocation3 + $0xf9] sm:$0xff]
        %v2359 = vld [vmem:[#allocation3 + $0x109] sm:$0xff]
        %v2360 = vld [vmem:[#allocation3 + $0x111] sm:$0xff]
        %v2361 = vld [vmem:[#allocation3 + $0x121] sm:$0xff]
        %v2362 = vld [vmem:[#allocation3 + $0x129] sm:$0xff]
        %v2363 = vld [vmem:[#allocation3 + $0x139] sm:$0xff]
        %v2364 = vld [vmem:[#allocation3 + $0x141] sm:$0xff]
        %v2365 = vld [vmem:[#allocation3 + $0x151] sm:$0xff]
        %v2366 = vld [vmem:[#allocation3 + $0x159] sm:$0xff]
        %v2367 = vld [vmem:[#allocation3 + $0x169] sm:$0xff]
        %v2368 = vld [vmem:[#allocation3 + $0x171] sm:$0xff]
        %v2369 = vld [vmem:[#allocation3 + $0x2] sm:$0xff]
        %v2370 = vld [vmem:[#allocation3 + $0xa] sm:$0xff]
        %v2371 = vld [vmem:[#allocation3 + $0x1a] sm:$0xff]
        %v2372 = vld [vmem:[#allocation3 + $0x22] sm:$0xff]
        %v2373 = vld [vmem:[#allocation3 + $0x32] sm:$0xff]
        %v2374 = vld [vmem:[#allocation3 + $0x3a] sm:$0xff]
        %v2375 = vld [vmem:[#allocation3 + $0x4a] sm:$0xff]
        %v2376 = vld [vmem:[#allocation3 + $0x52] sm:$0xff]
        %v2377 = vld [vmem:[#allocation3 + $0x62] sm:$0xff]
        %v2378 = vld [vmem:[#allocation3 + $0x6a] sm:$0xff]
        %v2379 = vld [vmem:[#allocation3 + $0x7a] sm:$0xff]
        %v2380 = vld [vmem:[#allocation3 + $0x82] sm:$0xff]
        %v2381 = vld [vmem:[#allocation3 + $0x92] sm:$0xff]
        %v2382 = vld [vmem:[#allocation3 + $0x9a] sm:$0xff]
        %v2383 = vld [vmem:[#allocation3 + $0xaa] sm:$0xff]
        %v2384 = vld [vmem:[#allocation3 + $0xb2] sm:$0xff]
        %v2385 = vld [vmem:[#allocation3 + $0xc2] sm:$0xff]
        %v2386 = vld [vmem:[#allocation3 + $0xca] sm:$0xff]
        %v2387 = vld [vmem:[#allocation3 + $0xda] sm:$0xff]
        %v2388 = vld [vmem:[#allocation3 + $0xe2] sm:$0xff]
        %v2389 = vld [vmem:[#allocation3 + $0xf2] sm:$0xff]
        %v2390 = vld [vmem:[#allocation3 + $0xfa] sm:$0xff]
        %v2391 = vld [vmem:[#allocation3 + $0x10a] sm:$0xff]
        %v2392 = vld [vmem:[#allocation3 + $0x112] sm:$0xff]
        %v2393 = vld [vmem:[#allocation3 + $0x122] sm:$0xff]
        %v2394 = vld [vmem:[#allocation3 + $0x12a] sm:$0xff]
        %v2395 = vld [vmem:[#allocation3 + $0x13a] sm:$0xff]
        %v2396 = vld [vmem:[#allocation3 + $0x142] sm:$0xff]
        %v2397 = vld [vmem:[#allocation3 + $0x152] sm:$0xff]
        %v2398 = vld [vmem:[#allocation3 + $0x15a] sm:$0xff]
        %v2399 = vld [vmem:[#allocation3 + $0x16a] sm:$0xff]
        %v2400 = vld [vmem:[#allocation3 + $0x172] sm:$0xff]
        %v2401 = vld [vmem:[%s2272] sm:$0xff]
        %v2402 = vld [vmem:[%s2272 + $0x8] sm:$0xff]
        %v2403 = vld [vmem:[%s2272 + $0x18] sm:$0xff]
        %v2404 = vld [vmem:[%s2272 + $0x20] sm:$0xff]
        %v2405 = vld [vmem:[%s2272 + $0x30] sm:$0xff]
        %v2406 = vld [vmem:[%s2272 + $0x38] sm:$0xff]
        %v2407 = vld [vmem:[%s2272 + $0x48] sm:$0xff]
        %v2408 = vld [vmem:[%s2272 + $0x50] sm:$0xff]
        %v2409 = vld [vmem:[%s2272 + $0x60] sm:$0xff]
        %v2410 = vld [vmem:[%s2272 + $0x68] sm:$0xff]
        %v2411 = vld [vmem:[%s2272 + $0x78] sm:$0xff]
        %v2412 = vld [vmem:[%s2272 + $0x80] sm:$0xff]
        %v2413 = vld [vmem:[%s2272 + $0x90] sm:$0xff]
        %v2414 = vld [vmem:[%s2272 + $0x98] sm:$0xff]
        %v2415 = vld [vmem:[%s2272 + $0xa8] sm:$0xff]
        %v2416 = vld [vmem:[%s2272 + $0xb0] sm:$0xff]
        %v2417 = vld [vmem:[%s2272 + $0xc0] sm:$0xff]
        %v2418 = vld [vmem:[%s2272 + $0xc8] sm:$0xff]
        %v2419 = vld [vmem:[%s2272 + $0xd8] sm:$0xff]
        %v2420 = vld [vmem:[%s2272 + $0xe0] sm:$0xff]
        %v2421 = vld [vmem:[%s2272 + $0xf0] sm:$0xff]
        %v2422 = vld [vmem:[%s2272 + $0xf8] sm:$0xff]
        %v2423 = vld [vmem:[%s2272 + $0x108] sm:$0xff]
        %v2424 = vld [vmem:[%s2272 + $0x110] sm:$0xff]
        %v2425 = vld [vmem:[%s2272 + $0x120] sm:$0xff]
        %v2426 = vld [vmem:[%s2272 + $0x128] sm:$0xff]
        %v2427 = vld [vmem:[%s2272 + $0x138] sm:$0xff]
        %v2428 = vld [vmem:[%s2272 + $0x140] sm:$0xff]
        %v2429 = vld [vmem:[%s2272 + $0x150] sm:$0xff]
        %v2430 = vld [vmem:[%s2272 + $0x158] sm:$0xff]
        %v2431 = vld [vmem:[%s2272 + $0x168] sm:$0xff]
        %v2432 = vld [vmem:[%s2272 + $0x170] sm:$0xff]
        %v2433 = vld [vmem:[%s2272 + $0x1] sm:$0xff]
        %v2434 = vld [vmem:[%s2272 + $0x9] sm:$0xff]
        %v2435 = vld [vmem:[%s2272 + $0x19] sm:$0xff]
        %v2436 = vld [vmem:[%s2272 + $0x21] sm:$0xff]
        %v2437 = vld [vmem:[%s2272 + $0x31] sm:$0xff]
        %v2438 = vld [vmem:[%s2272 + $0x39] sm:$0xff]
        %v2439 = vld [vmem:[%s2272 + $0x49] sm:$0xff]
        %v2440 = vld [vmem:[%s2272 + $0x51] sm:$0xff]
        %v2441 = vld [vmem:[%s2272 + $0x61] sm:$0xff]
        %v2442 = vld [vmem:[%s2272 + $0x69] sm:$0xff]
        %v2443 = vld [vmem:[%s2272 + $0x79] sm:$0xff]
        %v2444 = vld [vmem:[%s2272 + $0x81] sm:$0xff]
        %v2445 = vld [vmem:[%s2272 + $0x91] sm:$0xff]
        %v2446 = vld [vmem:[%s2272 + $0x99] sm:$0xff]
        %v2447 = vld [vmem:[%s2272 + $0xa9] sm:$0xff]
        %v2448 = vld [vmem:[%s2272 + $0xb1] sm:$0xff]
        %v2449 = vld [vmem:[%s2272 + $0xc1] sm:$0xff]
        %v2450 = vld [vmem:[%s2272 + $0xc9] sm:$0xff]
        %v2451 = vld [vmem:[%s2272 + $0xd9] sm:$0xff]
        %v2452 = vld [vmem:[%s2272 + $0xe1] sm:$0xff]
        %v2453 = vld [vmem:[%s2272 + $0xf1] sm:$0xff]
        %v2454 = vld [vmem:[%s2272 + $0xf9] sm:$0xff]
        %v2455 = vld [vmem:[%s2272 + $0x109] sm:$0xff]
        %v2456 = vld [vmem:[%s2272 + $0x111] sm:$0xff]
        %v2457 = vld [vmem:[%s2272 + $0x121] sm:$0xff]
        %v2458 = vld [vmem:[%s2272 + $0x129] sm:$0xff]
        %v2459 = vld [vmem:[%s2272 + $0x139] sm:$0xff]
        %v2460 = vld [vmem:[%s2272 + $0x141] sm:$0xff]
        %v2461 = vld [vmem:[%s2272 + $0x151] sm:$0xff]
        %v2462 = vld [vmem:[%s2272 + $0x159] sm:$0xff]
        %v2463 = vld [vmem:[%s2272 + $0x169] sm:$0xff]
        %v2464 = vld [vmem:[%s2272 + $0x171] sm:$0xff]
        %v2465 = vld [vmem:[%s2272 + $0x2] sm:$0xff]
        %v2466 = vld [vmem:[%s2272 + $0xa] sm:$0xff]
        %v2467 = vld [vmem:[%s2272 + $0x1a] sm:$0xff]
        %v2468 = vld [vmem:[%s2272 + $0x22] sm:$0xff]
        %v2469 = vld [vmem:[%s2272 + $0x32] sm:$0xff]
        %v2470 = vld [vmem:[%s2272 + $0x3a] sm:$0xff]
        %v2471 = vld [vmem:[%s2272 + $0x4a] sm:$0xff]
        %v2472 = vld [vmem:[%s2272 + $0x52] sm:$0xff]
        %v2473 = vld [vmem:[%s2272 + $0x62] sm:$0xff]
        %v2474 = vld [vmem:[%s2272 + $0x6a] sm:$0xff]
        %v2475 = vld [vmem:[%s2272 + $0x7a] sm:$0xff]
        %v2476 = vld [vmem:[%s2272 + $0x82] sm:$0xff]
        %v2477 = vld [vmem:[%s2272 + $0x92] sm:$0xff]
        %v2478 = vld [vmem:[%s2272 + $0x9a] sm:$0xff]
        %v2479 = vld [vmem:[%s2272 + $0xaa] sm:$0xff]
        %v2480 = vld [vmem:[%s2272 + $0xb2] sm:$0xff]
        %v2481 = vld [vmem:[%s2272 + $0xc2] sm:$0xff]
        %v2482 = vld [vmem:[%s2272 + $0xca] sm:$0xff]
        %v2483 = vld [vmem:[%s2272 + $0xda] sm:$0xff]
        %v2484 = vld [vmem:[%s2272 + $0xe2] sm:$0xff]
        %v2485 = vld [vmem:[%s2272 + $0xf2] sm:$0xff]
        %v2486 = vld [vmem:[%s2272 + $0xfa] sm:$0xff]
        %v2487 = vld [vmem:[%s2272 + $0x10a] sm:$0xff]
        %v2488 = vld [vmem:[%s2272 + $0x112] sm:$0xff]
        %v2489 = vld [vmem:[%s2272 + $0x122] sm:$0xff]
        %v2490 = vld [vmem:[%s2272 + $0x12a] sm:$0xff]
        %v2491 = vld [vmem:[%s2272 + $0x13a] sm:$0xff]
        %v2492 = vld [vmem:[%s2272 + $0x142] sm:$0xff]
        %v2493 = vld [vmem:[%s2272 + $0x152] sm:$0xff]
        %v2494 = vld [vmem:[%s2272 + $0x15a] sm:$0xff]
        %v2495 = vld [vmem:[%s2272 + $0x16a] sm:$0xff]
        %v2496 = vld [vmem:[%s2272 + $0x172] sm:$0xff]
        %s2497 = scalar_lea.vmem [#allocation3], 48
        %v2498 = vld [vmem:[%s2497] sm:$0xff]
        %v2499 = vld [vmem:[%s2497 + $0x8] sm:$0xff]
        %v2500 = vld [vmem:[%s2497 + $0x18] sm:$0xff]
        %v2501 = vld [vmem:[%s2497 + $0x20] sm:$0xff]
        %v2502 = vld [vmem:[%s2497 + $0x30] sm:$0xff]
        %v2503 = vld [vmem:[%s2497 + $0x38] sm:$0xff]
        %v2504 = vld [vmem:[%s2497 + $0x48] sm:$0xff]
        %v2505 = vld [vmem:[%s2497 + $0x50] sm:$0xff]
        %v2506 = vld [vmem:[%s2497 + $0x60] sm:$0xff]
        %v2507 = vld [vmem:[%s2497 + $0x68] sm:$0xff]
        %v2508 = vld [vmem:[%s2497 + $0x78] sm:$0xff]
        %v2509 = vld [vmem:[%s2497 + $0x80] sm:$0xff]
        %v2510 = vld [vmem:[%s2497 + $0x90] sm:$0xff]
        %v2511 = vld [vmem:[%s2497 + $0x98] sm:$0xff]
        %v2512 = vld [vmem:[%s2497 + $0xa8] sm:$0xff]
        %v2513 = vld [vmem:[%s2497 + $0xb0] sm:$0xff]
        %v2514 = vld [vmem:[%s2497 + $0xc0] sm:$0xff]
        %v2515 = vld [vmem:[%s2497 + $0xc8] sm:$0xff]
        %v2516 = vld [vmem:[%s2497 + $0xd8] sm:$0xff]
        %v2517 = vld [vmem:[%s2497 + $0xe0] sm:$0xff]
        %v2518 = vld [vmem:[%s2497 + $0xf0] sm:$0xff]
        %v2519 = vld [vmem:[%s2497 + $0xf8] sm:$0xff]
        %v2520 = vld [vmem:[%s2497 + $0x108] sm:$0xff]
        %v2521 = vld [vmem:[%s2497 + $0x110] sm:$0xff]
        %v2522 = vld [vmem:[%s2497 + $0x120] sm:$0xff]
        %v2523 = vld [vmem:[%s2497 + $0x128] sm:$0xff]
        %v2524 = vld [vmem:[%s2497 + $0x138] sm:$0xff]
        %v2525 = vld [vmem:[%s2497 + $0x140] sm:$0xff]
        %v2526 = vld [vmem:[%s2497 + $0x150] sm:$0xff]
        %v2527 = vld [vmem:[%s2497 + $0x158] sm:$0xff]
        %v2528 = vld [vmem:[%s2497 + $0x168] sm:$0xff]
        %v2529 = vld [vmem:[%s2497 + $0x170] sm:$0xff]
        %v2530 = vld [vmem:[%s2497 + $0x1] sm:$0xff]
        %v2531 = vld [vmem:[%s2497 + $0x9] sm:$0xff]
        %v2532 = vld [vmem:[%s2497 + $0x19] sm:$0xff]
        %v2533 = vld [vmem:[%s2497 + $0x21] sm:$0xff]
        %v2534 = vld [vmem:[%s2497 + $0x31] sm:$0xff]
        %v2535 = vld [vmem:[%s2497 + $0x39] sm:$0xff]
        %v2536 = vld [vmem:[%s2497 + $0x49] sm:$0xff]
        %v2537 = vld [vmem:[%s2497 + $0x51] sm:$0xff]
        %v2538 = vld [vmem:[%s2497 + $0x61] sm:$0xff]
        %v2539 = vld [vmem:[%s2497 + $0x69] sm:$0xff]
        %v2540 = vld [vmem:[%s2497 + $0x79] sm:$0xff]
        %v2541 = vld [vmem:[%s2497 + $0x81] sm:$0xff]
        %v2542 = vld [vmem:[%s2497 + $0x91] sm:$0xff]
        %v2543 = vld [vmem:[%s2497 + $0x99] sm:$0xff]
        %v2544 = vld [vmem:[%s2497 + $0xa9] sm:$0xff]
        %v2545 = vld [vmem:[%s2497 + $0xb1] sm:$0xff]
        %v2546 = vld [vmem:[%s2497 + $0xc1] sm:$0xff]
        %v2547 = vld [vmem:[%s2497 + $0xc9] sm:$0xff]
        %v2548 = vld [vmem:[%s2497 + $0xd9] sm:$0xff]
        %v2549 = vld [vmem:[%s2497 + $0xe1] sm:$0xff]
        %v2550 = vld [vmem:[%s2497 + $0xf1] sm:$0xff]
        %v2551 = vld [vmem:[%s2497 + $0xf9] sm:$0xff]
        %v2552 = vld [vmem:[%s2497 + $0x109] sm:$0xff]
        %v2553 = vld [vmem:[%s2497 + $0x111] sm:$0xff]
        %v2554 = vld [vmem:[%s2497 + $0x121] sm:$0xff]
        %v2555 = vld [vmem:[%s2497 + $0x129] sm:$0xff]
        %v2556 = vld [vmem:[%s2497 + $0x139] sm:$0xff]
        %v2557 = vld [vmem:[%s2497 + $0x141] sm:$0xff]
        %v2558 = vld [vmem:[%s2497 + $0x151] sm:$0xff]
        %v2559 = vld [vmem:[%s2497 + $0x159] sm:$0xff]
        %v2560 = vld [vmem:[%s2497 + $0x169] sm:$0xff]
        %v2561 = vld [vmem:[%s2497 + $0x171] sm:$0xff]
        %v2562 = vld [vmem:[%s2497 + $0x2] sm:$0xff]
        %v2563 = vld [vmem:[%s2497 + $0xa] sm:$0xff]
        %v2564 = vld [vmem:[%s2497 + $0x1a] sm:$0xff]
        %v2565 = vld [vmem:[%s2497 + $0x22] sm:$0xff]
        %v2566 = vld [vmem:[%s2497 + $0x32] sm:$0xff]
        %v2567 = vld [vmem:[%s2497 + $0x3a] sm:$0xff]
        %v2568 = vld [vmem:[%s2497 + $0x4a] sm:$0xff]
        %v2569 = vld [vmem:[%s2497 + $0x52] sm:$0xff]
        %v2570 = vld [vmem:[%s2497 + $0x62] sm:$0xff]
        %v2571 = vld [vmem:[%s2497 + $0x6a] sm:$0xff]
        %v2572 = vld [vmem:[%s2497 + $0x7a] sm:$0xff]
        %v2573 = vld [vmem:[%s2497 + $0x82] sm:$0xff]
        %v2574 = vld [vmem:[%s2497 + $0x92] sm:$0xff]
        %v2575 = vld [vmem:[%s2497 + $0x9a] sm:$0xff]
        %v2576 = vld [vmem:[%s2497 + $0xaa] sm:$0xff]
        %v2577 = vld [vmem:[%s2497 + $0xb2] sm:$0xff]
        %v2578 = vld [vmem:[%s2497 + $0xc2] sm:$0xff]
        %v2579 = vld [vmem:[%s2497 + $0xca] sm:$0xff]
        %v2580 = vld [vmem:[%s2497 + $0xda] sm:$0xff]
        %v2581 = vld [vmem:[%s2497 + $0xe2] sm:$0xff]
        %v2582 = vld [vmem:[%s2497 + $0xf2] sm:$0xff]
        %v2583 = vld [vmem:[%s2497 + $0xfa] sm:$0xff]
        %v2584 = vld [vmem:[%s2497 + $0x10a] sm:$0xff]
        %v2585 = vld [vmem:[%s2497 + $0x112] sm:$0xff]
        %v2586 = vld [vmem:[%s2497 + $0x122] sm:$0xff]
        %v2587 = vld [vmem:[%s2497 + $0x12a] sm:$0xff]
        %v2588 = vld [vmem:[%s2497 + $0x13a] sm:$0xff]
        %v2589 = vld [vmem:[%s2497 + $0x142] sm:$0xff]
        %v2590 = vld [vmem:[%s2497 + $0x152] sm:$0xff]
        %v2591 = vld [vmem:[%s2497 + $0x15a] sm:$0xff]
        %v2592 = vld [vmem:[%s2497 + $0x16a] sm:$0xff]
        %v2593 = vld [vmem:[%s2497 + $0x172] sm:$0xff]
        %2626 = vrot.lane.b32.xlu0 %v2337, 32
        %v2627 = vpop.permute.xlu0 %2626
        %2628 = vrot.lane.b32.xlu0 %v2338, 32
        %v2629 = vpop.permute.xlu0 %2628
        %2630 = vrot.lane.b32.xlu0 %v2339, 32
        %v2631 = vpop.permute.xlu0 %2630
        %2632 = vrot.lane.b32.xlu0 %v2340, 32
        %v2633 = vpop.permute.xlu0 %2632
        %2634 = vrot.lane.b32.xlu0 %v2341, 32
        %v2635 = vpop.permute.xlu0 %2634
        %2636 = vrot.lane.b32.xlu0 %v2342, 32
        %v2637 = vpop.permute.xlu0 %2636
        %2638 = vrot.lane.b32.xlu0 %v2343, 32
        %v2639 = vpop.permute.xlu0 %2638
        %2640 = vrot.lane.b32.xlu0 %v2344, 32
        %v2641 = vpop.permute.xlu0 %2640
        %2642 = vrot.lane.b32.xlu0 %v2345, 32
        %v2643 = vpop.permute.xlu0 %2642
        %2644 = vrot.lane.b32.xlu0 %v2346, 32
        %v2645 = vpop.permute.xlu0 %2644
        %2646 = vrot.lane.b32.xlu0 %v2347, 32
        %v2647 = vpop.permute.xlu0 %2646
        %2648 = vrot.lane.b32.xlu0 %v2348, 32
        %v2649 = vpop.permute.xlu0 %2648
        %2650 = vrot.lane.b32.xlu0 %v2349, 32
        %v2651 = vpop.permute.xlu0 %2650
        %2652 = vrot.lane.b32.xlu0 %v2350, 32
        %v2653 = vpop.permute.xlu0 %2652
        %2654 = vrot.lane.b32.xlu0 %v2351, 32
        %v2655 = vpop.permute.xlu0 %2654
        %2656 = vrot.lane.b32.xlu0 %v2352, 32
        %v2657 = vpop.permute.xlu0 %2656
        %2658 = vrot.lane.b32.xlu0 %v2353, 32
        %v2659 = vpop.permute.xlu0 %2658
        %2660 = vrot.lane.b32.xlu0 %v2354, 32
        %v2661 = vpop.permute.xlu0 %2660
        %2662 = vrot.lane.b32.xlu0 %v2355, 32
        %v2663 = vpop.permute.xlu0 %2662
        %2664 = vrot.lane.b32.xlu0 %v2356, 32
        %v2665 = vpop.permute.xlu0 %2664
        %2666 = vrot.lane.b32.xlu0 %v2357, 32
        %v2667 = vpop.permute.xlu0 %2666
        %2668 = vrot.lane.b32.xlu0 %v2358, 32
        %v2669 = vpop.permute.xlu0 %2668
        %2670 = vrot.lane.b32.xlu0 %v2359, 32
        %v2671 = vpop.permute.xlu0 %2670
        %2672 = vrot.lane.b32.xlu0 %v2360, 32
        %v2673 = vpop.permute.xlu0 %2672
        %2674 = vrot.lane.b32.xlu0 %v2361, 32
        %v2675 = vpop.permute.xlu0 %2674
        %2676 = vrot.lane.b32.xlu0 %v2362, 32
        %v2677 = vpop.permute.xlu0 %2676
        %2678 = vrot.lane.b32.xlu0 %v2363, 32
        %v2679 = vpop.permute.xlu0 %2678
        %2680 = vrot.lane.b32.xlu0 %v2364, 32
        %v2681 = vpop.permute.xlu0 %2680
        %2682 = vrot.lane.b32.xlu0 %v2365, 32
        %v2683 = vpop.permute.xlu0 %2682
        %2684 = vrot.lane.b32.xlu0 %v2366, 32
        %v2685 = vpop.permute.xlu0 %2684
        %2686 = vrot.lane.b32.xlu0 %v2367, 32
        %v2687 = vpop.permute.xlu0 %2686
        %2688 = vrot.lane.b32.xlu0 %v2368, 32
        %v2689 = vpop.permute.xlu0 %2688
        %2754 = vrot.lane.b32.xlu0 %v2369, 64
        %v2755 = vpop.permute.xlu0 %2754
        %2756 = vrot.lane.b32.xlu0 %v2370, 64
        %v2757 = vpop.permute.xlu0 %2756
        %2758 = vrot.lane.b32.xlu0 %v2371, 64
        %v2759 = vpop.permute.xlu0 %2758
        %2760 = vrot.lane.b32.xlu0 %v2372, 64
        %v2761 = vpop.permute.xlu0 %2760
        %2762 = vrot.lane.b32.xlu0 %v2373, 64
        %v2763 = vpop.permute.xlu0 %2762
        %2764 = vrot.lane.b32.xlu0 %v2374, 64
        %v2765 = vpop.permute.xlu0 %2764
        %2766 = vrot.lane.b32.xlu0 %v2375, 64
        %v2767 = vpop.permute.xlu0 %2766
        %2768 = vrot.lane.b32.xlu0 %v2376, 64
        %v2769 = vpop.permute.xlu0 %2768
        %2770 = vrot.lane.b32.xlu0 %v2377, 64
        %v2771 = vpop.permute.xlu0 %2770
        %2772 = vrot.lane.b32.xlu0 %v2378, 64
        %v2773 = vpop.permute.xlu0 %2772
        %2774 = vrot.lane.b32.xlu0 %v2379, 64
        %v2775 = vpop.permute.xlu0 %2774
        %2776 = vrot.lane.b32.xlu0 %v2380, 64
        %v2777 = vpop.permute.xlu0 %2776
        %2778 = vrot.lane.b32.xlu0 %v2381, 64
        %v2779 = vpop.permute.xlu0 %2778
        %2780 = vrot.lane.b32.xlu0 %v2382, 64
        %v2781 = vpop.permute.xlu0 %2780
        %2782 = vrot.lane.b32.xlu0 %v2383, 64
        %v2783 = vpop.permute.xlu0 %2782
        %2784 = vrot.lane.b32.xlu0 %v2384, 64
        %v2785 = vpop.permute.xlu0 %2784
        %2786 = vrot.lane.b32.xlu0 %v2385, 64
        %v2787 = vpop.permute.xlu0 %2786
        %2788 = vrot.lane.b32.xlu0 %v2386, 64
        %v2789 = vpop.permute.xlu0 %2788
        %2790 = vrot.lane.b32.xlu0 %v2387, 64
        %v2791 = vpop.permute.xlu0 %2790
        %2792 = vrot.lane.b32.xlu0 %v2388, 64
        %v2793 = vpop.permute.xlu0 %2792
        %2794 = vrot.lane.b32.xlu0 %v2389, 64
        %v2795 = vpop.permute.xlu0 %2794
        %2796 = vrot.lane.b32.xlu0 %v2390, 64
        %v2797 = vpop.permute.xlu0 %2796
        %2798 = vrot.lane.b32.xlu0 %v2391, 64
        %v2799 = vpop.permute.xlu0 %2798
        %2800 = vrot.lane.b32.xlu0 %v2392, 64
        %v2801 = vpop.permute.xlu0 %2800
        %2802 = vrot.lane.b32.xlu0 %v2393, 64
        %v2803 = vpop.permute.xlu0 %2802
        %2804 = vrot.lane.b32.xlu0 %v2394, 64
        %v2805 = vpop.permute.xlu0 %2804
        %2806 = vrot.lane.b32.xlu0 %v2395, 64
        %v2807 = vpop.permute.xlu0 %2806
        %2808 = vrot.lane.b32.xlu0 %v2396, 64
        %v2809 = vpop.permute.xlu0 %2808
        %2810 = vrot.lane.b32.xlu0 %v2397, 64
        %v2811 = vpop.permute.xlu0 %2810
        %2812 = vrot.lane.b32.xlu0 %v2398, 64
        %v2813 = vpop.permute.xlu0 %2812
        %2814 = vrot.lane.b32.xlu0 %v2399, 64
        %v2815 = vpop.permute.xlu0 %2814
        %2816 = vrot.lane.b32.xlu0 %v2400, 64
        %v2817 = vpop.permute.xlu0 %2816
        %2882 = vrot.lane.b32.xlu0 %v2401, 96
        %v2883 = vpop.permute.xlu0 %2882
        %2884 = vrot.lane.b32.xlu0 %v2402, 96
        %v2885 = vpop.permute.xlu0 %2884
        %2886 = vrot.lane.b32.xlu0 %v2403, 96
        %v2887 = vpop.permute.xlu0 %2886
        %2888 = vrot.lane.b32.xlu0 %v2404, 96
        %v2889 = vpop.permute.xlu0 %2888
        %2890 = vrot.lane.b32.xlu0 %v2405, 96
        %v2891 = vpop.permute.xlu0 %2890
        %2892 = vrot.lane.b32.xlu0 %v2406, 96
        %v2893 = vpop.permute.xlu0 %2892
        %2894 = vrot.lane.b32.xlu0 %v2407, 96
        %v2895 = vpop.permute.xlu0 %2894
        %2896 = vrot.lane.b32.xlu0 %v2408, 96
        %v2897 = vpop.permute.xlu0 %2896
        %2898 = vrot.lane.b32.xlu0 %v2409, 96
        %v2899 = vpop.permute.xlu0 %2898
        %2900 = vrot.lane.b32.xlu0 %v2410, 96
        %v2901 = vpop.permute.xlu0 %2900
        %2902 = vrot.lane.b32.xlu0 %v2411, 96
        %v2903 = vpop.permute.xlu0 %2902
        %2904 = vrot.lane.b32.xlu0 %v2412, 96
        %v2905 = vpop.permute.xlu0 %2904
        %2906 = vrot.lane.b32.xlu0 %v2413, 96
        %v2907 = vpop.permute.xlu0 %2906
        %2908 = vrot.lane.b32.xlu0 %v2414, 96
        %v2909 = vpop.permute.xlu0 %2908
        %2910 = vrot.lane.b32.xlu0 %v2415, 96
        %v2911 = vpop.permute.xlu0 %2910
        %2912 = vrot.lane.b32.xlu0 %v2416, 96
        %v2913 = vpop.permute.xlu0 %2912
        %2914 = vrot.lane.b32.xlu0 %v2417, 96
        %v2915 = vpop.permute.xlu0 %2914
        %2916 = vrot.lane.b32.xlu0 %v2418, 96
        %v2917 = vpop.permute.xlu0 %2916
        %2918 = vrot.lane.b32.xlu0 %v2419, 96
        %v2919 = vpop.permute.xlu0 %2918
        %2920 = vrot.lane.b32.xlu0 %v2420, 96
        %v2921 = vpop.permute.xlu0 %2920
        %2922 = vrot.lane.b32.xlu0 %v2421, 96
        %v2923 = vpop.permute.xlu0 %2922
        %2924 = vrot.lane.b32.xlu0 %v2422, 96
        %v2925 = vpop.permute.xlu0 %2924
        %2926 = vrot.lane.b32.xlu0 %v2423, 96
        %v2927 = vpop.permute.xlu0 %2926
        %2928 = vrot.lane.b32.xlu0 %v2424, 96
        %v2929 = vpop.permute.xlu0 %2928
        %2930 = vrot.lane.b32.xlu0 %v2425, 96
        %v2931 = vpop.permute.xlu0 %2930
        %2932 = vrot.lane.b32.xlu0 %v2426, 96
        %v2933 = vpop.permute.xlu0 %2932
        %2934 = vrot.lane.b32.xlu0 %v2427, 96
        %v2935 = vpop.permute.xlu0 %2934
        %2936 = vrot.lane.b32.xlu0 %v2428, 96
        %v2937 = vpop.permute.xlu0 %2936
        %2938 = vrot.lane.b32.xlu0 %v2429, 96
        %v2939 = vpop.permute.xlu0 %2938
        %2940 = vrot.lane.b32.xlu0 %v2430, 96
        %v2941 = vpop.permute.xlu0 %2940
        %2942 = vrot.lane.b32.xlu0 %v2431, 96
        %v2943 = vpop.permute.xlu0 %2942
        %2944 = vrot.lane.b32.xlu0 %v2432, 96
        %v2945 = vpop.permute.xlu0 %2944
        %3010 = vrot.lane.b32.xlu0 %v2465, 32
        %v3011 = vpop.permute.xlu0 %3010
        %3012 = vrot.lane.b32.xlu0 %v2466, 32
        %v3013 = vpop.permute.xlu0 %3012
        %3014 = vrot.lane.b32.xlu0 %v2467, 32
        %v3015 = vpop.permute.xlu0 %3014
        %3016 = vrot.lane.b32.xlu0 %v2468, 32
        %v3017 = vpop.permute.xlu0 %3016
        %3018 = vrot.lane.b32.xlu0 %v2469, 32
        %v3019 = vpop.permute.xlu0 %3018
        %3020 = vrot.lane.b32.xlu0 %v2470, 32
        %v3021 = vpop.permute.xlu0 %3020
        %3022 = vrot.lane.b32.xlu0 %v2471, 32
        %v3023 = vpop.permute.xlu0 %3022
        %3024 = vrot.lane.b32.xlu0 %v2472, 32
        %v3025 = vpop.permute.xlu0 %3024
        %3026 = vrot.lane.b32.xlu0 %v2473, 32
        %v3027 = vpop.permute.xlu0 %3026
        %3028 = vrot.lane.b32.xlu0 %v2474, 32
        %v3029 = vpop.permute.xlu0 %3028
        %3030 = vrot.lane.b32.xlu0 %v2475, 32
        %v3031 = vpop.permute.xlu0 %3030
        %3032 = vrot.lane.b32.xlu0 %v2476, 32
        %v3033 = vpop.permute.xlu0 %3032
        %3034 = vrot.lane.b32.xlu0 %v2477, 32
        %v3035 = vpop.permute.xlu0 %3034
        %3036 = vrot.lane.b32.xlu0 %v2478, 32
        %v3037 = vpop.permute.xlu0 %3036
        %3038 = vrot.lane.b32.xlu0 %v2479, 32
        %v3039 = vpop.permute.xlu0 %3038
        %3040 = vrot.lane.b32.xlu0 %v2480, 32
        %v3041 = vpop.permute.xlu0 %3040
        %3042 = vrot.lane.b32.xlu0 %v2481, 32
        %v3043 = vpop.permute.xlu0 %3042
        %3044 = vrot.lane.b32.xlu0 %v2482, 32
        %v3045 = vpop.permute.xlu0 %3044
        %3046 = vrot.lane.b32.xlu0 %v2483, 32
        %v3047 = vpop.permute.xlu0 %3046
        %3048 = vrot.lane.b32.xlu0 %v2484, 32
        %v3049 = vpop.permute.xlu0 %3048
        %3050 = vrot.lane.b32.xlu0 %v2485, 32
        %v3051 = vpop.permute.xlu0 %3050
        %3052 = vrot.lane.b32.xlu0 %v2486, 32
        %v3053 = vpop.permute.xlu0 %3052
        %3054 = vrot.lane.b32.xlu0 %v2487, 32
        %v3055 = vpop.permute.xlu0 %3054
        %3056 = vrot.lane.b32.xlu0 %v2488, 32
        %v3057 = vpop.permute.xlu0 %3056
        %3058 = vrot.lane.b32.xlu0 %v2489, 32
        %v3059 = vpop.permute.xlu0 %3058
        %3060 = vrot.lane.b32.xlu0 %v2490, 32
        %v3061 = vpop.permute.xlu0 %3060
        %3062 = vrot.lane.b32.xlu0 %v2491, 32
        %v3063 = vpop.permute.xlu0 %3062
        %3064 = vrot.lane.b32.xlu0 %v2492, 32
        %v3065 = vpop.permute.xlu0 %3064
        %3066 = vrot.lane.b32.xlu0 %v2493, 32
        %v3067 = vpop.permute.xlu0 %3066
        %3068 = vrot.lane.b32.xlu0 %v2494, 32
        %v3069 = vpop.permute.xlu0 %3068
        %3070 = vrot.lane.b32.xlu0 %v2495, 32
        %v3071 = vpop.permute.xlu0 %3070
        %3072 = vrot.lane.b32.xlu0 %v2496, 32
        %v3073 = vpop.permute.xlu0 %3072
        %3138 = vrot.lane.b32.xlu0 %v2498, 64
        %v3139 = vpop.permute.xlu0 %3138
        %3140 = vrot.lane.b32.xlu0 %v2499, 64
        %v3141 = vpop.permute.xlu0 %3140
        %3142 = vrot.lane.b32.xlu0 %v2500, 64
        %v3143 = vpop.permute.xlu0 %3142
        %3144 = vrot.lane.b32.xlu0 %v2501, 64
        %v3145 = vpop.permute.xlu0 %3144
        %3146 = vrot.lane.b32.xlu0 %v2502, 64
        %v3147 = vpop.permute.xlu0 %3146
        %3148 = vrot.lane.b32.xlu0 %v2503, 64
        %v3149 = vpop.permute.xlu0 %3148
        %3150 = vrot.lane.b32.xlu0 %v2504, 64
        %v3151 = vpop.permute.xlu0 %3150
        %3152 = vrot.lane.b32.xlu0 %v2505, 64
        %v3153 = vpop.permute.xlu0 %3152
        %3154 = vrot.lane.b32.xlu0 %v2506, 64
        %v3155 = vpop.permute.xlu0 %3154
        %3156 = vrot.lane.b32.xlu0 %v2507, 64
        %v3157 = vpop.permute.xlu0 %3156
        %3158 = vrot.lane.b32.xlu0 %v2508, 64
        %v3159 = vpop.permute.xlu0 %3158
        %3160 = vrot.lane.b32.xlu0 %v2509, 64
        %v3161 = vpop.permute.xlu0 %3160
        %3162 = vrot.lane.b32.xlu0 %v2510, 64
        %v3163 = vpop.permute.xlu0 %3162
        %3164 = vrot.lane.b32.xlu0 %v2511, 64
        %v3165 = vpop.permute.xlu0 %3164
        %3166 = vrot.lane.b32.xlu0 %v2512, 64
        %v3167 = vpop.permute.xlu0 %3166
        %3168 = vrot.lane.b32.xlu0 %v2513, 64
        %v3169 = vpop.permute.xlu0 %3168
        %3170 = vrot.lane.b32.xlu0 %v2514, 64
        %v3171 = vpop.permute.xlu0 %3170
        %3172 = vrot.lane.b32.xlu0 %v2515, 64
        %v3173 = vpop.permute.xlu0 %3172
        %3174 = vrot.lane.b32.xlu0 %v2516, 64
        %v3175 = vpop.permute.xlu0 %3174
        %3176 = vrot.lane.b32.xlu0 %v2517, 64
        %v3177 = vpop.permute.xlu0 %3176
        %3178 = vrot.lane.b32.xlu0 %v2518, 64
        %v3179 = vpop.permute.xlu0 %3178
        %3180 = vrot.lane.b32.xlu0 %v2519, 64
        %v3181 = vpop.permute.xlu0 %3180
        %3182 = vrot.lane.b32.xlu0 %v2520, 64
        %v3183 = vpop.permute.xlu0 %3182
        %3184 = vrot.lane.b32.xlu0 %v2521, 64
        %v3185 = vpop.permute.xlu0 %3184
        %3186 = vrot.lane.b32.xlu0 %v2522, 64
        %v3187 = vpop.permute.xlu0 %3186
        %3188 = vrot.lane.b32.xlu0 %v2523, 64
        %v3189 = vpop.permute.xlu0 %3188
        %3190 = vrot.lane.b32.xlu0 %v2524, 64
        %v3191 = vpop.permute.xlu0 %3190
        %3192 = vrot.lane.b32.xlu0 %v2525, 64
        %v3193 = vpop.permute.xlu0 %3192
        %3194 = vrot.lane.b32.xlu0 %v2526, 64
        %v3195 = vpop.permute.xlu0 %3194
        %3196 = vrot.lane.b32.xlu0 %v2527, 64
        %v3197 = vpop.permute.xlu0 %3196
        %3198 = vrot.lane.b32.xlu0 %v2528, 64
        %v3199 = vpop.permute.xlu0 %3198
        %3200 = vrot.lane.b32.xlu0 %v2529, 64
        %v3201 = vpop.permute.xlu0 %3200
        %3266 = vrot.lane.b32.xlu0 %v2530, 96
        %v3267 = vpop.permute.xlu0 %3266
        %3268 = vrot.lane.b32.xlu0 %v2531, 96
        %v3269 = vpop.permute.xlu0 %3268
        %3270 = vrot.lane.b32.xlu0 %v2532, 96
        %v3271 = vpop.permute.xlu0 %3270
        %3272 = vrot.lane.b32.xlu0 %v2533, 96
        %v3273 = vpop.permute.xlu0 %3272
        %3274 = vrot.lane.b32.xlu0 %v2534, 96
        %v3275 = vpop.permute.xlu0 %3274
        %3276 = vrot.lane.b32.xlu0 %v2535, 96
        %v3277 = vpop.permute.xlu0 %3276
        %3278 = vrot.lane.b32.xlu0 %v2536, 96
        %v3279 = vpop.permute.xlu0 %3278
        %3280 = vrot.lane.b32.xlu0 %v2537, 96
        %v3281 = vpop.permute.xlu0 %3280
        %3282 = vrot.lane.b32.xlu0 %v2538, 96
        %v3283 = vpop.permute.xlu0 %3282
        %3284 = vrot.lane.b32.xlu0 %v2539, 96
        %v3285 = vpop.permute.xlu0 %3284
        %3286 = vrot.lane.b32.xlu0 %v2540, 96
        %v3287 = vpop.permute.xlu0 %3286
        %3288 = vrot.lane.b32.xlu0 %v2541, 96
        %v3289 = vpop.permute.xlu0 %3288
        %3290 = vrot.lane.b32.xlu0 %v2542, 96
        %v3291 = vpop.permute.xlu0 %3290
        %3292 = vrot.lane.b32.xlu0 %v2543, 96
        %v3293 = vpop.permute.xlu0 %3292
        %3294 = vrot.lane.b32.xlu0 %v2544, 96
        %v3295 = vpop.permute.xlu0 %3294
        %3296 = vrot.lane.b32.xlu0 %v2545, 96
        %v3297 = vpop.permute.xlu0 %3296
        %3298 = vrot.lane.b32.xlu0 %v2546, 96
        %v3299 = vpop.permute.xlu0 %3298
        %3300 = vrot.lane.b32.xlu0 %v2547, 96
        %v3301 = vpop.permute.xlu0 %3300
        %3302 = vrot.lane.b32.xlu0 %v2548, 96
        %v3303 = vpop.permute.xlu0 %3302
        %3304 = vrot.lane.b32.xlu0 %v2549, 96
        %v3305 = vpop.permute.xlu0 %3304
        %3306 = vrot.lane.b32.xlu0 %v2550, 96
        %v3307 = vpop.permute.xlu0 %3306
        %3308 = vrot.lane.b32.xlu0 %v2551, 96
        %v3309 = vpop.permute.xlu0 %3308
        %3310 = vrot.lane.b32.xlu0 %v2552, 96
        %v3311 = vpop.permute.xlu0 %3310
        %3312 = vrot.lane.b32.xlu0 %v2553, 96
        %v3313 = vpop.permute.xlu0 %3312
        %3314 = vrot.lane.b32.xlu0 %v2554, 96
        %v3315 = vpop.permute.xlu0 %3314
        %3316 = vrot.lane.b32.xlu0 %v2555, 96
        %v3317 = vpop.permute.xlu0 %3316
        %3318 = vrot.lane.b32.xlu0 %v2556, 96
        %v3319 = vpop.permute.xlu0 %3318
        %3320 = vrot.lane.b32.xlu0 %v2557, 96
        %v3321 = vpop.permute.xlu0 %3320
        %3322 = vrot.lane.b32.xlu0 %v2558, 96
        %v3323 = vpop.permute.xlu0 %3322
        %3324 = vrot.lane.b32.xlu0 %v2559, 96
        %v3325 = vpop.permute.xlu0 %3324
        %3326 = vrot.lane.b32.xlu0 %v2560, 96
        %v3327 = vpop.permute.xlu0 %3326
        %3328 = vrot.lane.b32.xlu0 %v2561, 96
        %v3329 = vpop.permute.xlu0 %3328
        %v3362 = vsel %vm1682, %v2305, %v2627
        %v3363 = vsel %vm1682, %v2306, %v2629
        %v3364 = vsel %vm1682, %v2307, %v2631
        %v3365 = vsel %vm1682, %v2308, %v2633
        %v3366 = vsel %vm1682, %v2309, %v2635
        %v3367 = vsel %vm1682, %v2310, %v2637
        %v3368 = vsel %vm1682, %v2311, %v2639
        %v3369 = vsel %vm1682, %v2312, %v2641
        %v3370 = vsel %vm1682, %v2313, %v2643
        %v3371 = vsel %vm1682, %v2314, %v2645
        %v3372 = vsel %vm1682, %v2315, %v2647
        %v3373 = vsel %vm1682, %v2316, %v2649
        %v3374 = vsel %vm1682, %v2317, %v2651
        %v3375 = vsel %vm1682, %v2318, %v2653
        %v3376 = vsel %vm1682, %v2319, %v2655
        %v3377 = vsel %vm1682, %v2320, %v2657
        %v3378 = vsel %vm1682, %v2321, %v2659
        %v3379 = vsel %vm1682, %v2322, %v2661
        %v3380 = vsel %vm1682, %v2323, %v2663
        %v3381 = vsel %vm1682, %v2324, %v2665
        %v3382 = vsel %vm1682, %v2325, %v2667
        %v3383 = vsel %vm1682, %v2326, %v2669
        %v3384 = vsel %vm1682, %v2327, %v2671
        %v3385 = vsel %vm1682, %v2328, %v2673
        %v3386 = vsel %vm1682, %v2329, %v2675
        %v3387 = vsel %vm1682, %v2330, %v2677
        %v3388 = vsel %vm1682, %v2331, %v2679
        %v3389 = vsel %vm1682, %v2332, %v2681
        %v3390 = vsel %vm1682, %v2333, %v2683
        %v3391 = vsel %vm1682, %v2334, %v2685
        %v3392 = vsel %vm1682, %v2335, %v2687
        %v3393 = vsel %vm1682, %v2336, %v2689
        %vm3394 = vcmask 523264
        %v3395 = vsel %vm3394, %v3362, %v2755
        %v3396 = vsel %vm3394, %v3363, %v2757
        %v3397 = vsel %vm3394, %v3364, %v2759
        %v3398 = vsel %vm3394, %v3365, %v2761
        %v3399 = vsel %vm3394, %v3366, %v2763
        %v3400 = vsel %vm3394, %v3367, %v2765
        %v3401 = vsel %vm3394, %v3368, %v2767
        %v3402 = vsel %vm3394, %v3369, %v2769
        %v3403 = vsel %vm3394, %v3370, %v2771
        %v3404 = vsel %vm3394, %v3371, %v2773
        %v3405 = vsel %vm3394, %v3372, %v2775
        %v3406 = vsel %vm3394, %v3373, %v2777
        %v3407 = vsel %vm3394, %v3374, %v2779
        %v3408 = vsel %vm3394, %v3375, %v2781
        %v3409 = vsel %vm3394, %v3376, %v2783
        %v3410 = vsel %vm3394, %v3377, %v2785
        %v3411 = vsel %vm3394, %v3378, %v2787
        %v3412 = vsel %vm3394, %v3379, %v2789
        %v3413 = vsel %vm3394, %v3380, %v2791
        %v3414 = vsel %vm3394, %v3381, %v2793
        %v3415 = vsel %vm3394, %v3382, %v2795
        %v3416 = vsel %vm3394, %v3383, %v2797
        %v3417 = vsel %vm3394, %v3384, %v2799
        %v3418 = vsel %vm3394, %v3385, %v2801
        %v3419 = vsel %vm3394, %v3386, %v2803
        %v3420 = vsel %vm3394, %v3387, %v2805
        %v3421 = vsel %vm3394, %v3388, %v2807
        %v3422 = vsel %vm3394, %v3389, %v2809
        %v3423 = vsel %vm3394, %v3390, %v2811
        %v3424 = vsel %vm3394, %v3391, %v2813
        %v3425 = vsel %vm3394, %v3392, %v2815
        %v3426 = vsel %vm3394, %v3393, %v2817
        %vm3427 = vcmask 785408
        %v3428 = vsel %vm3427, %v3395, %v2883
        %v3429 = vsel %vm3427, %v3396, %v2885
        %v3430 = vsel %vm3427, %v3397, %v2887
        %v3431 = vsel %vm3427, %v3398, %v2889
        %v3432 = vsel %vm3427, %v3399, %v2891
        %v3433 = vsel %vm3427, %v3400, %v2893
        %v3434 = vsel %vm3427, %v3401, %v2895
        %v3435 = vsel %vm3427, %v3402, %v2897
        %v3436 = vsel %vm3427, %v3403, %v2899
        %v3437 = vsel %vm3427, %v3404, %v2901
        %v3438 = vsel %vm3427, %v3405, %v2903
        %v3439 = vsel %vm3427, %v3406, %v2905
        %v3440 = vsel %vm3427, %v3407, %v2907
        %v3441 = vsel %vm3427, %v3408, %v2909
        %v3442 = vsel %vm3427, %v3409, %v2911
        %v3443 = vsel %vm3427, %v3410, %v2913
        %v3444 = vsel %vm3427, %v3411, %v2915
        %v3445 = vsel %vm3427, %v3412, %v2917
        %v3446 = vsel %vm3427, %v3413, %v2919
        %v3447 = vsel %vm3427, %v3414, %v2921
        %v3448 = vsel %vm3427, %v3415, %v2923
        %v3449 = vsel %vm3427, %v3416, %v2925
        %v3450 = vsel %vm3427, %v3417, %v2927
        %v3451 = vsel %vm3427, %v3418, %v2929
        %v3452 = vsel %vm3427, %v3419, %v2931
        %v3453 = vsel %vm3427, %v3420, %v2933
        %v3454 = vsel %vm3427, %v3421, %v2935
        %v3455 = vsel %vm3427, %v3422, %v2937
        %v3456 = vsel %vm3427, %v3423, %v2939
        %v3457 = vsel %vm3427, %v3424, %v2941
        %v3458 = vsel %vm3427, %v3425, %v2943
        %v3459 = vsel %vm3427, %v3426, %v2945
        %v3460 = vsel %vm1682, %v2433, %v3011
        %v3461 = vsel %vm1682, %v2434, %v3013
        %v3462 = vsel %vm1682, %v2435, %v3015
        %v3463 = vsel %vm1682, %v2436, %v3017
        %v3464 = vsel %vm1682, %v2437, %v3019
        %v3465 = vsel %vm1682, %v2438, %v3021
        %v3466 = vsel %vm1682, %v2439, %v3023
        %v3467 = vsel %vm1682, %v2440, %v3025
        %v3468 = vsel %vm1682, %v2441, %v3027
        %v3469 = vsel %vm1682, %v2442, %v3029
        %v3470 = vsel %vm1682, %v2443, %v3031
        %v3471 = vsel %vm1682, %v2444, %v3033
        %v3472 = vsel %vm1682, %v2445, %v3035
        %v3473 = vsel %vm1682, %v2446, %v3037
        %v3474 = vsel %vm1682, %v2447, %v3039
        %v3475 = vsel %vm1682, %v2448, %v3041
        %v3476 = vsel %vm1682, %v2449, %v3043
        %v3477 = vsel %vm1682, %v2450, %v3045
        %v3478 = vsel %vm1682, %v2451, %v3047
        %v3479 = vsel %vm1682, %v2452, %v3049
        %v3480 = vsel %vm1682, %v2453, %v3051
        %v3481 = vsel %vm1682, %v2454, %v3053
        %v3482 = vsel %vm1682, %v2455, %v3055
        %v3483 = vsel %vm1682, %v2456, %v3057
        %v3484 = vsel %vm1682, %v2457, %v3059
        %v3485 = vsel %vm1682, %v2458, %v3061
        %v3486 = vsel %vm1682, %v2459, %v3063
        %v3487 = vsel %vm1682, %v2460, %v3065
        %v3488 = vsel %vm1682, %v2461, %v3067
        %v3489 = vsel %vm1682, %v2462, %v3069
        %v3490 = vsel %vm1682, %v2463, %v3071
        %v3491 = vsel %vm1682, %v2464, %v3073
        %v3492 = vsel %vm3394, %v3460, %v3139
        %v3493 = vsel %vm3394, %v3461, %v3141
        %v3494 = vsel %vm3394, %v3462, %v3143
        %v3495 = vsel %vm3394, %v3463, %v3145
        %v3496 = vsel %vm3394, %v3464, %v3147
        %v3497 = vsel %vm3394, %v3465, %v3149
        %v3498 = vsel %vm3394, %v3466, %v3151
        %v3499 = vsel %vm3394, %v3467, %v3153
        %v3500 = vsel %vm3394, %v3468, %v3155
        %v3501 = vsel %vm3394, %v3469, %v3157
        %v3502 = vsel %vm3394, %v3470, %v3159
        %v3503 = vsel %vm3394, %v3471, %v3161
        %v3504 = vsel %vm3394, %v3472, %v3163
        %v3505 = vsel %vm3394, %v3473, %v3165
        %v3506 = vsel %vm3394, %v3474, %v3167
        %v3507 = vsel %vm3394, %v3475, %v3169
        %v3508 = vsel %vm3394, %v3476, %v3171
        %v3509 = vsel %vm3394, %v3477, %v3173
        %v3510 = vsel %vm3394, %v3478, %v3175
        %v3511 = vsel %vm3394, %v3479, %v3177
        %v3512 = vsel %vm3394, %v3480, %v3179
        %v3513 = vsel %vm3394, %v3481, %v3181
        %v3514 = vsel %vm3394, %v3482, %v3183
        %v3515 = vsel %vm3394, %v3483, %v3185
        %v3516 = vsel %vm3394, %v3484, %v3187
        %v3517 = vsel %vm3394, %v3485, %v3189
        %v3518 = vsel %vm3394, %v3486, %v3191
        %v3519 = vsel %vm3394, %v3487, %v3193
        %v3520 = vsel %vm3394, %v3488, %v3195
        %v3521 = vsel %vm3394, %v3489, %v3197
        %v3522 = vsel %vm3394, %v3490, %v3199
        %v3523 = vsel %vm3394, %v3491, %v3201
        %v3524 = vsel %vm3427, %v3492, %v3267
        %v3525 = vsel %vm3427, %v3493, %v3269
        %v3526 = vsel %vm3427, %v3494, %v3271
        %v3527 = vsel %vm3427, %v3495, %v3273
        %v3528 = vsel %vm3427, %v3496, %v3275
        %v3529 = vsel %vm3427, %v3497, %v3277
        %v3530 = vsel %vm3427, %v3498, %v3279
        %v3531 = vsel %vm3427, %v3499, %v3281
        %v3532 = vsel %vm3427, %v3500, %v3283
        %v3533 = vsel %vm3427, %v3501, %v3285
        %v3534 = vsel %vm3427, %v3502, %v3287
        %v3535 = vsel %vm3427, %v3503, %v3289
        %v3536 = vsel %vm3427, %v3504, %v3291
        %v3537 = vsel %vm3427, %v3505, %v3293
        %v3538 = vsel %vm3427, %v3506, %v3295
        %v3539 = vsel %vm3427, %v3507, %v3297
        %v3540 = vsel %vm3427, %v3508, %v3299
        %v3541 = vsel %vm3427, %v3509, %v3301
        %v3542 = vsel %vm3427, %v3510, %v3303
        %v3543 = vsel %vm3427, %v3511, %v3305
        %v3544 = vsel %vm3427, %v3512, %v3307
        %v3545 = vsel %vm3427, %v3513, %v3309
        %v3546 = vsel %vm3427, %v3514, %v3311
        %v3547 = vsel %vm3427, %v3515, %v3313
        %v3548 = vsel %vm3427, %v3516, %v3315
        %v3549 = vsel %vm3427, %v3517, %v3317
        %v3550 = vsel %vm3427, %v3518, %v3319
        %v3551 = vsel %vm3427, %v3519, %v3321
        %v3552 = vsel %vm3427, %v3520, %v3323
        %v3553 = vsel %vm3427, %v3521, %v3325
        %v3554 = vsel %vm3427, %v3522, %v3327
        %v3555 = vsel %vm3427, %v3523, %v3329
        %v3556 = vld [vmem:[#allocation8] sm:$0xff]
        %v3557 = vld [vmem:[#allocation8 + $0x8] sm:$0xff]
        %v3558 = vld [vmem:[#allocation8 + $0x10] sm:$0xff]
        %v3559 = vld [vmem:[#allocation8 + $0x18] sm:$0xff]
        %v3560 = vld [vmem:[#allocation8 + $0x20] sm:$0xff]
        %v3561 = vld [vmem:[#allocation8 + $0x28] sm:$0xff]
        %v3562 = vld [vmem:[#allocation8 + $0x30] sm:$0xff]
        %v3563 = vld [vmem:[#allocation8 + $0x38] sm:$0xff]
        %v3564 = vld [vmem:[#allocation8 + $0x40] sm:$0xff]
        %v3565 = vld [vmem:[#allocation8 + $0x48] sm:$0xff]
        %v3566 = vld [vmem:[#allocation8 + $0x50] sm:$0xff]
        %v3567 = vld [vmem:[#allocation8 + $0x58] sm:$0xff]
        %v3568 = vld [vmem:[#allocation8 + $0x60] sm:$0xff]
        %v3569 = vld [vmem:[#allocation8 + $0x68] sm:$0xff]
        %v3570 = vld [vmem:[#allocation8 + $0x70] sm:$0xff]
        %v3571 = vld [vmem:[#allocation8 + $0x78] sm:$0xff]
        %v3572 = vld [vmem:[#allocation8 + $0x80] sm:$0xff]
        %v3573 = vld [vmem:[#allocation8 + $0x88] sm:$0xff]
        %v3574 = vld [vmem:[#allocation8 + $0x90] sm:$0xff]
        %v3575 = vld [vmem:[#allocation8 + $0x98] sm:$0xff]
        %v3576 = vld [vmem:[#allocation8 + $0xa0] sm:$0xff]
        %v3577 = vld [vmem:[#allocation8 + $0xa8] sm:$0xff]
        %v3578 = vld [vmem:[#allocation8 + $0xb0] sm:$0xff]
        %v3579 = vld [vmem:[#allocation8 + $0xb8] sm:$0xff]
        %v3580 = vld [vmem:[#allocation8 + $0xc0] sm:$0xff]
        %v3581 = vld [vmem:[#allocation8 + $0xc8] sm:$0xff]
        %v3582 = vld [vmem:[#allocation8 + $0xd0] sm:$0xff]
        %v3583 = vld [vmem:[#allocation8 + $0xd8] sm:$0xff]
        %v3584 = vld [vmem:[#allocation8 + $0xe0] sm:$0xff]
        %v3585 = vld [vmem:[#allocation8 + $0xe8] sm:$0xff]
        %v3586 = vld [vmem:[#allocation8 + $0xf0] sm:$0xff]
        %v3587 = vld [vmem:[#allocation8 + $0xf8] sm:$0xff]
        %v3588 = vld [vmem:[#allocation8 + $0x100] sm:$0xff]
        %v3589 = vld [vmem:[#allocation8 + $0x108] sm:$0xff]
        %v3590 = vld [vmem:[#allocation8 + $0x110] sm:$0xff]
        %v3591 = vld [vmem:[#allocation8 + $0x118] sm:$0xff]
        %v3592 = vld [vmem:[#allocation10] sm:$0x1]
        %v3594 = vlaneseq
        %v3595 = vshrl.u32 %v3594, 7
        %v3596 = vsub.s32 0, %v3595
        %v3597 = vrot.slane %v3592, %v3596
        %v3600 = vsel %vm1682, %v2562, 0
        %v3603 = vsel %vm1682, %v2563, 0
        %v3606 = vsel %vm1682, %v2564, 0
        %v3609 = vsel %vm1682, %v2565, 0
        %v3612 = vsel %vm1682, %v2566, 0
        %v3615 = vsel %vm1682, %v2567, 0
        %v3618 = vsel %vm1682, %v2568, 0
        %v3621 = vsel %vm1682, %v2569, 0
        %v3624 = vsel %vm1682, %v2570, 0
        %v3627 = vsel %vm1682, %v2571, 0
        %v3630 = vsel %vm1682, %v2572, 0
        %v3633 = vsel %vm1682, %v2573, 0
        %v3636 = vsel %vm1682, %v2574, 0
        %v3639 = vsel %vm1682, %v2575, 0
        %v3642 = vsel %vm1682, %v2576, 0
        %v3645 = vsel %vm1682, %v2577, 0
        %v3648 = vsel %vm1682, %v2578, 0
        %v3651 = vsel %vm1682, %v2579, 0
        %v3654 = vsel %vm1682, %v2580, 0
        %v3657 = vsel %vm1682, %v2581, 0
        %v3660 = vsel %vm1682, %v2582, 0
        %v3663 = vsel %vm1682, %v2583, 0
        %v3666 = vsel %vm1682, %v2584, 0
        %v3669 = vsel %vm1682, %v2585, 0
        %v3672 = vsel %vm1682, %v2586, 0
        %v3675 = vsel %vm1682, %v2587, 0
        %v3678 = vsel %vm1682, %v2588, 0
        %v3681 = vsel %vm1682, %v2589, 0
        %v3684 = vsel %vm1682, %v2590, 0
        %v3687 = vsel %vm1682, %v2591, 0
        %v3690 = vsel %vm1682, %v2592, 0
        %v3693 = vsel %vm1682, %v2593, 0
        %3695 = vmatprep.subr.mxu0 0.0
        %3696 = vmatpush1.msra.mxu0 %v3556
        %3697 = vmatprep.subr.mxu0 0.0
        %3698 = vmatpush1.msra.mxu0 %v3557
        %3699 = vmatprep.subr.mxu0 0.0
        %3700 = vmatpush1.msra.mxu0 %v3558
        %3701 = vmatprep.subr.mxu0 0.0
        %3702 = vmatpush1.msra.mxu0 %v3559
        %3703 = vmatprep.subr.mxu0 0.0
        %3704 = vmatpush1.msra.mxu0 %v3560
        %3705 = vmatprep.subr.mxu0 0.0
        %3706 = vmatpush1.msra.mxu0 %v3561
        %3707 = vmatprep.subr.mxu0 0.0
        %3708 = vmatpush1.msra.mxu0 %v3562
        %3709 = vmatprep.subr.mxu0 0.0
        %3710 = vmatpush1.msra.mxu0 %v3563
        %3711 = vmatprep.subr.mxu0 0.0
        %3712 = vmatpush1.msra.mxu0 %v3564
        %3713 = vmatprep.subr.mxu0 0.0
        %3714 = vmatpush1.msra.mxu0 %v3565
        %3715 = vmatprep.subr.mxu0 0.0
        %3716 = vmatpush1.msra.mxu0 %v3566
        %3717 = vmatprep.subr.mxu0 0.0
        %3718 = vmatpush1.msra.mxu0 %v3567
        %3719 = vmatprep.subr.mxu0 0.0
        %3720 = vmatpush1.msra.mxu0 %v3568
        %3721 = vmatprep.subr.mxu0 0.0
        %3722 = vmatpush1.msra.mxu0 %v3569
        %3723 = vmatprep.subr.mxu0 0.0
        %3724 = vmatpush1.msra.mxu0 %v3570
        %3725 = vmatprep.subr.mxu0 0.0
        %3726 = vmatpush1.msra.mxu0 %v3571
        %3727 = vmatprep.subr.mxu0 0.0
        %3728 = vmatpush1.msra.mxu0 %v3572
        %3729 = vmatprep.subr.mxu0 0.0
        %3730 = vmatpush1.msra.mxu0 %v3573
        %3731 = vmatprep.subr.mxu0 0.0
        %3732 = vmatpush1.msra.mxu0 %v3574
        %3733 = vmatprep.subr.mxu0 0.0
        %3734 = vmatpush1.msra.mxu0 %v3575
        %3735 = vmatprep.subr.mxu0 0.0
        %3736 = vmatpush1.msra.mxu0 %v3576
        %3737 = vmatprep.subr.mxu0 0.0
        %3738 = vmatpush1.msra.mxu0 %v3577
        %3739 = vmatprep.subr.mxu0 0.0
        %3740 = vmatpush1.msra.mxu0 %v3578
        %3741 = vmatprep.subr.mxu0 0.0
        %3742 = vmatpush1.msra.mxu0 %v3579
        %3743 = vmatprep.subr.mxu0 0.0
        %3744 = vmatpush1.msra.mxu0 %v3580
        %3745 = vmatprep.subr.mxu0 0.0
        %3746 = vmatpush1.msra.mxu0 %v3581
        %3747 = vmatprep.subr.mxu0 0.0
        %3748 = vmatpush1.msra.mxu0 %v3582
        %3749 = vmatprep.subr.mxu0 0.0
        %3750 = vmatpush1.msra.mxu0 %v3583
        %3751 = vmatprep.subr.mxu0 0.0
        %3752 = vmatpush1.msra.mxu0 %v3584
        %3753 = vmatprep.subr.mxu0 0.0
        %3754 = vmatpush1.msra.mxu0 %v3585
        %3755 = vmatprep.subr.mxu0 0.0
        %3756 = vmatpush1.msra.mxu0 %v3586
        %3757 = vmatprep.subr.mxu0 0.0
        %3758 = vmatpush1.msra.mxu0 %v3587
        %3759 = vmatprep.mubr.f32.mxu0 %v3524
        %3760 = vmatmul.mubr.f32.gmra.mrb[0].mxu0 %v3428
        %v3761 = vpop.f32.mrb[0].mxu0
        %v3762 = vadd.f32 %v3597, %v3761
        %v3763 = vpop.f32.mrb[0].mxu0
        %3764 = vmatprep.mubr.f32.mxu0 %v3525
        %3765 = vmatmul.mubr.f32.gmra.mrb[0].mxu0 %v3429
        %v3766 = vpop.f32.mrb[0].mxu0
        %v3767 = vadd.f32 %v3597, %v3766
        %v3768 = vpop.f32.mrb[0].mxu0
        %3769 = vmatprep.mubr.f32.mxu0 %v3526
        %3770 = vmatmul.mubr.f32.gmra.mrb[0].mxu0 %v3430
        %v3771 = vpop.f32.mrb[0].mxu0
        %v3772 = vadd.f32 %v3597, %v3771
        %v3773 = vpop.f32.mrb[0].mxu0
        %3774 = vmatprep.mubr.f32.mxu0 %v3527
        %3775 = vmatmul.mubr.f32.gmra.mrb[0].mxu0 %v3431
        %v3776 = vpop.f32.mrb[0].mxu0
        %v3777 = vadd.f32 %v3597, %v3776
        %v3778 = vpop.f32.mrb[0].mxu0
        %3779 = vmatprep.mubr.f32.mxu0 %v3528
        %3780 = vmatmul.mubr.f32.gmra.mrb[0].mxu0 %v3432
        %v3781 = vpop.f32.mrb[0].mxu0
        %v3782 = vadd.f32 %v3597, %v3781
        %v3783 = vpop.f32.mrb[0].mxu0
        %3784 = vmatprep.mubr.f32.mxu0 %v3529
        %3785 = vmatmul.mubr.f32.gmra.mrb[0].mxu0 %v3433
        %v3786 = vpop.f32.mrb[0].mxu0
        %v3787 = vadd.f32 %v3597, %v3786
        %v3788 = vpop.f32.mrb[0].mxu0
        %3789 = vmatprep.mubr.f32.mxu0 %v3530
        %3790 = vmatmul.mubr.f32.gmra.mrb[0].mxu0 %v3434
        %v3791 = vpop.f32.mrb[0].mxu0
        %v3792 = vadd.f32 %v3597, %v3791
        %v3793 = vpop.f32.mrb[0].mxu0
        %3794 = vmatprep.mubr.f32.mxu0 %v3531
        %3795 = vmatmul.mubr.f32.gmra.mrb[0].mxu0 %v3435
        %v3796 = vpop.f32.mrb[0].mxu0
        %v3797 = vadd.f32 %v3597, %v3796
        %v3798 = vpop.f32.mrb[0].mxu0
        %3799 = vmatprep.mubr.f32.mxu0 %v3532
        %3800 = vmatmul.mubr.f32.gmra.mrb[0].mxu0 %v3436
        %v3801 = vpop.f32.mrb[0].mxu0
        %v3802 = vadd.f32 %v3597, %v3801
        %v3803 = vpop.f32.mrb[0].mxu0
        %3804 = vmatprep.mubr.f32.mxu0 %v3533
        %3805 = vmatmul.mubr.f32.gmra.mrb[0].mxu0 %v3437
        %v3806 = vpop.f32.mrb[0].mxu0
        %v3807 = vadd.f32 %v3597, %v3806
        %v3808 = vpop.f32.mrb[0].mxu0
        %3809 = vmatprep.mubr.f32.mxu0 %v3534
        %3810 = vmatmul.mubr.f32.gmra.mrb[0].mxu0 %v3438
        %v3811 = vpop.f32.mrb[0].mxu0
        %v3812 = vadd.f32 %v3597, %v3811
        %v3813 = vpop.f32.mrb[0].mxu0
        %3814 = vmatprep.mubr.f32.mxu0 %v3535
        %3815 = vmatmul.mubr.f32.gmra.mrb[0].mxu0 %v3439
        %v3816 = vpop.f32.mrb[0].mxu0
        %v3817 = vadd.f32 %v3597, %v3816
        %v3818 = vpop.f32.mrb[0].mxu0
        %3819 = vmatprep.mubr.f32.mxu0 %v3536
        %3820 = vmatmul.mubr.f32.gmra.mrb[0].mxu0 %v3440
        %v3821 = vpop.f32.mrb[0].mxu0
        %v3822 = vadd.f32 %v3597, %v3821
        %v3823 = vpop.f32.mrb[0].mxu0
        %3824 = vmatprep.mubr.f32.mxu0 %v3537
        %3825 = vmatmul.mubr.f32.gmra.mrb[0].mxu0 %v3441
        %v3826 = vpop.f32.mrb[0].mxu0
        %v3827 = vadd.f32 %v3597, %v3826
        %v3828 = vpop.f32.mrb[0].mxu0
        %3829 = vmatprep.mubr.f32.mxu0 %v3538
        %3830 = vmatmul.mubr.f32.gmra.mrb[0].mxu0 %v3442
        %v3831 = vpop.f32.mrb[0].mxu0
        %v3832 = vadd.f32 %v3597, %v3831
        %v3833 = vpop.f32.mrb[0].mxu0
        %3834 = vmatprep.mubr.f32.mxu0 %v3539
        %3835 = vmatmul.mubr.f32.gmra.mrb[0].mxu0 %v3443
        %v3836 = vpop.f32.mrb[0].mxu0
        %v3837 = vadd.f32 %v3597, %v3836
        %v3838 = vpop.f32.mrb[0].mxu0
        %3839 = vmatprep.mubr.f32.mxu0 %v3540
        %3840 = vmatmul.mubr.f32.gmra.mrb[0].mxu0 %v3444
        %v3841 = vpop.f32.mrb[0].mxu0
        %v3842 = vadd.f32 %v3597, %v3841
        %v3843 = vpop.f32.mrb[0].mxu0
        %3844 = vmatprep.mubr.f32.mxu0 %v3541
        %3845 = vmatmul.mubr.f32.gmra.mrb[0].mxu0 %v3445
        %v3846 = vpop.f32.mrb[0].mxu0
        %v3847 = vadd.f32 %v3597, %v3846
        %v3848 = vpop.f32.mrb[0].mxu0
        %3849 = vmatprep.mubr.f32.mxu0 %v3542
        %3850 = vmatmul.mubr.f32.gmra.mrb[0].mxu0 %v3446
        %v3851 = vpop.f32.mrb[0].mxu0
        %v3852 = vadd.f32 %v3597, %v3851
        %v3853 = vpop.f32.mrb[0].mxu0
        %3854 = vmatprep.mubr.f32.mxu0 %v3543
        %3855 = vmatmul.mubr.f32.gmra.mrb[0].mxu0 %v3447
        %v3856 = vpop.f32.mrb[0].mxu0
        %v3857 = vadd.f32 %v3597, %v3856
        %v3858 = vpop.f32.mrb[0].mxu0
        %3859 = vmatprep.mubr.f32.mxu0 %v3544
        %3860 = vmatmul.mubr.f32.gmra.mrb[0].mxu0 %v3448
        %v3861 = vpop.f32.mrb[0].mxu0
        %v3862 = vadd.f32 %v3597, %v3861
        %v3863 = vpop.f32.mrb[0].mxu0
        %3864 = vmatprep.mubr.f32.mxu0 %v3545
        %3865 = vmatmul.mubr.f32.gmra.mrb[0].mxu0 %v3449
        %v3866 = vpop.f32.mrb[0].mxu0
        %v3867 = vadd.f32 %v3597, %v3866
        %v3868 = vpop.f32.mrb[0].mxu0
        %3869 = vmatprep.mubr.f32.mxu0 %v3546
        %3870 = vmatmul.mubr.f32.gmra.mrb[0].mxu0 %v3450
        %v3871 = vpop.f32.mrb[0].mxu0
        %v3872 = vadd.f32 %v3597, %v3871
        %v3873 = vpop.f32.mrb[0].mxu0
        %3874 = vmatprep.mubr.f32.mxu0 %v3547
        %3875 = vmatmul.mubr.f32.gmra.mrb[0].mxu0 %v3451
        %v3876 = vpop.f32.mrb[0].mxu0
        %v3877 = vadd.f32 %v3597, %v3876
        %v3878 = vpop.f32.mrb[0].mxu0
        %3879 = vmatprep.mubr.f32.mxu0 %v3548
        %3880 = vmatmul.mubr.f32.gmra.mrb[0].mxu0 %v3452
        %v3881 = vpop.f32.mrb[0].mxu0
        %v3882 = vadd.f32 %v3597, %v3881
        %v3883 = vpop.f32.mrb[0].mxu0
        %3884 = vmatprep.mubr.f32.mxu0 %v3549
        %3885 = vmatmul.mubr.f32.gmra.mrb[0].mxu0 %v3453
        %v3886 = vpop.f32.mrb[0].mxu0
        %v3887 = vadd.f32 %v3597, %v3886
        %v3888 = vpop.f32.mrb[0].mxu0
        %3889 = vmatprep.mubr.f32.mxu0 %v3550
        %3890 = vmatmul.mubr.f32.gmra.mrb[0].mxu0 %v3454
        %v3891 = vpop.f32.mrb[0].mxu0
        %v3892 = vadd.f32 %v3597, %v3891
        %v3893 = vpop.f32.mrb[0].mxu0
        %3894 = vmatprep.mubr.f32.mxu0 %v3551
        %3895 = vmatmul.mubr.f32.gmra.mrb[0].mxu0 %v3455
        %v3896 = vpop.f32.mrb[0].mxu0
        %v3897 = vadd.f32 %v3597, %v3896
        %v3898 = vpop.f32.mrb[0].mxu0
        %3899 = vmatprep.mubr.f32.mxu0 %v3552
        %3900 = vmatmul.mubr.f32.gmra.mrb[0].mxu0 %v3456
        %v3901 = vpop.f32.mrb[0].mxu0
        %v3902 = vadd.f32 %v3597, %v3901
        %v3903 = vpop.f32.mrb[0].mxu0
        %3904 = vmatprep.mubr.f32.mxu0 %v3553
        %3905 = vmatmul.mubr.f32.gmra.mrb[0].mxu0 %v3457
        %v3906 = vpop.f32.mrb[0].mxu0
        %v3907 = vadd.f32 %v3597, %v3906
        %v3908 = vpop.f32.mrb[0].mxu0
        %3909 = vmatprep.mubr.f32.mxu0 %v3554
        %3910 = vmatmul.mubr.f32.gmra.mrb[0].mxu0 %v3458
        %v3911 = vpop.f32.mrb[0].mxu0
        %v3912 = vadd.f32 %v3597, %v3911
        %v3913 = vpop.f32.mrb[0].mxu0
        %3914 = vmatprep.mubr.f32.mxu0 %v3555
        %3915 = vmatmul.mubr.f32.gmra.mrb[0].mxu0 %v3459
        %v3916 = vpop.f32.mrb[0].mxu0
        %v3917 = vadd.f32 %v3597, %v3916
        %v3918 = vpop.f32.mrb[0].mxu0
        %3919 = vdwg.mxu0
        %3920 = vmatprep.subr.mxu0 0.0
        %3921 = vmatpush1.msra.mxu0 %v3588
        %3922 = vmatprep.subr.mxu0 0.0
        %3923 = vmatpush1.msra.mxu0 %v3589
        %3924 = vmatprep.subr.mxu0 0.0
        %3925 = vmatpush1.msra.mxu0 %v3590
        %3926 = vmatprep.subr.mxu0 0.0
        %3927 = vmatpush1.msra.mxu0 %v3591
        %3928 = vmatprep.subr.mxu0 0.0
        %3929 = vmatpush1.msra.mxu0 0.0
        %3930 = vmatprep.subr.mxu0 0.0
        %3931 = vmatpush1.msra.mxu0 0.0
        %3932 = vmatprep.subr.mxu0 0.0
        %3933 = vmatpush1.msra.mxu0 0.0
        %3934 = vmatprep.subr.mxu0 0.0
        %3935 = vmatpush1.msra.mxu0 0.0
        %3936 = vmatprep.subr.mxu0 0.0
        %3937 = vmatpush1.msra.mxu0 0.0
        %3938 = vmatprep.subr.mxu0 0.0
        %3939 = vmatpush1.msra.mxu0 0.0
        %3940 = vmatprep.subr.mxu0 0.0
        %3941 = vmatpush1.msra.mxu0 0.0
        %3942 = vmatprep.subr.mxu0 0.0
        %3943 = vmatpush1.msra.mxu0 0.0
        %3944 = vmatprep.subr.mxu0 0.0
        %3945 = vmatpush1.msra.mxu0 0.0
        %3946 = vmatprep.subr.mxu0 0.0
        %3947 = vmatpush1.msra.mxu0 0.0
        %3948 = vmatprep.subr.mxu0 0.0
        %3949 = vmatpush1.msra.mxu0 0.0
        %3950 = vmatprep.subr.mxu0 0.0
        %3951 = vmatpush1.msra.mxu0 0.0
        %3952 = vmatprep.subr.mxu0 0.0
        %3953 = vmatpush1.msra.mxu0 0.0
        %3954 = vmatprep.subr.mxu0 0.0
        %3955 = vmatpush1.msra.mxu0 0.0
        %3956 = vmatprep.subr.mxu0 0.0
        %3957 = vmatpush1.msra.mxu0 0.0
        %3958 = vmatprep.subr.mxu0 0.0
        %3959 = vmatpush1.msra.mxu0 0.0
        %3960 = vmatprep.subr.mxu0 0.0
        %3961 = vmatpush1.msra.mxu0 0.0
        %3962 = vmatprep.subr.mxu0 0.0
        %3963 = vmatpush1.msra.mxu0 0.0
        %3964 = vmatprep.subr.mxu0 0.0
        %3965 = vmatpush1.msra.mxu0 0.0
        %3966 = vmatprep.subr.mxu0 0.0
        %3967 = vmatpush1.msra.mxu0 0.0
        %3968 = vmatprep.subr.mxu0 0.0
        %3969 = vmatpush1.msra.mxu0 0.0
        %3970 = vmatprep.subr.mxu0 0.0
        %3971 = vmatpush1.msra.mxu0 0.0
        %3972 = vmatprep.subr.mxu0 0.0
        %3973 = vmatpush1.msra.mxu0 0.0
        %3974 = vmatprep.subr.mxu0 0.0
        %3975 = vmatpush1.msra.mxu0 0.0
        %3976 = vmatprep.subr.mxu0 0.0
        %3977 = vmatpush1.msra.mxu0 0.0
        %3978 = vmatprep.subr.mxu0 0.0
        %3979 = vmatpush1.msra.mxu0 0.0
        %3980 = vmatprep.subr.mxu0 0.0
        %3981 = vmatpush1.msra.mxu0 0.0
        %3982 = vmatprep.subr.mxu0 0.0
        %3983 = vmatpush1.msra.mxu0 0.0
        %3984 = vmatprep.mubr.f32.mxu0 0.0
        %3985 = vmatmul.mubr.f32.gmra.mrb[0].mxu0 %v3600
        %v3986 = vpop.f32.mrb[0].mxu0
        %v3987 = vadd.f32 %v3762, %v3986
        %v3988 = vpop.f32.mrb[0].mxu0
        %3989 = vmatprep.mubr.f32.mxu0 0.0
        %3990 = vmatmul.mubr.f32.gmra.mrb[0].mxu0 %v3603
        %v3991 = vpop.f32.mrb[0].mxu0
        %v3992 = vadd.f32 %v3767, %v3991
        %v3993 = vpop.f32.mrb[0].mxu0
        %3994 = vmatprep.mubr.f32.mxu0 0.0
        %3995 = vmatmul.mubr.f32.gmra.mrb[0].mxu0 %v3606
        %v3996 = vpop.f32.mrb[0].mxu0
        %v3997 = vadd.f32 %v3772, %v3996
        %v3998 = vpop.f32.mrb[0].mxu0
        %3999 = vmatprep.mubr.f32.mxu0 0.0
        %4000 = vmatmul.mubr.f32.gmra.mrb[0].mxu0 %v3609
        %v4001 = vpop.f32.mrb[0].mxu0
        %v4002 = vadd.f32 %v3777, %v4001
        %v4003 = vpop.f32.mrb[0].mxu0
        %4004 = vmatprep.mubr.f32.mxu0 0.0
        %4005 = vmatmul.mubr.f32.gmra.mrb[0].mxu0 %v3612
        %v4006 = vpop.f32.mrb[0].mxu0
        %v4007 = vadd.f32 %v3782, %v4006
        %v4008 = vpop.f32.mrb[0].mxu0
        %4009 = vmatprep.mubr.f32.mxu0 0.0
        %4010 = vmatmul.mubr.f32.gmra.mrb[0].mxu0 %v3615
        %v4011 = vpop.f32.mrb[0].mxu0
        %v4012 = vadd.f32 %v3787, %v4011
        %v4013 = vpop.f32.mrb[0].mxu0
        %4014 = vmatprep.mubr.f32.mxu0 0.0
        %4015 = vmatmul.mubr.f32.gmra.mrb[0].mxu0 %v3618
        %v4016 = vpop.f32.mrb[0].mxu0
        %v4017 = vadd.f32 %v3792, %v4016
        %v4018 = vpop.f32.mrb[0].mxu0
        %4019 = vmatprep.mubr.f32.mxu0 0.0
        %4020 = vmatmul.mubr.f32.gmra.mrb[0].mxu0 %v3621
        %v4021 = vpop.f32.mrb[0].mxu0
        %v4022 = vadd.f32 %v3797, %v4021
        %v4023 = vpop.f32.mrb[0].mxu0
        %4024 = vmatprep.mubr.f32.mxu0 0.0
        %4025 = vmatmul.mubr.f32.gmra.mrb[0].mxu0 %v3624
        %v4026 = vpop.f32.mrb[0].mxu0
        %v4027 = vadd.f32 %v3802, %v4026
        %v4028 = vpop.f32.mrb[0].mxu0
        %4029 = vmatprep.mubr.f32.mxu0 0.0
        %4030 = vmatmul.mubr.f32.gmra.mrb[0].mxu0 %v3627
        %v4031 = vpop.f32.mrb[0].mxu0
        %v4032 = vadd.f32 %v3807, %v4031
        %v4033 = vpop.f32.mrb[0].mxu0
        %4034 = vmatprep.mubr.f32.mxu0 0.0
        %4035 = vmatmul.mubr.f32.gmra.mrb[0].mxu0 %v3630
        %v4036 = vpop.f32.mrb[0].mxu0
        %v4037 = vadd.f32 %v3812, %v4036
        %v4038 = vpop.f32.mrb[0].mxu0
        %4039 = vmatprep.mubr.f32.mxu0 0.0
        %4040 = vmatmul.mubr.f32.gmra.mrb[0].mxu0 %v3633
        %v4041 = vpop.f32.mrb[0].mxu0
        %v4042 = vadd.f32 %v3817, %v4041
        %v4043 = vpop.f32.mrb[0].mxu0
        %4044 = vmatprep.mubr.f32.mxu0 0.0
        %4045 = vmatmul.mubr.f32.gmra.mrb[0].mxu0 %v3636
        %v4046 = vpop.f32.mrb[0].mxu0
        %v4047 = vadd.f32 %v3822, %v4046
        %v4048 = vpop.f32.mrb[0].mxu0
        %4049 = vmatprep.mubr.f32.mxu0 0.0
        %4050 = vmatmul.mubr.f32.gmra.mrb[0].mxu0 %v3639
        %v4051 = vpop.f32.mrb[0].mxu0
        %v4052 = vadd.f32 %v3827, %v4051
        %v4053 = vpop.f32.mrb[0].mxu0
        %4054 = vmatprep.mubr.f32.mxu0 0.0
        %4055 = vmatmul.mubr.f32.gmra.mrb[0].mxu0 %v3642
        %v4056 = vpop.f32.mrb[0].mxu0
        %v4057 = vadd.f32 %v3832, %v4056
        %v4058 = vpop.f32.mrb[0].mxu0
        %4059 = vmatprep.mubr.f32.mxu0 0.0
        %4060 = vmatmul.mubr.f32.gmra.mrb[0].mxu0 %v3645
        %v4061 = vpop.f32.mrb[0].mxu0
        %v4062 = vadd.f32 %v3837, %v4061
        %v4063 = vpop.f32.mrb[0].mxu0
        %4064 = vmatprep.mubr.f32.mxu0 0.0
        %4065 = vmatmul.mubr.f32.gmra.mrb[0].mxu0 %v3648
        %v4066 = vpop.f32.mrb[0].mxu0
        %v4067 = vadd.f32 %v3842, %v4066
        %v4068 = vpop.f32.mrb[0].mxu0
        %4069 = vmatprep.mubr.f32.mxu0 0.0
        %4070 = vmatmul.mubr.f32.gmra.mrb[0].mxu0 %v3651
        %v4071 = vpop.f32.mrb[0].mxu0
        %v4072 = vadd.f32 %v3847, %v4071
        %v4073 = vpop.f32.mrb[0].mxu0
        %4074 = vmatprep.mubr.f32.mxu0 0.0
        %4075 = vmatmul.mubr.f32.gmra.mrb[0].mxu0 %v3654
        %v4076 = vpop.f32.mrb[0].mxu0
        %v4077 = vadd.f32 %v3852, %v4076
        %v4078 = vpop.f32.mrb[0].mxu0
        %4079 = vmatprep.mubr.f32.mxu0 0.0
        %4080 = vmatmul.mubr.f32.gmra.mrb[0].mxu0 %v3657
        %v4081 = vpop.f32.mrb[0].mxu0
        %v4082 = vadd.f32 %v3857, %v4081
        %v4083 = vpop.f32.mrb[0].mxu0
        %4084 = vmatprep.mubr.f32.mxu0 0.0
        %4085 = vmatmul.mubr.f32.gmra.mrb[0].mxu0 %v3660
        %v4086 = vpop.f32.mrb[0].mxu0
        %v4087 = vadd.f32 %v3862, %v4086
        %v4088 = vpop.f32.mrb[0].mxu0
        %4089 = vmatprep.mubr.f32.mxu0 0.0
        %4090 = vmatmul.mubr.f32.gmra.mrb[0].mxu0 %v3663
        %v4091 = vpop.f32.mrb[0].mxu0
        %v4092 = vadd.f32 %v3867, %v4091
        %v4093 = vpop.f32.mrb[0].mxu0
        %4094 = vmatprep.mubr.f32.mxu0 0.0
        %4095 = vmatmul.mubr.f32.gmra.mrb[0].mxu0 %v3666
        %v4096 = vpop.f32.mrb[0].mxu0
        %v4097 = vadd.f32 %v3872, %v4096
        %v4098 = vpop.f32.mrb[0].mxu0
        %4099 = vmatprep.mubr.f32.mxu0 0.0
        %4100 = vmatmul.mubr.f32.gmra.mrb[0].mxu0 %v3669
        %v4101 = vpop.f32.mrb[0].mxu0
        %v4102 = vadd.f32 %v3877, %v4101
        %v4103 = vpop.f32.mrb[0].mxu0
        %4104 = vmatprep.mubr.f32.mxu0 0.0
        %4105 = vmatmul.mubr.f32.gmra.mrb[0].mxu0 %v3672
        %v4106 = vpop.f32.mrb[0].mxu0
        %v4107 = vadd.f32 %v3882, %v4106
        %v4108 = vpop.f32.mrb[0].mxu0
        %4109 = vmatprep.mubr.f32.mxu0 0.0
        %4110 = vmatmul.mubr.f32.gmra.mrb[0].mxu0 %v3675
        %v4111 = vpop.f32.mrb[0].mxu0
        %v4112 = vadd.f32 %v3887, %v4111
        %v4113 = vpop.f32.mrb[0].mxu0
        %4114 = vmatprep.mubr.f32.mxu0 0.0
        %4115 = vmatmul.mubr.f32.gmra.mrb[0].mxu0 %v3678
        %v4116 = vpop.f32.mrb[0].mxu0
        %v4117 = vadd.f32 %v3892, %v4116
        %v4118 = vpop.f32.mrb[0].mxu0
        %4119 = vmatprep.mubr.f32.mxu0 0.0
        %4120 = vmatmul.mubr.f32.gmra.mrb[0].mxu0 %v3681
        %v4121 = vpop.f32.mrb[0].mxu0
        %v4122 = vadd.f32 %v3897, %v4121
        %v4123 = vpop.f32.mrb[0].mxu0
        %4124 = vmatprep.mubr.f32.mxu0 0.0
        %4125 = vmatmul.mubr.f32.gmra.mrb[0].mxu0 %v3684
        %v4126 = vpop.f32.mrb[0].mxu0
        %v4127 = vadd.f32 %v3902, %v4126
        %v4128 = vpop.f32.mrb[0].mxu0
        %4129 = vmatprep.mubr.f32.mxu0 0.0
        %4130 = vmatmul.mubr.f32.gmra.mrb[0].mxu0 %v3687
        %v4131 = vpop.f32.mrb[0].mxu0
        %v4132 = vadd.f32 %v3907, %v4131
        %v4133 = vpop.f32.mrb[0].mxu0
        %4134 = vmatprep.mubr.f32.mxu0 0.0
        %4135 = vmatmul.mubr.f32.gmra.mrb[0].mxu0 %v3690
        %v4136 = vpop.f32.mrb[0].mxu0
        %v4137 = vadd.f32 %v3912, %v4136
        %v4138 = vpop.f32.mrb[0].mxu0
        %4139 = vmatprep.mubr.f32.mxu0 0.0
        %4140 = vmatmul.mubr.f32.gmra.mrb[0].mxu0 %v3693
        %v4141 = vpop.f32.mrb[0].mxu0
        %v4142 = vadd.f32 %v3917, %v4141
        %v4143 = vpop.f32.mrb[0].mxu0
        %4144 = vdwg.mxu0
        %v4145 = vmax.f32 %v3987, 0.0
        %v4146 = vmax.f32 %v3992, 0.0
        %v4147 = vmax.f32 %v3997, 0.0
        %v4148 = vmax.f32 %v4002, 0.0
        %v4149 = vmax.f32 %v4007, 0.0
        %v4150 = vmax.f32 %v4012, 0.0
        %v4151 = vmax.f32 %v4017, 0.0
        %v4152 = vmax.f32 %v4022, 0.0
        %v4153 = vmax.f32 %v4027, 0.0
        %v4154 = vmax.f32 %v4032, 0.0
        %v4155 = vmax.f32 %v4037, 0.0
        %v4156 = vmax.f32 %v4042, 0.0
        %v4157 = vmax.f32 %v4047, 0.0
        %v4158 = vmax.f32 %v4052, 0.0
        %v4159 = vmax.f32 %v4057, 0.0
        %v4160 = vmax.f32 %v4062, 0.0
        %v4161 = vmax.f32 %v4067, 0.0
        %v4162 = vmax.f32 %v4072, 0.0
        %v4163 = vmax.f32 %v4077, 0.0
        %v4164 = vmax.f32 %v4082, 0.0
        %v4165 = vmax.f32 %v4087, 0.0
        %v4166 = vmax.f32 %v4092, 0.0
        %v4167 = vmax.f32 %v4097, 0.0
        %v4168 = vmax.f32 %v4102, 0.0
        %v4169 = vmax.f32 %v4107, 0.0
        %v4170 = vmax.f32 %v4112, 0.0
        %v4171 = vmax.f32 %v4117, 0.0
        %v4172 = vmax.f32 %v4122, 0.0
        %v4173 = vmax.f32 %v4127, 0.0
        %v4174 = vmax.f32 %v4132, 0.0
        %v4175 = vmax.f32 %v4137, 0.0
        %v4176 = vmax.f32 %v4142, 0.0
        %4177 = vst.msk [vmem:[#allocation4] sm:$0xff] %vm1682, 0.0
        %4178 = vst.msk [vmem:[#allocation4 + $0x8] sm:$0x3] %vm1685, 0.0
        %s4179 = scalar_lea.vmem [#allocation4], 144
        %4180 = vst.msk [vmem:[%s4179] sm:$0xff] %vm1682, 0.0
        %4181 = vst.msk [vmem:[%s4179 + $0x8] sm:$0x3] %vm1685, 0.0
        %4182 = vst.msk [vmem:[#allocation4] sm:$0x1] %vm1691, 0.0
        %4183 = vst.msk [vmem:[#allocation4 + $0x10] sm:$0x1] %vm1691, 0.0
        %4184 = vst.msk [vmem:[#allocation4 + $0x20] sm:$0x1] %vm1691, 0.0
        %4185 = vst.msk [vmem:[#allocation4 + $0x30] sm:$0x1] %vm1691, 0.0
        %4186 = vst.msk [vmem:[#allocation4 + $0x40] sm:$0x1] %vm1691, 0.0
        %4187 = vst.msk [vmem:[#allocation4 + $0x50] sm:$0x1] %vm1691, 0.0
        %4188 = vst.msk [vmem:[#allocation4 + $0x60] sm:$0x1] %vm1691, 0.0
        %4189 = vst.msk [vmem:[#allocation4 + $0x70] sm:$0x1] %vm1691, 0.0
        %4190 = vst.msk [vmem:[#allocation4 + $0x80] sm:$0x1] %vm1691, 0.0
        %4191 = vst.msk [vmem:[#allocation4 + $0x90] sm:$0x1] %vm1691, 0.0
        %4192 = vst.msk [vmem:[#allocation4 + $0x9] sm:$0x1] %vm1691, 0.0
        %4193 = vst.msk [vmem:[#allocation4 + $0x19] sm:$0x1] %vm1691, 0.0
        %4194 = vst.msk [vmem:[#allocation4 + $0x29] sm:$0x1] %vm1691, 0.0
        %4195 = vst.msk [vmem:[#allocation4 + $0x39] sm:$0x1] %vm1691, 0.0
        %4196 = vst.msk [vmem:[#allocation4 + $0x49] sm:$0x1] %vm1691, 0.0
        %4197 = vst.msk [vmem:[#allocation4 + $0x59] sm:$0x1] %vm1691, 0.0
        %4198 = vst.msk [vmem:[#allocation4 + $0x69] sm:$0x1] %vm1691, 0.0
        %4199 = vst.msk [vmem:[#allocation4 + $0x79] sm:$0x1] %vm1691, 0.0
        %4200 = vst.msk [vmem:[#allocation4 + $0x89] sm:$0x1] %vm1691, 0.0
        %4201 = vst.msk [vmem:[#allocation4 + $0x99] sm:$0x1] %vm1691, 0.0
        %4202 = vst.msk [vmem:[#allocation2] sm:$0xff] %vm1682, %v4145
        %4203 = vst.msk [vmem:[#allocation2 + $0x8] sm:$0xff] %vm1682, %v4146
        %4204 = vst.msk [vmem:[#allocation2 + $0x20] sm:$0xff] %vm1682, %v4147
        %4205 = vst.msk [vmem:[#allocation2 + $0x28] sm:$0xff] %vm1682, %v4148
        %4206 = vst.msk [vmem:[#allocation2 + $0x40] sm:$0xff] %vm1682, %v4149
        %4207 = vst.msk [vmem:[#allocation2 + $0x48] sm:$0xff] %vm1682, %v4150
        %4208 = vst.msk [vmem:[#allocation2 + $0x60] sm:$0xff] %vm1682, %v4151
        %4209 = vst.msk [vmem:[#allocation2 + $0x68] sm:$0xff] %vm1682, %v4152
        %4210 = vst.msk [vmem:[#allocation2 + $0x80] sm:$0xff] %vm1682, %v4153
        %4211 = vst.msk [vmem:[#allocation2 + $0x88] sm:$0xff] %vm1682, %v4154
        %4212 = vst.msk [vmem:[#allocation2 + $0xa0] sm:$0xff] %vm1682, %v4155
        %4213 = vst.msk [vmem:[#allocation2 + $0xa8] sm:$0xff] %vm1682, %v4156
        %4214 = vst.msk [vmem:[#allocation2 + $0xc0] sm:$0xff] %vm1682, %v4157
        %4215 = vst.msk [vmem:[#allocation2 + $0xc8] sm:$0xff] %vm1682, %v4158
        %4216 = vst.msk [vmem:[#allocation2 + $0xe0] sm:$0xff] %vm1682, %v4159
        %4217 = vst.msk [vmem:[#allocation2 + $0xe8] sm:$0xff] %vm1682, %v4160
        %4218 = vst.msk [vmem:[#allocation2 + $0x100] sm:$0xff] %vm1682, %v4161
        %4219 = vst.msk [vmem:[#allocation2 + $0x108] sm:$0xff] %vm1682, %v4162
        %4220 = vst.msk [vmem:[#allocation2 + $0x120] sm:$0xff] %vm1682, %v4163
        %4221 = vst.msk [vmem:[#allocation2 + $0x128] sm:$0xff] %vm1682, %v4164
        %4222 = vst.msk [vmem:[#allocation2 + $0x140] sm:$0xff] %vm1682, %v4165
        %4223 = vst.msk [vmem:[#allocation2 + $0x148] sm:$0xff] %vm1682, %v4166
        %4224 = vst.msk [vmem:[#allocation2 + $0x160] sm:$0xff] %vm1682, %v4167
        %4225 = vst.msk [vmem:[#allocation2 + $0x168] sm:$0xff] %vm1682, %v4168
        %4226 = vst.msk [vmem:[#allocation2 + $0x180] sm:$0xff] %vm1682, %v4169
        %4227 = vst.msk [vmem:[#allocation2 + $0x188] sm:$0xff] %vm1682, %v4170
        %4228 = vst.msk [vmem:[#allocation2 + $0x1a0] sm:$0xff] %vm1682, %v4171
        %4229 = vst.msk [vmem:[#allocation2 + $0x1a8] sm:$0xff] %vm1682, %v4172
        %4230 = vst.msk [vmem:[#allocation2 + $0x1c0] sm:$0xff] %vm1682, %v4173
        %4231 = vst.msk [vmem:[#allocation2 + $0x1c8] sm:$0xff] %vm1682, %v4174
        %4232 = vst.msk [vmem:[#allocation2 + $0x1e0] sm:$0xff] %vm1682, %v4175
        %4233 = vst.msk [vmem:[#allocation2 + $0x1e8] sm:$0xff] %vm1682, %v4176
        %v4234 = vld [vmem:[#allocation2] sm:$0xff]
        %v4235 = vld [vmem:[#allocation2 + $0x8] sm:$0xff]
        %v4236 = vld [vmem:[#allocation2 + $0x40] sm:$0xff]
        %v4237 = vld [vmem:[#allocation2 + $0x48] sm:$0xff]
        %v4238 = vld [vmem:[#allocation2 + $0x80] sm:$0xff]
        %v4239 = vld [vmem:[#allocation2 + $0x88] sm:$0xff]
        %v4240 = vld [vmem:[#allocation2 + $0xc0] sm:$0xff]
        %v4241 = vld [vmem:[#allocation2 + $0xc8] sm:$0xff]
        %v4242 = vld [vmem:[#allocation2 + $0x100] sm:$0xff]
        %v4243 = vld [vmem:[#allocation2 + $0x108] sm:$0xff]
        %v4244 = vld [vmem:[#allocation2 + $0x140] sm:$0xff]
        %v4245 = vld [vmem:[#allocation2 + $0x148] sm:$0xff]
        %v4246 = vld [vmem:[#allocation2 + $0x180] sm:$0xff]
        %v4247 = vld [vmem:[#allocation2 + $0x188] sm:$0xff]
        %v4248 = vld [vmem:[#allocation2 + $0x1c0] sm:$0xff]
        %v4249 = vld [vmem:[#allocation2 + $0x1c8] sm:$0xff]
        %v4250 = vld [vmem:[%s1920] sm:$0xff]
        %v4251 = vld [vmem:[%s1920 + $0x8] sm:$0xff]
        %v4252 = vld [vmem:[%s1920 + $0x40] sm:$0xff]
        %v4253 = vld [vmem:[%s1920 + $0x48] sm:$0xff]
        %v4254 = vld [vmem:[%s1920 + $0x80] sm:$0xff]
        %v4255 = vld [vmem:[%s1920 + $0x88] sm:$0xff]
        %v4256 = vld [vmem:[%s1920 + $0xc0] sm:$0xff]
        %v4257 = vld [vmem:[%s1920 + $0xc8] sm:$0xff]
        %v4258 = vld [vmem:[%s1920 + $0x100] sm:$0xff]
        %v4259 = vld [vmem:[%s1920 + $0x108] sm:$0xff]
        %v4260 = vld [vmem:[%s1920 + $0x140] sm:$0xff]
        %v4261 = vld [vmem:[%s1920 + $0x148] sm:$0xff]
        %v4262 = vld [vmem:[%s1920 + $0x180] sm:$0xff]
        %v4263 = vld [vmem:[%s1920 + $0x188] sm:$0xff]
        %v4264 = vld [vmem:[%s1920 + $0x1c0] sm:$0xff]
        %v4265 = vld [vmem:[%s1920 + $0x1c8] sm:$0xff]
        %v4266 = vmax.f32 %v4234, %v4250
        %v4267 = vmax.f32 %v4235, %v4251
        %v4268 = vmax.f32 %v4236, %v4252
        %v4269 = vmax.f32 %v4237, %v4253
        %v4270 = vmax.f32 %v4238, %v4254
        %v4271 = vmax.f32 %v4239, %v4255
        %v4272 = vmax.f32 %v4240, %v4256
        %v4273 = vmax.f32 %v4241, %v4257
        %v4274 = vmax.f32 %v4242, %v4258
        %v4275 = vmax.f32 %v4243, %v4259
        %v4276 = vmax.f32 %v4244, %v4260
        %v4277 = vmax.f32 %v4245, %v4261
        %v4278 = vmax.f32 %v4246, %v4262
        %v4279 = vmax.f32 %v4247, %v4263
        %v4280 = vmax.f32 %v4248, %v4264
        %v4281 = vmax.f32 %v4249, %v4265
        %4282 = vst.msk [vmem:[#allocation2] sm:$0xff] %vm1682, %v4266
        %4283 = vst.msk [vmem:[#allocation2 + $0x8] sm:$0xff] %vm1682, %v4267
        %4284 = vst.msk [vmem:[#allocation2 + $0x20] sm:$0xff] %vm1682, %v4268
        %4285 = vst.msk [vmem:[#allocation2 + $0x28] sm:$0xff] %vm1682, %v4269
        %4286 = vst.msk [vmem:[#allocation2 + $0x40] sm:$0xff] %vm1682, %v4270
        %4287 = vst.msk [vmem:[#allocation2 + $0x48] sm:$0xff] %vm1682, %v4271
        %4288 = vst.msk [vmem:[#allocation2 + $0x60] sm:$0xff] %vm1682, %v4272
        %4289 = vst.msk [vmem:[#allocation2 + $0x68] sm:$0xff] %vm1682, %v4273
        %4290 = vst.msk [vmem:[#allocation2 + $0x80] sm:$0xff] %vm1682, %v4274
        %4291 = vst.msk [vmem:[#allocation2 + $0x88] sm:$0xff] %vm1682, %v4275
        %4292 = vst.msk [vmem:[#allocation2 + $0xa0] sm:$0xff] %vm1682, %v4276
        %4293 = vst.msk [vmem:[#allocation2 + $0xa8] sm:$0xff] %vm1682, %v4277
        %4294 = vst.msk [vmem:[#allocation2 + $0xc0] sm:$0xff] %vm1682, %v4278
        %4295 = vst.msk [vmem:[#allocation2 + $0xc8] sm:$0xff] %vm1682, %v4279
        %4296 = vst.msk [vmem:[#allocation2 + $0xe0] sm:$0xff] %vm1682, %v4280
        %4297 = vst.msk [vmem:[#allocation2 + $0xe8] sm:$0xff] %vm1682, %v4281
        %v4298 = vld [vmem:[#allocation2] ss:$2 sm:$0xff]
        %v4299 = vld [vmem:[%s2116] ss:$2 sm:$0xff]
        %v4300 = vld [vmem:[%s2120] ss:$2 sm:$0xff]
        %v4301 = vld [vmem:[%s2124] ss:$2 sm:$0xff]
        %v4302 = vld [vmem:[%s2128] ss:$2 sm:$0xff]
        %v4303 = vld [vmem:[%s2132] ss:$2 sm:$0xff]
        %v4304 = vld [vmem:[%s2136] ss:$2 sm:$0xff]
        %v4305 = vld [vmem:[%s2140] ss:$2 sm:$0xff]
        %v4306 = vld [vmem:[%s2176] ss:$2 sm:$0xff]
        %v4307 = vld [vmem:[%s2180] ss:$2 sm:$0xff]
        %v4308 = vld [vmem:[%s2184] ss:$2 sm:$0xff]
        %v4309 = vld [vmem:[%s2188] ss:$2 sm:$0xff]
        %v4310 = vld [vmem:[%s2192] ss:$2 sm:$0xff]
        %v4311 = vld [vmem:[%s2196] ss:$2 sm:$0xff]
        %v4312 = vld [vmem:[%s2200] ss:$2 sm:$0xff]
        %v4313 = vld [vmem:[%s2204] ss:$2 sm:$0xff]
        %v4314 = vmax.f32 %v4298, %v4306
        %v4315 = vmax.f32 %v4299, %v4307
        %v4316 = vmax.f32 %v4300, %v4308
        %v4317 = vmax.f32 %v4301, %v4309
        %v4318 = vmax.f32 %v4302, %v4310
        %v4319 = vmax.f32 %v4303, %v4311
        %v4320 = vmax.f32 %v4304, %v4312
        %v4321 = vmax.f32 %v4305, %v4313
        %s4322 = scalar_lea.vmem [#allocation4], 16
        %4323 = vst.msk [vmem:[%s4322 + $0x1] sm:$0xff] %vm1682, %v4314
        %4324 = vst.msk [vmem:[%s4322 + $0x11] sm:$0xff] %vm1682, %v4315
        %4325 = vst.msk [vmem:[%s4322 + $0x21] sm:$0xff] %vm1682, %v4316
        %4326 = vst.msk [vmem:[%s4322 + $0x31] sm:$0xff] %vm1682, %v4317
        %4327 = vst.msk [vmem:[%s4322 + $0x41] sm:$0xff] %vm1682, %v4318
        %4328 = vst.msk [vmem:[%s4322 + $0x51] sm:$0xff] %vm1682, %v4319
        %4329 = vst.msk [vmem:[%s4322 + $0x61] sm:$0xff] %vm1682, %v4320
        %4330 = vst.msk [vmem:[%s4322 + $0x71] sm:$0xff] %vm1682, %v4321
        %v4331 = vld [vmem:[#allocation4] sm:$0xff]
        %v4332 = vld [vmem:[#allocation4 + $0x10] sm:$0xff]
        %v4333 = vld [vmem:[#allocation4 + $0x20] sm:$0xff]
        %v4334 = vld [vmem:[#allocation4 + $0x30] sm:$0xff]
        %v4335 = vld [vmem:[#allocation4 + $0x40] sm:$0xff]
        %v4336 = vld [vmem:[#allocation4 + $0x50] sm:$0xff]
        %v4337 = vld [vmem:[#allocation4 + $0x60] sm:$0xff]
        %v4338 = vld [vmem:[#allocation4 + $0x70] sm:$0xff]
        %v4339 = vld [vmem:[#allocation4 + $0x1] sm:$0xff]
        %v4340 = vld [vmem:[#allocation4 + $0x11] sm:$0xff]
        %v4341 = vld [vmem:[#allocation4 + $0x21] sm:$0xff]
        %v4342 = vld [vmem:[#allocation4 + $0x31] sm:$0xff]
        %v4343 = vld [vmem:[#allocation4 + $0x41] sm:$0xff]
        %v4344 = vld [vmem:[#allocation4 + $0x51] sm:$0xff]
        %v4345 = vld [vmem:[#allocation4 + $0x61] sm:$0xff]
        %v4346 = vld [vmem:[#allocation4 + $0x71] sm:$0xff]
        %v4347 = vld [vmem:[#allocation4 + $0x2] sm:$0xff]
        %v4348 = vld [vmem:[#allocation4 + $0x12] sm:$0xff]
        %v4349 = vld [vmem:[#allocation4 + $0x22] sm:$0xff]
        %v4350 = vld [vmem:[#allocation4 + $0x32] sm:$0xff]
        %v4351 = vld [vmem:[#allocation4 + $0x42] sm:$0xff]
        %v4352 = vld [vmem:[#allocation4 + $0x52] sm:$0xff]
        %v4353 = vld [vmem:[#allocation4 + $0x62] sm:$0xff]
        %v4354 = vld [vmem:[#allocation4 + $0x72] sm:$0xff]
        %v4355 = vld [vmem:[%s4322] sm:$0xff]
        %v4356 = vld [vmem:[%s4322 + $0x10] sm:$0xff]
        %v4357 = vld [vmem:[%s4322 + $0x20] sm:$0xff]
        %v4358 = vld [vmem:[%s4322 + $0x30] sm:$0xff]
        %v4359 = vld [vmem:[%s4322 + $0x40] sm:$0xff]
        %v4360 = vld [vmem:[%s4322 + $0x50] sm:$0xff]
        %v4361 = vld [vmem:[%s4322 + $0x60] sm:$0xff]
        %v4362 = vld [vmem:[%s4322 + $0x70] sm:$0xff]
        %v4363 = vld [vmem:[%s4322 + $0x1] sm:$0xff]
        %v4364 = vld [vmem:[%s4322 + $0x11] sm:$0xff]
        %v4365 = vld [vmem:[%s4322 + $0x21] sm:$0xff]
        %v4366 = vld [vmem:[%s4322 + $0x31] sm:$0xff]
        %v4367 = vld [vmem:[%s4322 + $0x41] sm:$0xff]
        %v4368 = vld [vmem:[%s4322 + $0x51] sm:$0xff]
        %v4369 = vld [vmem:[%s4322 + $0x61] sm:$0xff]
        %v4370 = vld [vmem:[%s4322 + $0x71] sm:$0xff]
        %v4371 = vld [vmem:[%s4322 + $0x2] sm:$0xff]
        %v4372 = vld [vmem:[%s4322 + $0x12] sm:$0xff]
        %v4373 = vld [vmem:[%s4322 + $0x22] sm:$0xff]
        %v4374 = vld [vmem:[%s4322 + $0x32] sm:$0xff]
        %v4375 = vld [vmem:[%s4322 + $0x42] sm:$0xff]
        %v4376 = vld [vmem:[%s4322 + $0x52] sm:$0xff]
        %v4377 = vld [vmem:[%s4322 + $0x62] sm:$0xff]
        %v4378 = vld [vmem:[%s4322 + $0x72] sm:$0xff]
        %s4379 = scalar_lea.vmem [#allocation4], 32
        %v4380 = vld [vmem:[%s4379] sm:$0xff]
        %v4381 = vld [vmem:[%s4379 + $0x10] sm:$0xff]
        %v4382 = vld [vmem:[%s4379 + $0x20] sm:$0xff]
        %v4383 = vld [vmem:[%s4379 + $0x30] sm:$0xff]
        %v4384 = vld [vmem:[%s4379 + $0x40] sm:$0xff]
        %v4385 = vld [vmem:[%s4379 + $0x50] sm:$0xff]
        %v4386 = vld [vmem:[%s4379 + $0x60] sm:$0xff]
        %v4387 = vld [vmem:[%s4379 + $0x70] sm:$0xff]
        %v4388 = vld [vmem:[%s4379 + $0x1] sm:$0xff]
        %v4389 = vld [vmem:[%s4379 + $0x11] sm:$0xff]
        %v4390 = vld [vmem:[%s4379 + $0x21] sm:$0xff]
        %v4391 = vld [vmem:[%s4379 + $0x31] sm:$0xff]
        %v4392 = vld [vmem:[%s4379 + $0x41] sm:$0xff]
        %v4393 = vld [vmem:[%s4379 + $0x51] sm:$0xff]
        %v4394 = vld [vmem:[%s4379 + $0x61] sm:$0xff]
        %v4395 = vld [vmem:[%s4379 + $0x71] sm:$0xff]
        %v4396 = vld [vmem:[%s4379 + $0x2] sm:$0xff]
        %v4397 = vld [vmem:[%s4379 + $0x12] sm:$0xff]
        %v4398 = vld [vmem:[%s4379 + $0x22] sm:$0xff]
        %v4399 = vld [vmem:[%s4379 + $0x32] sm:$0xff]
        %v4400 = vld [vmem:[%s4379 + $0x42] sm:$0xff]
        %v4401 = vld [vmem:[%s4379 + $0x52] sm:$0xff]
        %v4402 = vld [vmem:[%s4379 + $0x62] sm:$0xff]
        %v4403 = vld [vmem:[%s4379 + $0x72] sm:$0xff]
        %4412 = vrot.lane.b32.xlu0 %v4339, 32
        %v4413 = vpop.permute.xlu0 %4412
        %4414 = vrot.lane.b32.xlu0 %v4340, 32
        %v4415 = vpop.permute.xlu0 %4414
        %4416 = vrot.lane.b32.xlu0 %v4341, 32
        %v4417 = vpop.permute.xlu0 %4416
        %4418 = vrot.lane.b32.xlu0 %v4342, 32
        %v4419 = vpop.permute.xlu0 %4418
        %4420 = vrot.lane.b32.xlu0 %v4343, 32
        %v4421 = vpop.permute.xlu0 %4420
        %4422 = vrot.lane.b32.xlu0 %v4344, 32
        %v4423 = vpop.permute.xlu0 %4422
        %4424 = vrot.lane.b32.xlu0 %v4345, 32
        %v4425 = vpop.permute.xlu0 %4424
        %4426 = vrot.lane.b32.xlu0 %v4346, 32
        %v4427 = vpop.permute.xlu0 %4426
        %4444 = vrot.lane.b32.xlu0 %v4347, 64
        %v4445 = vpop.permute.xlu0 %4444
        %4446 = vrot.lane.b32.xlu0 %v4348, 64
        %v4447 = vpop.permute.xlu0 %4446
        %4448 = vrot.lane.b32.xlu0 %v4349, 64
        %v4449 = vpop.permute.xlu0 %4448
        %4450 = vrot.lane.b32.xlu0 %v4350, 64
        %v4451 = vpop.permute.xlu0 %4450
        %4452 = vrot.lane.b32.xlu0 %v4351, 64
        %v4453 = vpop.permute.xlu0 %4452
        %4454 = vrot.lane.b32.xlu0 %v4352, 64
        %v4455 = vpop.permute.xlu0 %4454
        %4456 = vrot.lane.b32.xlu0 %v4353, 64
        %v4457 = vpop.permute.xlu0 %4456
        %4458 = vrot.lane.b32.xlu0 %v4354, 64
        %v4459 = vpop.permute.xlu0 %4458
        %4476 = vrot.lane.b32.xlu0 %v4355, 96
        %v4477 = vpop.permute.xlu0 %4476
        %4478 = vrot.lane.b32.xlu0 %v4356, 96
        %v4479 = vpop.permute.xlu0 %4478
        %4480 = vrot.lane.b32.xlu0 %v4357, 96
        %v4481 = vpop.permute.xlu0 %4480
        %4482 = vrot.lane.b32.xlu0 %v4358, 96
        %v4483 = vpop.permute.xlu0 %4482
        %4484 = vrot.lane.b32.xlu0 %v4359, 96
        %v4485 = vpop.permute.xlu0 %4484
        %4486 = vrot.lane.b32.xlu0 %v4360, 96
        %v4487 = vpop.permute.xlu0 %4486
        %4488 = vrot.lane.b32.xlu0 %v4361, 96
        %v4489 = vpop.permute.xlu0 %4488
        %4490 = vrot.lane.b32.xlu0 %v4362, 96
        %v4491 = vpop.permute.xlu0 %4490
        %4508 = vrot.lane.b32.xlu0 %v4371, 32
        %v4509 = vpop.permute.xlu0 %4508
        %4510 = vrot.lane.b32.xlu0 %v4372, 32
        %v4511 = vpop.permute.xlu0 %4510
        %4512 = vrot.lane.b32.xlu0 %v4373, 32
        %v4513 = vpop.permute.xlu0 %4512
        %4514 = vrot.lane.b32.xlu0 %v4374, 32
        %v4515 = vpop.permute.xlu0 %4514
        %4516 = vrot.lane.b32.xlu0 %v4375, 32
        %v4517 = vpop.permute.xlu0 %4516
        %4518 = vrot.lane.b32.xlu0 %v4376, 32
        %v4519 = vpop.permute.xlu0 %4518
        %4520 = vrot.lane.b32.xlu0 %v4377, 32
        %v4521 = vpop.permute.xlu0 %4520
        %4522 = vrot.lane.b32.xlu0 %v4378, 32
        %v4523 = vpop.permute.xlu0 %4522
        %4540 = vrot.lane.b32.xlu0 %v4380, 64
        %v4541 = vpop.permute.xlu0 %4540
        %4542 = vrot.lane.b32.xlu0 %v4381, 64
        %v4543 = vpop.permute.xlu0 %4542
        %4544 = vrot.lane.b32.xlu0 %v4382, 64
        %v4545 = vpop.permute.xlu0 %4544
        %4546 = vrot.lane.b32.xlu0 %v4383, 64
        %v4547 = vpop.permute.xlu0 %4546
        %4548 = vrot.lane.b32.xlu0 %v4384, 64
        %v4549 = vpop.permute.xlu0 %4548
        %4550 = vrot.lane.b32.xlu0 %v4385, 64
        %v4551 = vpop.permute.xlu0 %4550
        %4552 = vrot.lane.b32.xlu0 %v4386, 64
        %v4553 = vpop.permute.xlu0 %4552
        %4554 = vrot.lane.b32.xlu0 %v4387, 64
        %v4555 = vpop.permute.xlu0 %4554
        %4572 = vrot.lane.b32.xlu0 %v4388, 96
        %v4573 = vpop.permute.xlu0 %4572
        %4574 = vrot.lane.b32.xlu0 %v4389, 96
        %v4575 = vpop.permute.xlu0 %4574
        %4576 = vrot.lane.b32.xlu0 %v4390, 96
        %v4577 = vpop.permute.xlu0 %4576
        %4578 = vrot.lane.b32.xlu0 %v4391, 96
        %v4579 = vpop.permute.xlu0 %4578
        %4580 = vrot.lane.b32.xlu0 %v4392, 96
        %v4581 = vpop.permute.xlu0 %4580
        %4582 = vrot.lane.b32.xlu0 %v4393, 96
        %v4583 = vpop.permute.xlu0 %4582
        %4584 = vrot.lane.b32.xlu0 %v4394, 96
        %v4585 = vpop.permute.xlu0 %4584
        %4586 = vrot.lane.b32.xlu0 %v4395, 96
        %v4587 = vpop.permute.xlu0 %4586
        %v4596 = vsel %vm1682, %v4331, %v4413
        %v4597 = vsel %vm1682, %v4332, %v4415
        %v4598 = vsel %vm1682, %v4333, %v4417
        %v4599 = vsel %vm1682, %v4334, %v4419
        %v4600 = vsel %vm1682, %v4335, %v4421
        %v4601 = vsel %vm1682, %v4336, %v4423
        %v4602 = vsel %vm1682, %v4337, %v4425
        %v4603 = vsel %vm1682, %v4338, %v4427
        %v4604 = vsel %vm3394, %v4596, %v4445
        %v4605 = vsel %vm3394, %v4597, %v4447
        %v4606 = vsel %vm3394, %v4598, %v4449
        %v4607 = vsel %vm3394, %v4599, %v4451
        %v4608 = vsel %vm3394, %v4600, %v4453
        %v4609 = vsel %vm3394, %v4601, %v4455
        %v4610 = vsel %vm3394, %v4602, %v4457
        %v4611 = vsel %vm3394, %v4603, %v4459
        %v4612 = vsel %vm3427, %v4604, %v4477
        %v4613 = vsel %vm3427, %v4605, %v4479
        %v4614 = vsel %vm3427, %v4606, %v4481
        %v4615 = vsel %vm3427, %v4607, %v4483
        %v4616 = vsel %vm3427, %v4608, %v4485
        %v4617 = vsel %vm3427, %v4609, %v4487
        %v4618 = vsel %vm3427, %v4610, %v4489
        %v4619 = vsel %vm3427, %v4611, %v4491
        %v4620 = vsel %vm1682, %v4363, %v4509
        %v4621 = vsel %vm1682, %v4364, %v4511
        %v4622 = vsel %vm1682, %v4365, %v4513
        %v4623 = vsel %vm1682, %v4366, %v4515
        %v4624 = vsel %vm1682, %v4367, %v4517
        %v4625 = vsel %vm1682, %v4368, %v4519
        %v4626 = vsel %vm1682, %v4369, %v4521
        %v4627 = vsel %vm1682, %v4370, %v4523
        %v4628 = vsel %vm3394, %v4620, %v4541
        %v4629 = vsel %vm3394, %v4621, %v4543
        %v4630 = vsel %vm3394, %v4622, %v4545
        %v4631 = vsel %vm3394, %v4623, %v4547
        %v4632 = vsel %vm3394, %v4624, %v4549
        %v4633 = vsel %vm3394, %v4625, %v4551
        %v4634 = vsel %vm3394, %v4626, %v4553
        %v4635 = vsel %vm3394, %v4627, %v4555
        %v4636 = vsel %vm3427, %v4628, %v4573
        %v4637 = vsel %vm3427, %v4629, %v4575
        %v4638 = vsel %vm3427, %v4630, %v4577
        %v4639 = vsel %vm3427, %v4631, %v4579
        %v4640 = vsel %vm3427, %v4632, %v4581
        %v4641 = vsel %vm3427, %v4633, %v4583
        %v4642 = vsel %vm3427, %v4634, %v4585
        %v4643 = vsel %vm3427, %v4635, %v4587
        %v4644 = vld [vmem:[#allocation11] sm:$0xff]
        %v4645 = vld [vmem:[#allocation11 + $0x8] sm:$0xff]
        %v4646 = vld [vmem:[#allocation11 + $0x10] sm:$0xff]
        %v4647 = vld [vmem:[#allocation11 + $0x18] sm:$0xff]
        %v4648 = vld [vmem:[#allocation11 + $0x20] sm:$0xff]
        %v4649 = vld [vmem:[#allocation11 + $0x28] sm:$0xff]
        %v4650 = vld [vmem:[#allocation11 + $0x30] sm:$0xff]
        %v4651 = vld [vmem:[#allocation11 + $0x38] sm:$0xff]
        %v4652 = vld [vmem:[#allocation11 + $0x40] sm:$0xff]
        %v4653 = vld [vmem:[#allocation11 + $0x48] sm:$0xff]
        %v4654 = vld [vmem:[#allocation11 + $0x50] sm:$0xff]
        %v4655 = vld [vmem:[#allocation11 + $0x58] sm:$0xff]
        %v4656 = vld [vmem:[#allocation11 + $0x60] sm:$0xff]
        %v4657 = vld [vmem:[#allocation11 + $0x68] sm:$0xff]
        %v4658 = vld [vmem:[#allocation11 + $0x70] sm:$0xff]
        %v4659 = vld [vmem:[#allocation11 + $0x78] sm:$0xff]
        %v4660 = vld [vmem:[#allocation11 + $0x80] sm:$0xff]
        %v4661 = vld [vmem:[#allocation11 + $0x88] sm:$0xff]
        %v4662 = vld [vmem:[#allocation11 + $0x90] sm:$0xff]
        %v4663 = vld [vmem:[#allocation11 + $0x98] sm:$0xff]
        %v4664 = vld [vmem:[#allocation11 + $0xa0] sm:$0xff]
        %v4665 = vld [vmem:[#allocation11 + $0xa8] sm:$0xff]
        %v4666 = vld [vmem:[#allocation11 + $0xb0] sm:$0xff]
        %v4667 = vld [vmem:[#allocation11 + $0xb8] sm:$0xff]
        %v4668 = vld [vmem:[#allocation11 + $0xc0] sm:$0xff]
        %v4669 = vld [vmem:[#allocation11 + $0xc8] sm:$0xff]
        %v4670 = vld [vmem:[#allocation11 + $0xd0] sm:$0xff]
        %v4671 = vld [vmem:[#allocation11 + $0xd8] sm:$0xff]
        %v4672 = vld [vmem:[#allocation11 + $0xe0] sm:$0xff]
        %v4673 = vld [vmem:[#allocation11 + $0xe8] sm:$0xff]
        %v4674 = vld [vmem:[#allocation11 + $0xf0] sm:$0xff]
        %v4675 = vld [vmem:[#allocation11 + $0xf8] sm:$0xff]
        %v4676 = vld [vmem:[#allocation11 + $0x100] sm:$0xff]
        %v4677 = vld [vmem:[#allocation11 + $0x108] sm:$0xff]
        %v4678 = vld [vmem:[#allocation11 + $0x110] sm:$0xff]
        %v4679 = vld [vmem:[#allocation11 + $0x118] sm:$0xff]
        %v4680 = vld [vmem:[#allocation13] sm:$0x1]
        %v4682 = vlaneseq
        %v4683 = vshrl.u32 %v4682, 7
        %v4684 = vsub.s32 0, %v4683
        %v4685 = vrot.slane %v4680, %v4684
        %v4688 = vsel %vm1682, %v4396, 0
        %v4691 = vsel %vm1682, %v4397, 0
        %v4694 = vsel %vm1682, %v4398, 0
        %v4697 = vsel %vm1682, %v4399, 0
        %v4700 = vsel %vm1682, %v4400, 0
        %v4703 = vsel %vm1682, %v4401, 0
        %v4706 = vsel %vm1682, %v4402, 0
        %v4709 = vsel %vm1682, %v4403, 0
        %4711 = vmatprep.subr.mxu0 0.0
        %4712 = vmatpush1.msra.mxu0 %v4644
        %4713 = vmatprep.subr.mxu0 0.0
        %4714 = vmatpush1.msra.mxu0 %v4645
        %4715 = vmatprep.subr.mxu0 0.0
        %4716 = vmatpush1.msra.mxu0 %v4646
        %4717 = vmatprep.subr.mxu0 0.0
        %4718 = vmatpush1.msra.mxu0 %v4647
        %4719 = vmatprep.subr.mxu0 0.0
        %4720 = vmatpush1.msra.mxu0 %v4648
        %4721 = vmatprep.subr.mxu0 0.0
        %4722 = vmatpush1.msra.mxu0 %v4649
        %4723 = vmatprep.subr.mxu0 0.0
        %4724 = vmatpush1.msra.mxu0 %v4650
        %4725 = vmatprep.subr.mxu0 0.0
        %4726 = vmatpush1.msra.mxu0 %v4651
        %4727 = vmatprep.subr.mxu0 0.0
        %4728 = vmatpush1.msra.mxu0 %v4652
        %4729 = vmatprep.subr.mxu0 0.0
        %4730 = vmatpush1.msra.mxu0 %v4653
        %4731 = vmatprep.subr.mxu0 0.0
        %4732 = vmatpush1.msra.mxu0 %v4654
        %4733 = vmatprep.subr.mxu0 0.0
        %4734 = vmatpush1.msra.mxu0 %v4655
        %4735 = vmatprep.subr.mxu0 0.0
        %4736 = vmatpush1.msra.mxu0 %v4656
        %4737 = vmatprep.subr.mxu0 0.0
        %4738 = vmatpush1.msra.mxu0 %v4657
        %4739 = vmatprep.subr.mxu0 0.0
        %4740 = vmatpush1.msra.mxu0 %v4658
        %4741 = vmatprep.subr.mxu0 0.0
        %4742 = vmatpush1.msra.mxu0 %v4659
        %4743 = vmatprep.subr.mxu0 0.0
        %4744 = vmatpush1.msra.mxu0 %v4660
        %4745 = vmatprep.subr.mxu0 0.0
        %4746 = vmatpush1.msra.mxu0 %v4661
        %4747 = vmatprep.subr.mxu0 0.0
        %4748 = vmatpush1.msra.mxu0 %v4662
        %4749 = vmatprep.subr.mxu0 0.0
        %4750 = vmatpush1.msra.mxu0 %v4663
        %4751 = vmatprep.subr.mxu0 0.0
        %4752 = vmatpush1.msra.mxu0 %v4664
        %4753 = vmatprep.subr.mxu0 0.0
        %4754 = vmatpush1.msra.mxu0 %v4665
        %4755 = vmatprep.subr.mxu0 0.0
        %4756 = vmatpush1.msra.mxu0 %v4666
        %4757 = vmatprep.subr.mxu0 0.0
        %4758 = vmatpush1.msra.mxu0 %v4667
        %4759 = vmatprep.subr.mxu0 0.0
        %4760 = vmatpush1.msra.mxu0 %v4668
        %4761 = vmatprep.subr.mxu0 0.0
        %4762 = vmatpush1.msra.mxu0 %v4669
        %4763 = vmatprep.subr.mxu0 0.0
        %4764 = vmatpush1.msra.mxu0 %v4670
        %4765 = vmatprep.subr.mxu0 0.0
        %4766 = vmatpush1.msra.mxu0 %v4671
        %4767 = vmatprep.subr.mxu0 0.0
        %4768 = vmatpush1.msra.mxu0 %v4672
        %4769 = vmatprep.subr.mxu0 0.0
        %4770 = vmatpush1.msra.mxu0 %v4673
        %4771 = vmatprep.subr.mxu0 0.0
        %4772 = vmatpush1.msra.mxu0 %v4674
        %4773 = vmatprep.subr.mxu0 0.0
        %4774 = vmatpush1.msra.mxu0 %v4675
        %4775 = vmatprep.mubr.f32.mxu0 %v4636
        %4776 = vmatmul.mubr.f32.gmra.mrb[0].mxu0 %v4612
        %v4777 = vpop.f32.mrb[0].mxu0
        %v4778 = vadd.f32 %v4685, %v4777
        %v4779 = vpop.f32.mrb[0].mxu0
        %4780 = vmatprep.mubr.f32.mxu0 %v4637
        %4781 = vmatmul.mubr.f32.gmra.mrb[0].mxu0 %v4613
        %v4782 = vpop.f32.mrb[0].mxu0
        %v4783 = vadd.f32 %v4685, %v4782
        %v4784 = vpop.f32.mrb[0].mxu0
        %4785 = vmatprep.mubr.f32.mxu0 %v4638
        %4786 = vmatmul.mubr.f32.gmra.mrb[0].mxu0 %v4614
        %v4787 = vpop.f32.mrb[0].mxu0
        %v4788 = vadd.f32 %v4685, %v4787
        %v4789 = vpop.f32.mrb[0].mxu0
        %4790 = vmatprep.mubr.f32.mxu0 %v4639
        %4791 = vmatmul.mubr.f32.gmra.mrb[0].mxu0 %v4615
        %v4792 = vpop.f32.mrb[0].mxu0
        %v4793 = vadd.f32 %v4685, %v4792
        %v4794 = vpop.f32.mrb[0].mxu0
        %4795 = vmatprep.mubr.f32.mxu0 %v4640
        %4796 = vmatmul.mubr.f32.gmra.mrb[0].mxu0 %v4616
        %v4797 = vpop.f32.mrb[0].mxu0
        %v4798 = vadd.f32 %v4685, %v4797
        %v4799 = vpop.f32.mrb[0].mxu0
        %4800 = vmatprep.mubr.f32.mxu0 %v4641
        %4801 = vmatmul.mubr.f32.gmra.mrb[0].mxu0 %v4617
        %v4802 = vpop.f32.mrb[0].mxu0
        %v4803 = vadd.f32 %v4685, %v4802
        %v4804 = vpop.f32.mrb[0].mxu0
        %4805 = vmatprep.mubr.f32.mxu0 %v4642
        %4806 = vmatmul.mubr.f32.gmra.mrb[0].mxu0 %v4618
        %v4807 = vpop.f32.mrb[0].mxu0
        %v4808 = vadd.f32 %v4685, %v4807
        %v4809 = vpop.f32.mrb[0].mxu0
        %4810 = vmatprep.mubr.f32.mxu0 %v4643
        %4811 = vmatmul.mubr.f32.gmra.mrb[0].mxu0 %v4619
        %v4812 = vpop.f32.mrb[0].mxu0
        %v4813 = vadd.f32 %v4685, %v4812
        %v4814 = vpop.f32.mrb[0].mxu0
        %4815 = vdwg.mxu0
        %4816 = vmatprep.subr.mxu0 0.0
        %4817 = vmatpush1.msra.mxu0 %v4676
        %4818 = vmatprep.subr.mxu0 0.0
        %4819 = vmatpush1.msra.mxu0 %v4677
        %4820 = vmatprep.subr.mxu0 0.0
        %4821 = vmatpush1.msra.mxu0 %v4678
        %4822 = vmatprep.subr.mxu0 0.0
        %4823 = vmatpush1.msra.mxu0 %v4679
        %4824 = vmatprep.subr.mxu0 0.0
        %4825 = vmatpush1.msra.mxu0 0.0
        %4826 = vmatprep.subr.mxu0 0.0
        %4827 = vmatpush1.msra.mxu0 0.0
        %4828 = vmatprep.subr.mxu0 0.0
        %4829 = vmatpush1.msra.mxu0 0.0
        %4830 = vmatprep.subr.mxu0 0.0
        %4831 = vmatpush1.msra.mxu0 0.0
        %4832 = vmatprep.subr.mxu0 0.0
        %4833 = vmatpush1.msra.mxu0 0.0
        %4834 = vmatprep.subr.mxu0 0.0
        %4835 = vmatpush1.msra.mxu0 0.0
        %4836 = vmatprep.subr.mxu0 0.0
        %4837 = vmatpush1.msra.mxu0 0.0
        %4838 = vmatprep.subr.mxu0 0.0
        %4839 = vmatpush1.msra.mxu0 0.0
        %4840 = vmatprep.subr.mxu0 0.0
        %4841 = vmatpush1.msra.mxu0 0.0
        %4842 = vmatprep.subr.mxu0 0.0
        %4843 = vmatpush1.msra.mxu0 0.0
        %4844 = vmatprep.subr.mxu0 0.0
        %4845 = vmatpush1.msra.mxu0 0.0
        %4846 = vmatprep.subr.mxu0 0.0
        %4847 = vmatpush1.msra.mxu0 0.0
        %4848 = vmatprep.subr.mxu0 0.0
        %4849 = vmatpush1.msra.mxu0 0.0
        %4850 = vmatprep.subr.mxu0 0.0
        %4851 = vmatpush1.msra.mxu0 0.0
        %4852 = vmatprep.subr.mxu0 0.0
        %4853 = vmatpush1.msra.mxu0 0.0
        %4854 = vmatprep.subr.mxu0 0.0
        %4855 = vmatpush1.msra.mxu0 0.0
        %4856 = vmatprep.subr.mxu0 0.0
        %4857 = vmatpush1.msra.mxu0 0.0
        %4858 = vmatprep.subr.mxu0 0.0
        %4859 = vmatpush1.msra.mxu0 0.0
        %4860 = vmatprep.subr.mxu0 0.0
        %4861 = vmatpush1.msra.mxu0 0.0
        %4862 = vmatprep.subr.mxu0 0.0
        %4863 = vmatpush1.msra.mxu0 0.0
        %4864 = vmatprep.subr.mxu0 0.0
        %4865 = vmatpush1.msra.mxu0 0.0
        %4866 = vmatprep.subr.mxu0 0.0
        %4867 = vmatpush1.msra.mxu0 0.0
        %4868 = vmatprep.subr.mxu0 0.0
        %4869 = vmatpush1.msra.mxu0 0.0
        %4870 = vmatprep.subr.mxu0 0.0
        %4871 = vmatpush1.msra.mxu0 0.0
        %4872 = vmatprep.subr.mxu0 0.0
        %4873 = vmatpush1.msra.mxu0 0.0
        %4874 = vmatprep.subr.mxu0 0.0
        %4875 = vmatpush1.msra.mxu0 0.0
        %4876 = vmatprep.subr.mxu0 0.0
        %4877 = vmatpush1.msra.mxu0 0.0
        %4878 = vmatprep.subr.mxu0 0.0
        %4879 = vmatpush1.msra.mxu0 0.0
        %4880 = vmatprep.mubr.f32.mxu0 0.0
        %4881 = vmatmul.mubr.f32.gmra.mrb[0].mxu0 %v4688
        %v4882 = vpop.f32.mrb[0].mxu0
        %v4883 = vadd.f32 %v4778, %v4882
        %v4884 = vpop.f32.mrb[0].mxu0
        %4885 = vmatprep.mubr.f32.mxu0 0.0
        %4886 = vmatmul.mubr.f32.gmra.mrb[0].mxu0 %v4691
        %v4887 = vpop.f32.mrb[0].mxu0
        %v4888 = vadd.f32 %v4783, %v4887
        %v4889 = vpop.f32.mrb[0].mxu0
        %4890 = vmatprep.mubr.f32.mxu0 0.0
        %4891 = vmatmul.mubr.f32.gmra.mrb[0].mxu0 %v4694
        %v4892 = vpop.f32.mrb[0].mxu0
        %v4893 = vadd.f32 %v4788, %v4892
        %v4894 = vpop.f32.mrb[0].mxu0
        %4895 = vmatprep.mubr.f32.mxu0 0.0
        %4896 = vmatmul.mubr.f32.gmra.mrb[0].mxu0 %v4697
        %v4897 = vpop.f32.mrb[0].mxu0
        %v4898 = vadd.f32 %v4793, %v4897
        %v4899 = vpop.f32.mrb[0].mxu0
        %4900 = vmatprep.mubr.f32.mxu0 0.0
        %4901 = vmatmul.mubr.f32.gmra.mrb[0].mxu0 %v4700
        %v4902 = vpop.f32.mrb[0].mxu0
        %v4903 = vadd.f32 %v4798, %v4902
        %v4904 = vpop.f32.mrb[0].mxu0
        %4905 = vmatprep.mubr.f32.mxu0 0.0
        %4906 = vmatmul.mubr.f32.gmra.mrb[0].mxu0 %v4703
        %v4907 = vpop.f32.mrb[0].mxu0
        %v4908 = vadd.f32 %v4803, %v4907
        %v4909 = vpop.f32.mrb[0].mxu0
        %4910 = vmatprep.mubr.f32.mxu0 0.0
        %4911 = vmatmul.mubr.f32.gmra.mrb[0].mxu0 %v4706
        %v4912 = vpop.f32.mrb[0].mxu0
        %v4913 = vadd.f32 %v4808, %v4912
        %v4914 = vpop.f32.mrb[0].mxu0
        %4915 = vmatprep.mubr.f32.mxu0 0.0
        %4916 = vmatmul.mubr.f32.gmra.mrb[0].mxu0 %v4709
        %v4917 = vpop.f32.mrb[0].mxu0
        %v4918 = vadd.f32 %v4813, %v4917
        %v4919 = vpop.f32.mrb[0].mxu0
        %4920 = vdwg.mxu0
        %v4921 = vmax.f32 %v4883, 0.0
        %v4922 = vmax.f32 %v4888, 0.0
        %v4923 = vmax.f32 %v4893, 0.0
        %v4924 = vmax.f32 %v4898, 0.0
        %v4925 = vmax.f32 %v4903, 0.0
        %v4926 = vmax.f32 %v4908, 0.0
        %v4927 = vmax.f32 %v4913, 0.0
        %v4928 = vmax.f32 %v4918, 0.0
        %4929 = vxpose.xlu0.b32.start [1/16] %v4921, 128
        %4930 = vxpose.xlu0.b32.cont [2/16] %v4922, 128
        %4931 = vxpose.xlu0.b32.cont [3/16] %v4923, 128
        %4932 = vxpose.xlu0.b32.cont [4/16] %v4924, 128
        %4933 = vxpose.xlu0.b32.cont [5/16] %v4925, 128
        %4934 = vxpose.xlu0.b32.cont [6/16] %v4926, 128
        %4935 = vxpose.xlu0.b32.cont [7/16] %v4927, 128
        %4936 = vxpose.xlu0.b32.cont [8/16] %v4928, 128
        %4937 = vxpose.xlu0.b32.cont [9/16] 0.0, 128
        %4938 = vxpose.xlu0.b32.cont [10/16] 0.0, 128
        %4939 = vxpose.xlu0.b32.cont [11/16] 0.0, 128
        %4940 = vxpose.xlu0.b32.cont [12/16] 0.0, 128
        %4941 = vxpose.xlu0.b32.cont [13/16] 0.0, 128
        %4942 = vxpose.xlu0.b32.cont [14/16] 0.0, 128
        %4943 = vxpose.xlu0.b32.cont [15/16] 0.0, 128
        %4944 = vxpose.xlu0.b32.end [16/16] 0.0, 128
        %v4945 = vpop.trf.xlu0
        %v4946 = vpop.trf.xlu0
        %v4947 = vpop.trf.xlu0
        %v4948 = vpop.trf.xlu0
        %v4949 = vpop.trf.xlu0
        %v4950 = vpop.trf.xlu0
        %v4951 = vpop.trf.xlu0
        %v4952 = vpop.trf.xlu0
        %v4953 = vpop.trf.xlu0
        %v4954 = vpop.trf.xlu0
        %v4955 = vpop.trf.xlu0
        %v4956 = vpop.trf.xlu0
        %v4957 = vpop.trf.xlu0
        %v4958 = vpop.trf.xlu0
        %v4959 = vpop.trf.xlu0
        %v4960 = vpop.trf.xlu0
        %4961 = vst.msk [vmem:[#allocation5] sm:$0xff] %vm3394, %v4945
        %4962 = vst.msk [vmem:[#allocation5 + $0x8] sm:$0xff] %vm3394, %v4946
        %4963 = vst.msk [vmem:[#allocation5 + $0x10] sm:$0xff] %vm3394, %v4947
        %4964 = vst.msk [vmem:[#allocation5 + $0x18] sm:$0xff] %vm3394, %v4948
        %v4965 = vld [vmem:[#allocation5] ss:$2 sm:$0xff]
        %s4966 = scalar_lea.vmem [#allocation5], 16
        %v4967 = vld [vmem:[%s4966] ss:$2 sm:$0xff]
        %s4968 = scalar_lea.vmem [#allocation5], 1
        %v4969 = vld [vmem:[%s4968] ss:$2 sm:$0xff]
        %s4970 = scalar_lea.vmem [#allocation5], 17
        %v4971 = vld [vmem:[%s4970] ss:$2 sm:$0xff]
        %4974 = vrot.lane.b32.xlu0 %v4969, 64
        %v4975 = vpop.permute.xlu0 %4974
        %4976 = vrot.lane.b32.xlu0 %v4971, 64
        %v4977 = vpop.permute.xlu0 %4976
        %v4980 = vsel %vm3394, %v4965, %v4975
        %v4981 = vsel %vm3394, %v4967, %v4977
        %v4982 = vpack.c.bf16 %v4981, %v4980
        %v4984 = vunpack.c.l.b16 %v4982
        %v4985 = vunpack.c.h.b16 %v4982
        %v4986 = vpack.c.b16 %v4984, %v4984
        %v4987 = vpack.c.b16 %v4985, %v4985
        %4990 = vst [vmem:[%s345] sm:$0xf] %v4986
        %4991 = vst [vmem:[%s345 + $0x4] sm:$0xf] %v4987
        %p4992 = scmp.lt.s32.totalorder %s21, 1
        %s4993 = scalar_select %p4992, %s21, 1
        %s4994 = smul.addr %s4993, 2
        %s4995 = smul.addr %s4994, 4
        %s4996 = scalar_lea.vmem %s7, %s4995
        // Predicated region
        $region69: #{cnn_forward.2} parent=47 // pred_check
          %p4997 = pneg %p191
        $region70: #{cnn_forward.2} parent=47 // pred_check_branch
          %4999 = sbr.rel (%p4997) target = $region72
        $region71: #{cnn_forward.2} parent=47 // pred_region
          _
        $region72: #{cnn_forward.2} parent=47 // pred_fallthru
          _
      $region48: #{cnn_forward.2} parent=5 // pred_fallthru
        _
      %p5000 = scmp.le.s32.totalorder 2, %s16
      // Predicated region
      $region73: #{cnn_forward.2} parent=5 // pred_check
        %p5001 = pneg %p5000
      $region74: #{cnn_forward.2} parent=5 // pred_check_branch
        %5003 = sbr.rel (%p5001) target = $region76
      $region75: #{cnn_forward.2} parent=5 // pred_region
        %s5004 = ssub.s32 %s16, 2
        // Predicated region
        $region77: #{cnn_forward.2} parent=75 // pred_check
          %p5005 = pneg %p197
        $region78: #{cnn_forward.2} parent=75 // pred_check_branch
          %5007 = sbr.rel (%p5005) target = $region80
        $region79: #{cnn_forward.2} parent=75 // pred_region
          %p5008 = scmp.lt.s32.totalorder %s22, 1
          %s5009 = scalar_select %p5008, %s22, 1
          %s5010 = smul.addr %s5009, 2
          %s5011 = smul.addr %s5010, 4
          %s5012 = scalar_lea.vmem %s7, %s5011
        $region80: #{cnn_forward.2} parent=75 // pred_fallthru
          _
      $region76: #{cnn_forward.2} parent=5 // pred_fallthru
        _
    $region6: #{cnn_forward.2} parent=1 // loop_footer
      %s20 = sadd.s32 1, %s16
    $region7: #{cnn_forward.2} parent=1 // loop_footer_branch
      %15 = sbr.rel target = $region3
    $region8: #{cnn_forward.2} parent=1 // loop_exit
      _
    %5013 = vsyncpa [#allocation7], 1
    %s5014 = scalar_lea.sflag [#allocation7], 1
    %5015 = vsyncpa %s5014, 1
    %5016 = vsyncpa [#allocation9], 1
    %5017 = vsyncpa [#allocation12], 1

</llo_original>
